<compile_context>
chip_gen: v7x
topology: tpu7x:2x2x1
jax: 0.10.0
libtpu: 0.0.40
codegen_flags: <defaults>
</compile_context>

<pallas_src>
import jax
import jax.numpy as jnp
from jax import lax
from jax.experimental import pallas as pl
from jax.experimental.pallas import tpu as pltpu


# ----------------------------------------------------------------------------
# Pallas kernels
# ----------------------------------------------------------------------------
def _conv_pool_kernel(p_ref, w_ref, b_ref, o_ref):
    """Fused im2col-GEMM conv + bias + relu + 2x2 max-pool.

    p_ref : (4, tm, K) bf16 -- the 4 pool-window members of each output pixel
    w_ref : (K, C)     bf16
    b_ref : (1, C)     f32
    o_ref : (tm, C)    pooled activation
    """
    w = w_ref[...]
    acc = jnp.dot(p_ref[0], w, preferred_element_type=jnp.float32)
    for k in range(1, 4):
        acc = jnp.maximum(
            acc, jnp.dot(p_ref[k], w, preferred_element_type=jnp.float32))
    o_ref[...] = jnp.maximum(acc + b_ref[...], 0.0).astype(o_ref.dtype)


def conv_relu_pool(x, w, b, *, out_dtype=jnp.bfloat16, tm_max=512):
    """pool2x2(relu(conv2d_valid(x, w) + b)) for NHWC x, PyTorch OIHW w.

    The conv is lowered to an im2col GEMM; the 4 members of every 2x2 pool
    window are grouped on a leading axis of the patch matrix so the kernel can
    reduce them in VMEM (the pre-pool activation never reaches HBM).
    """
    N, H, W, Cin = x.shape
    O, I, kh, kw = w.shape
    assert I == Cin
    oh, ow = H - kh + 1, W - kw + 1
    ph, pw = oh // 2, ow // 2
    K = kh * kw * Cin

    # im2col (plain XLA, tiny at these sizes): (N, oh, ow, K)
    # TODO(synk): for large batches, fold im2col into the kernel (grid axis
    # over the kh*kw taps) so patches never hit HBM at kh*kw expansion.
    cols = []
    for di in range(kh):
        for dj in range(kw):
            cols.append(x[:, di:di + oh, dj:dj + ow, :])
    p = jnp.stack(cols, axis=3).reshape(N, oh, ow, K)

    # Group the 4 pool-window members on a leading axis: (4, N*ph*pw, K) with
    # p4[a*2+b, (n, i, j), :] = patch(n, 2i+a, 2j+b).
    p = p[:, :2 * ph, :2 * pw, :].reshape(N, ph, 2, pw, 2, K)
    p = jnp.transpose(p, (2, 4, 0, 1, 3, 5)).reshape(4, N * ph * pw, K)
    p = p.astype(jnp.bfloat16)

    wg = jnp.transpose(w, (2, 3, 1, 0)).reshape(K, O).astype(jnp.bfloat16)
    bias = b.astype(jnp.float32).reshape(1, O)

    M = N * ph * pw
    if M <= tm_max:
        tm, m_pad = M, M                      # single full-extent block
    else:
        tm = tm_max
        m_pad = pl.cdiv(M, tm) * tm
        p = jnp.pad(p, ((0, 0), (0, m_pad - M), (0, 0)))

    # NOTE: O=16 gives narrow-lane stores; acceptable at these sizes (a
    # lane-dense repack would need an in-kernel sublane->lane relayout).
    out = pl.pallas_call(
        _conv_pool_kernel,
        out_shape=jax.ShapeDtypeStruct((m_pad, O), out_dtype),
        grid=(m_pad // tm,),
        in_specs=[
            pl.BlockSpec((4, tm, K), lambda i: (0, i, 0)),
            pl.BlockSpec((K, O), lambda i: (0, 0)),
            pl.BlockSpec((1, O), lambda i: (0, 0)),
        ],
        out_specs=pl.BlockSpec((tm, O), lambda i: (i, 0)),
        compiler_params=pltpu.CompilerParams(
            dimension_semantics=("parallel",)),
    )(p, wg, bias)
    if m_pad != M:
        out = out[:M]
    return out.reshape(N, ph, pw, O)


def _fused_fc_kernel(x_ref, w1_ref, b1_ref, w2_ref, b2_ref, w3_ref, b3_ref,
                     o_ref):
    h = jnp.dot(x_ref[...], w1_ref[...], preferred_element_type=jnp.float32)
    h = jnp.maximum(h + b1_ref[...], 0.0)
    h = jnp.dot(h.astype(w2_ref.dtype), w2_ref[...],
                preferred_element_type=jnp.float32)
    h = jnp.maximum(h + b2_ref[...], 0.0)
    h = jnp.dot(h.astype(w3_ref.dtype), w3_ref[...],
                preferred_element_type=jnp.float32)
    o_ref[...] = (h + b3_ref[...]).astype(o_ref.dtype)


def fused_fc(x, w1, b1, w2, b2, w3, b3, *, lane_pad=128):
    """relu(x@w1+b1) -> relu(@w2+b2) -> @w3+b3 in a single pallas_call.

    All weights stay resident in VMEM; no row padding for the tiny batch; the
    final output dim (10) is padded to 128 lanes for dense stores and sliced
    back here.
    """
    M, K1 = x.shape
    H1 = w1.shape[1]
    H2 = w2.shape[1]
    N3 = w3.shape[1]
    npad = max(lane_pad, N3)
    w3p = jnp.pad(w3, ((0, 0), (0, npad - N3))).astype(jnp.bfloat16)
    b3p = jnp.pad(b3.astype(jnp.float32), ((0, npad - N3),)).reshape(1, npad)

    def full(shape):
        return pl.BlockSpec(shape, lambda i, _s=shape: (0,) * len(_s))

    out = pl.pallas_call(
        _fused_fc_kernel,
        out_shape=jax.ShapeDtypeStruct((M, npad), jnp.float32),
        grid=(1,),
        in_specs=[
            full((M, K1)),
            full((K1, H1)), full((1, H1)),
            full((H1, H2)), full((1, H2)),
            full((H2, npad)), full((1, npad)),
        ],
        out_specs=full((M, npad)),
    )(x.astype(jnp.bfloat16),
      w1.astype(jnp.bfloat16), b1.astype(jnp.float32).reshape(1, H1),
      w2.astype(jnp.bfloat16), b2.astype(jnp.float32).reshape(1, H2),
      w3p, b3p)
    return out[:, :N3]


# ----------------------------------------------------------------------------
# Parameter setup (matches PyTorch nn.Conv2d / nn.Linear default init style)
# ----------------------------------------------------------------------------
def init_params(key):
    def uniform(k, shape, fan_in):
        s = 1.0 / jnp.sqrt(jnp.float32(fan_in))
        return jax.random.uniform(k, shape, jnp.float32, -s, s)

    ks = jax.random.split(key, 10)
    return {
        "conv1": (uniform(ks[0], (16, 1, 5, 5), 1 * 5 * 5),
                  uniform(ks[1], (16,), 1 * 5 * 5)),
        "conv2": (uniform(ks[2], (16, 16, 5, 5), 16 * 5 * 5),
                  uniform(ks[3], (16,), 16 * 5 * 5)),
        "fc1": (uniform(ks[4], (256, 16 * 9 * 9), 16 * 9 * 9),
                uniform(ks[5], (256,), 16 * 9 * 9)),
        "fc2": (uniform(ks[6], (256, 256), 256),
                uniform(ks[7], (256,), 256)),
        "fc3": (uniform(ks[8], (10, 256), 256),
                uniform(ks[9], (10,), 256)),
    }


# ----------------------------------------------------------------------------
# Forward pass (Pallas) and pure-JAX reference
# ----------------------------------------------------------------------------
def net_forward(x_nchw, params):
    N = x_nchw.shape[0]
    x = jnp.transpose(x_nchw, (0, 2, 3, 1)).astype(jnp.bfloat16)  # NCHW->NHWC

    w1, b1 = params["conv1"]
    y = conv_relu_pool(x, w1, b1)            # (N, 22, 22, 16)

    w2, b2 = params["conv2"]
    y = conv_relu_pool(y, w2, b2)            # (N, 9, 9, 16)

    # flatten exactly like PyTorch's x.view(-1, 16*9*9): (C, H, W) order
    y = jnp.transpose(y, (0, 3, 1, 2)).reshape(N, 16 * 9 * 9)

    w1f, b1f = params["fc1"]
    w2f, b2f = params["fc2"]
    w3f, b3f = params["fc3"]
    return fused_fc(y, w1f.T, b1f, w2f.T, b2f, w3f.T, b3f)


def net_forward_ref(x, params):
    dn = ("NCHW", "OIHW", "NCHW")
    w1, b1 = params["conv1"]
    y = lax.conv_general_dilated(x, w1, (1, 1), "VALID", dimension_numbers=dn)
    y = jnp.maximum(y + b1[None, :, None, None], 0.0)
    y = lax.reduce_window(y, -jnp.inf, lax.max, (1, 1, 2, 2), (1, 1, 2, 2), "VALID")
    w2, b2 = params["conv2"]
    y = lax.conv_general_dilated(y, w2, (1, 1), "VALID", dimension_numbers=dn)
    y = jnp.maximum(y + b2[None, :, None, None], 0.0)
    y = lax.reduce_window(y, -jnp.inf, lax.max, (1, 1, 2, 2), (1, 1, 2, 2), "VALID")
    y = y.reshape(y.shape[0], -1)
    w, b = params["fc1"]
    y = jnp.maximum(y @ w.T + b, 0.0)
    w, b = params["fc2"]
    y = jnp.maximum(y @ w.T + b, 0.0)
    w, b = params["fc3"]
    return y @ w.T + b


# ----------------------------------------------------------------------------
if __name__ == "__main__":
    key = jax.random.PRNGKey(0)
    k_param, k_x = jax.random.split(key)

    params = init_params(k_param)
    # batch=2, 1 channel, 48x48 (required so the flatten is 16*9*9).
    x = jax.random.normal(k_x, (2, 1, 48, 48), jnp.float32)

    out = jax.block_until_ready(jax.jit(net_forward)(x, params))
    assert out.shape == (2, 10), out.shape

    ref = jax.block_until_ready(net_forward_ref(x, params))
    # Tolerance accounts for bf16 GEMM operands (f32 accumulation) vs the
    # pure-f32 reference; structural bugs would produce O(1) errors.
    max_err = float(jnp.max(jnp.abs(out - ref)))
    assert jnp.allclose(out, ref, rtol=5e-2, atol=5e-2), (
        f"Pallas output mismatch vs JAX reference (max abs diff {max_err})")

    print("KERNEL_OK")
</pallas_src>

<mosaic_0001>
module attributes {stable_mosaic.version = 11 : i64} {
  func.func @_conv_pool_kernel(%arg0: i32, %arg1: memref<4x512x25xbf16, #tpu.memory_space<vmem>>, %arg2: memref<25x16xbf16, #tpu.memory_space<vmem>>, %arg3: memref<1x16xf32, #tpu.memory_space<vmem>>, %arg4: memref<512x16xbf16, #tpu.memory_space<vmem>>) attributes {dimension_semantics = [#tpu.dimension_semantics<parallel>], iteration_bounds = array<i64: 2>, scalar_prefetch = 0 : i64, scratch_operands = 0 : i64, tpu.core_type = #tpu.core_type<tc>, window_params = [{transform_indices = @transform_0, window_bounds = array<i64: 4, 512, 25>}, {pipeline_mode = #tpu.pipeline_mode<synchronous>, transform_indices = @transform_1, window_bounds = array<i64: 25, 16>}, {pipeline_mode = #tpu.pipeline_mode<synchronous>, transform_indices = @transform_2, window_bounds = array<i64: 1, 16>}, {transform_indices = @transform_3, window_bounds = array<i64: 512, 16>}]} {
    %c0 = arith.constant 0 : index
    %c0_0 = arith.constant 0 : index
    %0 = vector.load %arg2[%c0, %c0_0] : memref<25x16xbf16, #tpu.memory_space<vmem>>, vector<25x16xbf16>
    %c0_1 = arith.constant 0 : index
    %c0_2 = arith.constant 0 : index
    %c0_3 = arith.constant 0 : index
    %1 = vector.load %arg1[%c0_1, %c0_2, %c0_3] : memref<4x512x25xbf16, #tpu.memory_space<vmem>>, vector<1x512x25xbf16>
    %2 = vector.shape_cast %1 : vector<1x512x25xbf16> to vector<512x25xbf16>
    %cst = arith.constant dense<0.000000e+00> : vector<512x16xf32>
    %3 = tpu.matmul %2, %0, %cst {dimension_numbers = #tpu.dot_dimension_numbers<[1], [0], [0], [1], [0, 0, 1, 1], [], []>} : vector<512x25xbf16>, vector<25x16xbf16>, vector<512x16xf32> -> vector<512x16xf32>
    %c1 = arith.constant 1 : index
    %c0_4 = arith.constant 0 : index
    %c0_5 = arith.constant 0 : index
    %4 = vector.load %arg1[%c1, %c0_4, %c0_5] : memref<4x512x25xbf16, #tpu.memory_space<vmem>>, vector<1x512x25xbf16>
    %5 = vector.shape_cast %4 : vector<1x512x25xbf16> to vector<512x25xbf16>
    %cst_6 = arith.constant dense<0.000000e+00> : vector<512x16xf32>
    %6 = tpu.matmul %5, %0, %cst_6 {dimension_numbers = #tpu.dot_dimension_numbers<[1], [0], [0], [1], [0, 0, 1, 1], [], []>} : vector<512x25xbf16>, vector<25x16xbf16>, vector<512x16xf32> -> vector<512x16xf32>
    %7 = arith.maximumf %3, %6 : vector<512x16xf32>
    %c2 = arith.constant 2 : index
    %c0_7 = arith.constant 0 : index
    %c0_8 = arith.constant 0 : index
    %8 = vector.load %arg1[%c2, %c0_7, %c0_8] : memref<4x512x25xbf16, #tpu.memory_space<vmem>>, vector<1x512x25xbf16>
    %9 = vector.shape_cast %8 : vector<1x512x25xbf16> to vector<512x25xbf16>
    %cst_9 = arith.constant dense<0.000000e+00> : vector<512x16xf32>
    %10 = tpu.matmul %9, %0, %cst_9 {dimension_numbers = #tpu.dot_dimension_numbers<[1], [0], [0], [1], [0, 0, 1, 1], [], []>} : vector<512x25xbf16>, vector<25x16xbf16>, vector<512x16xf32> -> vector<512x16xf32>
    %11 = arith.maximumf %7, %10 : vector<512x16xf32>
    %c3 = arith.constant 3 : index
    %c0_10 = arith.constant 0 : index
    %c0_11 = arith.constant 0 : index
    %12 = vector.load %arg1[%c3, %c0_10, %c0_11] : memref<4x512x25xbf16, #tpu.memory_space<vmem>>, vector<1x512x25xbf16>
    %13 = vector.shape_cast %12 : vector<1x512x25xbf16> to vector<512x25xbf16>
    %cst_12 = arith.constant dense<0.000000e+00> : vector<512x16xf32>
    %14 = tpu.matmul %13, %0, %cst_12 {dimension_numbers = #tpu.dot_dimension_numbers<[1], [0], [0], [1], [0, 0, 1, 1], [], []>} : vector<512x25xbf16>, vector<25x16xbf16>, vector<512x16xf32> -> vector<512x16xf32>
    %15 = arith.maximumf %11, %14 : vector<512x16xf32>
    %c0_13 = arith.constant 0 : index
    %c0_14 = arith.constant 0 : index
    %16 = vector.load %arg3[%c0_13, %c0_14] : memref<1x16xf32, #tpu.memory_space<vmem>>, vector<1x16xf32>
    %17 = vector.broadcast %16 : vector<1x16xf32> to vector<512x16xf32>
    %18 = arith.addf %15, %17 : vector<512x16xf32>
    %cst_15 = arith.constant 0.000000e+00 : f32
    %19 = vector.broadcast %cst_15 : f32 to vector<512x16xf32>
    %20 = arith.maximumf %18, %19 : vector<512x16xf32>
    %21 = arith.truncf %20 : vector<512x16xf32> to vector<512x16xbf16>
    %c0_16 = arith.constant 0 : index
    %c0_17 = arith.constant 0 : index
    %22 = vector.load %arg4[%c0_16, %c0_17] : memref<512x16xbf16, #tpu.memory_space<vmem>>, vector<512x16xbf16>
    tpu.vector_store %arg4[%c0_16, %c0_17], %21 {strides = array<i32>} : memref<512x16xbf16, #tpu.memory_space<vmem>>, vector<512x16xbf16>,
    return
  }
  func.func @transform_0(%arg0: i32) -> (i32, i32, i32) {
    %c0_i32 = arith.constant 0 : i32
    %c0_i32_0 = arith.constant 0 : i32
    %c0_i32_1 = arith.constant 0 : i32
    return %c0_i32, %arg0, %c0_i32_0 : i32, i32, i32
  }
  func.func @transform_1(%arg0: i32) -> (i32, i32) {
    %c0_i32 = arith.constant 0 : i32
    %c0_i32_0 = arith.constant 0 : i32
    %c0_i32_1 = arith.constant 0 : i32
    return %c0_i32, %c0_i32_0 : i32, i32
  }
  func.func @transform_2(%arg0: i32) -> (i32, i32) {
    %c0_i32 = arith.constant 0 : i32
    %c0_i32_0 = arith.constant 0 : i32
    %c0_i32_1 = arith.constant 0 : i32
    return %c0_i32, %c0_i32_0 : i32, i32
  }
  func.func @transform_3(%arg0: i32) -> (i32, i32) {
    %c0_i32 = arith.constant 0 : i32
    %c0_i32_0 = arith.constant 0 : i32
    return %arg0, %c0_i32 : i32, i32
  }
}

module attributes {stable_mosaic.version = 11 : i64} {
  func.func @_conv_pool_kernel(%arg0: i32, %arg1: memref<4x162x400xbf16, #tpu.memory_space<vmem>>, %arg2: memref<400x16xbf16, #tpu.memory_space<vmem>>, %arg3: memref<1x16xf32, #tpu.memory_space<vmem>>, %arg4: memref<162x16xbf16, #tpu.memory_space<vmem>>) attributes {dimension_semantics = [#tpu.dimension_semantics<parallel>], iteration_bounds = array<i64: 1>, scalar_prefetch = 0 : i64, scratch_operands = 0 : i64, tpu.core_type = #tpu.core_type<tc>, window_params = [{transform_indices = @transform_0, window_bounds = array<i64: 4, 162, 400>}, {pipeline_mode = #tpu.pipeline_mode<synchronous>, transform_indices = @transform_1, window_bounds = array<i64: 400, 16>}, {pipeline_mode = #tpu.pipeline_mode<synchronous>, transform_indices = @transform_2, window_bounds = array<i64: 1, 16>}, {transform_indices = @transform_3, window_bounds = array<i64: 162, 16>}]} {
    %c0 = arith.constant 0 : index
    %c0_0 = arith.constant 0 : index
    %0 = vector.load %arg2[%c0, %c0_0] : memref<400x16xbf16, #tpu.memory_space<vmem>>, vector<400x16xbf16>
    %c0_1 = arith.constant 0 : index
    %c0_2 = arith.constant 0 : index
    %c0_3 = arith.constant 0 : index
    %1 = vector.load %arg1[%c0_1, %c0_2, %c0_3] : memref<4x162x400xbf16, #tpu.memory_space<vmem>>, vector<1x162x400xbf16>
    %2 = vector.shape_cast %1 : vector<1x162x400xbf16> to vector<162x400xbf16>
    %cst = arith.constant dense<0.000000e+00> : vector<162x16xf32>
    %3 = tpu.matmul %2, %0, %cst {dimension_numbers = #tpu.dot_dimension_numbers<[1], [0], [0], [1], [0, 0, 1, 1], [], []>} : vector<162x400xbf16>, vector<400x16xbf16>, vector<162x16xf32> -> vector<162x16xf32>
    %c1 = arith.constant 1 : index
    %c0_4 = arith.constant 0 : index
    %c0_5 = arith.constant 0 : index
    %4 = vector.load %arg1[%c1, %c0_4, %c0_5] : memref<4x162x400xbf16, #tpu.memory_space<vmem>>, vector<1x162x400xbf16>
    %5 = vector.shape_cast %4 : vector<1x162x400xbf16> to vector<162x400xbf16>
    %cst_6 = arith.constant dense<0.000000e+00> : vector<162x16xf32>
    %6 = tpu.matmul %5, %0, %cst_6 {dimension_numbers = #tpu.dot_dimension_numbers<[1], [0], [0], [1], [0, 0, 1, 1], [], []>} : vector<162x400xbf16>, vector<400x16xbf16>, vector<162x16xf32> -> vector<162x16xf32>
    %7 = arith.maximumf %3, %6 : vector<162x16xf32>
    %c2 = arith.constant 2 : index
    %c0_7 = arith.constant 0 : index
    %c0_8 = arith.constant 0 : index
    %8 = vector.load %arg1[%c2, %c0_7, %c0_8] : memref<4x162x400xbf16, #tpu.memory_space<vmem>>, vector<1x162x400xbf16>
    %9 = vector.shape_cast %8 : vector<1x162x400xbf16> to vector<162x400xbf16>
    %cst_9 = arith.constant dense<0.000000e+00> : vector<162x16xf32>
    %10 = tpu.matmul %9, %0, %cst_9 {dimension_numbers = #tpu.dot_dimension_numbers<[1], [0], [0], [1], [0, 0, 1, 1], [], []>} : vector<162x400xbf16>, vector<400x16xbf16>, vector<162x16xf32> -> vector<162x16xf32>
    %11 = arith.maximumf %7, %10 : vector<162x16xf32>
    %c3 = arith.constant 3 : index
    %c0_10 = arith.constant 0 : index
    %c0_11 = arith.constant 0 : index
    %12 = vector.load %arg1[%c3, %c0_10, %c0_11] : memref<4x162x400xbf16, #tpu.memory_space<vmem>>, vector<1x162x400xbf16>
    %13 = vector.shape_cast %12 : vector<1x162x400xbf16> to vector<162x400xbf16>
    %cst_12 = arith.constant dense<0.000000e+00> : vector<162x16xf32>
    %14 = tpu.matmul %13, %0, %cst_12 {dimension_numbers = #tpu.dot_dimension_numbers<[1], [0], [0], [1], [0, 0, 1, 1], [], []>} : vector<162x400xbf16>, vector<400x16xbf16>, vector<162x16xf32> -> vector<162x16xf32>
    %15 = arith.maximumf %11, %14 : vector<162x16xf32>
    %c0_13 = arith.constant 0 : index
    %c0_14 = arith.constant 0 : index
    %16 = vector.load %arg3[%c0_13, %c0_14] : memref<1x16xf32, #tpu.memory_space<vmem>>, vector<1x16xf32>
    %17 = vector.broadcast %16 : vector<1x16xf32> to vector<162x16xf32>
    %18 = arith.addf %15, %17 : vector<162x16xf32>
    %cst_15 = arith.constant 0.000000e+00 : f32
    %19 = vector.broadcast %cst_15 : f32 to vector<162x16xf32>
    %20 = arith.maximumf %18, %19 : vector<162x16xf32>
    %21 = arith.truncf %20 : vector<162x16xf32> to vector<162x16xbf16>
    %c0_16 = arith.constant 0 : index
    %c0_17 = arith.constant 0 : index
    %22 = vector.load %arg4[%c0_16, %c0_17] : memref<162x16xbf16, #tpu.memory_space<vmem>>, vector<162x16xbf16>
    tpu.vector_store %arg4[%c0_16, %c0_17], %21 {strides = array<i32>} : memref<162x16xbf16, #tpu.memory_space<vmem>>, vector<162x16xbf16>,
    return
  }
  func.func @transform_0(%arg0: i32) -> (i32, i32, i32) {
    %c0_i32 = arith.constant 0 : i32
    %c0_i32_0 = arith.constant 0 : i32
    %c0_i32_1 = arith.constant 0 : i32
    return %c0_i32, %arg0, %c0_i32_0 : i32, i32, i32
  }
  func.func @transform_1(%arg0: i32) -> (i32, i32) {
    %c0_i32 = arith.constant 0 : i32
    %c0_i32_0 = arith.constant 0 : i32
    %c0_i32_1 = arith.constant 0 : i32
    return %c0_i32, %c0_i32_0 : i32, i32
  }
  func.func @transform_2(%arg0: i32) -> (i32, i32) {
    %c0_i32 = arith.constant 0 : i32
    %c0_i32_0 = arith.constant 0 : i32
    %c0_i32_1 = arith.constant 0 : i32
    return %c0_i32, %c0_i32_0 : i32, i32
  }
  func.func @transform_3(%arg0: i32) -> (i32, i32) {
    %c0_i32 = arith.constant 0 : i32
    %c0_i32_0 = arith.constant 0 : i32
    return %arg0, %c0_i32 : i32, i32
  }
}

module attributes {stable_mosaic.version = 11 : i64} {
  func.func @_fused_fc_kernel(%arg0: i32, %arg1: memref<2x1296xbf16, #tpu.memory_space<vmem>>, %arg2: memref<1296x256xbf16, #tpu.memory_space<vmem>>, %arg3: memref<1x256xf32, #tpu.memory_space<vmem>>, %arg4: memref<256x256xbf16, #tpu.memory_space<vmem>>, %arg5: memref<1x256xf32, #tpu.memory_space<vmem>>, %arg6: memref<256x128xbf16, #tpu.memory_space<vmem>>, %arg7: memref<1x128xf32, #tpu.memory_space<vmem>>, %arg8: memref<2x128xf32, #tpu.memory_space<vmem>>) attributes {dimension_semantics = [#tpu.dimension_semantics<arbitrary>], iteration_bounds = array<i64: 1>, scalar_prefetch = 0 : i64, scratch_operands = 0 : i64, tpu.core_type = #tpu.core_type<tc>, window_params = [{pipeline_mode = #tpu.pipeline_mode<synchronous>, transform_indices = @transform_0, window_bounds = array<i64: 2, 1296>}, {pipeline_mode = #tpu.pipeline_mode<synchronous>, transform_indices = @transform_1, window_bounds = array<i64: 1296, 256>}, {pipeline_mode = #tpu.pipeline_mode<synchronous>, transform_indices = @transform_2, window_bounds = array<i64: 1, 256>}, {pipeline_mode = #tpu.pipeline_mode<synchronous>, transform_indices = @transform_3, window_bounds = array<i64: 256, 256>}, {pipeline_mode = #tpu.pipeline_mode<synchronous>, transform_indices = @transform_4, window_bounds = array<i64: 1, 256>}, {pipeline_mode = #tpu.pipeline_mode<synchronous>, transform_indices = @transform_5, window_bounds = array<i64: 256, 128>}, {pipeline_mode = #tpu.pipeline_mode<synchronous>, transform_indices = @transform_6, window_bounds = array<i64: 1, 128>}, {pipeline_mode = #tpu.pipeline_mode<synchronous>, transform_indices = @transform_7, window_bounds = array<i64: 2, 128>}]} {
    %c0 = arith.constant 0 : index
    %c0_0 = arith.constant 0 : index
    %0 = vector.load %arg1[%c0, %c0_0] : memref<2x1296xbf16, #tpu.memory_space<vmem>>, vector<2x1296xbf16>
    %c0_1 = arith.constant 0 : index
    %c0_2 = arith.constant 0 : index
    %1 = vector.load %arg2[%c0_1, %c0_2] : memref<1296x256xbf16, #tpu.memory_space<vmem>>, vector<1296x256xbf16>
    %cst = arith.constant dense<0.000000e+00> : vector<2x256xf32>
    %2 = tpu.matmul %0, %1, %cst {dimension_numbers = #tpu.dot_dimension_numbers<[1], [0], [0], [1], [0, 0, 1, 1], [], []>} : vector<2x1296xbf16>, vector<1296x256xbf16>, vector<2x256xf32> -> vector<2x256xf32>
    %c0_3 = arith.constant 0 : index
    %c0_4 = arith.constant 0 : index
    %3 = vector.load %arg3[%c0_3, %c0_4] : memref<1x256xf32, #tpu.memory_space<vmem>>, vector<1x256xf32>
    %4 = vector.broadcast %3 : vector<1x256xf32> to vector<2x256xf32>
    %5 = arith.addf %2, %4 : vector<2x256xf32>
    %cst_5 = arith.constant 0.000000e+00 : f32
    %6 = vector.broadcast %cst_5 : f32 to vector<2x256xf32>
    %7 = arith.maximumf %5, %6 : vector<2x256xf32>
    %8 = arith.truncf %7 : vector<2x256xf32> to vector<2x256xbf16>
    %c0_6 = arith.constant 0 : index
    %c0_7 = arith.constant 0 : index
    %9 = vector.load %arg4[%c0_6, %c0_7] : memref<256x256xbf16, #tpu.memory_space<vmem>>, vector<256x256xbf16>
    %cst_8 = arith.constant dense<0.000000e+00> : vector<2x256xf32>
    %10 = tpu.matmul %8, %9, %cst_8 {dimension_numbers = #tpu.dot_dimension_numbers<[1], [0], [0], [1], [0, 0, 1, 1], [], []>} : vector<2x256xbf16>, vector<256x256xbf16>, vector<2x256xf32> -> vector<2x256xf32>
    %c0_9 = arith.constant 0 : index
    %c0_10 = arith.constant 0 : index
    %11 = vector.load %arg5[%c0_9, %c0_10] : memref<1x256xf32, #tpu.memory_space<vmem>>, vector<1x256xf32>
    %12 = vector.broadcast %11 : vector<1x256xf32> to vector<2x256xf32>
    %13 = arith.addf %10, %12 : vector<2x256xf32>
    %cst_11 = arith.constant 0.000000e+00 : f32
    %14 = vector.broadcast %cst_11 : f32 to vector<2x256xf32>
    %15 = arith.maximumf %13, %14 : vector<2x256xf32>
    %16 = arith.truncf %15 : vector<2x256xf32> to vector<2x256xbf16>
    %c0_12 = arith.constant 0 : index
    %c0_13 = arith.constant 0 : index
    %17 = vector.load %arg6[%c0_12, %c0_13] : memref<256x128xbf16, #tpu.memory_space<vmem>>, vector<256x128xbf16>
    %cst_14 = arith.constant dense<0.000000e+00> : vector<2x128xf32>
    %18 = tpu.matmul %16, %17, %cst_14 {dimension_numbers = #tpu.dot_dimension_numbers<[1], [0], [0], [1], [0, 0, 1, 1], [], []>} : vector<2x256xbf16>, vector<256x128xbf16>, vector<2x128xf32> -> vector<2x128xf32>
    %c0_15 = arith.constant 0 : index
    %c0_16 = arith.constant 0 : index
    %19 = vector.load %arg7[%c0_15, %c0_16] : memref<1x128xf32, #tpu.memory_space<vmem>>, vector<1x128xf32>
    %20 = vector.broadcast %19 : vector<1x128xf32> to vector<2x128xf32>
    %21 = arith.addf %18, %20 : vector<2x128xf32>
    %c0_17 = arith.constant 0 : index
    %c0_18 = arith.constant 0 : index
    %22 = vector.load %arg8[%c0_17, %c0_18] : memref<2x128xf32, #tpu.memory_space<vmem>>, vector<2x128xf32>
    tpu.vector_store %arg8[%c0_17, %c0_18], %21 {strides = array<i32>} : memref<2x128xf32, #tpu.memory_space<vmem>>, vector<2x128xf32>,
    return
  }
  func.func @transform_0(%arg0: i32) -> (i32, i32) {
    %c0_i32 = arith.constant 0 : i32
    %c0_i32_0 = arith.constant 0 : i32
    %c0_i32_1 = arith.constant 0 : i32
    return %c0_i32, %c0_i32_0 : i32, i32
  }
  func.func @transform_1(%arg0: i32) -> (i32, i32) {
    %c0_i32 = arith.constant 0 : i32
    %c0_i32_0 = arith.constant 0 : i32
    %c0_i32_1 = arith.constant 0 : i32
    return %c0_i32, %c0_i32_0 : i32, i32
  }
  func.func @transform_2(%arg0: i32) -> (i32, i32) {
    %c0_i32 = arith.constant 0 : i32
    %c0_i32_0 = arith.constant 0 : i32
    %c0_i32_1 = arith.constant 0 : i32
    return %c0_i32, %c0_i32_0 : i32, i32
  }
  func.func @transform_3(%arg0: i32) -> (i32, i32) {
    %c0_i32 = arith.constant 0 : i32
    %c0_i32_0 = arith.constant 0 : i32
    %c0_i32_1 = arith.constant 0 : i32
    return %c0_i32, %c0_i32_0 : i32, i32
  }
  func.func @transform_4(%arg0: i32) -> (i32, i32) {
    %c0_i32 = arith.constant 0 : i32
    %c0_i32_0 = arith.constant 0 : i32
    %c0_i32_1 = arith.constant 0 : i32
    return %c0_i32, %c0_i32_0 : i32, i32
  }
  func.func @transform_5(%arg0: i32) -> (i32, i32) {
    %c0_i32 = arith.constant 0 : i32
    %c0_i32_0 = arith.constant 0 : i32
    %c0_i32_1 = arith.constant 0 : i32
    return %c0_i32, %c0_i32_0 : i32, i32
  }
  func.func @transform_6(%arg0: i32) -> (i32, i32) {
    %c0_i32 = arith.constant 0 : i32
    %c0_i32_0 = arith.constant 0 : i32
    %c0_i32_1 = arith.constant 0 : i32
    return %c0_i32, %c0_i32_0 : i32, i32
  }
  func.func @transform_7(%arg0: i32) -> (i32, i32) {
    %c0_i32 = arith.constant 0 : i32
    %c0_i32_0 = arith.constant 0 : i32
    %c0_i32_1 = arith.constant 0 : i32
    return %c0_i32, %c0_i32_0 : i32, i32
  }
}

</mosaic_0001>

<llo_original>
// kernel: net_forward.3
$region0: #{net_forward.3}
  #allocation0 [shape = 'u32[]', space=smem, size = 0x4, offset = 0x4, fixed_abs, tag = 'smem constant byte address 0x4 - core index']
  #allocation1 [shape = 'u32[144,128]{1,0:T(1,128)}', space=vmem, size = 0x12000, scoped, tag = 'internal scratch']
  %s0 = inlined_call_operand.vmem [shape: bf16[4,1024,25], index: 0, kind: input, shape index: {}]
  %s1 = inlined_call_operand.vmem [shape: bf16[25,16], index: 1, kind: input, shape index: {}]
  %s2 = inlined_call_operand.vmem [shape: f32[1,16], index: 2, kind: input, shape index: {}]
  %s3 = inlined_call_operand.vmem [shape: bf16[1024,16], index: 3, kind: output, shape index: {}]
  %s4 = sld [smem:[#allocation0]]
  $region86: #{net_forward.3} parent=0
    _
  %s6 = ssub.s32 1, %s4
  %s7 = scalar_select 0, %s6, %s4
  $region1: #{net_forward.3} parent=0
    #allocation2 [shape = 'u8[1048576]{0}', space=vmem, size = 0x100000, scoped, tag = 'input window, operand 0']
    loop: start=0, step=1, limit=4
    $region2: #{net_forward.3} parent=1 // loop_pre_header
      _
    $region3: #{net_forward.3} parent=1 // loop_header
      %s9 = sphi 0, %s13
      %p10 = scmp.ge.s32.totalorder %s9, 4
      %s19 = sphi 0, %s21
      %s22 = sphi 0, %s19
      %s23 = sphi 0, %s22
      %s39 = sphi 0, %s23
      %s43 = sphi 0, %s43
      %s45 = sphi 0, %s43
      %s46 = sphi 0, %s45
      %s60 = sphi 0, %s46
      %s64 = sphi 0, %s64
      %s66 = sphi 0, %s64
      %s67 = sphi 0, %s66
      %s81 = sphi 0, %s67
      %s87 = sphi 0, %s89
      %s90 = sphi 0, %s87
      %s91 = sphi 0, %s90
      %s107 = sphi 0, %s91
    $region4: #{net_forward.3} parent=1 // loop_header_branch
      %12 = sbr.rel (%p10) target = $region8
    $region5: #{net_forward.3} parent=1 // loop_body
      %s14 = ssub.s32 %s9, 1
      %s15 = ssub.s32 %s9, 2
      %s16 = sadd.s32 %s9, 1
      %s17 = ssub.s32 %s9, %s16
      %p18 = scmp.eq.s32.totalorder %s17, 0
      %s20 = sadd.s32 %s19, 1
      %s21 = scalar_select %p18, %s19, %s20
      %p24 = pneg %p18
      %p25 = scmp.eq.s32.totalorder %s9, 1
      %p26 = por %p24, %p25
      %p27 = scmp.ne.s32.totalorder %s19, %s22
      %p28 = scmp.eq.s32.totalorder %s9, 0
      %p29 = por %p27, %p28
      %p30 = scmp.ne.s32.totalorder %s19, %s22
      %p31 = scmp.eq.s32.totalorder %s14, 1
      %p32 = por %p30, %p31
      %p33 = scmp.ne.s32.totalorder %s22, %s23
      %p34 = scmp.eq.s32.totalorder %s14, 0
      %p35 = por %p33, %p34
      %p36 = scmp.ne.s32.totalorder %s22, %s23
      %p37 = scmp.eq.s32.totalorder %s15, 1
      %p38 = por %p36, %p37
      %p40 = scmp.ne.s32.totalorder %s23, %s39
      %p41 = scmp.eq.s32.totalorder %s15, 0
      %p42 = por %p40, %p41
      %s44 = sadd.s32 %s43, 1
      %p47 = scmp.eq.s32.totalorder %s9, 1
      %p48 = scmp.ne.s32.totalorder %s43, %s45
      %p49 = scmp.eq.s32.totalorder %s9, 0
      %p50 = por %p48, %p49
      %p51 = scmp.ne.s32.totalorder %s43, %s45
      %p52 = scmp.eq.s32.totalorder %s14, 1
      %p53 = por %p51, %p52
      %p54 = scmp.ne.s32.totalorder %s45, %s46
      %p55 = scmp.eq.s32.totalorder %s14, 0
      %p56 = por %p54, %p55
      %p57 = scmp.ne.s32.totalorder %s45, %s46
      %p58 = scmp.eq.s32.totalorder %s15, 1
      %p59 = por %p57, %p58
      %p61 = scmp.ne.s32.totalorder %s46, %s60
      %p62 = scmp.eq.s32.totalorder %s15, 0
      %p63 = por %p61, %p62
      %s65 = sadd.s32 %s64, 1
      %p68 = scmp.eq.s32.totalorder %s9, 1
      %p69 = scmp.ne.s32.totalorder %s64, %s66
      %p70 = scmp.eq.s32.totalorder %s9, 0
      %p71 = por %p69, %p70
      %p72 = scmp.ne.s32.totalorder %s64, %s66
      %p73 = scmp.eq.s32.totalorder %s14, 1
      %p74 = por %p72, %p73
      %p75 = scmp.ne.s32.totalorder %s66, %s67
      %p76 = scmp.eq.s32.totalorder %s14, 0
      %p77 = por %p75, %p76
      %p78 = scmp.ne.s32.totalorder %s66, %s67
      %p79 = scmp.eq.s32.totalorder %s15, 1
      %p80 = por %p78, %p79
      %p82 = scmp.ne.s32.totalorder %s67, %s81
      %p83 = scmp.eq.s32.totalorder %s15, 0
      %p84 = por %p82, %p83
      %s85 = ssub.s32 %s9, %s16
      %p86 = scmp.eq.s32.totalorder %s85, 0
      %s88 = sadd.s32 %s87, 1
      %s89 = scalar_select %p86, %s87, %s88
      %p92 = pneg %p86
      %p93 = scmp.eq.s32.totalorder %s9, 1
      %p94 = por %p92, %p93
      %p95 = scmp.ne.s32.totalorder %s87, %s90
      %p96 = scmp.eq.s32.totalorder %s9, 0
      %p97 = por %p95, %p96
      %p98 = scmp.ne.s32.totalorder %s87, %s90
      %p99 = scmp.eq.s32.totalorder %s14, 1
      %p100 = por %p98, %p99
      %p101 = scmp.ne.s32.totalorder %s90, %s91
      %p102 = scmp.eq.s32.totalorder %s14, 0
      %p103 = por %p101, %p102
      %p104 = scmp.ne.s32.totalorder %s90, %s91
      %p105 = scmp.eq.s32.totalorder %s15, 1
      %p106 = por %p104, %p105
      %p108 = scmp.ne.s32.totalorder %s91, %s107
      %p109 = scmp.eq.s32.totalorder %s15, 0
      %p110 = por %p108, %p109
      %p111 = scmp.le.s32.totalorder 1, %s9
      %p112 = scmp.lt.s32.totalorder %s9, 3
      %p113 = pnand %p111, %p112
      %p114 = pneg %p113
      // Predicated region
      $region9: #{net_forward.3} parent=5 // pred_check
        _
      $region10: #{net_forward.3} parent=5 // pred_check_branch
        %116 = sbr.rel (%p113) target = $region12
      $region11: #{net_forward.3} parent=5 // pred_region
        %s117 = ssub.s32 %s9, 1
        // Predicated region
        $region13: #{net_forward.3} parent=11 // pred_check
          %p118 = pneg %p56
        $region14: #{net_forward.3} parent=11 // pred_check_branch
          %120 = sbr.rel (%p118) target = $region16
        $region15: #{net_forward.3} parent=11 // pred_region
          _
        $region16: #{net_forward.3} parent=11 // pred_fallthru
          _
        // Predicated region
        $region17: #{net_forward.3} parent=11 // pred_check
          %p121 = pneg %p77
        $region18: #{net_forward.3} parent=11 // pred_check_branch
          %123 = sbr.rel (%p121) target = $region20
        $region19: #{net_forward.3} parent=11 // pred_region
          _
        $region20: #{net_forward.3} parent=11 // pred_fallthru
          _
      $region12: #{net_forward.3} parent=5 // pred_fallthru
        _
      %p124 = scmp.lt.s32.totalorder %s9, 2
      // Predicated region
      $region21: #{net_forward.3} parent=5 // pred_check
        %p125 = pneg %p124
      $region22: #{net_forward.3} parent=5 // pred_check_branch
        %127 = sbr.rel (%p125) target = $region24
      $region23: #{net_forward.3} parent=5 // pred_region
        // Predicated region
        $region25: #{net_forward.3} parent=23 // pred_check
          %p128 = pneg %p29
        $region26: #{net_forward.3} parent=23 // pred_check_branch
          %130 = sbr.rel (%p128) target = $region28
        $region27: #{net_forward.3} parent=23 // pred_region
          %s131 = sand.u32 %s19, 1
          %s132 = sand.u32 %s19, 1
          %s133 = smul.addr %s132, 1024
          %s134 = scalar_lea.vmem [#allocation2], %s133
          %s135 = smul.u32 64, %s9
          %s136 = smul.addr %s135, 4
          %s137 = scalar_lea.vmem %s0, %s136
          // Predicated region
          $region29: #{net_forward.3} parent=27 // pred_check
            _
          $region30: #{net_forward.3} parent=27 // pred_check_branch
            %139 = sbr.rel (0) target = $region32
          $region31: #{net_forward.3} parent=27 // pred_region
            // Predicated region
            $region33: #{net_forward.3} parent=31 // pred_check
              _
            $region34: #{net_forward.3} parent=31 // pred_check_branch
              %141 = sbr.rel target = $region36
            $region35: #{net_forward.3} parent=31 // pred_region
              // Predicated region
              $region48: #{net_forward.3} parent=35 // pred_check
                _
              $region49: #{net_forward.3} parent=35 // pred_check_branch
                %666 = sbr.rel (0) target = $region51
              $region50: #{net_forward.3} parent=35 // pred_region
                loop: start=0, step=1, limit=1
                $region52: #{net_forward.3} parent=50 // loop_pre_header
                  _
                $region53: #{net_forward.3} parent=50 // loop_header
                  %s668 = sphi 0, %s672
                  %p669 = scmp.ge.s32.totalorder %s668, 1
                  %s673 = sphi %s137, %s137
                  %s674 = sphi %s134, %s134
                $region54: #{net_forward.3} parent=50 // loop_header_branch
                  %671 = sbr.rel (%p669) target = $region58
                $region55: #{net_forward.3} parent=50 // loop_body
                  _
                $region56: #{net_forward.3} parent=50 // loop_footer
                  %s672 = sadd.s32 1, %s668
                $region57: #{net_forward.3} parent=50 // loop_footer_branch
                  %667 = sbr.rel target = $region53
                $region58: #{net_forward.3} parent=50 // loop_exit
                  _
                loop: start=0, step=1, limit=1
                $region59: #{net_forward.3} parent=50 // loop_pre_header
                  _
                $region60: #{net_forward.3} parent=50 // loop_header
                  %s677 = sphi 0, %s681
                  %p678 = scmp.ge.s32.totalorder %s677, 1
                  %s682 = sphi %s137, %s137
                  %s683 = sphi %s134, %s134
                $region61: #{net_forward.3} parent=50 // loop_header_branch
                  %680 = sbr.rel (%p678) target = $region65
                $region62: #{net_forward.3} parent=50 // loop_body
                  %v684 = vld [vmem:[%s682] sm:$0xf]
                  %685 = vst [vmem:[%s683] sm:$0xf] %v684
                  %v686 = vld [vmem:[%s682 + $0x4] sm:$0xf]
                  %687 = vst [vmem:[%s683 + $0x4] sm:$0xf] %v686
                  %v688 = vld [vmem:[%s682 + $0x8] sm:$0xf]
                  %689 = vst [vmem:[%s683 + $0x8] sm:$0xf] %v688
                  %v690 = vld [vmem:[%s682 + $0xc] sm:$0xf]
                  %691 = vst [vmem:[%s683 + $0xc] sm:$0xf] %v690
                  %v692 = vld [vmem:[%s682 + $0x10] sm:$0xf]
                  %693 = vst [vmem:[%s683 + $0x10] sm:$0xf] %v692
                  %v694 = vld [vmem:[%s682 + $0x14] sm:$0xf]
                  %695 = vst [vmem:[%s683 + $0x14] sm:$0xf] %v694
                  %v696 = vld [vmem:[%s682 + $0x18] sm:$0xf]
                  %697 = vst [vmem:[%s683 + $0x18] sm:$0xf] %v696
                  %v698 = vld [vmem:[%s682 + $0x1c] sm:$0xf]
                  %699 = vst [vmem:[%s683 + $0x1c] sm:$0xf] %v698
                  %v700 = vld [vmem:[%s682 + $0x20] sm:$0xf]
                  %701 = vst [vmem:[%s683 + $0x20] sm:$0xf] %v700
                  %v702 = vld [vmem:[%s682 + $0x24] sm:$0xf]
                  %703 = vst [vmem:[%s683 + $0x24] sm:$0xf] %v702
                  %v704 = vld [vmem:[%s682 + $0x28] sm:$0xf]
                  %705 = vst [vmem:[%s683 + $0x28] sm:$0xf] %v704
                  %v706 = vld [vmem:[%s682 + $0x2c] sm:$0xf]
                  %707 = vst [vmem:[%s683 + $0x2c] sm:$0xf] %v706
                  %v708 = vld [vmem:[%s682 + $0x30] sm:$0xf]
                  %709 = vst [vmem:[%s683 + $0x30] sm:$0xf] %v708
                  %v710 = vld [vmem:[%s682 + $0x34] sm:$0xf]
                  %711 = vst [vmem:[%s683 + $0x34] sm:$0xf] %v710
                  %v712 = vld [vmem:[%s682 + $0x38] sm:$0xf]
                  %713 = vst [vmem:[%s683 + $0x38] sm:$0xf] %v712
                  %v714 = vld [vmem:[%s682 + $0x3c] sm:$0xf]
                  %715 = vst [vmem:[%s683 + $0x3c] sm:$0xf] %v714
                  %v716 = vld [vmem:[%s682 + $0x40] sm:$0xf]
                  %717 = vst [vmem:[%s683 + $0x40] sm:$0xf] %v716
                  %v718 = vld [vmem:[%s682 + $0x44] sm:$0xf]
                  %719 = vst [vmem:[%s683 + $0x44] sm:$0xf] %v718
                  %v720 = vld [vmem:[%s682 + $0x48] sm:$0xf]
                  %721 = vst [vmem:[%s683 + $0x48] sm:$0xf] %v720
                  %v722 = vld [vmem:[%s682 + $0x4c] sm:$0xf]
                  %723 = vst [vmem:[%s683 + $0x4c] sm:$0xf] %v722
                  %v724 = vld [vmem:[%s682 + $0x50] sm:$0xf]
                  %725 = vst [vmem:[%s683 + $0x50] sm:$0xf] %v724
                  %v726 = vld [vmem:[%s682 + $0x54] sm:$0xf]
                  %727 = vst [vmem:[%s683 + $0x54] sm:$0xf] %v726
                  %v728 = vld [vmem:[%s682 + $0x58] sm:$0xf]
                  %729 = vst [vmem:[%s683 + $0x58] sm:$0xf] %v728
                  %v730 = vld [vmem:[%s682 + $0x5c] sm:$0xf]
                  %731 = vst [vmem:[%s683 + $0x5c] sm:$0xf] %v730
                  %v732 = vld [vmem:[%s682 + $0x60] sm:$0xf]
                  %733 = vst [vmem:[%s683 + $0x60] sm:$0xf] %v732
                  %v734 = vld [vmem:[%s682 + $0x64] sm:$0xf]
                  %735 = vst [vmem:[%s683 + $0x64] sm:$0xf] %v734
                  %v736 = vld [vmem:[%s682 + $0x68] sm:$0xf]
                  %737 = vst [vmem:[%s683 + $0x68] sm:$0xf] %v736
                  %v738 = vld [vmem:[%s682 + $0x6c] sm:$0xf]
                  %739 = vst [vmem:[%s683 + $0x6c] sm:$0xf] %v738
                  %v740 = vld [vmem:[%s682 + $0x70] sm:$0xf]
                  %741 = vst [vmem:[%s683 + $0x70] sm:$0xf] %v740
                  %v742 = vld [vmem:[%s682 + $0x74] sm:$0xf]
                  %743 = vst [vmem:[%s683 + $0x74] sm:$0xf] %v742
                  %v744 = vld [vmem:[%s682 + $0x78] sm:$0xf]
                  %745 = vst [vmem:[%s683 + $0x78] sm:$0xf] %v744
                  %v746 = vld [vmem:[%s682 + $0x7c] sm:$0xf]
                  %747 = vst [vmem:[%s683 + $0x7c] sm:$0xf] %v746
                  %v748 = vld [vmem:[%s682 + $0x80] sm:$0xf]
                  %749 = vst [vmem:[%s683 + $0x80] sm:$0xf] %v748
                  %v750 = vld [vmem:[%s682 + $0x84] sm:$0xf]
                  %751 = vst [vmem:[%s683 + $0x84] sm:$0xf] %v750
                  %v752 = vld [vmem:[%s682 + $0x88] sm:$0xf]
                  %753 = vst [vmem:[%s683 + $0x88] sm:$0xf] %v752
                  %v754 = vld [vmem:[%s682 + $0x8c] sm:$0xf]
                  %755 = vst [vmem:[%s683 + $0x8c] sm:$0xf] %v754
                  %v756 = vld [vmem:[%s682 + $0x90] sm:$0xf]
                  %757 = vst [vmem:[%s683 + $0x90] sm:$0xf] %v756
                  %v758 = vld [vmem:[%s682 + $0x94] sm:$0xf]
                  %759 = vst [vmem:[%s683 + $0x94] sm:$0xf] %v758
                  %v760 = vld [vmem:[%s682 + $0x98] sm:$0xf]
                  %761 = vst [vmem:[%s683 + $0x98] sm:$0xf] %v760
                  %v762 = vld [vmem:[%s682 + $0x9c] sm:$0xf]
                  %763 = vst [vmem:[%s683 + $0x9c] sm:$0xf] %v762
                  %v764 = vld [vmem:[%s682 + $0xa0] sm:$0xf]
                  %765 = vst [vmem:[%s683 + $0xa0] sm:$0xf] %v764
                  %v766 = vld [vmem:[%s682 + $0xa4] sm:$0xf]
                  %767 = vst [vmem:[%s683 + $0xa4] sm:$0xf] %v766
                  %v768 = vld [vmem:[%s682 + $0xa8] sm:$0xf]
                  %769 = vst [vmem:[%s683 + $0xa8] sm:$0xf] %v768
                  %v770 = vld [vmem:[%s682 + $0xac] sm:$0xf]
                  %771 = vst [vmem:[%s683 + $0xac] sm:$0xf] %v770
                  %v772 = vld [vmem:[%s682 + $0xb0] sm:$0xf]
                  %773 = vst [vmem:[%s683 + $0xb0] sm:$0xf] %v772
                  %v774 = vld [vmem:[%s682 + $0xb4] sm:$0xf]
                  %775 = vst [vmem:[%s683 + $0xb4] sm:$0xf] %v774
                  %v776 = vld [vmem:[%s682 + $0xb8] sm:$0xf]
                  %777 = vst [vmem:[%s683 + $0xb8] sm:$0xf] %v776
                  %v778 = vld [vmem:[%s682 + $0xbc] sm:$0xf]
                  %779 = vst [vmem:[%s683 + $0xbc] sm:$0xf] %v778
                  %v780 = vld [vmem:[%s682 + $0xc0] sm:$0xf]
                  %781 = vst [vmem:[%s683 + $0xc0] sm:$0xf] %v780
                  %v782 = vld [vmem:[%s682 + $0xc4] sm:$0xf]
                  %783 = vst [vmem:[%s683 + $0xc4] sm:$0xf] %v782
                  %v784 = vld [vmem:[%s682 + $0xc8] sm:$0xf]
                  %785 = vst [vmem:[%s683 + $0xc8] sm:$0xf] %v784
                  %v786 = vld [vmem:[%s682 + $0xcc] sm:$0xf]
                  %787 = vst [vmem:[%s683 + $0xcc] sm:$0xf] %v786
                  %v788 = vld [vmem:[%s682 + $0xd0] sm:$0xf]
                  %789 = vst [vmem:[%s683 + $0xd0] sm:$0xf] %v788
                  %v790 = vld [vmem:[%s682 + $0xd4] sm:$0xf]
                  %791 = vst [vmem:[%s683 + $0xd4] sm:$0xf] %v790
                  %v792 = vld [vmem:[%s682 + $0xd8] sm:$0xf]
                  %793 = vst [vmem:[%s683 + $0xd8] sm:$0xf] %v792
                  %v794 = vld [vmem:[%s682 + $0xdc] sm:$0xf]
                  %795 = vst [vmem:[%s683 + $0xdc] sm:$0xf] %v794
                  %v796 = vld [vmem:[%s682 + $0xe0] sm:$0xf]
                  %797 = vst [vmem:[%s683 + $0xe0] sm:$0xf] %v796
                  %v798 = vld [vmem:[%s682 + $0xe4] sm:$0xf]
                  %799 = vst [vmem:[%s683 + $0xe4] sm:$0xf] %v798
                  %v800 = vld [vmem:[%s682 + $0xe8] sm:$0xf]
                  %801 = vst [vmem:[%s683 + $0xe8] sm:$0xf] %v800
                  %v802 = vld [vmem:[%s682 + $0xec] sm:$0xf]
                  %803 = vst [vmem:[%s683 + $0xec] sm:$0xf] %v802
                  %v804 = vld [vmem:[%s682 + $0xf0] sm:$0xf]
                  %805 = vst [vmem:[%s683 + $0xf0] sm:$0xf] %v804
                  %v806 = vld [vmem:[%s682 + $0xf4] sm:$0xf]
                  %807 = vst [vmem:[%s683 + $0xf4] sm:$0xf] %v806
                  %v808 = vld [vmem:[%s682 + $0xf8] sm:$0xf]
                  %809 = vst [vmem:[%s683 + $0xf8] sm:$0xf] %v808
                  %v810 = vld [vmem:[%s682 + $0xfc] sm:$0xf]
                  %811 = vst [vmem:[%s683 + $0xfc] sm:$0xf] %v810
                  %v812 = vld [vmem:[%s682 + $0x200] sm:$0xf]
                  %813 = vst [vmem:[%s683 + $0x100] sm:$0xf] %v812
                  %v814 = vld [vmem:[%s682 + $0x204] sm:$0xf]
                  %815 = vst [vmem:[%s683 + $0x104] sm:$0xf] %v814
                  %v816 = vld [vmem:[%s682 + $0x208] sm:$0xf]
                  %817 = vst [vmem:[%s683 + $0x108] sm:$0xf] %v816
                  %v818 = vld [vmem:[%s682 + $0x20c] sm:$0xf]
                  %819 = vst [vmem:[%s683 + $0x10c] sm:$0xf] %v818
                  %v820 = vld [vmem:[%s682 + $0x210] sm:$0xf]
                  %821 = vst [vmem:[%s683 + $0x110] sm:$0xf] %v820
                  %v822 = vld [vmem:[%s682 + $0x214] sm:$0xf]
                  %823 = vst [vmem:[%s683 + $0x114] sm:$0xf] %v822
                  %v824 = vld [vmem:[%s682 + $0x218] sm:$0xf]
                  %825 = vst [vmem:[%s683 + $0x118] sm:$0xf] %v824
                  %v826 = vld [vmem:[%s682 + $0x21c] sm:$0xf]
                  %827 = vst [vmem:[%s683 + $0x11c] sm:$0xf] %v826
                  %v828 = vld [vmem:[%s682 + $0x220] sm:$0xf]
                  %829 = vst [vmem:[%s683 + $0x120] sm:$0xf] %v828
                  %v830 = vld [vmem:[%s682 + $0x224] sm:$0xf]
                  %831 = vst [vmem:[%s683 + $0x124] sm:$0xf] %v830
                  %v832 = vld [vmem:[%s682 + $0x228] sm:$0xf]
                  %833 = vst [vmem:[%s683 + $0x128] sm:$0xf] %v832
                  %v834 = vld [vmem:[%s682 + $0x22c] sm:$0xf]
                  %835 = vst [vmem:[%s683 + $0x12c] sm:$0xf] %v834
                  %v836 = vld [vmem:[%s682 + $0x230] sm:$0xf]
                  %837 = vst [vmem:[%s683 + $0x130] sm:$0xf] %v836
                  %v838 = vld [vmem:[%s682 + $0x234] sm:$0xf]
                  %839 = vst [vmem:[%s683 + $0x134] sm:$0xf] %v838
                  %v840 = vld [vmem:[%s682 + $0x238] sm:$0xf]
                  %841 = vst [vmem:[%s683 + $0x138] sm:$0xf] %v840
                  %v842 = vld [vmem:[%s682 + $0x23c] sm:$0xf]
                  %843 = vst [vmem:[%s683 + $0x13c] sm:$0xf] %v842
                  %v844 = vld [vmem:[%s682 + $0x240] sm:$0xf]
                  %845 = vst [vmem:[%s683 + $0x140] sm:$0xf] %v844
                  %v846 = vld [vmem:[%s682 + $0x244] sm:$0xf]
                  %847 = vst [vmem:[%s683 + $0x144] sm:$0xf] %v846
                  %v848 = vld [vmem:[%s682 + $0x248] sm:$0xf]
                  %849 = vst [vmem:[%s683 + $0x148] sm:$0xf] %v848
                  %v850 = vld [vmem:[%s682 + $0x24c] sm:$0xf]
                  %851 = vst [vmem:[%s683 + $0x14c] sm:$0xf] %v850
                  %v852 = vld [vmem:[%s682 + $0x250] sm:$0xf]
                  %853 = vst [vmem:[%s683 + $0x150] sm:$0xf] %v852
                  %v854 = vld [vmem:[%s682 + $0x254] sm:$0xf]
                  %855 = vst [vmem:[%s683 + $0x154] sm:$0xf] %v854
                  %v856 = vld [vmem:[%s682 + $0x258] sm:$0xf]
                  %857 = vst [vmem:[%s683 + $0x158] sm:$0xf] %v856
                  %v858 = vld [vmem:[%s682 + $0x25c] sm:$0xf]
                  %859 = vst [vmem:[%s683 + $0x15c] sm:$0xf] %v858
                  %v860 = vld [vmem:[%s682 + $0x260] sm:$0xf]
                  %861 = vst [vmem:[%s683 + $0x160] sm:$0xf] %v860
                  %v862 = vld [vmem:[%s682 + $0x264] sm:$0xf]
                  %863 = vst [vmem:[%s683 + $0x164] sm:$0xf] %v862
                  %v864 = vld [vmem:[%s682 + $0x268] sm:$0xf]
                  %865 = vst [vmem:[%s683 + $0x168] sm:$0xf] %v864
                  %v866 = vld [vmem:[%s682 + $0x26c] sm:$0xf]
                  %867 = vst [vmem:[%s683 + $0x16c] sm:$0xf] %v866
                  %v868 = vld [vmem:[%s682 + $0x270] sm:$0xf]
                  %869 = vst [vmem:[%s683 + $0x170] sm:$0xf] %v868
                  %v870 = vld [vmem:[%s682 + $0x274] sm:$0xf]
                  %871 = vst [vmem:[%s683 + $0x174] sm:$0xf] %v870
                  %v872 = vld [vmem:[%s682 + $0x278] sm:$0xf]
                  %873 = vst [vmem:[%s683 + $0x178] sm:$0xf] %v872
                  %v874 = vld [vmem:[%s682 + $0x27c] sm:$0xf]
                  %875 = vst [vmem:[%s683 + $0x17c] sm:$0xf] %v874
                  %v876 = vld [vmem:[%s682 + $0x280] sm:$0xf]
                  %877 = vst [vmem:[%s683 + $0x180] sm:$0xf] %v876
                  %v878 = vld [vmem:[%s682 + $0x284] sm:$0xf]
                  %879 = vst [vmem:[%s683 + $0x184] sm:$0xf] %v878
                  %v880 = vld [vmem:[%s682 + $0x288] sm:$0xf]
                  %881 = vst [vmem:[%s683 + $0x188] sm:$0xf] %v880
                  %v882 = vld [vmem:[%s682 + $0x28c] sm:$0xf]
                  %883 = vst [vmem:[%s683 + $0x18c] sm:$0xf] %v882
                  %v884 = vld [vmem:[%s682 + $0x290] sm:$0xf]
                  %885 = vst [vmem:[%s683 + $0x190] sm:$0xf] %v884
                  %v886 = vld [vmem:[%s682 + $0x294] sm:$0xf]
                  %887 = vst [vmem:[%s683 + $0x194] sm:$0xf] %v886
                  %v888 = vld [vmem:[%s682 + $0x298] sm:$0xf]
                  %889 = vst [vmem:[%s683 + $0x198] sm:$0xf] %v888
                  %v890 = vld [vmem:[%s682 + $0x29c] sm:$0xf]
                  %891 = vst [vmem:[%s683 + $0x19c] sm:$0xf] %v890
                  %v892 = vld [vmem:[%s682 + $0x2a0] sm:$0xf]
                  %893 = vst [vmem:[%s683 + $0x1a0] sm:$0xf] %v892
                  %v894 = vld [vmem:[%s682 + $0x2a4] sm:$0xf]
                  %895 = vst [vmem:[%s683 + $0x1a4] sm:$0xf] %v894
                  %v896 = vld [vmem:[%s682 + $0x2a8] sm:$0xf]
                  %897 = vst [vmem:[%s683 + $0x1a8] sm:$0xf] %v896
                  %v898 = vld [vmem:[%s682 + $0x2ac] sm:$0xf]
                  %899 = vst [vmem:[%s683 + $0x1ac] sm:$0xf] %v898
                  %v900 = vld [vmem:[%s682 + $0x2b0] sm:$0xf]
                  %901 = vst [vmem:[%s683 + $0x1b0] sm:$0xf] %v900
                  %v902 = vld [vmem:[%s682 + $0x2b4] sm:$0xf]
                  %903 = vst [vmem:[%s683 + $0x1b4] sm:$0xf] %v902
                  %v904 = vld [vmem:[%s682 + $0x2b8] sm:$0xf]
                  %905 = vst [vmem:[%s683 + $0x1b8] sm:$0xf] %v904
                  %v906 = vld [vmem:[%s682 + $0x2bc] sm:$0xf]
                  %907 = vst [vmem:[%s683 + $0x1bc] sm:$0xf] %v906
                  %v908 = vld [vmem:[%s682 + $0x2c0] sm:$0xf]
                  %909 = vst [vmem:[%s683 + $0x1c0] sm:$0xf] %v908
                  %v910 = vld [vmem:[%s682 + $0x2c4] sm:$0xf]
                  %911 = vst [vmem:[%s683 + $0x1c4] sm:$0xf] %v910
                  %v912 = vld [vmem:[%s682 + $0x2c8] sm:$0xf]
                  %913 = vst [vmem:[%s683 + $0x1c8] sm:$0xf] %v912
                  %v914 = vld [vmem:[%s682 + $0x2cc] sm:$0xf]
                  %915 = vst [vmem:[%s683 + $0x1cc] sm:$0xf] %v914
                  %v916 = vld [vmem:[%s682 + $0x2d0] sm:$0xf]
                  %917 = vst [vmem:[%s683 + $0x1d0] sm:$0xf] %v916
                  %v918 = vld [vmem:[%s682 + $0x2d4] sm:$0xf]
                  %919 = vst [vmem:[%s683 + $0x1d4] sm:$0xf] %v918
                  %v920 = vld [vmem:[%s682 + $0x2d8] sm:$0xf]
                  %921 = vst [vmem:[%s683 + $0x1d8] sm:$0xf] %v920
                  %v922 = vld [vmem:[%s682 + $0x2dc] sm:$0xf]
                  %923 = vst [vmem:[%s683 + $0x1dc] sm:$0xf] %v922
                  %v924 = vld [vmem:[%s682 + $0x2e0] sm:$0xf]
                  %925 = vst [vmem:[%s683 + $0x1e0] sm:$0xf] %v924
                  %v926 = vld [vmem:[%s682 + $0x2e4] sm:$0xf]
                  %927 = vst [vmem:[%s683 + $0x1e4] sm:$0xf] %v926
                  %v928 = vld [vmem:[%s682 + $0x2e8] sm:$0xf]
                  %929 = vst [vmem:[%s683 + $0x1e8] sm:$0xf] %v928
                  %v930 = vld [vmem:[%s682 + $0x2ec] sm:$0xf]
                  %931 = vst [vmem:[%s683 + $0x1ec] sm:$0xf] %v930
                  %v932 = vld [vmem:[%s682 + $0x2f0] sm:$0xf]
                  %933 = vst [vmem:[%s683 + $0x1f0] sm:$0xf] %v932
                  %v934 = vld [vmem:[%s682 + $0x2f4] sm:$0xf]
                  %935 = vst [vmem:[%s683 + $0x1f4] sm:$0xf] %v934
                  %v936 = vld [vmem:[%s682 + $0x2f8] sm:$0xf]
                  %937 = vst [vmem:[%s683 + $0x1f8] sm:$0xf] %v936
                  %v938 = vld [vmem:[%s682 + $0x2fc] sm:$0xf]
                  %939 = vst [vmem:[%s683 + $0x1fc] sm:$0xf] %v938
                  %v940 = vld [vmem:[%s682 + $0x400] sm:$0xf]
                  %941 = vst [vmem:[%s683 + $0x200] sm:$0xf] %v940
                  %v942 = vld [vmem:[%s682 + $0x404] sm:$0xf]
                  %943 = vst [vmem:[%s683 + $0x204] sm:$0xf] %v942
                  %v944 = vld [vmem:[%s682 + $0x408] sm:$0xf]
                  %945 = vst [vmem:[%s683 + $0x208] sm:$0xf] %v944
                  %v946 = vld [vmem:[%s682 + $0x40c] sm:$0xf]
                  %947 = vst [vmem:[%s683 + $0x20c] sm:$0xf] %v946
                  %v948 = vld [vmem:[%s682 + $0x410] sm:$0xf]
                  %949 = vst [vmem:[%s683 + $0x210] sm:$0xf] %v948
                  %v950 = vld [vmem:[%s682 + $0x414] sm:$0xf]
                  %951 = vst [vmem:[%s683 + $0x214] sm:$0xf] %v950
                  %v952 = vld [vmem:[%s682 + $0x418] sm:$0xf]
                  %953 = vst [vmem:[%s683 + $0x218] sm:$0xf] %v952
                  %v954 = vld [vmem:[%s682 + $0x41c] sm:$0xf]
                  %955 = vst [vmem:[%s683 + $0x21c] sm:$0xf] %v954
                  %v956 = vld [vmem:[%s682 + $0x420] sm:$0xf]
                  %957 = vst [vmem:[%s683 + $0x220] sm:$0xf] %v956
                  %v958 = vld [vmem:[%s682 + $0x424] sm:$0xf]
                  %959 = vst [vmem:[%s683 + $0x224] sm:$0xf] %v958
                  %v960 = vld [vmem:[%s682 + $0x428] sm:$0xf]
                  %961 = vst [vmem:[%s683 + $0x228] sm:$0xf] %v960
                  %v962 = vld [vmem:[%s682 + $0x42c] sm:$0xf]
                  %963 = vst [vmem:[%s683 + $0x22c] sm:$0xf] %v962
                  %v964 = vld [vmem:[%s682 + $0x430] sm:$0xf]
                  %965 = vst [vmem:[%s683 + $0x230] sm:$0xf] %v964
                  %v966 = vld [vmem:[%s682 + $0x434] sm:$0xf]
                  %967 = vst [vmem:[%s683 + $0x234] sm:$0xf] %v966
                  %v968 = vld [vmem:[%s682 + $0x438] sm:$0xf]
                  %969 = vst [vmem:[%s683 + $0x238] sm:$0xf] %v968
                  %v970 = vld [vmem:[%s682 + $0x43c] sm:$0xf]
                  %971 = vst [vmem:[%s683 + $0x23c] sm:$0xf] %v970
                  %v972 = vld [vmem:[%s682 + $0x440] sm:$0xf]
                  %973 = vst [vmem:[%s683 + $0x240] sm:$0xf] %v972
                  %v974 = vld [vmem:[%s682 + $0x444] sm:$0xf]
                  %975 = vst [vmem:[%s683 + $0x244] sm:$0xf] %v974
                  %v976 = vld [vmem:[%s682 + $0x448] sm:$0xf]
                  %977 = vst [vmem:[%s683 + $0x248] sm:$0xf] %v976
                  %v978 = vld [vmem:[%s682 + $0x44c] sm:$0xf]
                  %979 = vst [vmem:[%s683 + $0x24c] sm:$0xf] %v978
                  %v980 = vld [vmem:[%s682 + $0x450] sm:$0xf]
                  %981 = vst [vmem:[%s683 + $0x250] sm:$0xf] %v980
                  %v982 = vld [vmem:[%s682 + $0x454] sm:$0xf]
                  %983 = vst [vmem:[%s683 + $0x254] sm:$0xf] %v982
                  %v984 = vld [vmem:[%s682 + $0x458] sm:$0xf]
                  %985 = vst [vmem:[%s683 + $0x258] sm:$0xf] %v984
                  %v986 = vld [vmem:[%s682 + $0x45c] sm:$0xf]
                  %987 = vst [vmem:[%s683 + $0x25c] sm:$0xf] %v986
                  %v988 = vld [vmem:[%s682 + $0x460] sm:$0xf]
                  %989 = vst [vmem:[%s683 + $0x260] sm:$0xf] %v988
                  %v990 = vld [vmem:[%s682 + $0x464] sm:$0xf]
                  %991 = vst [vmem:[%s683 + $0x264] sm:$0xf] %v990
                  %v992 = vld [vmem:[%s682 + $0x468] sm:$0xf]
                  %993 = vst [vmem:[%s683 + $0x268] sm:$0xf] %v992
                  %v994 = vld [vmem:[%s682 + $0x46c] sm:$0xf]
                  %995 = vst [vmem:[%s683 + $0x26c] sm:$0xf] %v994
                  %v996 = vld [vmem:[%s682 + $0x470] sm:$0xf]
                  %997 = vst [vmem:[%s683 + $0x270] sm:$0xf] %v996
                  %v998 = vld [vmem:[%s682 + $0x474] sm:$0xf]
                  %999 = vst [vmem:[%s683 + $0x274] sm:$0xf] %v998
                  %v1000 = vld [vmem:[%s682 + $0x478] sm:$0xf]
                  %1001 = vst [vmem:[%s683 + $0x278] sm:$0xf] %v1000
                  %v1002 = vld [vmem:[%s682 + $0x47c] sm:$0xf]
                  %1003 = vst [vmem:[%s683 + $0x27c] sm:$0xf] %v1002
                  %v1004 = vld [vmem:[%s682 + $0x480] sm:$0xf]
                  %1005 = vst [vmem:[%s683 + $0x280] sm:$0xf] %v1004
                  %v1006 = vld [vmem:[%s682 + $0x484] sm:$0xf]
                  %1007 = vst [vmem:[%s683 + $0x284] sm:$0xf] %v1006
                  %v1008 = vld [vmem:[%s682 + $0x488] sm:$0xf]
                  %1009 = vst [vmem:[%s683 + $0x288] sm:$0xf] %v1008
                  %v1010 = vld [vmem:[%s682 + $0x48c] sm:$0xf]
                  %1011 = vst [vmem:[%s683 + $0x28c] sm:$0xf] %v1010
                  %v1012 = vld [vmem:[%s682 + $0x490] sm:$0xf]
                  %1013 = vst [vmem:[%s683 + $0x290] sm:$0xf] %v1012
                  %v1014 = vld [vmem:[%s682 + $0x494] sm:$0xf]
                  %1015 = vst [vmem:[%s683 + $0x294] sm:$0xf] %v1014
                  %v1016 = vld [vmem:[%s682 + $0x498] sm:$0xf]
                  %1017 = vst [vmem:[%s683 + $0x298] sm:$0xf] %v1016
                  %v1018 = vld [vmem:[%s682 + $0x49c] sm:$0xf]
                  %1019 = vst [vmem:[%s683 + $0x29c] sm:$0xf] %v1018
                  %v1020 = vld [vmem:[%s682 + $0x4a0] sm:$0xf]
                  %1021 = vst [vmem:[%s683 + $0x2a0] sm:$0xf] %v1020
                  %v1022 = vld [vmem:[%s682 + $0x4a4] sm:$0xf]
                  %1023 = vst [vmem:[%s683 + $0x2a4] sm:$0xf] %v1022
                  %v1024 = vld [vmem:[%s682 + $0x4a8] sm:$0xf]
                  %1025 = vst [vmem:[%s683 + $0x2a8] sm:$0xf] %v1024
                  %v1026 = vld [vmem:[%s682 + $0x4ac] sm:$0xf]
                  %1027 = vst [vmem:[%s683 + $0x2ac] sm:$0xf] %v1026
                  %v1028 = vld [vmem:[%s682 + $0x4b0] sm:$0xf]
                  %1029 = vst [vmem:[%s683 + $0x2b0] sm:$0xf] %v1028
                  %v1030 = vld [vmem:[%s682 + $0x4b4] sm:$0xf]
                  %1031 = vst [vmem:[%s683 + $0x2b4] sm:$0xf] %v1030
                  %v1032 = vld [vmem:[%s682 + $0x4b8] sm:$0xf]
                  %1033 = vst [vmem:[%s683 + $0x2b8] sm:$0xf] %v1032
                  %v1034 = vld [vmem:[%s682 + $0x4bc] sm:$0xf]
                  %1035 = vst [vmem:[%s683 + $0x2bc] sm:$0xf] %v1034
                  %v1036 = vld [vmem:[%s682 + $0x4c0] sm:$0xf]
                  %1037 = vst [vmem:[%s683 + $0x2c0] sm:$0xf] %v1036
                  %v1038 = vld [vmem:[%s682 + $0x4c4] sm:$0xf]
                  %1039 = vst [vmem:[%s683 + $0x2c4] sm:$0xf] %v1038
                  %v1040 = vld [vmem:[%s682 + $0x4c8] sm:$0xf]
                  %1041 = vst [vmem:[%s683 + $0x2c8] sm:$0xf] %v1040
                  %v1042 = vld [vmem:[%s682 + $0x4cc] sm:$0xf]
                  %1043 = vst [vmem:[%s683 + $0x2cc] sm:$0xf] %v1042
                  %v1044 = vld [vmem:[%s682 + $0x4d0] sm:$0xf]
                  %1045 = vst [vmem:[%s683 + $0x2d0] sm:$0xf] %v1044
                  %v1046 = vld [vmem:[%s682 + $0x4d4] sm:$0xf]
                  %1047 = vst [vmem:[%s683 + $0x2d4] sm:$0xf] %v1046
                  %v1048 = vld [vmem:[%s682 + $0x4d8] sm:$0xf]
                  %1049 = vst [vmem:[%s683 + $0x2d8] sm:$0xf] %v1048
                  %v1050 = vld [vmem:[%s682 + $0x4dc] sm:$0xf]
                  %1051 = vst [vmem:[%s683 + $0x2dc] sm:$0xf] %v1050
                  %v1052 = vld [vmem:[%s682 + $0x4e0] sm:$0xf]
                  %1053 = vst [vmem:[%s683 + $0x2e0] sm:$0xf] %v1052
                  %v1054 = vld [vmem:[%s682 + $0x4e4] sm:$0xf]
                  %1055 = vst [vmem:[%s683 + $0x2e4] sm:$0xf] %v1054
                  %v1056 = vld [vmem:[%s682 + $0x4e8] sm:$0xf]
                  %1057 = vst [vmem:[%s683 + $0x2e8] sm:$0xf] %v1056
                  %v1058 = vld [vmem:[%s682 + $0x4ec] sm:$0xf]
                  %1059 = vst [vmem:[%s683 + $0x2ec] sm:$0xf] %v1058
                  %v1060 = vld [vmem:[%s682 + $0x4f0] sm:$0xf]
                  %1061 = vst [vmem:[%s683 + $0x2f0] sm:$0xf] %v1060
                  %v1062 = vld [vmem:[%s682 + $0x4f4] sm:$0xf]
                  %1063 = vst [vmem:[%s683 + $0x2f4] sm:$0xf] %v1062
                  %v1064 = vld [vmem:[%s682 + $0x4f8] sm:$0xf]
                  %1065 = vst [vmem:[%s683 + $0x2f8] sm:$0xf] %v1064
                  %v1066 = vld [vmem:[%s682 + $0x4fc] sm:$0xf]
                  %1067 = vst [vmem:[%s683 + $0x2fc] sm:$0xf] %v1066
                  %v1068 = vld [vmem:[%s682 + $0x600] sm:$0xf]
                  %1069 = vst [vmem:[%s683 + $0x300] sm:$0xf] %v1068
                  %v1070 = vld [vmem:[%s682 + $0x604] sm:$0xf]
                  %1071 = vst [vmem:[%s683 + $0x304] sm:$0xf] %v1070
                  %v1072 = vld [vmem:[%s682 + $0x608] sm:$0xf]
                  %1073 = vst [vmem:[%s683 + $0x308] sm:$0xf] %v1072
                  %v1074 = vld [vmem:[%s682 + $0x60c] sm:$0xf]
                  %1075 = vst [vmem:[%s683 + $0x30c] sm:$0xf] %v1074
                  %v1076 = vld [vmem:[%s682 + $0x610] sm:$0xf]
                  %1077 = vst [vmem:[%s683 + $0x310] sm:$0xf] %v1076
                  %v1078 = vld [vmem:[%s682 + $0x614] sm:$0xf]
                  %1079 = vst [vmem:[%s683 + $0x314] sm:$0xf] %v1078
                  %v1080 = vld [vmem:[%s682 + $0x618] sm:$0xf]
                  %1081 = vst [vmem:[%s683 + $0x318] sm:$0xf] %v1080
                  %v1082 = vld [vmem:[%s682 + $0x61c] sm:$0xf]
                  %1083 = vst [vmem:[%s683 + $0x31c] sm:$0xf] %v1082
                  %v1084 = vld [vmem:[%s682 + $0x620] sm:$0xf]
                  %1085 = vst [vmem:[%s683 + $0x320] sm:$0xf] %v1084
                  %v1086 = vld [vmem:[%s682 + $0x624] sm:$0xf]
                  %1087 = vst [vmem:[%s683 + $0x324] sm:$0xf] %v1086
                  %v1088 = vld [vmem:[%s682 + $0x628] sm:$0xf]
                  %1089 = vst [vmem:[%s683 + $0x328] sm:$0xf] %v1088
                  %v1090 = vld [vmem:[%s682 + $0x62c] sm:$0xf]
                  %1091 = vst [vmem:[%s683 + $0x32c] sm:$0xf] %v1090
                  %v1092 = vld [vmem:[%s682 + $0x630] sm:$0xf]
                  %1093 = vst [vmem:[%s683 + $0x330] sm:$0xf] %v1092
                  %v1094 = vld [vmem:[%s682 + $0x634] sm:$0xf]
                  %1095 = vst [vmem:[%s683 + $0x334] sm:$0xf] %v1094
                  %v1096 = vld [vmem:[%s682 + $0x638] sm:$0xf]
                  %1097 = vst [vmem:[%s683 + $0x338] sm:$0xf] %v1096
                  %v1098 = vld [vmem:[%s682 + $0x63c] sm:$0xf]
                  %1099 = vst [vmem:[%s683 + $0x33c] sm:$0xf] %v1098
                  %v1100 = vld [vmem:[%s682 + $0x640] sm:$0xf]
                  %1101 = vst [vmem:[%s683 + $0x340] sm:$0xf] %v1100
                  %v1102 = vld [vmem:[%s682 + $0x644] sm:$0xf]
                  %1103 = vst [vmem:[%s683 + $0x344] sm:$0xf] %v1102
                  %v1104 = vld [vmem:[%s682 + $0x648] sm:$0xf]
                  %1105 = vst [vmem:[%s683 + $0x348] sm:$0xf] %v1104
                  %v1106 = vld [vmem:[%s682 + $0x64c] sm:$0xf]
                  %1107 = vst [vmem:[%s683 + $0x34c] sm:$0xf] %v1106
                  %v1108 = vld [vmem:[%s682 + $0x650] sm:$0xf]
                  %1109 = vst [vmem:[%s683 + $0x350] sm:$0xf] %v1108
                  %v1110 = vld [vmem:[%s682 + $0x654] sm:$0xf]
                  %1111 = vst [vmem:[%s683 + $0x354] sm:$0xf] %v1110
                  %v1112 = vld [vmem:[%s682 + $0x658] sm:$0xf]
                  %1113 = vst [vmem:[%s683 + $0x358] sm:$0xf] %v1112
                  %v1114 = vld [vmem:[%s682 + $0x65c] sm:$0xf]
                  %1115 = vst [vmem:[%s683 + $0x35c] sm:$0xf] %v1114
                  %v1116 = vld [vmem:[%s682 + $0x660] sm:$0xf]
                  %1117 = vst [vmem:[%s683 + $0x360] sm:$0xf] %v1116
                  %v1118 = vld [vmem:[%s682 + $0x664] sm:$0xf]
                  %1119 = vst [vmem:[%s683 + $0x364] sm:$0xf] %v1118
                  %v1120 = vld [vmem:[%s682 + $0x668] sm:$0xf]
                  %1121 = vst [vmem:[%s683 + $0x368] sm:$0xf] %v1120
                  %v1122 = vld [vmem:[%s682 + $0x66c] sm:$0xf]
                  %1123 = vst [vmem:[%s683 + $0x36c] sm:$0xf] %v1122
                  %v1124 = vld [vmem:[%s682 + $0x670] sm:$0xf]
                  %1125 = vst [vmem:[%s683 + $0x370] sm:$0xf] %v1124
                  %v1126 = vld [vmem:[%s682 + $0x674] sm:$0xf]
                  %1127 = vst [vmem:[%s683 + $0x374] sm:$0xf] %v1126
                  %v1128 = vld [vmem:[%s682 + $0x678] sm:$0xf]
                  %1129 = vst [vmem:[%s683 + $0x378] sm:$0xf] %v1128
                  %v1130 = vld [vmem:[%s682 + $0x67c] sm:$0xf]
                  %1131 = vst [vmem:[%s683 + $0x37c] sm:$0xf] %v1130
                  %v1132 = vld [vmem:[%s682 + $0x680] sm:$0xf]
                  %1133 = vst [vmem:[%s683 + $0x380] sm:$0xf] %v1132
                  %v1134 = vld [vmem:[%s682 + $0x684] sm:$0xf]
                  %1135 = vst [vmem:[%s683 + $0x384] sm:$0xf] %v1134
                  %v1136 = vld [vmem:[%s682 + $0x688] sm:$0xf]
                  %1137 = vst [vmem:[%s683 + $0x388] sm:$0xf] %v1136
                  %v1138 = vld [vmem:[%s682 + $0x68c] sm:$0xf]
                  %1139 = vst [vmem:[%s683 + $0x38c] sm:$0xf] %v1138
                  %v1140 = vld [vmem:[%s682 + $0x690] sm:$0xf]
                  %1141 = vst [vmem:[%s683 + $0x390] sm:$0xf] %v1140
                  %v1142 = vld [vmem:[%s682 + $0x694] sm:$0xf]
                  %1143 = vst [vmem:[%s683 + $0x394] sm:$0xf] %v1142
                  %v1144 = vld [vmem:[%s682 + $0x698] sm:$0xf]
                  %1145 = vst [vmem:[%s683 + $0x398] sm:$0xf] %v1144
                  %v1146 = vld [vmem:[%s682 + $0x69c] sm:$0xf]
                  %1147 = vst [vmem:[%s683 + $0x39c] sm:$0xf] %v1146
                  %v1148 = vld [vmem:[%s682 + $0x6a0] sm:$0xf]
                  %1149 = vst [vmem:[%s683 + $0x3a0] sm:$0xf] %v1148
                  %v1150 = vld [vmem:[%s682 + $0x6a4] sm:$0xf]
                  %1151 = vst [vmem:[%s683 + $0x3a4] sm:$0xf] %v1150
                  %v1152 = vld [vmem:[%s682 + $0x6a8] sm:$0xf]
                  %1153 = vst [vmem:[%s683 + $0x3a8] sm:$0xf] %v1152
                  %v1154 = vld [vmem:[%s682 + $0x6ac] sm:$0xf]
                  %1155 = vst [vmem:[%s683 + $0x3ac] sm:$0xf] %v1154
                  %v1156 = vld [vmem:[%s682 + $0x6b0] sm:$0xf]
                  %1157 = vst [vmem:[%s683 + $0x3b0] sm:$0xf] %v1156
                  %v1158 = vld [vmem:[%s682 + $0x6b4] sm:$0xf]
                  %1159 = vst [vmem:[%s683 + $0x3b4] sm:$0xf] %v1158
                  %v1160 = vld [vmem:[%s682 + $0x6b8] sm:$0xf]
                  %1161 = vst [vmem:[%s683 + $0x3b8] sm:$0xf] %v1160
                  %v1162 = vld [vmem:[%s682 + $0x6bc] sm:$0xf]
                  %1163 = vst [vmem:[%s683 + $0x3bc] sm:$0xf] %v1162
                  %v1164 = vld [vmem:[%s682 + $0x6c0] sm:$0xf]
                  %1165 = vst [vmem:[%s683 + $0x3c0] sm:$0xf] %v1164
                  %v1166 = vld [vmem:[%s682 + $0x6c4] sm:$0xf]
                  %1167 = vst [vmem:[%s683 + $0x3c4] sm:$0xf] %v1166
                  %v1168 = vld [vmem:[%s682 + $0x6c8] sm:$0xf]
                  %1169 = vst [vmem:[%s683 + $0x3c8] sm:$0xf] %v1168
                  %v1170 = vld [vmem:[%s682 + $0x6cc] sm:$0xf]
                  %1171 = vst [vmem:[%s683 + $0x3cc] sm:$0xf] %v1170
                  %v1172 = vld [vmem:[%s682 + $0x6d0] sm:$0xf]
                  %1173 = vst [vmem:[%s683 + $0x3d0] sm:$0xf] %v1172
                  %v1174 = vld [vmem:[%s682 + $0x6d4] sm:$0xf]
                  %1175 = vst [vmem:[%s683 + $0x3d4] sm:$0xf] %v1174
                  %v1176 = vld [vmem:[%s682 + $0x6d8] sm:$0xf]
                  %1177 = vst [vmem:[%s683 + $0x3d8] sm:$0xf] %v1176
                  %v1178 = vld [vmem:[%s682 + $0x6dc] sm:$0xf]
                  %1179 = vst [vmem:[%s683 + $0x3dc] sm:$0xf] %v1178
                  %v1180 = vld [vmem:[%s682 + $0x6e0] sm:$0xf]
                  %1181 = vst [vmem:[%s683 + $0x3e0] sm:$0xf] %v1180
                  %v1182 = vld [vmem:[%s682 + $0x6e4] sm:$0xf]
                  %1183 = vst [vmem:[%s683 + $0x3e4] sm:$0xf] %v1182
                  %v1184 = vld [vmem:[%s682 + $0x6e8] sm:$0xf]
                  %1185 = vst [vmem:[%s683 + $0x3e8] sm:$0xf] %v1184
                  %v1186 = vld [vmem:[%s682 + $0x6ec] sm:$0xf]
                  %1187 = vst [vmem:[%s683 + $0x3ec] sm:$0xf] %v1186
                  %v1188 = vld [vmem:[%s682 + $0x6f0] sm:$0xf]
                  %1189 = vst [vmem:[%s683 + $0x3f0] sm:$0xf] %v1188
                  %v1190 = vld [vmem:[%s682 + $0x6f4] sm:$0xf]
                  %1191 = vst [vmem:[%s683 + $0x3f4] sm:$0xf] %v1190
                  %v1192 = vld [vmem:[%s682 + $0x6f8] sm:$0xf]
                  %1193 = vst [vmem:[%s683 + $0x3f8] sm:$0xf] %v1192
                  %v1194 = vld [vmem:[%s682 + $0x6fc] sm:$0xf]
                  %1195 = vst [vmem:[%s683 + $0x3fc] sm:$0xf] %v1194
                $region63: #{net_forward.3} parent=50 // loop_footer
                  %s681 = sadd.s32 1, %s677
                $region64: #{net_forward.3} parent=50 // loop_footer_branch
                  %676 = sbr.rel target = $region60
                $region65: #{net_forward.3} parent=50 // loop_exit
                  _
              $region51: #{net_forward.3} parent=35 // pred_fallthru
                _
            $region36: #{net_forward.3} parent=31 // pred_fallthru
              _
            // Predicated region
            $region37: #{net_forward.3} parent=31 // pred_check
              _
            $region38: #{net_forward.3} parent=31 // pred_check_branch
              %143 = sbr.rel (0) target = $region40
            $region39: #{net_forward.3} parent=31 // pred_region
              loop: start=0, step=1, limit=1
              $region41: #{net_forward.3} parent=39 // loop_pre_header
                _
              $region42: #{net_forward.3} parent=39 // loop_header
                %s146 = sphi 0, %s150
                %p147 = scmp.ge.s32.totalorder %s146, 1
                %s151 = sphi %s137, %s137
                %s152 = sphi %s134, %s134
              $region43: #{net_forward.3} parent=39 // loop_header_branch
                %149 = sbr.rel (%p147) target = $region47
              $region44: #{net_forward.3} parent=39 // loop_body
                %v153 = vld [vmem:[%s151] sm:$0xf]
                %154 = vst [vmem:[%s152] sm:$0xf] %v153
                %v155 = vld [vmem:[%s151 + $0x4] sm:$0xf]
                %156 = vst [vmem:[%s152 + $0x4] sm:$0xf] %v155
                %v157 = vld [vmem:[%s151 + $0x8] sm:$0xf]
                %158 = vst [vmem:[%s152 + $0x8] sm:$0xf] %v157
                %v159 = vld [vmem:[%s151 + $0xc] sm:$0xf]
                %160 = vst [vmem:[%s152 + $0xc] sm:$0xf] %v159
                %v161 = vld [vmem:[%s151 + $0x10] sm:$0xf]
                %162 = vst [vmem:[%s152 + $0x10] sm:$0xf] %v161
                %v163 = vld [vmem:[%s151 + $0x14] sm:$0xf]
                %164 = vst [vmem:[%s152 + $0x14] sm:$0xf] %v163
                %v165 = vld [vmem:[%s151 + $0x18] sm:$0xf]
                %166 = vst [vmem:[%s152 + $0x18] sm:$0xf] %v165
                %v167 = vld [vmem:[%s151 + $0x1c] sm:$0xf]
                %168 = vst [vmem:[%s152 + $0x1c] sm:$0xf] %v167
                %v169 = vld [vmem:[%s151 + $0x20] sm:$0xf]
                %170 = vst [vmem:[%s152 + $0x20] sm:$0xf] %v169
                %v171 = vld [vmem:[%s151 + $0x24] sm:$0xf]
                %172 = vst [vmem:[%s152 + $0x24] sm:$0xf] %v171
                %v173 = vld [vmem:[%s151 + $0x28] sm:$0xf]
                %174 = vst [vmem:[%s152 + $0x28] sm:$0xf] %v173
                %v175 = vld [vmem:[%s151 + $0x2c] sm:$0xf]
                %176 = vst [vmem:[%s152 + $0x2c] sm:$0xf] %v175
                %v177 = vld [vmem:[%s151 + $0x30] sm:$0xf]
                %178 = vst [vmem:[%s152 + $0x30] sm:$0xf] %v177
                %v179 = vld [vmem:[%s151 + $0x34] sm:$0xf]
                %180 = vst [vmem:[%s152 + $0x34] sm:$0xf] %v179
                %v181 = vld [vmem:[%s151 + $0x38] sm:$0xf]
                %182 = vst [vmem:[%s152 + $0x38] sm:$0xf] %v181
                %v183 = vld [vmem:[%s151 + $0x3c] sm:$0xf]
                %184 = vst [vmem:[%s152 + $0x3c] sm:$0xf] %v183
                %v185 = vld [vmem:[%s151 + $0x40] sm:$0xf]
                %186 = vst [vmem:[%s152 + $0x40] sm:$0xf] %v185
                %v187 = vld [vmem:[%s151 + $0x44] sm:$0xf]
                %188 = vst [vmem:[%s152 + $0x44] sm:$0xf] %v187
                %v189 = vld [vmem:[%s151 + $0x48] sm:$0xf]
                %190 = vst [vmem:[%s152 + $0x48] sm:$0xf] %v189
                %v191 = vld [vmem:[%s151 + $0x4c] sm:$0xf]
                %192 = vst [vmem:[%s152 + $0x4c] sm:$0xf] %v191
                %v193 = vld [vmem:[%s151 + $0x50] sm:$0xf]
                %194 = vst [vmem:[%s152 + $0x50] sm:$0xf] %v193
                %v195 = vld [vmem:[%s151 + $0x54] sm:$0xf]
                %196 = vst [vmem:[%s152 + $0x54] sm:$0xf] %v195
                %v197 = vld [vmem:[%s151 + $0x58] sm:$0xf]
                %198 = vst [vmem:[%s152 + $0x58] sm:$0xf] %v197
                %v199 = vld [vmem:[%s151 + $0x5c] sm:$0xf]
                %200 = vst [vmem:[%s152 + $0x5c] sm:$0xf] %v199
                %v201 = vld [vmem:[%s151 + $0x60] sm:$0xf]
                %202 = vst [vmem:[%s152 + $0x60] sm:$0xf] %v201
                %v203 = vld [vmem:[%s151 + $0x64] sm:$0xf]
                %204 = vst [vmem:[%s152 + $0x64] sm:$0xf] %v203
                %v205 = vld [vmem:[%s151 + $0x68] sm:$0xf]
                %206 = vst [vmem:[%s152 + $0x68] sm:$0xf] %v205
                %v207 = vld [vmem:[%s151 + $0x6c] sm:$0xf]
                %208 = vst [vmem:[%s152 + $0x6c] sm:$0xf] %v207
                %v209 = vld [vmem:[%s151 + $0x70] sm:$0xf]
                %210 = vst [vmem:[%s152 + $0x70] sm:$0xf] %v209
                %v211 = vld [vmem:[%s151 + $0x74] sm:$0xf]
                %212 = vst [vmem:[%s152 + $0x74] sm:$0xf] %v211
                %v213 = vld [vmem:[%s151 + $0x78] sm:$0xf]
                %214 = vst [vmem:[%s152 + $0x78] sm:$0xf] %v213
                %v215 = vld [vmem:[%s151 + $0x7c] sm:$0xf]
                %216 = vst [vmem:[%s152 + $0x7c] sm:$0xf] %v215
                %v217 = vld [vmem:[%s151 + $0x80] sm:$0xf]
                %218 = vst [vmem:[%s152 + $0x80] sm:$0xf] %v217
                %v219 = vld [vmem:[%s151 + $0x84] sm:$0xf]
                %220 = vst [vmem:[%s152 + $0x84] sm:$0xf] %v219
                %v221 = vld [vmem:[%s151 + $0x88] sm:$0xf]
                %222 = vst [vmem:[%s152 + $0x88] sm:$0xf] %v221
                %v223 = vld [vmem:[%s151 + $0x8c] sm:$0xf]
                %224 = vst [vmem:[%s152 + $0x8c] sm:$0xf] %v223
                %v225 = vld [vmem:[%s151 + $0x90] sm:$0xf]
                %226 = vst [vmem:[%s152 + $0x90] sm:$0xf] %v225
                %v227 = vld [vmem:[%s151 + $0x94] sm:$0xf]
                %228 = vst [vmem:[%s152 + $0x94] sm:$0xf] %v227
                %v229 = vld [vmem:[%s151 + $0x98] sm:$0xf]
                %230 = vst [vmem:[%s152 + $0x98] sm:$0xf] %v229
                %v231 = vld [vmem:[%s151 + $0x9c] sm:$0xf]
                %232 = vst [vmem:[%s152 + $0x9c] sm:$0xf] %v231
                %v233 = vld [vmem:[%s151 + $0xa0] sm:$0xf]
                %234 = vst [vmem:[%s152 + $0xa0] sm:$0xf] %v233
                %v235 = vld [vmem:[%s151 + $0xa4] sm:$0xf]
                %236 = vst [vmem:[%s152 + $0xa4] sm:$0xf] %v235
                %v237 = vld [vmem:[%s151 + $0xa8] sm:$0xf]
                %238 = vst [vmem:[%s152 + $0xa8] sm:$0xf] %v237
                %v239 = vld [vmem:[%s151 + $0xac] sm:$0xf]
                %240 = vst [vmem:[%s152 + $0xac] sm:$0xf] %v239
                %v241 = vld [vmem:[%s151 + $0xb0] sm:$0xf]
                %242 = vst [vmem:[%s152 + $0xb0] sm:$0xf] %v241
                %v243 = vld [vmem:[%s151 + $0xb4] sm:$0xf]
                %244 = vst [vmem:[%s152 + $0xb4] sm:$0xf] %v243
                %v245 = vld [vmem:[%s151 + $0xb8] sm:$0xf]
                %246 = vst [vmem:[%s152 + $0xb8] sm:$0xf] %v245
                %v247 = vld [vmem:[%s151 + $0xbc] sm:$0xf]
                %248 = vst [vmem:[%s152 + $0xbc] sm:$0xf] %v247
                %v249 = vld [vmem:[%s151 + $0xc0] sm:$0xf]
                %250 = vst [vmem:[%s152 + $0xc0] sm:$0xf] %v249
                %v251 = vld [vmem:[%s151 + $0xc4] sm:$0xf]
                %252 = vst [vmem:[%s152 + $0xc4] sm:$0xf] %v251
                %v253 = vld [vmem:[%s151 + $0xc8] sm:$0xf]
                %254 = vst [vmem:[%s152 + $0xc8] sm:$0xf] %v253
                %v255 = vld [vmem:[%s151 + $0xcc] sm:$0xf]
                %256 = vst [vmem:[%s152 + $0xcc] sm:$0xf] %v255
                %v257 = vld [vmem:[%s151 + $0xd0] sm:$0xf]
                %258 = vst [vmem:[%s152 + $0xd0] sm:$0xf] %v257
                %v259 = vld [vmem:[%s151 + $0xd4] sm:$0xf]
                %260 = vst [vmem:[%s152 + $0xd4] sm:$0xf] %v259
                %v261 = vld [vmem:[%s151 + $0xd8] sm:$0xf]
                %262 = vst [vmem:[%s152 + $0xd8] sm:$0xf] %v261
                %v263 = vld [vmem:[%s151 + $0xdc] sm:$0xf]
                %264 = vst [vmem:[%s152 + $0xdc] sm:$0xf] %v263
                %v265 = vld [vmem:[%s151 + $0xe0] sm:$0xf]
                %266 = vst [vmem:[%s152 + $0xe0] sm:$0xf] %v265
                %v267 = vld [vmem:[%s151 + $0xe4] sm:$0xf]
                %268 = vst [vmem:[%s152 + $0xe4] sm:$0xf] %v267
                %v269 = vld [vmem:[%s151 + $0xe8] sm:$0xf]
                %270 = vst [vmem:[%s152 + $0xe8] sm:$0xf] %v269
                %v271 = vld [vmem:[%s151 + $0xec] sm:$0xf]
                %272 = vst [vmem:[%s152 + $0xec] sm:$0xf] %v271
                %v273 = vld [vmem:[%s151 + $0xf0] sm:$0xf]
                %274 = vst [vmem:[%s152 + $0xf0] sm:$0xf] %v273
                %v275 = vld [vmem:[%s151 + $0xf4] sm:$0xf]
                %276 = vst [vmem:[%s152 + $0xf4] sm:$0xf] %v275
                %v277 = vld [vmem:[%s151 + $0xf8] sm:$0xf]
                %278 = vst [vmem:[%s152 + $0xf8] sm:$0xf] %v277
                %v279 = vld [vmem:[%s151 + $0xfc] sm:$0xf]
                %280 = vst [vmem:[%s152 + $0xfc] sm:$0xf] %v279
                %v281 = vld [vmem:[%s151 + $0x200] sm:$0xf]
                %282 = vst [vmem:[%s152 + $0x100] sm:$0xf] %v281
                %v283 = vld [vmem:[%s151 + $0x204] sm:$0xf]
                %284 = vst [vmem:[%s152 + $0x104] sm:$0xf] %v283
                %v285 = vld [vmem:[%s151 + $0x208] sm:$0xf]
                %286 = vst [vmem:[%s152 + $0x108] sm:$0xf] %v285
                %v287 = vld [vmem:[%s151 + $0x20c] sm:$0xf]
                %288 = vst [vmem:[%s152 + $0x10c] sm:$0xf] %v287
                %v289 = vld [vmem:[%s151 + $0x210] sm:$0xf]
                %290 = vst [vmem:[%s152 + $0x110] sm:$0xf] %v289
                %v291 = vld [vmem:[%s151 + $0x214] sm:$0xf]
                %292 = vst [vmem:[%s152 + $0x114] sm:$0xf] %v291
                %v293 = vld [vmem:[%s151 + $0x218] sm:$0xf]
                %294 = vst [vmem:[%s152 + $0x118] sm:$0xf] %v293
                %v295 = vld [vmem:[%s151 + $0x21c] sm:$0xf]
                %296 = vst [vmem:[%s152 + $0x11c] sm:$0xf] %v295
                %v297 = vld [vmem:[%s151 + $0x220] sm:$0xf]
                %298 = vst [vmem:[%s152 + $0x120] sm:$0xf] %v297
                %v299 = vld [vmem:[%s151 + $0x224] sm:$0xf]
                %300 = vst [vmem:[%s152 + $0x124] sm:$0xf] %v299
                %v301 = vld [vmem:[%s151 + $0x228] sm:$0xf]
                %302 = vst [vmem:[%s152 + $0x128] sm:$0xf] %v301
                %v303 = vld [vmem:[%s151 + $0x22c] sm:$0xf]
                %304 = vst [vmem:[%s152 + $0x12c] sm:$0xf] %v303
                %v305 = vld [vmem:[%s151 + $0x230] sm:$0xf]
                %306 = vst [vmem:[%s152 + $0x130] sm:$0xf] %v305
                %v307 = vld [vmem:[%s151 + $0x234] sm:$0xf]
                %308 = vst [vmem:[%s152 + $0x134] sm:$0xf] %v307
                %v309 = vld [vmem:[%s151 + $0x238] sm:$0xf]
                %310 = vst [vmem:[%s152 + $0x138] sm:$0xf] %v309
                %v311 = vld [vmem:[%s151 + $0x23c] sm:$0xf]
                %312 = vst [vmem:[%s152 + $0x13c] sm:$0xf] %v311
                %v313 = vld [vmem:[%s151 + $0x240] sm:$0xf]
                %314 = vst [vmem:[%s152 + $0x140] sm:$0xf] %v313
                %v315 = vld [vmem:[%s151 + $0x244] sm:$0xf]
                %316 = vst [vmem:[%s152 + $0x144] sm:$0xf] %v315
                %v317 = vld [vmem:[%s151 + $0x248] sm:$0xf]
                %318 = vst [vmem:[%s152 + $0x148] sm:$0xf] %v317
                %v319 = vld [vmem:[%s151 + $0x24c] sm:$0xf]
                %320 = vst [vmem:[%s152 + $0x14c] sm:$0xf] %v319
                %v321 = vld [vmem:[%s151 + $0x250] sm:$0xf]
                %322 = vst [vmem:[%s152 + $0x150] sm:$0xf] %v321
                %v323 = vld [vmem:[%s151 + $0x254] sm:$0xf]
                %324 = vst [vmem:[%s152 + $0x154] sm:$0xf] %v323
                %v325 = vld [vmem:[%s151 + $0x258] sm:$0xf]
                %326 = vst [vmem:[%s152 + $0x158] sm:$0xf] %v325
                %v327 = vld [vmem:[%s151 + $0x25c] sm:$0xf]
                %328 = vst [vmem:[%s152 + $0x15c] sm:$0xf] %v327
                %v329 = vld [vmem:[%s151 + $0x260] sm:$0xf]
                %330 = vst [vmem:[%s152 + $0x160] sm:$0xf] %v329
                %v331 = vld [vmem:[%s151 + $0x264] sm:$0xf]
                %332 = vst [vmem:[%s152 + $0x164] sm:$0xf] %v331
                %v333 = vld [vmem:[%s151 + $0x268] sm:$0xf]
                %334 = vst [vmem:[%s152 + $0x168] sm:$0xf] %v333
                %v335 = vld [vmem:[%s151 + $0x26c] sm:$0xf]
                %336 = vst [vmem:[%s152 + $0x16c] sm:$0xf] %v335
                %v337 = vld [vmem:[%s151 + $0x270] sm:$0xf]
                %338 = vst [vmem:[%s152 + $0x170] sm:$0xf] %v337
                %v339 = vld [vmem:[%s151 + $0x274] sm:$0xf]
                %340 = vst [vmem:[%s152 + $0x174] sm:$0xf] %v339
                %v341 = vld [vmem:[%s151 + $0x278] sm:$0xf]
                %342 = vst [vmem:[%s152 + $0x178] sm:$0xf] %v341
                %v343 = vld [vmem:[%s151 + $0x27c] sm:$0xf]
                %344 = vst [vmem:[%s152 + $0x17c] sm:$0xf] %v343
                %v345 = vld [vmem:[%s151 + $0x280] sm:$0xf]
                %346 = vst [vmem:[%s152 + $0x180] sm:$0xf] %v345
                %v347 = vld [vmem:[%s151 + $0x284] sm:$0xf]
                %348 = vst [vmem:[%s152 + $0x184] sm:$0xf] %v347
                %v349 = vld [vmem:[%s151 + $0x288] sm:$0xf]
                %350 = vst [vmem:[%s152 + $0x188] sm:$0xf] %v349
                %v351 = vld [vmem:[%s151 + $0x28c] sm:$0xf]
                %352 = vst [vmem:[%s152 + $0x18c] sm:$0xf] %v351
                %v353 = vld [vmem:[%s151 + $0x290] sm:$0xf]
                %354 = vst [vmem:[%s152 + $0x190] sm:$0xf] %v353
                %v355 = vld [vmem:[%s151 + $0x294] sm:$0xf]
                %356 = vst [vmem:[%s152 + $0x194] sm:$0xf] %v355
                %v357 = vld [vmem:[%s151 + $0x298] sm:$0xf]
                %358 = vst [vmem:[%s152 + $0x198] sm:$0xf] %v357
                %v359 = vld [vmem:[%s151 + $0x29c] sm:$0xf]
                %360 = vst [vmem:[%s152 + $0x19c] sm:$0xf] %v359
                %v361 = vld [vmem:[%s151 + $0x2a0] sm:$0xf]
                %362 = vst [vmem:[%s152 + $0x1a0] sm:$0xf] %v361
                %v363 = vld [vmem:[%s151 + $0x2a4] sm:$0xf]
                %364 = vst [vmem:[%s152 + $0x1a4] sm:$0xf] %v363
                %v365 = vld [vmem:[%s151 + $0x2a8] sm:$0xf]
                %366 = vst [vmem:[%s152 + $0x1a8] sm:$0xf] %v365
                %v367 = vld [vmem:[%s151 + $0x2ac] sm:$0xf]
                %368 = vst [vmem:[%s152 + $0x1ac] sm:$0xf] %v367
                %v369 = vld [vmem:[%s151 + $0x2b0] sm:$0xf]
                %370 = vst [vmem:[%s152 + $0x1b0] sm:$0xf] %v369
                %v371 = vld [vmem:[%s151 + $0x2b4] sm:$0xf]
                %372 = vst [vmem:[%s152 + $0x1b4] sm:$0xf] %v371
                %v373 = vld [vmem:[%s151 + $0x2b8] sm:$0xf]
                %374 = vst [vmem:[%s152 + $0x1b8] sm:$0xf] %v373
                %v375 = vld [vmem:[%s151 + $0x2bc] sm:$0xf]
                %376 = vst [vmem:[%s152 + $0x1bc] sm:$0xf] %v375
                %v377 = vld [vmem:[%s151 + $0x2c0] sm:$0xf]
                %378 = vst [vmem:[%s152 + $0x1c0] sm:$0xf] %v377
                %v379 = vld [vmem:[%s151 + $0x2c4] sm:$0xf]
                %380 = vst [vmem:[%s152 + $0x1c4] sm:$0xf] %v379
                %v381 = vld [vmem:[%s151 + $0x2c8] sm:$0xf]
                %382 = vst [vmem:[%s152 + $0x1c8] sm:$0xf] %v381
                %v383 = vld [vmem:[%s151 + $0x2cc] sm:$0xf]
                %384 = vst [vmem:[%s152 + $0x1cc] sm:$0xf] %v383
                %v385 = vld [vmem:[%s151 + $0x2d0] sm:$0xf]
                %386 = vst [vmem:[%s152 + $0x1d0] sm:$0xf] %v385
                %v387 = vld [vmem:[%s151 + $0x2d4] sm:$0xf]
                %388 = vst [vmem:[%s152 + $0x1d4] sm:$0xf] %v387
                %v389 = vld [vmem:[%s151 + $0x2d8] sm:$0xf]
                %390 = vst [vmem:[%s152 + $0x1d8] sm:$0xf] %v389
                %v391 = vld [vmem:[%s151 + $0x2dc] sm:$0xf]
                %392 = vst [vmem:[%s152 + $0x1dc] sm:$0xf] %v391
                %v393 = vld [vmem:[%s151 + $0x2e0] sm:$0xf]
                %394 = vst [vmem:[%s152 + $0x1e0] sm:$0xf] %v393
                %v395 = vld [vmem:[%s151 + $0x2e4] sm:$0xf]
                %396 = vst [vmem:[%s152 + $0x1e4] sm:$0xf] %v395
                %v397 = vld [vmem:[%s151 + $0x2e8] sm:$0xf]
                %398 = vst [vmem:[%s152 + $0x1e8] sm:$0xf] %v397
                %v399 = vld [vmem:[%s151 + $0x2ec] sm:$0xf]
                %400 = vst [vmem:[%s152 + $0x1ec] sm:$0xf] %v399
                %v401 = vld [vmem:[%s151 + $0x2f0] sm:$0xf]
                %402 = vst [vmem:[%s152 + $0x1f0] sm:$0xf] %v401
                %v403 = vld [vmem:[%s151 + $0x2f4] sm:$0xf]
                %404 = vst [vmem:[%s152 + $0x1f4] sm:$0xf] %v403
                %v405 = vld [vmem:[%s151 + $0x2f8] sm:$0xf]
                %406 = vst [vmem:[%s152 + $0x1f8] sm:$0xf] %v405
                %v407 = vld [vmem:[%s151 + $0x2fc] sm:$0xf]
                %408 = vst [vmem:[%s152 + $0x1fc] sm:$0xf] %v407
                %v409 = vld [vmem:[%s151 + $0x400] sm:$0xf]
                %410 = vst [vmem:[%s152 + $0x200] sm:$0xf] %v409
                %v411 = vld [vmem:[%s151 + $0x404] sm:$0xf]
                %412 = vst [vmem:[%s152 + $0x204] sm:$0xf] %v411
                %v413 = vld [vmem:[%s151 + $0x408] sm:$0xf]
                %414 = vst [vmem:[%s152 + $0x208] sm:$0xf] %v413
                %v415 = vld [vmem:[%s151 + $0x40c] sm:$0xf]
                %416 = vst [vmem:[%s152 + $0x20c] sm:$0xf] %v415
                %v417 = vld [vmem:[%s151 + $0x410] sm:$0xf]
                %418 = vst [vmem:[%s152 + $0x210] sm:$0xf] %v417
                %v419 = vld [vmem:[%s151 + $0x414] sm:$0xf]
                %420 = vst [vmem:[%s152 + $0x214] sm:$0xf] %v419
                %v421 = vld [vmem:[%s151 + $0x418] sm:$0xf]
                %422 = vst [vmem:[%s152 + $0x218] sm:$0xf] %v421
                %v423 = vld [vmem:[%s151 + $0x41c] sm:$0xf]
                %424 = vst [vmem:[%s152 + $0x21c] sm:$0xf] %v423
                %v425 = vld [vmem:[%s151 + $0x420] sm:$0xf]
                %426 = vst [vmem:[%s152 + $0x220] sm:$0xf] %v425
                %v427 = vld [vmem:[%s151 + $0x424] sm:$0xf]
                %428 = vst [vmem:[%s152 + $0x224] sm:$0xf] %v427
                %v429 = vld [vmem:[%s151 + $0x428] sm:$0xf]
                %430 = vst [vmem:[%s152 + $0x228] sm:$0xf] %v429
                %v431 = vld [vmem:[%s151 + $0x42c] sm:$0xf]
                %432 = vst [vmem:[%s152 + $0x22c] sm:$0xf] %v431
                %v433 = vld [vmem:[%s151 + $0x430] sm:$0xf]
                %434 = vst [vmem:[%s152 + $0x230] sm:$0xf] %v433
                %v435 = vld [vmem:[%s151 + $0x434] sm:$0xf]
                %436 = vst [vmem:[%s152 + $0x234] sm:$0xf] %v435
                %v437 = vld [vmem:[%s151 + $0x438] sm:$0xf]
                %438 = vst [vmem:[%s152 + $0x238] sm:$0xf] %v437
                %v439 = vld [vmem:[%s151 + $0x43c] sm:$0xf]
                %440 = vst [vmem:[%s152 + $0x23c] sm:$0xf] %v439
                %v441 = vld [vmem:[%s151 + $0x440] sm:$0xf]
                %442 = vst [vmem:[%s152 + $0x240] sm:$0xf] %v441
                %v443 = vld [vmem:[%s151 + $0x444] sm:$0xf]
                %444 = vst [vmem:[%s152 + $0x244] sm:$0xf] %v443
                %v445 = vld [vmem:[%s151 + $0x448] sm:$0xf]
                %446 = vst [vmem:[%s152 + $0x248] sm:$0xf] %v445
                %v447 = vld [vmem:[%s151 + $0x44c] sm:$0xf]
                %448 = vst [vmem:[%s152 + $0x24c] sm:$0xf] %v447
                %v449 = vld [vmem:[%s151 + $0x450] sm:$0xf]
                %450 = vst [vmem:[%s152 + $0x250] sm:$0xf] %v449
                %v451 = vld [vmem:[%s151 + $0x454] sm:$0xf]
                %452 = vst [vmem:[%s152 + $0x254] sm:$0xf] %v451
                %v453 = vld [vmem:[%s151 + $0x458] sm:$0xf]
                %454 = vst [vmem:[%s152 + $0x258] sm:$0xf] %v453
                %v455 = vld [vmem:[%s151 + $0x45c] sm:$0xf]
                %456 = vst [vmem:[%s152 + $0x25c] sm:$0xf] %v455
                %v457 = vld [vmem:[%s151 + $0x460] sm:$0xf]
                %458 = vst [vmem:[%s152 + $0x260] sm:$0xf] %v457
                %v459 = vld [vmem:[%s151 + $0x464] sm:$0xf]
                %460 = vst [vmem:[%s152 + $0x264] sm:$0xf] %v459
                %v461 = vld [vmem:[%s151 + $0x468] sm:$0xf]
                %462 = vst [vmem:[%s152 + $0x268] sm:$0xf] %v461
                %v463 = vld [vmem:[%s151 + $0x46c] sm:$0xf]
                %464 = vst [vmem:[%s152 + $0x26c] sm:$0xf] %v463
                %v465 = vld [vmem:[%s151 + $0x470] sm:$0xf]
                %466 = vst [vmem:[%s152 + $0x270] sm:$0xf] %v465
                %v467 = vld [vmem:[%s151 + $0x474] sm:$0xf]
                %468 = vst [vmem:[%s152 + $0x274] sm:$0xf] %v467
                %v469 = vld [vmem:[%s151 + $0x478] sm:$0xf]
                %470 = vst [vmem:[%s152 + $0x278] sm:$0xf] %v469
                %v471 = vld [vmem:[%s151 + $0x47c] sm:$0xf]
                %472 = vst [vmem:[%s152 + $0x27c] sm:$0xf] %v471
                %v473 = vld [vmem:[%s151 + $0x480] sm:$0xf]
                %474 = vst [vmem:[%s152 + $0x280] sm:$0xf] %v473
                %v475 = vld [vmem:[%s151 + $0x484] sm:$0xf]
                %476 = vst [vmem:[%s152 + $0x284] sm:$0xf] %v475
                %v477 = vld [vmem:[%s151 + $0x488] sm:$0xf]
                %478 = vst [vmem:[%s152 + $0x288] sm:$0xf] %v477
                %v479 = vld [vmem:[%s151 + $0x48c] sm:$0xf]
                %480 = vst [vmem:[%s152 + $0x28c] sm:$0xf] %v479
                %v481 = vld [vmem:[%s151 + $0x490] sm:$0xf]
                %482 = vst [vmem:[%s152 + $0x290] sm:$0xf] %v481
                %v483 = vld [vmem:[%s151 + $0x494] sm:$0xf]
                %484 = vst [vmem:[%s152 + $0x294] sm:$0xf] %v483
                %v485 = vld [vmem:[%s151 + $0x498] sm:$0xf]
                %486 = vst [vmem:[%s152 + $0x298] sm:$0xf] %v485
                %v487 = vld [vmem:[%s151 + $0x49c] sm:$0xf]
                %488 = vst [vmem:[%s152 + $0x29c] sm:$0xf] %v487
                %v489 = vld [vmem:[%s151 + $0x4a0] sm:$0xf]
                %490 = vst [vmem:[%s152 + $0x2a0] sm:$0xf] %v489
                %v491 = vld [vmem:[%s151 + $0x4a4] sm:$0xf]
                %492 = vst [vmem:[%s152 + $0x2a4] sm:$0xf] %v491
                %v493 = vld [vmem:[%s151 + $0x4a8] sm:$0xf]
                %494 = vst [vmem:[%s152 + $0x2a8] sm:$0xf] %v493
                %v495 = vld [vmem:[%s151 + $0x4ac] sm:$0xf]
                %496 = vst [vmem:[%s152 + $0x2ac] sm:$0xf] %v495
                %v497 = vld [vmem:[%s151 + $0x4b0] sm:$0xf]
                %498 = vst [vmem:[%s152 + $0x2b0] sm:$0xf] %v497
                %v499 = vld [vmem:[%s151 + $0x4b4] sm:$0xf]
                %500 = vst [vmem:[%s152 + $0x2b4] sm:$0xf] %v499
                %v501 = vld [vmem:[%s151 + $0x4b8] sm:$0xf]
                %502 = vst [vmem:[%s152 + $0x2b8] sm:$0xf] %v501
                %v503 = vld [vmem:[%s151 + $0x4bc] sm:$0xf]
                %504 = vst [vmem:[%s152 + $0x2bc] sm:$0xf] %v503
                %v505 = vld [vmem:[%s151 + $0x4c0] sm:$0xf]
                %506 = vst [vmem:[%s152 + $0x2c0] sm:$0xf] %v505
                %v507 = vld [vmem:[%s151 + $0x4c4] sm:$0xf]
                %508 = vst [vmem:[%s152 + $0x2c4] sm:$0xf] %v507
                %v509 = vld [vmem:[%s151 + $0x4c8] sm:$0xf]
                %510 = vst [vmem:[%s152 + $0x2c8] sm:$0xf] %v509
                %v511 = vld [vmem:[%s151 + $0x4cc] sm:$0xf]
                %512 = vst [vmem:[%s152 + $0x2cc] sm:$0xf] %v511
                %v513 = vld [vmem:[%s151 + $0x4d0] sm:$0xf]
                %514 = vst [vmem:[%s152 + $0x2d0] sm:$0xf] %v513
                %v515 = vld [vmem:[%s151 + $0x4d4] sm:$0xf]
                %516 = vst [vmem:[%s152 + $0x2d4] sm:$0xf] %v515
                %v517 = vld [vmem:[%s151 + $0x4d8] sm:$0xf]
                %518 = vst [vmem:[%s152 + $0x2d8] sm:$0xf] %v517
                %v519 = vld [vmem:[%s151 + $0x4dc] sm:$0xf]
                %520 = vst [vmem:[%s152 + $0x2dc] sm:$0xf] %v519
                %v521 = vld [vmem:[%s151 + $0x4e0] sm:$0xf]
                %522 = vst [vmem:[%s152 + $0x2e0] sm:$0xf] %v521
                %v523 = vld [vmem:[%s151 + $0x4e4] sm:$0xf]
                %524 = vst [vmem:[%s152 + $0x2e4] sm:$0xf] %v523
                %v525 = vld [vmem:[%s151 + $0x4e8] sm:$0xf]
                %526 = vst [vmem:[%s152 + $0x2e8] sm:$0xf] %v525
                %v527 = vld [vmem:[%s151 + $0x4ec] sm:$0xf]
                %528 = vst [vmem:[%s152 + $0x2ec] sm:$0xf] %v527
                %v529 = vld [vmem:[%s151 + $0x4f0] sm:$0xf]
                %530 = vst [vmem:[%s152 + $0x2f0] sm:$0xf] %v529
                %v531 = vld [vmem:[%s151 + $0x4f4] sm:$0xf]
                %532 = vst [vmem:[%s152 + $0x2f4] sm:$0xf] %v531
                %v533 = vld [vmem:[%s151 + $0x4f8] sm:$0xf]
                %534 = vst [vmem:[%s152 + $0x2f8] sm:$0xf] %v533
                %v535 = vld [vmem:[%s151 + $0x4fc] sm:$0xf]
                %536 = vst [vmem:[%s152 + $0x2fc] sm:$0xf] %v535
                %v537 = vld [vmem:[%s151 + $0x600] sm:$0xf]
                %538 = vst [vmem:[%s152 + $0x300] sm:$0xf] %v537
                %v539 = vld [vmem:[%s151 + $0x604] sm:$0xf]
                %540 = vst [vmem:[%s152 + $0x304] sm:$0xf] %v539
                %v541 = vld [vmem:[%s151 + $0x608] sm:$0xf]
                %542 = vst [vmem:[%s152 + $0x308] sm:$0xf] %v541
                %v543 = vld [vmem:[%s151 + $0x60c] sm:$0xf]
                %544 = vst [vmem:[%s152 + $0x30c] sm:$0xf] %v543
                %v545 = vld [vmem:[%s151 + $0x610] sm:$0xf]
                %546 = vst [vmem:[%s152 + $0x310] sm:$0xf] %v545
                %v547 = vld [vmem:[%s151 + $0x614] sm:$0xf]
                %548 = vst [vmem:[%s152 + $0x314] sm:$0xf] %v547
                %v549 = vld [vmem:[%s151 + $0x618] sm:$0xf]
                %550 = vst [vmem:[%s152 + $0x318] sm:$0xf] %v549
                %v551 = vld [vmem:[%s151 + $0x61c] sm:$0xf]
                %552 = vst [vmem:[%s152 + $0x31c] sm:$0xf] %v551
                %v553 = vld [vmem:[%s151 + $0x620] sm:$0xf]
                %554 = vst [vmem:[%s152 + $0x320] sm:$0xf] %v553
                %v555 = vld [vmem:[%s151 + $0x624] sm:$0xf]
                %556 = vst [vmem:[%s152 + $0x324] sm:$0xf] %v555
                %v557 = vld [vmem:[%s151 + $0x628] sm:$0xf]
                %558 = vst [vmem:[%s152 + $0x328] sm:$0xf] %v557
                %v559 = vld [vmem:[%s151 + $0x62c] sm:$0xf]
                %560 = vst [vmem:[%s152 + $0x32c] sm:$0xf] %v559
                %v561 = vld [vmem:[%s151 + $0x630] sm:$0xf]
                %562 = vst [vmem:[%s152 + $0x330] sm:$0xf] %v561
                %v563 = vld [vmem:[%s151 + $0x634] sm:$0xf]
                %564 = vst [vmem:[%s152 + $0x334] sm:$0xf] %v563
                %v565 = vld [vmem:[%s151 + $0x638] sm:$0xf]
                %566 = vst [vmem:[%s152 + $0x338] sm:$0xf] %v565
                %v567 = vld [vmem:[%s151 + $0x63c] sm:$0xf]
                %568 = vst [vmem:[%s152 + $0x33c] sm:$0xf] %v567
                %v569 = vld [vmem:[%s151 + $0x640] sm:$0xf]
                %570 = vst [vmem:[%s152 + $0x340] sm:$0xf] %v569
                %v571 = vld [vmem:[%s151 + $0x644] sm:$0xf]
                %572 = vst [vmem:[%s152 + $0x344] sm:$0xf] %v571
                %v573 = vld [vmem:[%s151 + $0x648] sm:$0xf]
                %574 = vst [vmem:[%s152 + $0x348] sm:$0xf] %v573
                %v575 = vld [vmem:[%s151 + $0x64c] sm:$0xf]
                %576 = vst [vmem:[%s152 + $0x34c] sm:$0xf] %v575
                %v577 = vld [vmem:[%s151 + $0x650] sm:$0xf]
                %578 = vst [vmem:[%s152 + $0x350] sm:$0xf] %v577
                %v579 = vld [vmem:[%s151 + $0x654] sm:$0xf]
                %580 = vst [vmem:[%s152 + $0x354] sm:$0xf] %v579
                %v581 = vld [vmem:[%s151 + $0x658] sm:$0xf]
                %582 = vst [vmem:[%s152 + $0x358] sm:$0xf] %v581
                %v583 = vld [vmem:[%s151 + $0x65c] sm:$0xf]
                %584 = vst [vmem:[%s152 + $0x35c] sm:$0xf] %v583
                %v585 = vld [vmem:[%s151 + $0x660] sm:$0xf]
                %586 = vst [vmem:[%s152 + $0x360] sm:$0xf] %v585
                %v587 = vld [vmem:[%s151 + $0x664] sm:$0xf]
                %588 = vst [vmem:[%s152 + $0x364] sm:$0xf] %v587
                %v589 = vld [vmem:[%s151 + $0x668] sm:$0xf]
                %590 = vst [vmem:[%s152 + $0x368] sm:$0xf] %v589
                %v591 = vld [vmem:[%s151 + $0x66c] sm:$0xf]
                %592 = vst [vmem:[%s152 + $0x36c] sm:$0xf] %v591
                %v593 = vld [vmem:[%s151 + $0x670] sm:$0xf]
                %594 = vst [vmem:[%s152 + $0x370] sm:$0xf] %v593
                %v595 = vld [vmem:[%s151 + $0x674] sm:$0xf]
                %596 = vst [vmem:[%s152 + $0x374] sm:$0xf] %v595
                %v597 = vld [vmem:[%s151 + $0x678] sm:$0xf]
                %598 = vst [vmem:[%s152 + $0x378] sm:$0xf] %v597
                %v599 = vld [vmem:[%s151 + $0x67c] sm:$0xf]
                %600 = vst [vmem:[%s152 + $0x37c] sm:$0xf] %v599
                %v601 = vld [vmem:[%s151 + $0x680] sm:$0xf]
                %602 = vst [vmem:[%s152 + $0x380] sm:$0xf] %v601
                %v603 = vld [vmem:[%s151 + $0x684] sm:$0xf]
                %604 = vst [vmem:[%s152 + $0x384] sm:$0xf] %v603
                %v605 = vld [vmem:[%s151 + $0x688] sm:$0xf]
                %606 = vst [vmem:[%s152 + $0x388] sm:$0xf] %v605
                %v607 = vld [vmem:[%s151 + $0x68c] sm:$0xf]
                %608 = vst [vmem:[%s152 + $0x38c] sm:$0xf] %v607
                %v609 = vld [vmem:[%s151 + $0x690] sm:$0xf]
                %610 = vst [vmem:[%s152 + $0x390] sm:$0xf] %v609
                %v611 = vld [vmem:[%s151 + $0x694] sm:$0xf]
                %612 = vst [vmem:[%s152 + $0x394] sm:$0xf] %v611
                %v613 = vld [vmem:[%s151 + $0x698] sm:$0xf]
                %614 = vst [vmem:[%s152 + $0x398] sm:$0xf] %v613
                %v615 = vld [vmem:[%s151 + $0x69c] sm:$0xf]
                %616 = vst [vmem:[%s152 + $0x39c] sm:$0xf] %v615
                %v617 = vld [vmem:[%s151 + $0x6a0] sm:$0xf]
                %618 = vst [vmem:[%s152 + $0x3a0] sm:$0xf] %v617
                %v619 = vld [vmem:[%s151 + $0x6a4] sm:$0xf]
                %620 = vst [vmem:[%s152 + $0x3a4] sm:$0xf] %v619
                %v621 = vld [vmem:[%s151 + $0x6a8] sm:$0xf]
                %622 = vst [vmem:[%s152 + $0x3a8] sm:$0xf] %v621
                %v623 = vld [vmem:[%s151 + $0x6ac] sm:$0xf]
                %624 = vst [vmem:[%s152 + $0x3ac] sm:$0xf] %v623
                %v625 = vld [vmem:[%s151 + $0x6b0] sm:$0xf]
                %626 = vst [vmem:[%s152 + $0x3b0] sm:$0xf] %v625
                %v627 = vld [vmem:[%s151 + $0x6b4] sm:$0xf]
                %628 = vst [vmem:[%s152 + $0x3b4] sm:$0xf] %v627
                %v629 = vld [vmem:[%s151 + $0x6b8] sm:$0xf]
                %630 = vst [vmem:[%s152 + $0x3b8] sm:$0xf] %v629
                %v631 = vld [vmem:[%s151 + $0x6bc] sm:$0xf]
                %632 = vst [vmem:[%s152 + $0x3bc] sm:$0xf] %v631
                %v633 = vld [vmem:[%s151 + $0x6c0] sm:$0xf]
                %634 = vst [vmem:[%s152 + $0x3c0] sm:$0xf] %v633
                %v635 = vld [vmem:[%s151 + $0x6c4] sm:$0xf]
                %636 = vst [vmem:[%s152 + $0x3c4] sm:$0xf] %v635
                %v637 = vld [vmem:[%s151 + $0x6c8] sm:$0xf]
                %638 = vst [vmem:[%s152 + $0x3c8] sm:$0xf] %v637
                %v639 = vld [vmem:[%s151 + $0x6cc] sm:$0xf]
                %640 = vst [vmem:[%s152 + $0x3cc] sm:$0xf] %v639
                %v641 = vld [vmem:[%s151 + $0x6d0] sm:$0xf]
                %642 = vst [vmem:[%s152 + $0x3d0] sm:$0xf] %v641
                %v643 = vld [vmem:[%s151 + $0x6d4] sm:$0xf]
                %644 = vst [vmem:[%s152 + $0x3d4] sm:$0xf] %v643
                %v645 = vld [vmem:[%s151 + $0x6d8] sm:$0xf]
                %646 = vst [vmem:[%s152 + $0x3d8] sm:$0xf] %v645
                %v647 = vld [vmem:[%s151 + $0x6dc] sm:$0xf]
                %648 = vst [vmem:[%s152 + $0x3dc] sm:$0xf] %v647
                %v649 = vld [vmem:[%s151 + $0x6e0] sm:$0xf]
                %650 = vst [vmem:[%s152 + $0x3e0] sm:$0xf] %v649
                %v651 = vld [vmem:[%s151 + $0x6e4] sm:$0xf]
                %652 = vst [vmem:[%s152 + $0x3e4] sm:$0xf] %v651
                %v653 = vld [vmem:[%s151 + $0x6e8] sm:$0xf]
                %654 = vst [vmem:[%s152 + $0x3e8] sm:$0xf] %v653
                %v655 = vld [vmem:[%s151 + $0x6ec] sm:$0xf]
                %656 = vst [vmem:[%s152 + $0x3ec] sm:$0xf] %v655
                %v657 = vld [vmem:[%s151 + $0x6f0] sm:$0xf]
                %658 = vst [vmem:[%s152 + $0x3f0] sm:$0xf] %v657
                %v659 = vld [vmem:[%s151 + $0x6f4] sm:$0xf]
                %660 = vst [vmem:[%s152 + $0x3f4] sm:$0xf] %v659
                %v661 = vld [vmem:[%s151 + $0x6f8] sm:$0xf]
                %662 = vst [vmem:[%s152 + $0x3f8] sm:$0xf] %v661
                %v663 = vld [vmem:[%s151 + $0x6fc] sm:$0xf]
                %664 = vst [vmem:[%s152 + $0x3fc] sm:$0xf] %v663
              $region45: #{net_forward.3} parent=39 // loop_footer
                %s150 = sadd.s32 1, %s146
              $region46: #{net_forward.3} parent=39 // loop_footer_branch
                %145 = sbr.rel target = $region42
              $region47: #{net_forward.3} parent=39 // loop_exit
                _
            $region40: #{net_forward.3} parent=31 // pred_fallthru
              _
          $region32: #{net_forward.3} parent=27 // pred_fallthru
            _
          %1196 = vnop
        $region28: #{net_forward.3} parent=23 // pred_fallthru
          _
      $region24: #{net_forward.3} parent=5 // pred_fallthru
        _
      %p1197 = scmp.le.s32.totalorder 1, %s9
      %p1198 = scmp.lt.s32.totalorder %s9, 3
      %p1199 = pnand %p1197, %p1198
      %p1200 = pneg %p1199
      // Predicated region
      $region66: #{net_forward.3} parent=5 // pred_check
        _
      $region67: #{net_forward.3} parent=5 // pred_check_branch
        %1202 = sbr.rel (%p1199) target = $region69
      $region68: #{net_forward.3} parent=5 // pred_region
        %s1203 = ssub.s32 %s9, 1
        %s1204 = sand.u32 %s22, 1
        %s1205 = sand.u32 %s22, 1
        %s1206 = smul.addr %s1205, 1024
        %s1207 = scalar_lea.vmem [#allocation2], %s1206
        // Predicated region
        $region70: #{net_forward.3} parent=68 // pred_check
          %p1208 = pneg %p35
        $region71: #{net_forward.3} parent=68 // pred_check_branch
          %1210 = sbr.rel (%p1208) target = $region73
        $region72: #{net_forward.3} parent=68 // pred_region
          _
        $region73: #{net_forward.3} parent=68 // pred_fallthru
          _
        %s1211 = sand.u32 %s22, 1
        %s1212 = sand.u32 %s22, 1
        %s1213 = smul.addr %s1212, 1024
        %s1214 = scalar_lea.vmem [#allocation2], %s1213
        %p1215 = pneg %p35
        %p1216 = pneg %p32
        %p1217 = pneg %p56
        %p1218 = pneg %p53
        %p1219 = pneg %p77
        %p1220 = pneg %p74
        %p1221 = pneg %p103
        %p1222 = pneg %p100
        %s1223 = smul.u32 64, %s14
        %p1224 = scmp.lt.s32.totalorder %s1223, 127
        %s1225 = scalar_select %p1224, %s1223, 127
        %s1226 = smul.addr %s1225, 4
        %s1227 = scalar_lea.vmem %s3, %s1226
        %s1228 = smul.u32 64, %s14
        %s1229 = smul.u32 64, %s14
        %p1230 = scmp.lt.s32.totalorder %s1229, 127
        %s1231 = scalar_select %p1230, %s1229, 127
        %s1232 = smul.addr %s1231, 4
        %s1233 = scalar_lea.vmem %s3, %s1232
        %s1234 = smul.u32 64, %s14
        %v1236 = vld [vmem:[%s1] sm:$0xf]
        %v1237 = vld [vmem:[%s1 + $0x4] sm:$0xf]
        %v1238 = vld [vmem:[%s1 + $0x8] sm:$0xf]
        %v1239 = vld [vmem:[%s1 + $0xc] sm:$0x1]
        %v1240 = vld [vmem:[%s1207] sm:$0xf]
        %v1241 = vld [vmem:[%s1207 + $0x4] sm:$0xf]
        %v1242 = vld [vmem:[%s1207 + $0x8] sm:$0xf]
        %v1243 = vld [vmem:[%s1207 + $0xc] sm:$0xf]
        %v1244 = vld [vmem:[%s1207 + $0x10] sm:$0xf]
        %v1245 = vld [vmem:[%s1207 + $0x14] sm:$0xf]
        %v1246 = vld [vmem:[%s1207 + $0x18] sm:$0xf]
        %v1247 = vld [vmem:[%s1207 + $0x1c] sm:$0xf]
        %v1248 = vld [vmem:[%s1207 + $0x20] sm:$0xf]
        %v1249 = vld [vmem:[%s1207 + $0x24] sm:$0xf]
        %v1250 = vld [vmem:[%s1207 + $0x28] sm:$0xf]
        %v1251 = vld [vmem:[%s1207 + $0x2c] sm:$0xf]
        %v1252 = vld [vmem:[%s1207 + $0x30] sm:$0xf]
        %v1253 = vld [vmem:[%s1207 + $0x34] sm:$0xf]
        %v1254 = vld [vmem:[%s1207 + $0x38] sm:$0xf]
        %v1255 = vld [vmem:[%s1207 + $0x3c] sm:$0xf]
        %v1256 = vld [vmem:[%s1207 + $0x40] sm:$0xf]
        %v1257 = vld [vmem:[%s1207 + $0x44] sm:$0xf]
        %v1258 = vld [vmem:[%s1207 + $0x48] sm:$0xf]
        %v1259 = vld [vmem:[%s1207 + $0x4c] sm:$0xf]
        %v1260 = vld [vmem:[%s1207 + $0x50] sm:$0xf]
        %v1261 = vld [vmem:[%s1207 + $0x54] sm:$0xf]
        %v1262 = vld [vmem:[%s1207 + $0x58] sm:$0xf]
        %v1263 = vld [vmem:[%s1207 + $0x5c] sm:$0xf]
        %v1264 = vld [vmem:[%s1207 + $0x60] sm:$0xf]
        %v1265 = vld [vmem:[%s1207 + $0x64] sm:$0xf]
        %v1266 = vld [vmem:[%s1207 + $0x68] sm:$0xf]
        %v1267 = vld [vmem:[%s1207 + $0x6c] sm:$0xf]
        %v1268 = vld [vmem:[%s1207 + $0x70] sm:$0xf]
        %v1269 = vld [vmem:[%s1207 + $0x74] sm:$0xf]
        %v1270 = vld [vmem:[%s1207 + $0x78] sm:$0xf]
        %v1271 = vld [vmem:[%s1207 + $0x7c] sm:$0xf]
        %v1272 = vld [vmem:[%s1207 + $0x80] sm:$0xf]
        %v1273 = vld [vmem:[%s1207 + $0x84] sm:$0xf]
        %v1274 = vld [vmem:[%s1207 + $0x88] sm:$0xf]
        %v1275 = vld [vmem:[%s1207 + $0x8c] sm:$0xf]
        %v1276 = vld [vmem:[%s1207 + $0x90] sm:$0xf]
        %v1277 = vld [vmem:[%s1207 + $0x94] sm:$0xf]
        %v1278 = vld [vmem:[%s1207 + $0x98] sm:$0xf]
        %v1279 = vld [vmem:[%s1207 + $0x9c] sm:$0xf]
        %v1280 = vld [vmem:[%s1207 + $0xa0] sm:$0xf]
        %v1281 = vld [vmem:[%s1207 + $0xa4] sm:$0xf]
        %v1282 = vld [vmem:[%s1207 + $0xa8] sm:$0xf]
        %v1283 = vld [vmem:[%s1207 + $0xac] sm:$0xf]
        %v1284 = vld [vmem:[%s1207 + $0xb0] sm:$0xf]
        %v1285 = vld [vmem:[%s1207 + $0xb4] sm:$0xf]
        %v1286 = vld [vmem:[%s1207 + $0xb8] sm:$0xf]
        %v1287 = vld [vmem:[%s1207 + $0xbc] sm:$0xf]
        %v1288 = vld [vmem:[%s1207 + $0xc0] sm:$0xf]
        %v1289 = vld [vmem:[%s1207 + $0xc4] sm:$0xf]
        %v1290 = vld [vmem:[%s1207 + $0xc8] sm:$0xf]
        %v1291 = vld [vmem:[%s1207 + $0xcc] sm:$0xf]
        %v1292 = vld [vmem:[%s1207 + $0xd0] sm:$0xf]
        %v1293 = vld [vmem:[%s1207 + $0xd4] sm:$0xf]
        %v1294 = vld [vmem:[%s1207 + $0xd8] sm:$0xf]
        %v1295 = vld [vmem:[%s1207 + $0xdc] sm:$0xf]
        %v1296 = vld [vmem:[%s1207 + $0xe0] sm:$0xf]
        %v1297 = vld [vmem:[%s1207 + $0xe4] sm:$0xf]
        %v1298 = vld [vmem:[%s1207 + $0xe8] sm:$0xf]
        %v1299 = vld [vmem:[%s1207 + $0xec] sm:$0xf]
        %v1300 = vld [vmem:[%s1207 + $0xf0] sm:$0xf]
        %v1301 = vld [vmem:[%s1207 + $0xf4] sm:$0xf]
        %v1302 = vld [vmem:[%s1207 + $0xf8] sm:$0xf]
        %v1303 = vld [vmem:[%s1207 + $0xfc] sm:$0xf]
        %v1368 = vunpack.c.l.b16 %v1240
        %v1369 = vunpack.c.l.b16 %v1241
        %v1370 = vunpack.c.l.b16 %v1242
        %v1371 = vunpack.c.l.b16 %v1243
        %v1372 = vunpack.c.l.b16 %v1244
        %v1373 = vunpack.c.l.b16 %v1245
        %v1374 = vunpack.c.l.b16 %v1246
        %v1375 = vunpack.c.l.b16 %v1247
        %v1376 = vunpack.c.l.b16 %v1248
        %v1377 = vunpack.c.l.b16 %v1249
        %v1378 = vunpack.c.l.b16 %v1250
        %v1379 = vunpack.c.l.b16 %v1251
        %v1380 = vunpack.c.l.b16 %v1252
        %v1381 = vunpack.c.l.b16 %v1253
        %v1382 = vunpack.c.l.b16 %v1254
        %v1383 = vunpack.c.l.b16 %v1255
        %v1384 = vunpack.c.l.b16 %v1256
        %v1385 = vunpack.c.l.b16 %v1257
        %v1386 = vunpack.c.l.b16 %v1258
        %v1387 = vunpack.c.l.b16 %v1259
        %v1388 = vunpack.c.l.b16 %v1260
        %v1389 = vunpack.c.l.b16 %v1261
        %v1390 = vunpack.c.l.b16 %v1262
        %v1391 = vunpack.c.l.b16 %v1263
        %v1392 = vunpack.c.l.b16 %v1264
        %v1393 = vunpack.c.l.b16 %v1265
        %v1394 = vunpack.c.l.b16 %v1266
        %v1395 = vunpack.c.l.b16 %v1267
        %v1396 = vunpack.c.l.b16 %v1268
        %v1397 = vunpack.c.l.b16 %v1269
        %v1398 = vunpack.c.l.b16 %v1270
        %v1399 = vunpack.c.l.b16 %v1271
        %v1400 = vunpack.c.l.b16 %v1272
        %v1401 = vunpack.c.l.b16 %v1273
        %v1402 = vunpack.c.l.b16 %v1274
        %v1403 = vunpack.c.l.b16 %v1275
        %v1404 = vunpack.c.l.b16 %v1276
        %v1405 = vunpack.c.l.b16 %v1277
        %v1406 = vunpack.c.l.b16 %v1278
        %v1407 = vunpack.c.l.b16 %v1279
        %v1408 = vunpack.c.l.b16 %v1280
        %v1409 = vunpack.c.l.b16 %v1281
        %v1410 = vunpack.c.l.b16 %v1282
        %v1411 = vunpack.c.l.b16 %v1283
        %v1412 = vunpack.c.l.b16 %v1284
        %v1413 = vunpack.c.l.b16 %v1285
        %v1414 = vunpack.c.l.b16 %v1286
        %v1415 = vunpack.c.l.b16 %v1287
        %v1416 = vunpack.c.l.b16 %v1288
        %v1417 = vunpack.c.l.b16 %v1289
        %v1418 = vunpack.c.l.b16 %v1290
        %v1419 = vunpack.c.l.b16 %v1291
        %v1420 = vunpack.c.l.b16 %v1292
        %v1421 = vunpack.c.l.b16 %v1293
        %v1422 = vunpack.c.l.b16 %v1294
        %v1423 = vunpack.c.l.b16 %v1295
        %v1424 = vunpack.c.l.b16 %v1296
        %v1425 = vunpack.c.l.b16 %v1297
        %v1426 = vunpack.c.l.b16 %v1298
        %v1427 = vunpack.c.l.b16 %v1299
        %v1428 = vunpack.c.l.b16 %v1300
        %v1429 = vunpack.c.l.b16 %v1301
        %v1430 = vunpack.c.l.b16 %v1302
        %v1431 = vunpack.c.l.b16 %v1303
        %v1432 = vpack.c.b16 %v1369, %v1368
        %v1433 = vpack.c.b16 %v1371, %v1370
        %v1434 = vpack.c.b16 %v1373, %v1372
        %v1435 = vpack.c.b16 %v1375, %v1374
        %v1436 = vpack.c.b16 %v1377, %v1376
        %v1437 = vpack.c.b16 %v1379, %v1378
        %v1438 = vpack.c.b16 %v1381, %v1380
        %v1439 = vpack.c.b16 %v1383, %v1382
        %v1440 = vpack.c.b16 %v1385, %v1384
        %v1441 = vpack.c.b16 %v1387, %v1386
        %v1442 = vpack.c.b16 %v1389, %v1388
        %v1443 = vpack.c.b16 %v1391, %v1390
        %v1444 = vpack.c.b16 %v1393, %v1392
        %v1445 = vpack.c.b16 %v1395, %v1394
        %v1446 = vpack.c.b16 %v1397, %v1396
        %v1447 = vpack.c.b16 %v1399, %v1398
        %v1448 = vpack.c.b16 %v1401, %v1400
        %v1449 = vpack.c.b16 %v1403, %v1402
        %v1450 = vpack.c.b16 %v1405, %v1404
        %v1451 = vpack.c.b16 %v1407, %v1406
        %v1452 = vpack.c.b16 %v1409, %v1408
        %v1453 = vpack.c.b16 %v1411, %v1410
        %v1454 = vpack.c.b16 %v1413, %v1412
        %v1455 = vpack.c.b16 %v1415, %v1414
        %v1456 = vpack.c.b16 %v1417, %v1416
        %v1457 = vpack.c.b16 %v1419, %v1418
        %v1458 = vpack.c.b16 %v1421, %v1420
        %v1459 = vpack.c.b16 %v1423, %v1422
        %v1460 = vpack.c.b16 %v1425, %v1424
        %v1461 = vpack.c.b16 %v1427, %v1426
        %v1462 = vpack.c.b16 %v1429, %v1428
        %v1463 = vpack.c.b16 %v1431, %v1430
        %v1468 = vunpack.c.l.b16 %v1236
        %v1469 = vunpack.c.l.b16 %v1237
        %v1470 = vunpack.c.l.b16 %v1238
        %v1471 = vunpack.c.l.b16 %v1239
        %v1472 = vpack.c.b16 %v1469, %v1468
        %v1473 = vpack.c.b16 %v1471, %v1470
        %vm1475 = vcmask 203776
        %v1477 = vsel %vm1475, %v1432, 0
        %v1480 = vsel %vm1475, %v1433, 0
        %v1483 = vsel %vm1475, %v1434, 0
        %v1486 = vsel %vm1475, %v1435, 0
        %v1489 = vsel %vm1475, %v1436, 0
        %v1492 = vsel %vm1475, %v1437, 0
        %v1495 = vsel %vm1475, %v1438, 0
        %v1498 = vsel %vm1475, %v1439, 0
        %v1501 = vsel %vm1475, %v1440, 0
        %v1504 = vsel %vm1475, %v1441, 0
        %v1507 = vsel %vm1475, %v1442, 0
        %v1510 = vsel %vm1475, %v1443, 0
        %v1513 = vsel %vm1475, %v1444, 0
        %v1516 = vsel %vm1475, %v1445, 0
        %v1519 = vsel %vm1475, %v1446, 0
        %v1522 = vsel %vm1475, %v1447, 0
        %v1525 = vsel %vm1475, %v1448, 0
        %v1528 = vsel %vm1475, %v1449, 0
        %v1531 = vsel %vm1475, %v1450, 0
        %v1534 = vsel %vm1475, %v1451, 0
        %v1537 = vsel %vm1475, %v1452, 0
        %v1540 = vsel %vm1475, %v1453, 0
        %v1543 = vsel %vm1475, %v1454, 0
        %v1546 = vsel %vm1475, %v1455, 0
        %v1549 = vsel %vm1475, %v1456, 0
        %v1552 = vsel %vm1475, %v1457, 0
        %v1555 = vsel %vm1475, %v1458, 0
        %v1558 = vsel %vm1475, %v1459, 0
        %v1561 = vsel %vm1475, %v1460, 0
        %v1564 = vsel %vm1475, %v1461, 0
        %v1567 = vsel %vm1475, %v1462, 0
        %v1570 = vsel %vm1475, %v1463, 0
        %vm1572 = vcmask 1043456
        %vm1573 = vcmask 1044480
        %v1574 = vsel %vm1572, 4294967295, 65535
        %v1575 = vsel %vm1573, %v1574, 0
        %v1577 = vand.u32 %v1473, %v1575
        %1579 = vmatprep.subr.bf16.mxu0 0
        %1580 = vmatpush1.bf16.msra.mxu0 %v1472
        %1581 = vmatprep.subr.bf16.mxu0 0
        %1582 = vmatpush1.bf16.msra.mxu0 %v1577
        %1583 = vmatprep.subr.bf16.mxu0 0
        %1584 = vmatpush1.bf16.msra.mxu0 0
        %1585 = vmatprep.subr.bf16.mxu0 0
        %1586 = vmatpush1.bf16.msra.mxu0 0
        %1587 = vmatprep.subr.bf16.mxu0 0
        %1588 = vmatpush1.bf16.msra.mxu0 0
        %1589 = vmatprep.subr.bf16.mxu0 0
        %1590 = vmatpush1.bf16.msra.mxu0 0
        %1591 = vmatprep.subr.bf16.mxu0 0
        %1592 = vmatpush1.bf16.msra.mxu0 0
        %1593 = vmatprep.subr.bf16.mxu0 0
        %1594 = vmatpush1.bf16.msra.mxu0 0
        %1595 = vmatprep.subr.bf16.mxu0 0
        %1596 = vmatpush1.bf16.msra.mxu0 0
        %1597 = vmatprep.subr.bf16.mxu0 0
        %1598 = vmatpush1.bf16.msra.mxu0 0
        %1599 = vmatprep.subr.bf16.mxu0 0
        %1600 = vmatpush1.bf16.msra.mxu0 0
        %1601 = vmatprep.subr.bf16.mxu0 0
        %1602 = vmatpush1.bf16.msra.mxu0 0
        %1603 = vmatprep.subr.bf16.mxu0 0
        %1604 = vmatpush1.bf16.msra.mxu0 0
        %1605 = vmatprep.subr.bf16.mxu0 0
        %1606 = vmatpush1.bf16.msra.mxu0 0
        %1607 = vmatprep.subr.bf16.mxu0 0
        %1608 = vmatpush1.bf16.msra.mxu0 0
        %1609 = vmatprep.subr.bf16.mxu0 0
        %1610 = vmatpush1.bf16.msra.mxu0 0
        %1611 = vmatprep.mubr.bf16.mxu0 0
        %1612 = vmatmul.mubr.bf16.gmra.mrb[0].mxu0 %v1477
        %v1613 = vpop.f32.mrb[0].mxu0
        %v1614 = vadd.f32 0.0, %v1613
        %v1615 = vpop.f32.mrb[0].mxu0
        %v1616 = vpop.f32.mrb[0].mxu0
        %v1617 = vadd.f32 0.0, %v1616
        %v1618 = vpop.f32.mrb[0].mxu0
        %1619 = vmatprep.mubr.bf16.mxu0 0
        %1620 = vmatmul.mubr.bf16.gmra.mrb[0].mxu0 %v1480
        %v1621 = vpop.f32.mrb[0].mxu0
        %v1622 = vadd.f32 0.0, %v1621
        %v1623 = vpop.f32.mrb[0].mxu0
        %v1624 = vpop.f32.mrb[0].mxu0
        %v1625 = vadd.f32 0.0, %v1624
        %v1626 = vpop.f32.mrb[0].mxu0
        %1627 = vmatprep.mubr.bf16.mxu0 0
        %1628 = vmatmul.mubr.bf16.gmra.mrb[0].mxu0 %v1483
        %v1629 = vpop.f32.mrb[0].mxu0
        %v1630 = vadd.f32 0.0, %v1629
        %v1631 = vpop.f32.mrb[0].mxu0
        %v1632 = vpop.f32.mrb[0].mxu0
        %v1633 = vadd.f32 0.0, %v1632
        %v1634 = vpop.f32.mrb[0].mxu0
        %1635 = vmatprep.mubr.bf16.mxu0 0
        %1636 = vmatmul.mubr.bf16.gmra.mrb[0].mxu0 %v1486
        %v1637 = vpop.f32.mrb[0].mxu0
        %v1638 = vadd.f32 0.0, %v1637
        %v1639 = vpop.f32.mrb[0].mxu0
        %v1640 = vpop.f32.mrb[0].mxu0
        %v1641 = vadd.f32 0.0, %v1640
        %v1642 = vpop.f32.mrb[0].mxu0
        %1643 = vmatprep.mubr.bf16.mxu0 0
        %1644 = vmatmul.mubr.bf16.gmra.mrb[0].mxu0 %v1489
        %v1645 = vpop.f32.mrb[0].mxu0
        %v1646 = vadd.f32 0.0, %v1645
        %v1647 = vpop.f32.mrb[0].mxu0
        %v1648 = vpop.f32.mrb[0].mxu0
        %v1649 = vadd.f32 0.0, %v1648
        %v1650 = vpop.f32.mrb[0].mxu0
        %1651 = vmatprep.mubr.bf16.mxu0 0
        %1652 = vmatmul.mubr.bf16.gmra.mrb[0].mxu0 %v1492
        %v1653 = vpop.f32.mrb[0].mxu0
        %v1654 = vadd.f32 0.0, %v1653
        %v1655 = vpop.f32.mrb[0].mxu0
        %v1656 = vpop.f32.mrb[0].mxu0
        %v1657 = vadd.f32 0.0, %v1656
        %v1658 = vpop.f32.mrb[0].mxu0
        %1659 = vmatprep.mubr.bf16.mxu0 0
        %1660 = vmatmul.mubr.bf16.gmra.mrb[0].mxu0 %v1495
        %v1661 = vpop.f32.mrb[0].mxu0
        %v1662 = vadd.f32 0.0, %v1661
        %v1663 = vpop.f32.mrb[0].mxu0
        %v1664 = vpop.f32.mrb[0].mxu0
        %v1665 = vadd.f32 0.0, %v1664
        %v1666 = vpop.f32.mrb[0].mxu0
        %1667 = vmatprep.mubr.bf16.mxu0 0
        %1668 = vmatmul.mubr.bf16.gmra.mrb[0].mxu0 %v1498
        %v1669 = vpop.f32.mrb[0].mxu0
        %v1670 = vadd.f32 0.0, %v1669
        %v1671 = vpop.f32.mrb[0].mxu0
        %v1672 = vpop.f32.mrb[0].mxu0
        %v1673 = vadd.f32 0.0, %v1672
        %v1674 = vpop.f32.mrb[0].mxu0
        %1675 = vmatprep.mubr.bf16.mxu0 0
        %1676 = vmatmul.mubr.bf16.gmra.mrb[0].mxu0 %v1501
        %v1677 = vpop.f32.mrb[0].mxu0
        %v1678 = vadd.f32 0.0, %v1677
        %v1679 = vpop.f32.mrb[0].mxu0
        %v1680 = vpop.f32.mrb[0].mxu0
        %v1681 = vadd.f32 0.0, %v1680
        %v1682 = vpop.f32.mrb[0].mxu0
        %1683 = vmatprep.mubr.bf16.mxu0 0
        %1684 = vmatmul.mubr.bf16.gmra.mrb[0].mxu0 %v1504
        %v1685 = vpop.f32.mrb[0].mxu0
        %v1686 = vadd.f32 0.0, %v1685
        %v1687 = vpop.f32.mrb[0].mxu0
        %v1688 = vpop.f32.mrb[0].mxu0
        %v1689 = vadd.f32 0.0, %v1688
        %v1690 = vpop.f32.mrb[0].mxu0
        %1691 = vmatprep.mubr.bf16.mxu0 0
        %1692 = vmatmul.mubr.bf16.gmra.mrb[0].mxu0 %v1507
        %v1693 = vpop.f32.mrb[0].mxu0
        %v1694 = vadd.f32 0.0, %v1693
        %v1695 = vpop.f32.mrb[0].mxu0
        %v1696 = vpop.f32.mrb[0].mxu0
        %v1697 = vadd.f32 0.0, %v1696
        %v1698 = vpop.f32.mrb[0].mxu0
        %1699 = vmatprep.mubr.bf16.mxu0 0
        %1700 = vmatmul.mubr.bf16.gmra.mrb[0].mxu0 %v1510
        %v1701 = vpop.f32.mrb[0].mxu0
        %v1702 = vadd.f32 0.0, %v1701
        %v1703 = vpop.f32.mrb[0].mxu0
        %v1704 = vpop.f32.mrb[0].mxu0
        %v1705 = vadd.f32 0.0, %v1704
        %v1706 = vpop.f32.mrb[0].mxu0
        %1707 = vmatprep.mubr.bf16.mxu0 0
        %1708 = vmatmul.mubr.bf16.gmra.mrb[0].mxu0 %v1513
        %v1709 = vpop.f32.mrb[0].mxu0
        %v1710 = vadd.f32 0.0, %v1709
        %v1711 = vpop.f32.mrb[0].mxu0
        %v1712 = vpop.f32.mrb[0].mxu0
        %v1713 = vadd.f32 0.0, %v1712
        %v1714 = vpop.f32.mrb[0].mxu0
        %1715 = vmatprep.mubr.bf16.mxu0 0
        %1716 = vmatmul.mubr.bf16.gmra.mrb[0].mxu0 %v1516
        %v1717 = vpop.f32.mrb[0].mxu0
        %v1718 = vadd.f32 0.0, %v1717
        %v1719 = vpop.f32.mrb[0].mxu0
        %v1720 = vpop.f32.mrb[0].mxu0
        %v1721 = vadd.f32 0.0, %v1720
        %v1722 = vpop.f32.mrb[0].mxu0
        %1723 = vmatprep.mubr.bf16.mxu0 0
        %1724 = vmatmul.mubr.bf16.gmra.mrb[0].mxu0 %v1519
        %v1725 = vpop.f32.mrb[0].mxu0
        %v1726 = vadd.f32 0.0, %v1725
        %v1727 = vpop.f32.mrb[0].mxu0
        %v1728 = vpop.f32.mrb[0].mxu0
        %v1729 = vadd.f32 0.0, %v1728
        %v1730 = vpop.f32.mrb[0].mxu0
        %1731 = vmatprep.mubr.bf16.mxu0 0
        %1732 = vmatmul.mubr.bf16.gmra.mrb[0].mxu0 %v1522
        %v1733 = vpop.f32.mrb[0].mxu0
        %v1734 = vadd.f32 0.0, %v1733
        %v1735 = vpop.f32.mrb[0].mxu0
        %v1736 = vpop.f32.mrb[0].mxu0
        %v1737 = vadd.f32 0.0, %v1736
        %v1738 = vpop.f32.mrb[0].mxu0
        %1739 = vmatprep.mubr.bf16.mxu0 0
        %1740 = vmatmul.mubr.bf16.gmra.mrb[0].mxu0 %v1525
        %v1741 = vpop.f32.mrb[0].mxu0
        %v1742 = vadd.f32 0.0, %v1741
        %v1743 = vpop.f32.mrb[0].mxu0
        %v1744 = vpop.f32.mrb[0].mxu0
        %v1745 = vadd.f32 0.0, %v1744
        %v1746 = vpop.f32.mrb[0].mxu0
        %1747 = vmatprep.mubr.bf16.mxu0 0
        %1748 = vmatmul.mubr.bf16.gmra.mrb[0].mxu0 %v1528
        %v1749 = vpop.f32.mrb[0].mxu0
        %v1750 = vadd.f32 0.0, %v1749
        %v1751 = vpop.f32.mrb[0].mxu0
        %v1752 = vpop.f32.mrb[0].mxu0
        %v1753 = vadd.f32 0.0, %v1752
        %v1754 = vpop.f32.mrb[0].mxu0
        %1755 = vmatprep.mubr.bf16.mxu0 0
        %1756 = vmatmul.mubr.bf16.gmra.mrb[0].mxu0 %v1531
        %v1757 = vpop.f32.mrb[0].mxu0
        %v1758 = vadd.f32 0.0, %v1757
        %v1759 = vpop.f32.mrb[0].mxu0
        %v1760 = vpop.f32.mrb[0].mxu0
        %v1761 = vadd.f32 0.0, %v1760
        %v1762 = vpop.f32.mrb[0].mxu0
        %1763 = vmatprep.mubr.bf16.mxu0 0
        %1764 = vmatmul.mubr.bf16.gmra.mrb[0].mxu0 %v1534
        %v1765 = vpop.f32.mrb[0].mxu0
        %v1766 = vadd.f32 0.0, %v1765
        %v1767 = vpop.f32.mrb[0].mxu0
        %v1768 = vpop.f32.mrb[0].mxu0
        %v1769 = vadd.f32 0.0, %v1768
        %v1770 = vpop.f32.mrb[0].mxu0
        %1771 = vmatprep.mubr.bf16.mxu0 0
        %1772 = vmatmul.mubr.bf16.gmra.mrb[0].mxu0 %v1537
        %v1773 = vpop.f32.mrb[0].mxu0
        %v1774 = vadd.f32 0.0, %v1773
        %v1775 = vpop.f32.mrb[0].mxu0
        %v1776 = vpop.f32.mrb[0].mxu0
        %v1777 = vadd.f32 0.0, %v1776
        %v1778 = vpop.f32.mrb[0].mxu0
        %1779 = vmatprep.mubr.bf16.mxu0 0
        %1780 = vmatmul.mubr.bf16.gmra.mrb[0].mxu0 %v1540
        %v1781 = vpop.f32.mrb[0].mxu0
        %v1782 = vadd.f32 0.0, %v1781
        %v1783 = vpop.f32.mrb[0].mxu0
        %v1784 = vpop.f32.mrb[0].mxu0
        %v1785 = vadd.f32 0.0, %v1784
        %v1786 = vpop.f32.mrb[0].mxu0
        %1787 = vmatprep.mubr.bf16.mxu0 0
        %1788 = vmatmul.mubr.bf16.gmra.mrb[0].mxu0 %v1543
        %v1789 = vpop.f32.mrb[0].mxu0
        %v1790 = vadd.f32 0.0, %v1789
        %v1791 = vpop.f32.mrb[0].mxu0
        %v1792 = vpop.f32.mrb[0].mxu0
        %v1793 = vadd.f32 0.0, %v1792
        %v1794 = vpop.f32.mrb[0].mxu0
        %1795 = vmatprep.mubr.bf16.mxu0 0
        %1796 = vmatmul.mubr.bf16.gmra.mrb[0].mxu0 %v1546
        %v1797 = vpop.f32.mrb[0].mxu0
        %v1798 = vadd.f32 0.0, %v1797
        %v1799 = vpop.f32.mrb[0].mxu0
        %v1800 = vpop.f32.mrb[0].mxu0
        %v1801 = vadd.f32 0.0, %v1800
        %v1802 = vpop.f32.mrb[0].mxu0
        %1803 = vmatprep.mubr.bf16.mxu0 0
        %1804 = vmatmul.mubr.bf16.gmra.mrb[0].mxu0 %v1549
        %v1805 = vpop.f32.mrb[0].mxu0
        %v1806 = vadd.f32 0.0, %v1805
        %v1807 = vpop.f32.mrb[0].mxu0
        %v1808 = vpop.f32.mrb[0].mxu0
        %v1809 = vadd.f32 0.0, %v1808
        %v1810 = vpop.f32.mrb[0].mxu0
        %1811 = vmatprep.mubr.bf16.mxu0 0
        %1812 = vmatmul.mubr.bf16.gmra.mrb[0].mxu0 %v1552
        %v1813 = vpop.f32.mrb[0].mxu0
        %v1814 = vadd.f32 0.0, %v1813
        %v1815 = vpop.f32.mrb[0].mxu0
        %v1816 = vpop.f32.mrb[0].mxu0
        %v1817 = vadd.f32 0.0, %v1816
        %v1818 = vpop.f32.mrb[0].mxu0
        %1819 = vmatprep.mubr.bf16.mxu0 0
        %1820 = vmatmul.mubr.bf16.gmra.mrb[0].mxu0 %v1555
        %v1821 = vpop.f32.mrb[0].mxu0
        %v1822 = vadd.f32 0.0, %v1821
        %v1823 = vpop.f32.mrb[0].mxu0
        %v1824 = vpop.f32.mrb[0].mxu0
        %v1825 = vadd.f32 0.0, %v1824
        %v1826 = vpop.f32.mrb[0].mxu0
        %1827 = vmatprep.mubr.bf16.mxu0 0
        %1828 = vmatmul.mubr.bf16.gmra.mrb[0].mxu0 %v1558
        %v1829 = vpop.f32.mrb[0].mxu0
        %v1830 = vadd.f32 0.0, %v1829
        %v1831 = vpop.f32.mrb[0].mxu0
        %v1832 = vpop.f32.mrb[0].mxu0
        %v1833 = vadd.f32 0.0, %v1832
        %v1834 = vpop.f32.mrb[0].mxu0
        %1835 = vmatprep.mubr.bf16.mxu0 0
        %1836 = vmatmul.mubr.bf16.gmra.mrb[0].mxu0 %v1561
        %v1837 = vpop.f32.mrb[0].mxu0
        %v1838 = vadd.f32 0.0, %v1837
        %v1839 = vpop.f32.mrb[0].mxu0
        %v1840 = vpop.f32.mrb[0].mxu0
        %v1841 = vadd.f32 0.0, %v1840
        %v1842 = vpop.f32.mrb[0].mxu0
        %1843 = vmatprep.mubr.bf16.mxu0 0
        %1844 = vmatmul.mubr.bf16.gmra.mrb[0].mxu0 %v1564
        %v1845 = vpop.f32.mrb[0].mxu0
        %v1846 = vadd.f32 0.0, %v1845
        %v1847 = vpop.f32.mrb[0].mxu0
        %v1848 = vpop.f32.mrb[0].mxu0
        %v1849 = vadd.f32 0.0, %v1848
        %v1850 = vpop.f32.mrb[0].mxu0
        %1851 = vmatprep.mubr.bf16.mxu0 0
        %1852 = vmatmul.mubr.bf16.gmra.mrb[0].mxu0 %v1567
        %v1853 = vpop.f32.mrb[0].mxu0
        %v1854 = vadd.f32 0.0, %v1853
        %v1855 = vpop.f32.mrb[0].mxu0
        %v1856 = vpop.f32.mrb[0].mxu0
        %v1857 = vadd.f32 0.0, %v1856
        %v1858 = vpop.f32.mrb[0].mxu0
        %1859 = vmatprep.mubr.bf16.mxu0 0
        %1860 = vmatmul.mubr.bf16.gmra.mrb[0].mxu0 %v1570
        %v1861 = vpop.f32.mrb[0].mxu0
        %v1862 = vadd.f32 0.0, %v1861
        %v1863 = vpop.f32.mrb[0].mxu0
        %v1864 = vpop.f32.mrb[0].mxu0
        %v1865 = vadd.f32 0.0, %v1864
        %v1866 = vpop.f32.mrb[0].mxu0
        %1867 = vdwg.mxu0
        %s1868 = scalar_lea.vmem %s1207, 256 [#allocation2]
        %v1869 = vld [vmem:[%s1868] sm:$0xf]
        %v1870 = vld [vmem:[%s1868 + $0x4] sm:$0xf]
        %v1871 = vld [vmem:[%s1868 + $0x8] sm:$0xf]
        %v1872 = vld [vmem:[%s1868 + $0xc] sm:$0xf]
        %v1873 = vld [vmem:[%s1868 + $0x10] sm:$0xf]
        %v1874 = vld [vmem:[%s1868 + $0x14] sm:$0xf]
        %v1875 = vld [vmem:[%s1868 + $0x18] sm:$0xf]
        %v1876 = vld [vmem:[%s1868 + $0x1c] sm:$0xf]
        %v1877 = vld [vmem:[%s1868 + $0x20] sm:$0xf]
        %v1878 = vld [vmem:[%s1868 + $0x24] sm:$0xf]
        %v1879 = vld [vmem:[%s1868 + $0x28] sm:$0xf]
        %v1880 = vld [vmem:[%s1868 + $0x2c] sm:$0xf]
        %v1881 = vld [vmem:[%s1868 + $0x30] sm:$0xf]
        %v1882 = vld [vmem:[%s1868 + $0x34] sm:$0xf]
        %v1883 = vld [vmem:[%s1868 + $0x38] sm:$0xf]
        %v1884 = vld [vmem:[%s1868 + $0x3c] sm:$0xf]
        %v1885 = vld [vmem:[%s1868 + $0x40] sm:$0xf]
        %v1886 = vld [vmem:[%s1868 + $0x44] sm:$0xf]
        %v1887 = vld [vmem:[%s1868 + $0x48] sm:$0xf]
        %v1888 = vld [vmem:[%s1868 + $0x4c] sm:$0xf]
        %v1889 = vld [vmem:[%s1868 + $0x50] sm:$0xf]
        %v1890 = vld [vmem:[%s1868 + $0x54] sm:$0xf]
        %v1891 = vld [vmem:[%s1868 + $0x58] sm:$0xf]
        %v1892 = vld [vmem:[%s1868 + $0x5c] sm:$0xf]
        %v1893 = vld [vmem:[%s1868 + $0x60] sm:$0xf]
        %v1894 = vld [vmem:[%s1868 + $0x64] sm:$0xf]
        %v1895 = vld [vmem:[%s1868 + $0x68] sm:$0xf]
        %v1896 = vld [vmem:[%s1868 + $0x6c] sm:$0xf]
        %v1897 = vld [vmem:[%s1868 + $0x70] sm:$0xf]
        %v1898 = vld [vmem:[%s1868 + $0x74] sm:$0xf]
        %v1899 = vld [vmem:[%s1868 + $0x78] sm:$0xf]
        %v1900 = vld [vmem:[%s1868 + $0x7c] sm:$0xf]
        %v1901 = vld [vmem:[%s1868 + $0x80] sm:$0xf]
        %v1902 = vld [vmem:[%s1868 + $0x84] sm:$0xf]
        %v1903 = vld [vmem:[%s1868 + $0x88] sm:$0xf]
        %v1904 = vld [vmem:[%s1868 + $0x8c] sm:$0xf]
        %v1905 = vld [vmem:[%s1868 + $0x90] sm:$0xf]
        %v1906 = vld [vmem:[%s1868 + $0x94] sm:$0xf]
        %v1907 = vld [vmem:[%s1868 + $0x98] sm:$0xf]
        %v1908 = vld [vmem:[%s1868 + $0x9c] sm:$0xf]
        %v1909 = vld [vmem:[%s1868 + $0xa0] sm:$0xf]
        %v1910 = vld [vmem:[%s1868 + $0xa4] sm:$0xf]
        %v1911 = vld [vmem:[%s1868 + $0xa8] sm:$0xf]
        %v1912 = vld [vmem:[%s1868 + $0xac] sm:$0xf]
        %v1913 = vld [vmem:[%s1868 + $0xb0] sm:$0xf]
        %v1914 = vld [vmem:[%s1868 + $0xb4] sm:$0xf]
        %v1915 = vld [vmem:[%s1868 + $0xb8] sm:$0xf]
        %v1916 = vld [vmem:[%s1868 + $0xbc] sm:$0xf]
        %v1917 = vld [vmem:[%s1868 + $0xc0] sm:$0xf]
        %v1918 = vld [vmem:[%s1868 + $0xc4] sm:$0xf]
        %v1919 = vld [vmem:[%s1868 + $0xc8] sm:$0xf]
        %v1920 = vld [vmem:[%s1868 + $0xcc] sm:$0xf]
        %v1921 = vld [vmem:[%s1868 + $0xd0] sm:$0xf]
        %v1922 = vld [vmem:[%s1868 + $0xd4] sm:$0xf]
        %v1923 = vld [vmem:[%s1868 + $0xd8] sm:$0xf]
        %v1924 = vld [vmem:[%s1868 + $0xdc] sm:$0xf]
        %v1925 = vld [vmem:[%s1868 + $0xe0] sm:$0xf]
        %v1926 = vld [vmem:[%s1868 + $0xe4] sm:$0xf]
        %v1927 = vld [vmem:[%s1868 + $0xe8] sm:$0xf]
        %v1928 = vld [vmem:[%s1868 + $0xec] sm:$0xf]
        %v1929 = vld [vmem:[%s1868 + $0xf0] sm:$0xf]
        %v1930 = vld [vmem:[%s1868 + $0xf4] sm:$0xf]
        %v1931 = vld [vmem:[%s1868 + $0xf8] sm:$0xf]
        %v1932 = vld [vmem:[%s1868 + $0xfc] sm:$0xf]
        %v1997 = vunpack.c.l.b16 %v1869
        %v1998 = vunpack.c.l.b16 %v1870
        %v1999 = vunpack.c.l.b16 %v1871
        %v2000 = vunpack.c.l.b16 %v1872
        %v2001 = vunpack.c.l.b16 %v1873
        %v2002 = vunpack.c.l.b16 %v1874
        %v2003 = vunpack.c.l.b16 %v1875
        %v2004 = vunpack.c.l.b16 %v1876
        %v2005 = vunpack.c.l.b16 %v1877
        %v2006 = vunpack.c.l.b16 %v1878
        %v2007 = vunpack.c.l.b16 %v1879
        %v2008 = vunpack.c.l.b16 %v1880
        %v2009 = vunpack.c.l.b16 %v1881
        %v2010 = vunpack.c.l.b16 %v1882
        %v2011 = vunpack.c.l.b16 %v1883
        %v2012 = vunpack.c.l.b16 %v1884
        %v2013 = vunpack.c.l.b16 %v1885
        %v2014 = vunpack.c.l.b16 %v1886
        %v2015 = vunpack.c.l.b16 %v1887
        %v2016 = vunpack.c.l.b16 %v1888
        %v2017 = vunpack.c.l.b16 %v1889
        %v2018 = vunpack.c.l.b16 %v1890
        %v2019 = vunpack.c.l.b16 %v1891
        %v2020 = vunpack.c.l.b16 %v1892
        %v2021 = vunpack.c.l.b16 %v1893
        %v2022 = vunpack.c.l.b16 %v1894
        %v2023 = vunpack.c.l.b16 %v1895
        %v2024 = vunpack.c.l.b16 %v1896
        %v2025 = vunpack.c.l.b16 %v1897
        %v2026 = vunpack.c.l.b16 %v1898
        %v2027 = vunpack.c.l.b16 %v1899
        %v2028 = vunpack.c.l.b16 %v1900
        %v2029 = vunpack.c.l.b16 %v1901
        %v2030 = vunpack.c.l.b16 %v1902
        %v2031 = vunpack.c.l.b16 %v1903
        %v2032 = vunpack.c.l.b16 %v1904
        %v2033 = vunpack.c.l.b16 %v1905
        %v2034 = vunpack.c.l.b16 %v1906
        %v2035 = vunpack.c.l.b16 %v1907
        %v2036 = vunpack.c.l.b16 %v1908
        %v2037 = vunpack.c.l.b16 %v1909
        %v2038 = vunpack.c.l.b16 %v1910
        %v2039 = vunpack.c.l.b16 %v1911
        %v2040 = vunpack.c.l.b16 %v1912
        %v2041 = vunpack.c.l.b16 %v1913
        %v2042 = vunpack.c.l.b16 %v1914
        %v2043 = vunpack.c.l.b16 %v1915
        %v2044 = vunpack.c.l.b16 %v1916
        %v2045 = vunpack.c.l.b16 %v1917
        %v2046 = vunpack.c.l.b16 %v1918
        %v2047 = vunpack.c.l.b16 %v1919
        %v2048 = vunpack.c.l.b16 %v1920
        %v2049 = vunpack.c.l.b16 %v1921
        %v2050 = vunpack.c.l.b16 %v1922
        %v2051 = vunpack.c.l.b16 %v1923
        %v2052 = vunpack.c.l.b16 %v1924
        %v2053 = vunpack.c.l.b16 %v1925
        %v2054 = vunpack.c.l.b16 %v1926
        %v2055 = vunpack.c.l.b16 %v1927
        %v2056 = vunpack.c.l.b16 %v1928
        %v2057 = vunpack.c.l.b16 %v1929
        %v2058 = vunpack.c.l.b16 %v1930
        %v2059 = vunpack.c.l.b16 %v1931
        %v2060 = vunpack.c.l.b16 %v1932
        %v2061 = vpack.c.b16 %v1998, %v1997
        %v2062 = vpack.c.b16 %v2000, %v1999
        %v2063 = vpack.c.b16 %v2002, %v2001
        %v2064 = vpack.c.b16 %v2004, %v2003
        %v2065 = vpack.c.b16 %v2006, %v2005
        %v2066 = vpack.c.b16 %v2008, %v2007
        %v2067 = vpack.c.b16 %v2010, %v2009
        %v2068 = vpack.c.b16 %v2012, %v2011
        %v2069 = vpack.c.b16 %v2014, %v2013
        %v2070 = vpack.c.b16 %v2016, %v2015
        %v2071 = vpack.c.b16 %v2018, %v2017
        %v2072 = vpack.c.b16 %v2020, %v2019
        %v2073 = vpack.c.b16 %v2022, %v2021
        %v2074 = vpack.c.b16 %v2024, %v2023
        %v2075 = vpack.c.b16 %v2026, %v2025
        %v2076 = vpack.c.b16 %v2028, %v2027
        %v2077 = vpack.c.b16 %v2030, %v2029
        %v2078 = vpack.c.b16 %v2032, %v2031
        %v2079 = vpack.c.b16 %v2034, %v2033
        %v2080 = vpack.c.b16 %v2036, %v2035
        %v2081 = vpack.c.b16 %v2038, %v2037
        %v2082 = vpack.c.b16 %v2040, %v2039
        %v2083 = vpack.c.b16 %v2042, %v2041
        %v2084 = vpack.c.b16 %v2044, %v2043
        %v2085 = vpack.c.b16 %v2046, %v2045
        %v2086 = vpack.c.b16 %v2048, %v2047
        %v2087 = vpack.c.b16 %v2050, %v2049
        %v2088 = vpack.c.b16 %v2052, %v2051
        %v2089 = vpack.c.b16 %v2054, %v2053
        %v2090 = vpack.c.b16 %v2056, %v2055
        %v2091 = vpack.c.b16 %v2058, %v2057
        %v2092 = vpack.c.b16 %v2060, %v2059
        %v2094 = vsel %vm1475, %v2061, 0
        %v2097 = vsel %vm1475, %v2062, 0
        %v2100 = vsel %vm1475, %v2063, 0
        %v2103 = vsel %vm1475, %v2064, 0
        %v2106 = vsel %vm1475, %v2065, 0
        %v2109 = vsel %vm1475, %v2066, 0
        %v2112 = vsel %vm1475, %v2067, 0
        %v2115 = vsel %vm1475, %v2068, 0
        %v2118 = vsel %vm1475, %v2069, 0
        %v2121 = vsel %vm1475, %v2070, 0
        %v2124 = vsel %vm1475, %v2071, 0
        %v2127 = vsel %vm1475, %v2072, 0
        %v2130 = vsel %vm1475, %v2073, 0
        %v2133 = vsel %vm1475, %v2074, 0
        %v2136 = vsel %vm1475, %v2075, 0
        %v2139 = vsel %vm1475, %v2076, 0
        %v2142 = vsel %vm1475, %v2077, 0
        %v2145 = vsel %vm1475, %v2078, 0
        %v2148 = vsel %vm1475, %v2079, 0
        %v2151 = vsel %vm1475, %v2080, 0
        %v2154 = vsel %vm1475, %v2081, 0
        %v2157 = vsel %vm1475, %v2082, 0
        %v2160 = vsel %vm1475, %v2083, 0
        %v2163 = vsel %vm1475, %v2084, 0
        %v2166 = vsel %vm1475, %v2085, 0
        %v2169 = vsel %vm1475, %v2086, 0
        %v2172 = vsel %vm1475, %v2087, 0
        %v2175 = vsel %vm1475, %v2088, 0
        %v2178 = vsel %vm1475, %v2089, 0
        %v2181 = vsel %vm1475, %v2090, 0
        %v2184 = vsel %vm1475, %v2091, 0
        %v2187 = vsel %vm1475, %v2092, 0
        %2189 = vmatprep.subr.bf16.mxu0 0
        %2190 = vmatpush1.bf16.msra.mxu0 %v1472
        %2191 = vmatprep.subr.bf16.mxu0 0
        %2192 = vmatpush1.bf16.msra.mxu0 %v1577
        %2193 = vmatprep.subr.bf16.mxu0 0
        %2194 = vmatpush1.bf16.msra.mxu0 0
        %2195 = vmatprep.subr.bf16.mxu0 0
        %2196 = vmatpush1.bf16.msra.mxu0 0
        %2197 = vmatprep.subr.bf16.mxu0 0
        %2198 = vmatpush1.bf16.msra.mxu0 0
        %2199 = vmatprep.subr.bf16.mxu0 0
        %2200 = vmatpush1.bf16.msra.mxu0 0
        %2201 = vmatprep.subr.bf16.mxu0 0
        %2202 = vmatpush1.bf16.msra.mxu0 0
        %2203 = vmatprep.subr.bf16.mxu0 0
        %2204 = vmatpush1.bf16.msra.mxu0 0
        %2205 = vmatprep.subr.bf16.mxu0 0
        %2206 = vmatpush1.bf16.msra.mxu0 0
        %2207 = vmatprep.subr.bf16.mxu0 0
        %2208 = vmatpush1.bf16.msra.mxu0 0
        %2209 = vmatprep.subr.bf16.mxu0 0
        %2210 = vmatpush1.bf16.msra.mxu0 0
        %2211 = vmatprep.subr.bf16.mxu0 0
        %2212 = vmatpush1.bf16.msra.mxu0 0
        %2213 = vmatprep.subr.bf16.mxu0 0
        %2214 = vmatpush1.bf16.msra.mxu0 0
        %2215 = vmatprep.subr.bf16.mxu0 0
        %2216 = vmatpush1.bf16.msra.mxu0 0
        %2217 = vmatprep.subr.bf16.mxu0 0
        %2218 = vmatpush1.bf16.msra.mxu0 0
        %2219 = vmatprep.subr.bf16.mxu0 0
        %2220 = vmatpush1.bf16.msra.mxu0 0
        %2221 = vmatprep.mubr.bf16.mxu0 0
        %2222 = vmatmul.mubr.bf16.gmra.mrb[0].mxu0 %v2094
        %v2223 = vpop.f32.mrb[0].mxu0
        %v2224 = vadd.f32 0.0, %v2223
        %v2225 = vpop.f32.mrb[0].mxu0
        %v2226 = vpop.f32.mrb[0].mxu0
        %v2227 = vadd.f32 0.0, %v2226
        %v2228 = vpop.f32.mrb[0].mxu0
        %2229 = vmatprep.mubr.bf16.mxu0 0
        %2230 = vmatmul.mubr.bf16.gmra.mrb[0].mxu0 %v2097
        %v2231 = vpop.f32.mrb[0].mxu0
        %v2232 = vadd.f32 0.0, %v2231
        %v2233 = vpop.f32.mrb[0].mxu0
        %v2234 = vpop.f32.mrb[0].mxu0
        %v2235 = vadd.f32 0.0, %v2234
        %v2236 = vpop.f32.mrb[0].mxu0
        %2237 = vmatprep.mubr.bf16.mxu0 0
        %2238 = vmatmul.mubr.bf16.gmra.mrb[0].mxu0 %v2100
        %v2239 = vpop.f32.mrb[0].mxu0
        %v2240 = vadd.f32 0.0, %v2239
        %v2241 = vpop.f32.mrb[0].mxu0
        %v2242 = vpop.f32.mrb[0].mxu0
        %v2243 = vadd.f32 0.0, %v2242
        %v2244 = vpop.f32.mrb[0].mxu0
        %2245 = vmatprep.mubr.bf16.mxu0 0
        %2246 = vmatmul.mubr.bf16.gmra.mrb[0].mxu0 %v2103
        %v2247 = vpop.f32.mrb[0].mxu0
        %v2248 = vadd.f32 0.0, %v2247
        %v2249 = vpop.f32.mrb[0].mxu0
        %v2250 = vpop.f32.mrb[0].mxu0
        %v2251 = vadd.f32 0.0, %v2250
        %v2252 = vpop.f32.mrb[0].mxu0
        %2253 = vmatprep.mubr.bf16.mxu0 0
        %2254 = vmatmul.mubr.bf16.gmra.mrb[0].mxu0 %v2106
        %v2255 = vpop.f32.mrb[0].mxu0
        %v2256 = vadd.f32 0.0, %v2255
        %v2257 = vpop.f32.mrb[0].mxu0
        %v2258 = vpop.f32.mrb[0].mxu0
        %v2259 = vadd.f32 0.0, %v2258
        %v2260 = vpop.f32.mrb[0].mxu0
        %2261 = vmatprep.mubr.bf16.mxu0 0
        %2262 = vmatmul.mubr.bf16.gmra.mrb[0].mxu0 %v2109
        %v2263 = vpop.f32.mrb[0].mxu0
        %v2264 = vadd.f32 0.0, %v2263
        %v2265 = vpop.f32.mrb[0].mxu0
        %v2266 = vpop.f32.mrb[0].mxu0
        %v2267 = vadd.f32 0.0, %v2266
        %v2268 = vpop.f32.mrb[0].mxu0
        %2269 = vmatprep.mubr.bf16.mxu0 0
        %2270 = vmatmul.mubr.bf16.gmra.mrb[0].mxu0 %v2112
        %v2271 = vpop.f32.mrb[0].mxu0
        %v2272 = vadd.f32 0.0, %v2271
        %v2273 = vpop.f32.mrb[0].mxu0
        %v2274 = vpop.f32.mrb[0].mxu0
        %v2275 = vadd.f32 0.0, %v2274
        %v2276 = vpop.f32.mrb[0].mxu0
        %2277 = vmatprep.mubr.bf16.mxu0 0
        %2278 = vmatmul.mubr.bf16.gmra.mrb[0].mxu0 %v2115
        %v2279 = vpop.f32.mrb[0].mxu0
        %v2280 = vadd.f32 0.0, %v2279
        %v2281 = vpop.f32.mrb[0].mxu0
        %v2282 = vpop.f32.mrb[0].mxu0
        %v2283 = vadd.f32 0.0, %v2282
        %v2284 = vpop.f32.mrb[0].mxu0
        %2285 = vmatprep.mubr.bf16.mxu0 0
        %2286 = vmatmul.mubr.bf16.gmra.mrb[0].mxu0 %v2118
        %v2287 = vpop.f32.mrb[0].mxu0
        %v2288 = vadd.f32 0.0, %v2287
        %v2289 = vpop.f32.mrb[0].mxu0
        %v2290 = vpop.f32.mrb[0].mxu0
        %v2291 = vadd.f32 0.0, %v2290
        %v2292 = vpop.f32.mrb[0].mxu0
        %2293 = vmatprep.mubr.bf16.mxu0 0
        %2294 = vmatmul.mubr.bf16.gmra.mrb[0].mxu0 %v2121
        %v2295 = vpop.f32.mrb[0].mxu0
        %v2296 = vadd.f32 0.0, %v2295
        %v2297 = vpop.f32.mrb[0].mxu0
        %v2298 = vpop.f32.mrb[0].mxu0
        %v2299 = vadd.f32 0.0, %v2298
        %v2300 = vpop.f32.mrb[0].mxu0
        %2301 = vmatprep.mubr.bf16.mxu0 0
        %2302 = vmatmul.mubr.bf16.gmra.mrb[0].mxu0 %v2124
        %v2303 = vpop.f32.mrb[0].mxu0
        %v2304 = vadd.f32 0.0, %v2303
        %v2305 = vpop.f32.mrb[0].mxu0
        %v2306 = vpop.f32.mrb[0].mxu0
        %v2307 = vadd.f32 0.0, %v2306
        %v2308 = vpop.f32.mrb[0].mxu0
        %2309 = vmatprep.mubr.bf16.mxu0 0
        %2310 = vmatmul.mubr.bf16.gmra.mrb[0].mxu0 %v2127
        %v2311 = vpop.f32.mrb[0].mxu0
        %v2312 = vadd.f32 0.0, %v2311
        %v2313 = vpop.f32.mrb[0].mxu0
        %v2314 = vpop.f32.mrb[0].mxu0
        %v2315 = vadd.f32 0.0, %v2314
        %v2316 = vpop.f32.mrb[0].mxu0
        %2317 = vmatprep.mubr.bf16.mxu0 0
        %2318 = vmatmul.mubr.bf16.gmra.mrb[0].mxu0 %v2130
        %v2319 = vpop.f32.mrb[0].mxu0
        %v2320 = vadd.f32 0.0, %v2319
        %v2321 = vpop.f32.mrb[0].mxu0
        %v2322 = vpop.f32.mrb[0].mxu0
        %v2323 = vadd.f32 0.0, %v2322
        %v2324 = vpop.f32.mrb[0].mxu0
        %2325 = vmatprep.mubr.bf16.mxu0 0
        %2326 = vmatmul.mubr.bf16.gmra.mrb[0].mxu0 %v2133
        %v2327 = vpop.f32.mrb[0].mxu0
        %v2328 = vadd.f32 0.0, %v2327
        %v2329 = vpop.f32.mrb[0].mxu0
        %v2330 = vpop.f32.mrb[0].mxu0
        %v2331 = vadd.f32 0.0, %v2330
        %v2332 = vpop.f32.mrb[0].mxu0
        %2333 = vmatprep.mubr.bf16.mxu0 0
        %2334 = vmatmul.mubr.bf16.gmra.mrb[0].mxu0 %v2136
        %v2335 = vpop.f32.mrb[0].mxu0
        %v2336 = vadd.f32 0.0, %v2335
        %v2337 = vpop.f32.mrb[0].mxu0
        %v2338 = vpop.f32.mrb[0].mxu0
        %v2339 = vadd.f32 0.0, %v2338
        %v2340 = vpop.f32.mrb[0].mxu0
        %2341 = vmatprep.mubr.bf16.mxu0 0
        %2342 = vmatmul.mubr.bf16.gmra.mrb[0].mxu0 %v2139
        %v2343 = vpop.f32.mrb[0].mxu0
        %v2344 = vadd.f32 0.0, %v2343
        %v2345 = vpop.f32.mrb[0].mxu0
        %v2346 = vpop.f32.mrb[0].mxu0
        %v2347 = vadd.f32 0.0, %v2346
        %v2348 = vpop.f32.mrb[0].mxu0
        %2349 = vmatprep.mubr.bf16.mxu0 0
        %2350 = vmatmul.mubr.bf16.gmra.mrb[0].mxu0 %v2142
        %v2351 = vpop.f32.mrb[0].mxu0
        %v2352 = vadd.f32 0.0, %v2351
        %v2353 = vpop.f32.mrb[0].mxu0
        %v2354 = vpop.f32.mrb[0].mxu0
        %v2355 = vadd.f32 0.0, %v2354
        %v2356 = vpop.f32.mrb[0].mxu0
        %2357 = vmatprep.mubr.bf16.mxu0 0
        %2358 = vmatmul.mubr.bf16.gmra.mrb[0].mxu0 %v2145
        %v2359 = vpop.f32.mrb[0].mxu0
        %v2360 = vadd.f32 0.0, %v2359
        %v2361 = vpop.f32.mrb[0].mxu0
        %v2362 = vpop.f32.mrb[0].mxu0
        %v2363 = vadd.f32 0.0, %v2362
        %v2364 = vpop.f32.mrb[0].mxu0
        %2365 = vmatprep.mubr.bf16.mxu0 0
        %2366 = vmatmul.mubr.bf16.gmra.mrb[0].mxu0 %v2148
        %v2367 = vpop.f32.mrb[0].mxu0
        %v2368 = vadd.f32 0.0, %v2367
        %v2369 = vpop.f32.mrb[0].mxu0
        %v2370 = vpop.f32.mrb[0].mxu0
        %v2371 = vadd.f32 0.0, %v2370
        %v2372 = vpop.f32.mrb[0].mxu0
        %2373 = vmatprep.mubr.bf16.mxu0 0
        %2374 = vmatmul.mubr.bf16.gmra.mrb[0].mxu0 %v2151
        %v2375 = vpop.f32.mrb[0].mxu0
        %v2376 = vadd.f32 0.0, %v2375
        %v2377 = vpop.f32.mrb[0].mxu0
        %v2378 = vpop.f32.mrb[0].mxu0
        %v2379 = vadd.f32 0.0, %v2378
        %v2380 = vpop.f32.mrb[0].mxu0
        %2381 = vmatprep.mubr.bf16.mxu0 0
        %2382 = vmatmul.mubr.bf16.gmra.mrb[0].mxu0 %v2154
        %v2383 = vpop.f32.mrb[0].mxu0
        %v2384 = vadd.f32 0.0, %v2383
        %v2385 = vpop.f32.mrb[0].mxu0
        %v2386 = vpop.f32.mrb[0].mxu0
        %v2387 = vadd.f32 0.0, %v2386
        %v2388 = vpop.f32.mrb[0].mxu0
        %2389 = vmatprep.mubr.bf16.mxu0 0
        %2390 = vmatmul.mubr.bf16.gmra.mrb[0].mxu0 %v2157
        %v2391 = vpop.f32.mrb[0].mxu0
        %v2392 = vadd.f32 0.0, %v2391
        %v2393 = vpop.f32.mrb[0].mxu0
        %v2394 = vpop.f32.mrb[0].mxu0
        %v2395 = vadd.f32 0.0, %v2394
        %v2396 = vpop.f32.mrb[0].mxu0
        %2397 = vmatprep.mubr.bf16.mxu0 0
        %2398 = vmatmul.mubr.bf16.gmra.mrb[0].mxu0 %v2160
        %v2399 = vpop.f32.mrb[0].mxu0
        %v2400 = vadd.f32 0.0, %v2399
        %v2401 = vpop.f32.mrb[0].mxu0
        %v2402 = vpop.f32.mrb[0].mxu0
        %v2403 = vadd.f32 0.0, %v2402
        %v2404 = vpop.f32.mrb[0].mxu0
        %2405 = vmatprep.mubr.bf16.mxu0 0
        %2406 = vmatmul.mubr.bf16.gmra.mrb[0].mxu0 %v2163
        %v2407 = vpop.f32.mrb[0].mxu0
        %v2408 = vadd.f32 0.0, %v2407
        %v2409 = vpop.f32.mrb[0].mxu0
        %v2410 = vpop.f32.mrb[0].mxu0
        %v2411 = vadd.f32 0.0, %v2410
        %v2412 = vpop.f32.mrb[0].mxu0
        %2413 = vmatprep.mubr.bf16.mxu0 0
        %2414 = vmatmul.mubr.bf16.gmra.mrb[0].mxu0 %v2166
        %v2415 = vpop.f32.mrb[0].mxu0
        %v2416 = vadd.f32 0.0, %v2415
        %v2417 = vpop.f32.mrb[0].mxu0
        %v2418 = vpop.f32.mrb[0].mxu0
        %v2419 = vadd.f32 0.0, %v2418
        %v2420 = vpop.f32.mrb[0].mxu0
        %2421 = vmatprep.mubr.bf16.mxu0 0
        %2422 = vmatmul.mubr.bf16.gmra.mrb[0].mxu0 %v2169
        %v2423 = vpop.f32.mrb[0].mxu0
        %v2424 = vadd.f32 0.0, %v2423
        %v2425 = vpop.f32.mrb[0].mxu0
        %v2426 = vpop.f32.mrb[0].mxu0
        %v2427 = vadd.f32 0.0, %v2426
        %v2428 = vpop.f32.mrb[0].mxu0
        %2429 = vmatprep.mubr.bf16.mxu0 0
        %2430 = vmatmul.mubr.bf16.gmra.mrb[0].mxu0 %v2172
        %v2431 = vpop.f32.mrb[0].mxu0
        %v2432 = vadd.f32 0.0, %v2431
        %v2433 = vpop.f32.mrb[0].mxu0
        %v2434 = vpop.f32.mrb[0].mxu0
        %v2435 = vadd.f32 0.0, %v2434
        %v2436 = vpop.f32.mrb[0].mxu0
        %2437 = vmatprep.mubr.bf16.mxu0 0
        %2438 = vmatmul.mubr.bf16.gmra.mrb[0].mxu0 %v2175
        %v2439 = vpop.f32.mrb[0].mxu0
        %v2440 = vadd.f32 0.0, %v2439
        %v2441 = vpop.f32.mrb[0].mxu0
        %v2442 = vpop.f32.mrb[0].mxu0
        %v2443 = vadd.f32 0.0, %v2442
        %v2444 = vpop.f32.mrb[0].mxu0
        %2445 = vmatprep.mubr.bf16.mxu0 0
        %2446 = vmatmul.mubr.bf16.gmra.mrb[0].mxu0 %v2178
        %v2447 = vpop.f32.mrb[0].mxu0
        %v2448 = vadd.f32 0.0, %v2447
        %v2449 = vpop.f32.mrb[0].mxu0
        %v2450 = vpop.f32.mrb[0].mxu0
        %v2451 = vadd.f32 0.0, %v2450
        %v2452 = vpop.f32.mrb[0].mxu0
        %2453 = vmatprep.mubr.bf16.mxu0 0
        %2454 = vmatmul.mubr.bf16.gmra.mrb[0].mxu0 %v2181
        %v2455 = vpop.f32.mrb[0].mxu0
        %v2456 = vadd.f32 0.0, %v2455
        %v2457 = vpop.f32.mrb[0].mxu0
        %v2458 = vpop.f32.mrb[0].mxu0
        %v2459 = vadd.f32 0.0, %v2458
        %v2460 = vpop.f32.mrb[0].mxu0
        %2461 = vmatprep.mubr.bf16.mxu0 0
        %2462 = vmatmul.mubr.bf16.gmra.mrb[0].mxu0 %v2184
        %v2463 = vpop.f32.mrb[0].mxu0
        %v2464 = vadd.f32 0.0, %v2463
        %v2465 = vpop.f32.mrb[0].mxu0
        %v2466 = vpop.f32.mrb[0].mxu0
        %v2467 = vadd.f32 0.0, %v2466
        %v2468 = vpop.f32.mrb[0].mxu0
        %2469 = vmatprep.mubr.bf16.mxu0 0
        %2470 = vmatmul.mubr.bf16.gmra.mrb[0].mxu0 %v2187
        %v2471 = vpop.f32.mrb[0].mxu0
        %v2472 = vadd.f32 0.0, %v2471
        %v2473 = vpop.f32.mrb[0].mxu0
        %v2474 = vpop.f32.mrb[0].mxu0
        %v2475 = vadd.f32 0.0, %v2474
        %v2476 = vpop.f32.mrb[0].mxu0
        %2477 = vdwg.mxu0
        %v2478 = vmax.f32 %v1614, %v2224
        %v2479 = vmax.f32 %v1617, %v2227
        %v2480 = vmax.f32 %v1622, %v2232
        %v2481 = vmax.f32 %v1625, %v2235
        %v2482 = vmax.f32 %v1630, %v2240
        %v2483 = vmax.f32 %v1633, %v2243
        %v2484 = vmax.f32 %v1638, %v2248
        %v2485 = vmax.f32 %v1641, %v2251
        %v2486 = vmax.f32 %v1646, %v2256
        %v2487 = vmax.f32 %v1649, %v2259
        %v2488 = vmax.f32 %v1654, %v2264
        %v2489 = vmax.f32 %v1657, %v2267
        %v2490 = vmax.f32 %v1662, %v2272
        %v2491 = vmax.f32 %v1665, %v2275
        %v2492 = vmax.f32 %v1670, %v2280
        %v2493 = vmax.f32 %v1673, %v2283
        %v2494 = vmax.f32 %v1678, %v2288
        %v2495 = vmax.f32 %v1681, %v2291
        %v2496 = vmax.f32 %v1686, %v2296
        %v2497 = vmax.f32 %v1689, %v2299
        %v2498 = vmax.f32 %v1694, %v2304
        %v2499 = vmax.f32 %v1697, %v2307
        %v2500 = vmax.f32 %v1702, %v2312
        %v2501 = vmax.f32 %v1705, %v2315
        %v2502 = vmax.f32 %v1710, %v2320
        %v2503 = vmax.f32 %v1713, %v2323
        %v2504 = vmax.f32 %v1718, %v2328
        %v2505 = vmax.f32 %v1721, %v2331
        %v2506 = vmax.f32 %v1726, %v2336
        %v2507 = vmax.f32 %v1729, %v2339
        %v2508 = vmax.f32 %v1734, %v2344
        %v2509 = vmax.f32 %v1737, %v2347
        %v2510 = vmax.f32 %v1742, %v2352
        %v2511 = vmax.f32 %v1745, %v2355
        %v2512 = vmax.f32 %v1750, %v2360
        %v2513 = vmax.f32 %v1753, %v2363
        %v2514 = vmax.f32 %v1758, %v2368
        %v2515 = vmax.f32 %v1761, %v2371
        %v2516 = vmax.f32 %v1766, %v2376
        %v2517 = vmax.f32 %v1769, %v2379
        %v2518 = vmax.f32 %v1774, %v2384
        %v2519 = vmax.f32 %v1777, %v2387
        %v2520 = vmax.f32 %v1782, %v2392
        %v2521 = vmax.f32 %v1785, %v2395
        %v2522 = vmax.f32 %v1790, %v2400
        %v2523 = vmax.f32 %v1793, %v2403
        %v2524 = vmax.f32 %v1798, %v2408
        %v2525 = vmax.f32 %v1801, %v2411
        %v2526 = vmax.f32 %v1806, %v2416
        %v2527 = vmax.f32 %v1809, %v2419
        %v2528 = vmax.f32 %v1814, %v2424
        %v2529 = vmax.f32 %v1817, %v2427
        %v2530 = vmax.f32 %v1822, %v2432
        %v2531 = vmax.f32 %v1825, %v2435
        %v2532 = vmax.f32 %v1830, %v2440
        %v2533 = vmax.f32 %v1833, %v2443
        %v2534 = vmax.f32 %v1838, %v2448
        %v2535 = vmax.f32 %v1841, %v2451
        %v2536 = vmax.f32 %v1846, %v2456
        %v2537 = vmax.f32 %v1849, %v2459
        %v2538 = vmax.f32 %v1854, %v2464
        %v2539 = vmax.f32 %v1857, %v2467
        %v2540 = vmax.f32 %v1862, %v2472
        %v2541 = vmax.f32 %v1865, %v2475
        %s2542 = scalar_lea.vmem %s1207, 512 [#allocation2]
        %v2543 = vld [vmem:[%s2542] sm:$0xf]
        %v2544 = vld [vmem:[%s2542 + $0x4] sm:$0xf]
        %v2545 = vld [vmem:[%s2542 + $0x8] sm:$0xf]
        %v2546 = vld [vmem:[%s2542 + $0xc] sm:$0xf]
        %v2547 = vld [vmem:[%s2542 + $0x10] sm:$0xf]
        %v2548 = vld [vmem:[%s2542 + $0x14] sm:$0xf]
        %v2549 = vld [vmem:[%s2542 + $0x18] sm:$0xf]
        %v2550 = vld [vmem:[%s2542 + $0x1c] sm:$0xf]
        %v2551 = vld [vmem:[%s2542 + $0x20] sm:$0xf]
        %v2552 = vld [vmem:[%s2542 + $0x24] sm:$0xf]
        %v2553 = vld [vmem:[%s2542 + $0x28] sm:$0xf]
        %v2554 = vld [vmem:[%s2542 + $0x2c] sm:$0xf]
        %v2555 = vld [vmem:[%s2542 + $0x30] sm:$0xf]
        %v2556 = vld [vmem:[%s2542 + $0x34] sm:$0xf]
        %v2557 = vld [vmem:[%s2542 + $0x38] sm:$0xf]
        %v2558 = vld [vmem:[%s2542 + $0x3c] sm:$0xf]
        %v2559 = vld [vmem:[%s2542 + $0x40] sm:$0xf]
        %v2560 = vld [vmem:[%s2542 + $0x44] sm:$0xf]
        %v2561 = vld [vmem:[%s2542 + $0x48] sm:$0xf]
        %v2562 = vld [vmem:[%s2542 + $0x4c] sm:$0xf]
        %v2563 = vld [vmem:[%s2542 + $0x50] sm:$0xf]
        %v2564 = vld [vmem:[%s2542 + $0x54] sm:$0xf]
        %v2565 = vld [vmem:[%s2542 + $0x58] sm:$0xf]
        %v2566 = vld [vmem:[%s2542 + $0x5c] sm:$0xf]
        %v2567 = vld [vmem:[%s2542 + $0x60] sm:$0xf]
        %v2568 = vld [vmem:[%s2542 + $0x64] sm:$0xf]
        %v2569 = vld [vmem:[%s2542 + $0x68] sm:$0xf]
        %v2570 = vld [vmem:[%s2542 + $0x6c] sm:$0xf]
        %v2571 = vld [vmem:[%s2542 + $0x70] sm:$0xf]
        %v2572 = vld [vmem:[%s2542 + $0x74] sm:$0xf]
        %v2573 = vld [vmem:[%s2542 + $0x78] sm:$0xf]
        %v2574 = vld [vmem:[%s2542 + $0x7c] sm:$0xf]
        %v2575 = vld [vmem:[%s2542 + $0x80] sm:$0xf]
        %v2576 = vld [vmem:[%s2542 + $0x84] sm:$0xf]
        %v2577 = vld [vmem:[%s2542 + $0x88] sm:$0xf]
        %v2578 = vld [vmem:[%s2542 + $0x8c] sm:$0xf]
        %v2579 = vld [vmem:[%s2542 + $0x90] sm:$0xf]
        %v2580 = vld [vmem:[%s2542 + $0x94] sm:$0xf]
        %v2581 = vld [vmem:[%s2542 + $0x98] sm:$0xf]
        %v2582 = vld [vmem:[%s2542 + $0x9c] sm:$0xf]
        %v2583 = vld [vmem:[%s2542 + $0xa0] sm:$0xf]
        %v2584 = vld [vmem:[%s2542 + $0xa4] sm:$0xf]
        %v2585 = vld [vmem:[%s2542 + $0xa8] sm:$0xf]
        %v2586 = vld [vmem:[%s2542 + $0xac] sm:$0xf]
        %v2587 = vld [vmem:[%s2542 + $0xb0] sm:$0xf]
        %v2588 = vld [vmem:[%s2542 + $0xb4] sm:$0xf]
        %v2589 = vld [vmem:[%s2542 + $0xb8] sm:$0xf]
        %v2590 = vld [vmem:[%s2542 + $0xbc] sm:$0xf]
        %v2591 = vld [vmem:[%s2542 + $0xc0] sm:$0xf]
        %v2592 = vld [vmem:[%s2542 + $0xc4] sm:$0xf]
        %v2593 = vld [vmem:[%s2542 + $0xc8] sm:$0xf]
        %v2594 = vld [vmem:[%s2542 + $0xcc] sm:$0xf]
        %v2595 = vld [vmem:[%s2542 + $0xd0] sm:$0xf]
        %v2596 = vld [vmem:[%s2542 + $0xd4] sm:$0xf]
        %v2597 = vld [vmem:[%s2542 + $0xd8] sm:$0xf]
        %v2598 = vld [vmem:[%s2542 + $0xdc] sm:$0xf]
        %v2599 = vld [vmem:[%s2542 + $0xe0] sm:$0xf]
        %v2600 = vld [vmem:[%s2542 + $0xe4] sm:$0xf]
        %v2601 = vld [vmem:[%s2542 + $0xe8] sm:$0xf]
        %v2602 = vld [vmem:[%s2542 + $0xec] sm:$0xf]
        %v2603 = vld [vmem:[%s2542 + $0xf0] sm:$0xf]
        %v2604 = vld [vmem:[%s2542 + $0xf4] sm:$0xf]
        %v2605 = vld [vmem:[%s2542 + $0xf8] sm:$0xf]
        %v2606 = vld [vmem:[%s2542 + $0xfc] sm:$0xf]
        %v2671 = vunpack.c.l.b16 %v2543
        %v2672 = vunpack.c.l.b16 %v2544
        %v2673 = vunpack.c.l.b16 %v2545
        %v2674 = vunpack.c.l.b16 %v2546
        %v2675 = vunpack.c.l.b16 %v2547
        %v2676 = vunpack.c.l.b16 %v2548
        %v2677 = vunpack.c.l.b16 %v2549
        %v2678 = vunpack.c.l.b16 %v2550
        %v2679 = vunpack.c.l.b16 %v2551
        %v2680 = vunpack.c.l.b16 %v2552
        %v2681 = vunpack.c.l.b16 %v2553
        %v2682 = vunpack.c.l.b16 %v2554
        %v2683 = vunpack.c.l.b16 %v2555
        %v2684 = vunpack.c.l.b16 %v2556
        %v2685 = vunpack.c.l.b16 %v2557
        %v2686 = vunpack.c.l.b16 %v2558
        %v2687 = vunpack.c.l.b16 %v2559
        %v2688 = vunpack.c.l.b16 %v2560
        %v2689 = vunpack.c.l.b16 %v2561
        %v2690 = vunpack.c.l.b16 %v2562
        %v2691 = vunpack.c.l.b16 %v2563
        %v2692 = vunpack.c.l.b16 %v2564
        %v2693 = vunpack.c.l.b16 %v2565
        %v2694 = vunpack.c.l.b16 %v2566
        %v2695 = vunpack.c.l.b16 %v2567
        %v2696 = vunpack.c.l.b16 %v2568
        %v2697 = vunpack.c.l.b16 %v2569
        %v2698 = vunpack.c.l.b16 %v2570
        %v2699 = vunpack.c.l.b16 %v2571
        %v2700 = vunpack.c.l.b16 %v2572
        %v2701 = vunpack.c.l.b16 %v2573
        %v2702 = vunpack.c.l.b16 %v2574
        %v2703 = vunpack.c.l.b16 %v2575
        %v2704 = vunpack.c.l.b16 %v2576
        %v2705 = vunpack.c.l.b16 %v2577
        %v2706 = vunpack.c.l.b16 %v2578
        %v2707 = vunpack.c.l.b16 %v2579
        %v2708 = vunpack.c.l.b16 %v2580
        %v2709 = vunpack.c.l.b16 %v2581
        %v2710 = vunpack.c.l.b16 %v2582
        %v2711 = vunpack.c.l.b16 %v2583
        %v2712 = vunpack.c.l.b16 %v2584
        %v2713 = vunpack.c.l.b16 %v2585
        %v2714 = vunpack.c.l.b16 %v2586
        %v2715 = vunpack.c.l.b16 %v2587
        %v2716 = vunpack.c.l.b16 %v2588
        %v2717 = vunpack.c.l.b16 %v2589
        %v2718 = vunpack.c.l.b16 %v2590
        %v2719 = vunpack.c.l.b16 %v2591
        %v2720 = vunpack.c.l.b16 %v2592
        %v2721 = vunpack.c.l.b16 %v2593
        %v2722 = vunpack.c.l.b16 %v2594
        %v2723 = vunpack.c.l.b16 %v2595
        %v2724 = vunpack.c.l.b16 %v2596
        %v2725 = vunpack.c.l.b16 %v2597
        %v2726 = vunpack.c.l.b16 %v2598
        %v2727 = vunpack.c.l.b16 %v2599
        %v2728 = vunpack.c.l.b16 %v2600
        %v2729 = vunpack.c.l.b16 %v2601
        %v2730 = vunpack.c.l.b16 %v2602
        %v2731 = vunpack.c.l.b16 %v2603
        %v2732 = vunpack.c.l.b16 %v2604
        %v2733 = vunpack.c.l.b16 %v2605
        %v2734 = vunpack.c.l.b16 %v2606
        %v2735 = vpack.c.b16 %v2672, %v2671
        %v2736 = vpack.c.b16 %v2674, %v2673
        %v2737 = vpack.c.b16 %v2676, %v2675
        %v2738 = vpack.c.b16 %v2678, %v2677
        %v2739 = vpack.c.b16 %v2680, %v2679
        %v2740 = vpack.c.b16 %v2682, %v2681
        %v2741 = vpack.c.b16 %v2684, %v2683
        %v2742 = vpack.c.b16 %v2686, %v2685
        %v2743 = vpack.c.b16 %v2688, %v2687
        %v2744 = vpack.c.b16 %v2690, %v2689
        %v2745 = vpack.c.b16 %v2692, %v2691
        %v2746 = vpack.c.b16 %v2694, %v2693
        %v2747 = vpack.c.b16 %v2696, %v2695
        %v2748 = vpack.c.b16 %v2698, %v2697
        %v2749 = vpack.c.b16 %v2700, %v2699
        %v2750 = vpack.c.b16 %v2702, %v2701
        %v2751 = vpack.c.b16 %v2704, %v2703
        %v2752 = vpack.c.b16 %v2706, %v2705
        %v2753 = vpack.c.b16 %v2708, %v2707
        %v2754 = vpack.c.b16 %v2710, %v2709
        %v2755 = vpack.c.b16 %v2712, %v2711
        %v2756 = vpack.c.b16 %v2714, %v2713
        %v2757 = vpack.c.b16 %v2716, %v2715
        %v2758 = vpack.c.b16 %v2718, %v2717
        %v2759 = vpack.c.b16 %v2720, %v2719
        %v2760 = vpack.c.b16 %v2722, %v2721
        %v2761 = vpack.c.b16 %v2724, %v2723
        %v2762 = vpack.c.b16 %v2726, %v2725
        %v2763 = vpack.c.b16 %v2728, %v2727
        %v2764 = vpack.c.b16 %v2730, %v2729
        %v2765 = vpack.c.b16 %v2732, %v2731
        %v2766 = vpack.c.b16 %v2734, %v2733
        %v2768 = vsel %vm1475, %v2735, 0
        %v2771 = vsel %vm1475, %v2736, 0
        %v2774 = vsel %vm1475, %v2737, 0
        %v2777 = vsel %vm1475, %v2738, 0
        %v2780 = vsel %vm1475, %v2739, 0
        %v2783 = vsel %vm1475, %v2740, 0
        %v2786 = vsel %vm1475, %v2741, 0
        %v2789 = vsel %vm1475, %v2742, 0
        %v2792 = vsel %vm1475, %v2743, 0
        %v2795 = vsel %vm1475, %v2744, 0
        %v2798 = vsel %vm1475, %v2745, 0
        %v2801 = vsel %vm1475, %v2746, 0
        %v2804 = vsel %vm1475, %v2747, 0
        %v2807 = vsel %vm1475, %v2748, 0
        %v2810 = vsel %vm1475, %v2749, 0
        %v2813 = vsel %vm1475, %v2750, 0
        %v2816 = vsel %vm1475, %v2751, 0
        %v2819 = vsel %vm1475, %v2752, 0
        %v2822 = vsel %vm1475, %v2753, 0
        %v2825 = vsel %vm1475, %v2754, 0
        %v2828 = vsel %vm1475, %v2755, 0
        %v2831 = vsel %vm1475, %v2756, 0
        %v2834 = vsel %vm1475, %v2757, 0
        %v2837 = vsel %vm1475, %v2758, 0
        %v2840 = vsel %vm1475, %v2759, 0
        %v2843 = vsel %vm1475, %v2760, 0
        %v2846 = vsel %vm1475, %v2761, 0
        %v2849 = vsel %vm1475, %v2762, 0
        %v2852 = vsel %vm1475, %v2763, 0
        %v2855 = vsel %vm1475, %v2764, 0
        %v2858 = vsel %vm1475, %v2765, 0
        %v2861 = vsel %vm1475, %v2766, 0
        %2863 = vmatprep.subr.bf16.mxu0 0
        %2864 = vmatpush1.bf16.msra.mxu0 %v1472
        %2865 = vmatprep.subr.bf16.mxu0 0
        %2866 = vmatpush1.bf16.msra.mxu0 %v1577
        %2867 = vmatprep.subr.bf16.mxu0 0
        %2868 = vmatpush1.bf16.msra.mxu0 0
        %2869 = vmatprep.subr.bf16.mxu0 0
        %2870 = vmatpush1.bf16.msra.mxu0 0
        %2871 = vmatprep.subr.bf16.mxu0 0
        %2872 = vmatpush1.bf16.msra.mxu0 0
        %2873 = vmatprep.subr.bf16.mxu0 0
        %2874 = vmatpush1.bf16.msra.mxu0 0
        %2875 = vmatprep.subr.bf16.mxu0 0
        %2876 = vmatpush1.bf16.msra.mxu0 0
        %2877 = vmatprep.subr.bf16.mxu0 0
        %2878 = vmatpush1.bf16.msra.mxu0 0
        %2879 = vmatprep.subr.bf16.mxu0 0
        %2880 = vmatpush1.bf16.msra.mxu0 0
        %2881 = vmatprep.subr.bf16.mxu0 0
        %2882 = vmatpush1.bf16.msra.mxu0 0
        %2883 = vmatprep.subr.bf16.mxu0 0
        %2884 = vmatpush1.bf16.msra.mxu0 0
        %2885 = vmatprep.subr.bf16.mxu0 0
        %2886 = vmatpush1.bf16.msra.mxu0 0
        %2887 = vmatprep.subr.bf16.mxu0 0
        %2888 = vmatpush1.bf16.msra.mxu0 0
        %2889 = vmatprep.subr.bf16.mxu0 0
        %2890 = vmatpush1.bf16.msra.mxu0 0
        %2891 = vmatprep.subr.bf16.mxu0 0
        %2892 = vmatpush1.bf16.msra.mxu0 0
        %2893 = vmatprep.subr.bf16.mxu0 0
        %2894 = vmatpush1.bf16.msra.mxu0 0
        %2895 = vmatprep.mubr.bf16.mxu0 0
        %2896 = vmatmul.mubr.bf16.gmra.mrb[0].mxu0 %v2768
        %v2897 = vpop.f32.mrb[0].mxu0
        %v2898 = vadd.f32 0.0, %v2897
        %v2899 = vpop.f32.mrb[0].mxu0
        %v2900 = vpop.f32.mrb[0].mxu0
        %v2901 = vadd.f32 0.0, %v2900
        %v2902 = vpop.f32.mrb[0].mxu0
        %2903 = vmatprep.mubr.bf16.mxu0 0
        %2904 = vmatmul.mubr.bf16.gmra.mrb[0].mxu0 %v2771
        %v2905 = vpop.f32.mrb[0].mxu0
        %v2906 = vadd.f32 0.0, %v2905
        %v2907 = vpop.f32.mrb[0].mxu0
        %v2908 = vpop.f32.mrb[0].mxu0
        %v2909 = vadd.f32 0.0, %v2908
        %v2910 = vpop.f32.mrb[0].mxu0
        %2911 = vmatprep.mubr.bf16.mxu0 0
        %2912 = vmatmul.mubr.bf16.gmra.mrb[0].mxu0 %v2774
        %v2913 = vpop.f32.mrb[0].mxu0
        %v2914 = vadd.f32 0.0, %v2913
        %v2915 = vpop.f32.mrb[0].mxu0
        %v2916 = vpop.f32.mrb[0].mxu0
        %v2917 = vadd.f32 0.0, %v2916
        %v2918 = vpop.f32.mrb[0].mxu0
        %2919 = vmatprep.mubr.bf16.mxu0 0
        %2920 = vmatmul.mubr.bf16.gmra.mrb[0].mxu0 %v2777
        %v2921 = vpop.f32.mrb[0].mxu0
        %v2922 = vadd.f32 0.0, %v2921
        %v2923 = vpop.f32.mrb[0].mxu0
        %v2924 = vpop.f32.mrb[0].mxu0
        %v2925 = vadd.f32 0.0, %v2924
        %v2926 = vpop.f32.mrb[0].mxu0
        %2927 = vmatprep.mubr.bf16.mxu0 0
        %2928 = vmatmul.mubr.bf16.gmra.mrb[0].mxu0 %v2780
        %v2929 = vpop.f32.mrb[0].mxu0
        %v2930 = vadd.f32 0.0, %v2929
        %v2931 = vpop.f32.mrb[0].mxu0
        %v2932 = vpop.f32.mrb[0].mxu0
        %v2933 = vadd.f32 0.0, %v2932
        %v2934 = vpop.f32.mrb[0].mxu0
        %2935 = vmatprep.mubr.bf16.mxu0 0
        %2936 = vmatmul.mubr.bf16.gmra.mrb[0].mxu0 %v2783
        %v2937 = vpop.f32.mrb[0].mxu0
        %v2938 = vadd.f32 0.0, %v2937
        %v2939 = vpop.f32.mrb[0].mxu0
        %v2940 = vpop.f32.mrb[0].mxu0
        %v2941 = vadd.f32 0.0, %v2940
        %v2942 = vpop.f32.mrb[0].mxu0
        %2943 = vmatprep.mubr.bf16.mxu0 0
        %2944 = vmatmul.mubr.bf16.gmra.mrb[0].mxu0 %v2786
        %v2945 = vpop.f32.mrb[0].mxu0
        %v2946 = vadd.f32 0.0, %v2945
        %v2947 = vpop.f32.mrb[0].mxu0
        %v2948 = vpop.f32.mrb[0].mxu0
        %v2949 = vadd.f32 0.0, %v2948
        %v2950 = vpop.f32.mrb[0].mxu0
        %2951 = vmatprep.mubr.bf16.mxu0 0
        %2952 = vmatmul.mubr.bf16.gmra.mrb[0].mxu0 %v2789
        %v2953 = vpop.f32.mrb[0].mxu0
        %v2954 = vadd.f32 0.0, %v2953
        %v2955 = vpop.f32.mrb[0].mxu0
        %v2956 = vpop.f32.mrb[0].mxu0
        %v2957 = vadd.f32 0.0, %v2956
        %v2958 = vpop.f32.mrb[0].mxu0
        %2959 = vmatprep.mubr.bf16.mxu0 0
        %2960 = vmatmul.mubr.bf16.gmra.mrb[0].mxu0 %v2792
        %v2961 = vpop.f32.mrb[0].mxu0
        %v2962 = vadd.f32 0.0, %v2961
        %v2963 = vpop.f32.mrb[0].mxu0
        %v2964 = vpop.f32.mrb[0].mxu0
        %v2965 = vadd.f32 0.0, %v2964
        %v2966 = vpop.f32.mrb[0].mxu0
        %2967 = vmatprep.mubr.bf16.mxu0 0
        %2968 = vmatmul.mubr.bf16.gmra.mrb[0].mxu0 %v2795
        %v2969 = vpop.f32.mrb[0].mxu0
        %v2970 = vadd.f32 0.0, %v2969
        %v2971 = vpop.f32.mrb[0].mxu0
        %v2972 = vpop.f32.mrb[0].mxu0
        %v2973 = vadd.f32 0.0, %v2972
        %v2974 = vpop.f32.mrb[0].mxu0
        %2975 = vmatprep.mubr.bf16.mxu0 0
        %2976 = vmatmul.mubr.bf16.gmra.mrb[0].mxu0 %v2798
        %v2977 = vpop.f32.mrb[0].mxu0
        %v2978 = vadd.f32 0.0, %v2977
        %v2979 = vpop.f32.mrb[0].mxu0
        %v2980 = vpop.f32.mrb[0].mxu0
        %v2981 = vadd.f32 0.0, %v2980
        %v2982 = vpop.f32.mrb[0].mxu0
        %2983 = vmatprep.mubr.bf16.mxu0 0
        %2984 = vmatmul.mubr.bf16.gmra.mrb[0].mxu0 %v2801
        %v2985 = vpop.f32.mrb[0].mxu0
        %v2986 = vadd.f32 0.0, %v2985
        %v2987 = vpop.f32.mrb[0].mxu0
        %v2988 = vpop.f32.mrb[0].mxu0
        %v2989 = vadd.f32 0.0, %v2988
        %v2990 = vpop.f32.mrb[0].mxu0
        %2991 = vmatprep.mubr.bf16.mxu0 0
        %2992 = vmatmul.mubr.bf16.gmra.mrb[0].mxu0 %v2804
        %v2993 = vpop.f32.mrb[0].mxu0
        %v2994 = vadd.f32 0.0, %v2993
        %v2995 = vpop.f32.mrb[0].mxu0
        %v2996 = vpop.f32.mrb[0].mxu0
        %v2997 = vadd.f32 0.0, %v2996
        %v2998 = vpop.f32.mrb[0].mxu0
        %2999 = vmatprep.mubr.bf16.mxu0 0
        %3000 = vmatmul.mubr.bf16.gmra.mrb[0].mxu0 %v2807
        %v3001 = vpop.f32.mrb[0].mxu0
        %v3002 = vadd.f32 0.0, %v3001
        %v3003 = vpop.f32.mrb[0].mxu0
        %v3004 = vpop.f32.mrb[0].mxu0
        %v3005 = vadd.f32 0.0, %v3004
        %v3006 = vpop.f32.mrb[0].mxu0
        %3007 = vmatprep.mubr.bf16.mxu0 0
        %3008 = vmatmul.mubr.bf16.gmra.mrb[0].mxu0 %v2810
        %v3009 = vpop.f32.mrb[0].mxu0
        %v3010 = vadd.f32 0.0, %v3009
        %v3011 = vpop.f32.mrb[0].mxu0
        %v3012 = vpop.f32.mrb[0].mxu0
        %v3013 = vadd.f32 0.0, %v3012
        %v3014 = vpop.f32.mrb[0].mxu0
        %3015 = vmatprep.mubr.bf16.mxu0 0
        %3016 = vmatmul.mubr.bf16.gmra.mrb[0].mxu0 %v2813
        %v3017 = vpop.f32.mrb[0].mxu0
        %v3018 = vadd.f32 0.0, %v3017
        %v3019 = vpop.f32.mrb[0].mxu0
        %v3020 = vpop.f32.mrb[0].mxu0
        %v3021 = vadd.f32 0.0, %v3020
        %v3022 = vpop.f32.mrb[0].mxu0
        %3023 = vmatprep.mubr.bf16.mxu0 0
        %3024 = vmatmul.mubr.bf16.gmra.mrb[0].mxu0 %v2816
        %v3025 = vpop.f32.mrb[0].mxu0
        %v3026 = vadd.f32 0.0, %v3025
        %v3027 = vpop.f32.mrb[0].mxu0
        %v3028 = vpop.f32.mrb[0].mxu0
        %v3029 = vadd.f32 0.0, %v3028
        %v3030 = vpop.f32.mrb[0].mxu0
        %3031 = vmatprep.mubr.bf16.mxu0 0
        %3032 = vmatmul.mubr.bf16.gmra.mrb[0].mxu0 %v2819
        %v3033 = vpop.f32.mrb[0].mxu0
        %v3034 = vadd.f32 0.0, %v3033
        %v3035 = vpop.f32.mrb[0].mxu0
        %v3036 = vpop.f32.mrb[0].mxu0
        %v3037 = vadd.f32 0.0, %v3036
        %v3038 = vpop.f32.mrb[0].mxu0
        %3039 = vmatprep.mubr.bf16.mxu0 0
        %3040 = vmatmul.mubr.bf16.gmra.mrb[0].mxu0 %v2822
        %v3041 = vpop.f32.mrb[0].mxu0
        %v3042 = vadd.f32 0.0, %v3041
        %v3043 = vpop.f32.mrb[0].mxu0
        %v3044 = vpop.f32.mrb[0].mxu0
        %v3045 = vadd.f32 0.0, %v3044
        %v3046 = vpop.f32.mrb[0].mxu0
        %3047 = vmatprep.mubr.bf16.mxu0 0
        %3048 = vmatmul.mubr.bf16.gmra.mrb[0].mxu0 %v2825
        %v3049 = vpop.f32.mrb[0].mxu0
        %v3050 = vadd.f32 0.0, %v3049
        %v3051 = vpop.f32.mrb[0].mxu0
        %v3052 = vpop.f32.mrb[0].mxu0
        %v3053 = vadd.f32 0.0, %v3052
        %v3054 = vpop.f32.mrb[0].mxu0
        %3055 = vmatprep.mubr.bf16.mxu0 0
        %3056 = vmatmul.mubr.bf16.gmra.mrb[0].mxu0 %v2828
        %v3057 = vpop.f32.mrb[0].mxu0
        %v3058 = vadd.f32 0.0, %v3057
        %v3059 = vpop.f32.mrb[0].mxu0
        %v3060 = vpop.f32.mrb[0].mxu0
        %v3061 = vadd.f32 0.0, %v3060
        %v3062 = vpop.f32.mrb[0].mxu0
        %3063 = vmatprep.mubr.bf16.mxu0 0
        %3064 = vmatmul.mubr.bf16.gmra.mrb[0].mxu0 %v2831
        %v3065 = vpop.f32.mrb[0].mxu0
        %v3066 = vadd.f32 0.0, %v3065
        %v3067 = vpop.f32.mrb[0].mxu0
        %v3068 = vpop.f32.mrb[0].mxu0
        %v3069 = vadd.f32 0.0, %v3068
        %v3070 = vpop.f32.mrb[0].mxu0
        %3071 = vmatprep.mubr.bf16.mxu0 0
        %3072 = vmatmul.mubr.bf16.gmra.mrb[0].mxu0 %v2834
        %v3073 = vpop.f32.mrb[0].mxu0
        %v3074 = vadd.f32 0.0, %v3073
        %v3075 = vpop.f32.mrb[0].mxu0
        %v3076 = vpop.f32.mrb[0].mxu0
        %v3077 = vadd.f32 0.0, %v3076
        %v3078 = vpop.f32.mrb[0].mxu0
        %3079 = vmatprep.mubr.bf16.mxu0 0
        %3080 = vmatmul.mubr.bf16.gmra.mrb[0].mxu0 %v2837
        %v3081 = vpop.f32.mrb[0].mxu0
        %v3082 = vadd.f32 0.0, %v3081
        %v3083 = vpop.f32.mrb[0].mxu0
        %v3084 = vpop.f32.mrb[0].mxu0
        %v3085 = vadd.f32 0.0, %v3084
        %v3086 = vpop.f32.mrb[0].mxu0
        %3087 = vmatprep.mubr.bf16.mxu0 0
        %3088 = vmatmul.mubr.bf16.gmra.mrb[0].mxu0 %v2840
        %v3089 = vpop.f32.mrb[0].mxu0
        %v3090 = vadd.f32 0.0, %v3089
        %v3091 = vpop.f32.mrb[0].mxu0
        %v3092 = vpop.f32.mrb[0].mxu0
        %v3093 = vadd.f32 0.0, %v3092
        %v3094 = vpop.f32.mrb[0].mxu0
        %3095 = vmatprep.mubr.bf16.mxu0 0
        %3096 = vmatmul.mubr.bf16.gmra.mrb[0].mxu0 %v2843
        %v3097 = vpop.f32.mrb[0].mxu0
        %v3098 = vadd.f32 0.0, %v3097
        %v3099 = vpop.f32.mrb[0].mxu0
        %v3100 = vpop.f32.mrb[0].mxu0
        %v3101 = vadd.f32 0.0, %v3100
        %v3102 = vpop.f32.mrb[0].mxu0
        %3103 = vmatprep.mubr.bf16.mxu0 0
        %3104 = vmatmul.mubr.bf16.gmra.mrb[0].mxu0 %v2846
        %v3105 = vpop.f32.mrb[0].mxu0
        %v3106 = vadd.f32 0.0, %v3105
        %v3107 = vpop.f32.mrb[0].mxu0
        %v3108 = vpop.f32.mrb[0].mxu0
        %v3109 = vadd.f32 0.0, %v3108
        %v3110 = vpop.f32.mrb[0].mxu0
        %3111 = vmatprep.mubr.bf16.mxu0 0
        %3112 = vmatmul.mubr.bf16.gmra.mrb[0].mxu0 %v2849
        %v3113 = vpop.f32.mrb[0].mxu0
        %v3114 = vadd.f32 0.0, %v3113
        %v3115 = vpop.f32.mrb[0].mxu0
        %v3116 = vpop.f32.mrb[0].mxu0
        %v3117 = vadd.f32 0.0, %v3116
        %v3118 = vpop.f32.mrb[0].mxu0
        %3119 = vmatprep.mubr.bf16.mxu0 0
        %3120 = vmatmul.mubr.bf16.gmra.mrb[0].mxu0 %v2852
        %v3121 = vpop.f32.mrb[0].mxu0
        %v3122 = vadd.f32 0.0, %v3121
        %v3123 = vpop.f32.mrb[0].mxu0
        %v3124 = vpop.f32.mrb[0].mxu0
        %v3125 = vadd.f32 0.0, %v3124
        %v3126 = vpop.f32.mrb[0].mxu0
        %3127 = vmatprep.mubr.bf16.mxu0 0
        %3128 = vmatmul.mubr.bf16.gmra.mrb[0].mxu0 %v2855
        %v3129 = vpop.f32.mrb[0].mxu0
        %v3130 = vadd.f32 0.0, %v3129
        %v3131 = vpop.f32.mrb[0].mxu0
        %v3132 = vpop.f32.mrb[0].mxu0
        %v3133 = vadd.f32 0.0, %v3132
        %v3134 = vpop.f32.mrb[0].mxu0
        %3135 = vmatprep.mubr.bf16.mxu0 0
        %3136 = vmatmul.mubr.bf16.gmra.mrb[0].mxu0 %v2858
        %v3137 = vpop.f32.mrb[0].mxu0
        %v3138 = vadd.f32 0.0, %v3137
        %v3139 = vpop.f32.mrb[0].mxu0
        %v3140 = vpop.f32.mrb[0].mxu0
        %v3141 = vadd.f32 0.0, %v3140
        %v3142 = vpop.f32.mrb[0].mxu0
        %3143 = vmatprep.mubr.bf16.mxu0 0
        %3144 = vmatmul.mubr.bf16.gmra.mrb[0].mxu0 %v2861
        %v3145 = vpop.f32.mrb[0].mxu0
        %v3146 = vadd.f32 0.0, %v3145
        %v3147 = vpop.f32.mrb[0].mxu0
        %v3148 = vpop.f32.mrb[0].mxu0
        %v3149 = vadd.f32 0.0, %v3148
        %v3150 = vpop.f32.mrb[0].mxu0
        %3151 = vdwg.mxu0
        %v3152 = vmax.f32 %v2478, %v2898
        %v3153 = vmax.f32 %v2479, %v2901
        %v3154 = vmax.f32 %v2480, %v2906
        %v3155 = vmax.f32 %v2481, %v2909
        %v3156 = vmax.f32 %v2482, %v2914
        %v3157 = vmax.f32 %v2483, %v2917
        %v3158 = vmax.f32 %v2484, %v2922
        %v3159 = vmax.f32 %v2485, %v2925
        %v3160 = vmax.f32 %v2486, %v2930
        %v3161 = vmax.f32 %v2487, %v2933
        %v3162 = vmax.f32 %v2488, %v2938
        %v3163 = vmax.f32 %v2489, %v2941
        %v3164 = vmax.f32 %v2490, %v2946
        %v3165 = vmax.f32 %v2491, %v2949
        %v3166 = vmax.f32 %v2492, %v2954
        %v3167 = vmax.f32 %v2493, %v2957
        %v3168 = vmax.f32 %v2494, %v2962
        %v3169 = vmax.f32 %v2495, %v2965
        %v3170 = vmax.f32 %v2496, %v2970
        %v3171 = vmax.f32 %v2497, %v2973
        %v3172 = vmax.f32 %v2498, %v2978
        %v3173 = vmax.f32 %v2499, %v2981
        %v3174 = vmax.f32 %v2500, %v2986
        %v3175 = vmax.f32 %v2501, %v2989
        %v3176 = vmax.f32 %v2502, %v2994
        %v3177 = vmax.f32 %v2503, %v2997
        %v3178 = vmax.f32 %v2504, %v3002
        %v3179 = vmax.f32 %v2505, %v3005
        %v3180 = vmax.f32 %v2506, %v3010
        %v3181 = vmax.f32 %v2507, %v3013
        %v3182 = vmax.f32 %v2508, %v3018
        %v3183 = vmax.f32 %v2509, %v3021
        %v3184 = vmax.f32 %v2510, %v3026
        %v3185 = vmax.f32 %v2511, %v3029
        %v3186 = vmax.f32 %v2512, %v3034
        %v3187 = vmax.f32 %v2513, %v3037
        %v3188 = vmax.f32 %v2514, %v3042
        %v3189 = vmax.f32 %v2515, %v3045
        %v3190 = vmax.f32 %v2516, %v3050
        %v3191 = vmax.f32 %v2517, %v3053
        %v3192 = vmax.f32 %v2518, %v3058
        %v3193 = vmax.f32 %v2519, %v3061
        %v3194 = vmax.f32 %v2520, %v3066
        %v3195 = vmax.f32 %v2521, %v3069
        %v3196 = vmax.f32 %v2522, %v3074
        %v3197 = vmax.f32 %v2523, %v3077
        %v3198 = vmax.f32 %v2524, %v3082
        %v3199 = vmax.f32 %v2525, %v3085
        %v3200 = vmax.f32 %v2526, %v3090
        %v3201 = vmax.f32 %v2527, %v3093
        %v3202 = vmax.f32 %v2528, %v3098
        %v3203 = vmax.f32 %v2529, %v3101
        %v3204 = vmax.f32 %v2530, %v3106
        %v3205 = vmax.f32 %v2531, %v3109
        %v3206 = vmax.f32 %v2532, %v3114
        %v3207 = vmax.f32 %v2533, %v3117
        %v3208 = vmax.f32 %v2534, %v3122
        %v3209 = vmax.f32 %v2535, %v3125
        %v3210 = vmax.f32 %v2536, %v3130
        %v3211 = vmax.f32 %v2537, %v3133
        %v3212 = vmax.f32 %v2538, %v3138
        %v3213 = vmax.f32 %v2539, %v3141
        %v3214 = vmax.f32 %v2540, %v3146
        %v3215 = vmax.f32 %v2541, %v3149
        %s3216 = scalar_lea.vmem %s1207, 768 [#allocation2]
        %v3217 = vld [vmem:[%s3216] sm:$0xf]
        %v3218 = vld [vmem:[%s3216 + $0x4] sm:$0xf]
        %v3219 = vld [vmem:[%s3216 + $0x8] sm:$0xf]
        %v3220 = vld [vmem:[%s3216 + $0xc] sm:$0xf]
        %v3221 = vld [vmem:[%s3216 + $0x10] sm:$0xf]
        %v3222 = vld [vmem:[%s3216 + $0x14] sm:$0xf]
        %v3223 = vld [vmem:[%s3216 + $0x18] sm:$0xf]
        %v3224 = vld [vmem:[%s3216 + $0x1c] sm:$0xf]
        %v3225 = vld [vmem:[%s3216 + $0x20] sm:$0xf]
        %v3226 = vld [vmem:[%s3216 + $0x24] sm:$0xf]
        %v3227 = vld [vmem:[%s3216 + $0x28] sm:$0xf]
        %v3228 = vld [vmem:[%s3216 + $0x2c] sm:$0xf]
        %v3229 = vld [vmem:[%s3216 + $0x30] sm:$0xf]
        %v3230 = vld [vmem:[%s3216 + $0x34] sm:$0xf]
        %v3231 = vld [vmem:[%s3216 + $0x38] sm:$0xf]
        %v3232 = vld [vmem:[%s3216 + $0x3c] sm:$0xf]
        %v3233 = vld [vmem:[%s3216 + $0x40] sm:$0xf]
        %v3234 = vld [vmem:[%s3216 + $0x44] sm:$0xf]
        %v3235 = vld [vmem:[%s3216 + $0x48] sm:$0xf]
        %v3236 = vld [vmem:[%s3216 + $0x4c] sm:$0xf]
        %v3237 = vld [vmem:[%s3216 + $0x50] sm:$0xf]
        %v3238 = vld [vmem:[%s3216 + $0x54] sm:$0xf]
        %v3239 = vld [vmem:[%s3216 + $0x58] sm:$0xf]
        %v3240 = vld [vmem:[%s3216 + $0x5c] sm:$0xf]
        %v3241 = vld [vmem:[%s3216 + $0x60] sm:$0xf]
        %v3242 = vld [vmem:[%s3216 + $0x64] sm:$0xf]
        %v3243 = vld [vmem:[%s3216 + $0x68] sm:$0xf]
        %v3244 = vld [vmem:[%s3216 + $0x6c] sm:$0xf]
        %v3245 = vld [vmem:[%s3216 + $0x70] sm:$0xf]
        %v3246 = vld [vmem:[%s3216 + $0x74] sm:$0xf]
        %v3247 = vld [vmem:[%s3216 + $0x78] sm:$0xf]
        %v3248 = vld [vmem:[%s3216 + $0x7c] sm:$0xf]
        %v3249 = vld [vmem:[%s3216 + $0x80] sm:$0xf]
        %v3250 = vld [vmem:[%s3216 + $0x84] sm:$0xf]
        %v3251 = vld [vmem:[%s3216 + $0x88] sm:$0xf]
        %v3252 = vld [vmem:[%s3216 + $0x8c] sm:$0xf]
        %v3253 = vld [vmem:[%s3216 + $0x90] sm:$0xf]
        %v3254 = vld [vmem:[%s3216 + $0x94] sm:$0xf]
        %v3255 = vld [vmem:[%s3216 + $0x98] sm:$0xf]
        %v3256 = vld [vmem:[%s3216 + $0x9c] sm:$0xf]
        %v3257 = vld [vmem:[%s3216 + $0xa0] sm:$0xf]
        %v3258 = vld [vmem:[%s3216 + $0xa4] sm:$0xf]
        %v3259 = vld [vmem:[%s3216 + $0xa8] sm:$0xf]
        %v3260 = vld [vmem:[%s3216 + $0xac] sm:$0xf]
        %v3261 = vld [vmem:[%s3216 + $0xb0] sm:$0xf]
        %v3262 = vld [vmem:[%s3216 + $0xb4] sm:$0xf]
        %v3263 = vld [vmem:[%s3216 + $0xb8] sm:$0xf]
        %v3264 = vld [vmem:[%s3216 + $0xbc] sm:$0xf]
        %v3265 = vld [vmem:[%s3216 + $0xc0] sm:$0xf]
        %v3266 = vld [vmem:[%s3216 + $0xc4] sm:$0xf]
        %v3267 = vld [vmem:[%s3216 + $0xc8] sm:$0xf]
        %v3268 = vld [vmem:[%s3216 + $0xcc] sm:$0xf]
        %v3269 = vld [vmem:[%s3216 + $0xd0] sm:$0xf]
        %v3270 = vld [vmem:[%s3216 + $0xd4] sm:$0xf]
        %v3271 = vld [vmem:[%s3216 + $0xd8] sm:$0xf]
        %v3272 = vld [vmem:[%s3216 + $0xdc] sm:$0xf]
        %v3273 = vld [vmem:[%s3216 + $0xe0] sm:$0xf]
        %v3274 = vld [vmem:[%s3216 + $0xe4] sm:$0xf]
        %v3275 = vld [vmem:[%s3216 + $0xe8] sm:$0xf]
        %v3276 = vld [vmem:[%s3216 + $0xec] sm:$0xf]
        %v3277 = vld [vmem:[%s3216 + $0xf0] sm:$0xf]
        %v3278 = vld [vmem:[%s3216 + $0xf4] sm:$0xf]
        %v3279 = vld [vmem:[%s3216 + $0xf8] sm:$0xf]
        %v3280 = vld [vmem:[%s3216 + $0xfc] sm:$0xf]
        %v3345 = vunpack.c.l.b16 %v3217
        %v3346 = vunpack.c.l.b16 %v3218
        %v3347 = vunpack.c.l.b16 %v3219
        %v3348 = vunpack.c.l.b16 %v3220
        %v3349 = vunpack.c.l.b16 %v3221
        %v3350 = vunpack.c.l.b16 %v3222
        %v3351 = vunpack.c.l.b16 %v3223
        %v3352 = vunpack.c.l.b16 %v3224
        %v3353 = vunpack.c.l.b16 %v3225
        %v3354 = vunpack.c.l.b16 %v3226
        %v3355 = vunpack.c.l.b16 %v3227
        %v3356 = vunpack.c.l.b16 %v3228
        %v3357 = vunpack.c.l.b16 %v3229
        %v3358 = vunpack.c.l.b16 %v3230
        %v3359 = vunpack.c.l.b16 %v3231
        %v3360 = vunpack.c.l.b16 %v3232
        %v3361 = vunpack.c.l.b16 %v3233
        %v3362 = vunpack.c.l.b16 %v3234
        %v3363 = vunpack.c.l.b16 %v3235
        %v3364 = vunpack.c.l.b16 %v3236
        %v3365 = vunpack.c.l.b16 %v3237
        %v3366 = vunpack.c.l.b16 %v3238
        %v3367 = vunpack.c.l.b16 %v3239
        %v3368 = vunpack.c.l.b16 %v3240
        %v3369 = vunpack.c.l.b16 %v3241
        %v3370 = vunpack.c.l.b16 %v3242
        %v3371 = vunpack.c.l.b16 %v3243
        %v3372 = vunpack.c.l.b16 %v3244
        %v3373 = vunpack.c.l.b16 %v3245
        %v3374 = vunpack.c.l.b16 %v3246
        %v3375 = vunpack.c.l.b16 %v3247
        %v3376 = vunpack.c.l.b16 %v3248
        %v3377 = vunpack.c.l.b16 %v3249
        %v3378 = vunpack.c.l.b16 %v3250
        %v3379 = vunpack.c.l.b16 %v3251
        %v3380 = vunpack.c.l.b16 %v3252
        %v3381 = vunpack.c.l.b16 %v3253
        %v3382 = vunpack.c.l.b16 %v3254
        %v3383 = vunpack.c.l.b16 %v3255
        %v3384 = vunpack.c.l.b16 %v3256
        %v3385 = vunpack.c.l.b16 %v3257
        %v3386 = vunpack.c.l.b16 %v3258
        %v3387 = vunpack.c.l.b16 %v3259
        %v3388 = vunpack.c.l.b16 %v3260
        %v3389 = vunpack.c.l.b16 %v3261
        %v3390 = vunpack.c.l.b16 %v3262
        %v3391 = vunpack.c.l.b16 %v3263
        %v3392 = vunpack.c.l.b16 %v3264
        %v3393 = vunpack.c.l.b16 %v3265
        %v3394 = vunpack.c.l.b16 %v3266
        %v3395 = vunpack.c.l.b16 %v3267
        %v3396 = vunpack.c.l.b16 %v3268
        %v3397 = vunpack.c.l.b16 %v3269
        %v3398 = vunpack.c.l.b16 %v3270
        %v3399 = vunpack.c.l.b16 %v3271
        %v3400 = vunpack.c.l.b16 %v3272
        %v3401 = vunpack.c.l.b16 %v3273
        %v3402 = vunpack.c.l.b16 %v3274
        %v3403 = vunpack.c.l.b16 %v3275
        %v3404 = vunpack.c.l.b16 %v3276
        %v3405 = vunpack.c.l.b16 %v3277
        %v3406 = vunpack.c.l.b16 %v3278
        %v3407 = vunpack.c.l.b16 %v3279
        %v3408 = vunpack.c.l.b16 %v3280
        %v3409 = vpack.c.b16 %v3346, %v3345
        %v3410 = vpack.c.b16 %v3348, %v3347
        %v3411 = vpack.c.b16 %v3350, %v3349
        %v3412 = vpack.c.b16 %v3352, %v3351
        %v3413 = vpack.c.b16 %v3354, %v3353
        %v3414 = vpack.c.b16 %v3356, %v3355
        %v3415 = vpack.c.b16 %v3358, %v3357
        %v3416 = vpack.c.b16 %v3360, %v3359
        %v3417 = vpack.c.b16 %v3362, %v3361
        %v3418 = vpack.c.b16 %v3364, %v3363
        %v3419 = vpack.c.b16 %v3366, %v3365
        %v3420 = vpack.c.b16 %v3368, %v3367
        %v3421 = vpack.c.b16 %v3370, %v3369
        %v3422 = vpack.c.b16 %v3372, %v3371
        %v3423 = vpack.c.b16 %v3374, %v3373
        %v3424 = vpack.c.b16 %v3376, %v3375
        %v3425 = vpack.c.b16 %v3378, %v3377
        %v3426 = vpack.c.b16 %v3380, %v3379
        %v3427 = vpack.c.b16 %v3382, %v3381
        %v3428 = vpack.c.b16 %v3384, %v3383
        %v3429 = vpack.c.b16 %v3386, %v3385
        %v3430 = vpack.c.b16 %v3388, %v3387
        %v3431 = vpack.c.b16 %v3390, %v3389
        %v3432 = vpack.c.b16 %v3392, %v3391
        %v3433 = vpack.c.b16 %v3394, %v3393
        %v3434 = vpack.c.b16 %v3396, %v3395
        %v3435 = vpack.c.b16 %v3398, %v3397
        %v3436 = vpack.c.b16 %v3400, %v3399
        %v3437 = vpack.c.b16 %v3402, %v3401
        %v3438 = vpack.c.b16 %v3404, %v3403
        %v3439 = vpack.c.b16 %v3406, %v3405
        %v3440 = vpack.c.b16 %v3408, %v3407
        %v3442 = vsel %vm1475, %v3409, 0
        %v3445 = vsel %vm1475, %v3410, 0
        %v3448 = vsel %vm1475, %v3411, 0
        %v3451 = vsel %vm1475, %v3412, 0
        %v3454 = vsel %vm1475, %v3413, 0
        %v3457 = vsel %vm1475, %v3414, 0
        %v3460 = vsel %vm1475, %v3415, 0
        %v3463 = vsel %vm1475, %v3416, 0
        %v3466 = vsel %vm1475, %v3417, 0
        %v3469 = vsel %vm1475, %v3418, 0
        %v3472 = vsel %vm1475, %v3419, 0
        %v3475 = vsel %vm1475, %v3420, 0
        %v3478 = vsel %vm1475, %v3421, 0
        %v3481 = vsel %vm1475, %v3422, 0
        %v3484 = vsel %vm1475, %v3423, 0
        %v3487 = vsel %vm1475, %v3424, 0
        %v3490 = vsel %vm1475, %v3425, 0
        %v3493 = vsel %vm1475, %v3426, 0
        %v3496 = vsel %vm1475, %v3427, 0
        %v3499 = vsel %vm1475, %v3428, 0
        %v3502 = vsel %vm1475, %v3429, 0
        %v3505 = vsel %vm1475, %v3430, 0
        %v3508 = vsel %vm1475, %v3431, 0
        %v3511 = vsel %vm1475, %v3432, 0
        %v3514 = vsel %vm1475, %v3433, 0
        %v3517 = vsel %vm1475, %v3434, 0
        %v3520 = vsel %vm1475, %v3435, 0
        %v3523 = vsel %vm1475, %v3436, 0
        %v3526 = vsel %vm1475, %v3437, 0
        %v3529 = vsel %vm1475, %v3438, 0
        %v3532 = vsel %vm1475, %v3439, 0
        %v3535 = vsel %vm1475, %v3440, 0
        %3537 = vmatprep.subr.bf16.mxu0 0
        %3538 = vmatpush1.bf16.msra.mxu0 %v1472
        %3539 = vmatprep.subr.bf16.mxu0 0
        %3540 = vmatpush1.bf16.msra.mxu0 %v1577
        %3541 = vmatprep.subr.bf16.mxu0 0
        %3542 = vmatpush1.bf16.msra.mxu0 0
        %3543 = vmatprep.subr.bf16.mxu0 0
        %3544 = vmatpush1.bf16.msra.mxu0 0
        %3545 = vmatprep.subr.bf16.mxu0 0
        %3546 = vmatpush1.bf16.msra.mxu0 0
        %3547 = vmatprep.subr.bf16.mxu0 0
        %3548 = vmatpush1.bf16.msra.mxu0 0
        %3549 = vmatprep.subr.bf16.mxu0 0
        %3550 = vmatpush1.bf16.msra.mxu0 0
        %3551 = vmatprep.subr.bf16.mxu0 0
        %3552 = vmatpush1.bf16.msra.mxu0 0
        %3553 = vmatprep.subr.bf16.mxu0 0
        %3554 = vmatpush1.bf16.msra.mxu0 0
        %3555 = vmatprep.subr.bf16.mxu0 0
        %3556 = vmatpush1.bf16.msra.mxu0 0
        %3557 = vmatprep.subr.bf16.mxu0 0
        %3558 = vmatpush1.bf16.msra.mxu0 0
        %3559 = vmatprep.subr.bf16.mxu0 0
        %3560 = vmatpush1.bf16.msra.mxu0 0
        %3561 = vmatprep.subr.bf16.mxu0 0
        %3562 = vmatpush1.bf16.msra.mxu0 0
        %3563 = vmatprep.subr.bf16.mxu0 0
        %3564 = vmatpush1.bf16.msra.mxu0 0
        %3565 = vmatprep.subr.bf16.mxu0 0
        %3566 = vmatpush1.bf16.msra.mxu0 0
        %3567 = vmatprep.subr.bf16.mxu0 0
        %3568 = vmatpush1.bf16.msra.mxu0 0
        %3569 = vmatprep.mubr.bf16.mxu0 0
        %3570 = vmatmul.mubr.bf16.gmra.mrb[0].mxu0 %v3442
        %v3571 = vpop.f32.mrb[0].mxu0
        %v3572 = vadd.f32 0.0, %v3571
        %v3573 = vpop.f32.mrb[0].mxu0
        %v3574 = vpop.f32.mrb[0].mxu0
        %v3575 = vadd.f32 0.0, %v3574
        %v3576 = vpop.f32.mrb[0].mxu0
        %3577 = vmatprep.mubr.bf16.mxu0 0
        %3578 = vmatmul.mubr.bf16.gmra.mrb[0].mxu0 %v3445
        %v3579 = vpop.f32.mrb[0].mxu0
        %v3580 = vadd.f32 0.0, %v3579
        %v3581 = vpop.f32.mrb[0].mxu0
        %v3582 = vpop.f32.mrb[0].mxu0
        %v3583 = vadd.f32 0.0, %v3582
        %v3584 = vpop.f32.mrb[0].mxu0
        %3585 = vmatprep.mubr.bf16.mxu0 0
        %3586 = vmatmul.mubr.bf16.gmra.mrb[0].mxu0 %v3448
        %v3587 = vpop.f32.mrb[0].mxu0
        %v3588 = vadd.f32 0.0, %v3587
        %v3589 = vpop.f32.mrb[0].mxu0
        %v3590 = vpop.f32.mrb[0].mxu0
        %v3591 = vadd.f32 0.0, %v3590
        %v3592 = vpop.f32.mrb[0].mxu0
        %3593 = vmatprep.mubr.bf16.mxu0 0
        %3594 = vmatmul.mubr.bf16.gmra.mrb[0].mxu0 %v3451
        %v3595 = vpop.f32.mrb[0].mxu0
        %v3596 = vadd.f32 0.0, %v3595
        %v3597 = vpop.f32.mrb[0].mxu0
        %v3598 = vpop.f32.mrb[0].mxu0
        %v3599 = vadd.f32 0.0, %v3598
        %v3600 = vpop.f32.mrb[0].mxu0
        %3601 = vmatprep.mubr.bf16.mxu0 0
        %3602 = vmatmul.mubr.bf16.gmra.mrb[0].mxu0 %v3454
        %v3603 = vpop.f32.mrb[0].mxu0
        %v3604 = vadd.f32 0.0, %v3603
        %v3605 = vpop.f32.mrb[0].mxu0
        %v3606 = vpop.f32.mrb[0].mxu0
        %v3607 = vadd.f32 0.0, %v3606
        %v3608 = vpop.f32.mrb[0].mxu0
        %3609 = vmatprep.mubr.bf16.mxu0 0
        %3610 = vmatmul.mubr.bf16.gmra.mrb[0].mxu0 %v3457
        %v3611 = vpop.f32.mrb[0].mxu0
        %v3612 = vadd.f32 0.0, %v3611
        %v3613 = vpop.f32.mrb[0].mxu0
        %v3614 = vpop.f32.mrb[0].mxu0
        %v3615 = vadd.f32 0.0, %v3614
        %v3616 = vpop.f32.mrb[0].mxu0
        %3617 = vmatprep.mubr.bf16.mxu0 0
        %3618 = vmatmul.mubr.bf16.gmra.mrb[0].mxu0 %v3460
        %v3619 = vpop.f32.mrb[0].mxu0
        %v3620 = vadd.f32 0.0, %v3619
        %v3621 = vpop.f32.mrb[0].mxu0
        %v3622 = vpop.f32.mrb[0].mxu0
        %v3623 = vadd.f32 0.0, %v3622
        %v3624 = vpop.f32.mrb[0].mxu0
        %3625 = vmatprep.mubr.bf16.mxu0 0
        %3626 = vmatmul.mubr.bf16.gmra.mrb[0].mxu0 %v3463
        %v3627 = vpop.f32.mrb[0].mxu0
        %v3628 = vadd.f32 0.0, %v3627
        %v3629 = vpop.f32.mrb[0].mxu0
        %v3630 = vpop.f32.mrb[0].mxu0
        %v3631 = vadd.f32 0.0, %v3630
        %v3632 = vpop.f32.mrb[0].mxu0
        %3633 = vmatprep.mubr.bf16.mxu0 0
        %3634 = vmatmul.mubr.bf16.gmra.mrb[0].mxu0 %v3466
        %v3635 = vpop.f32.mrb[0].mxu0
        %v3636 = vadd.f32 0.0, %v3635
        %v3637 = vpop.f32.mrb[0].mxu0
        %v3638 = vpop.f32.mrb[0].mxu0
        %v3639 = vadd.f32 0.0, %v3638
        %v3640 = vpop.f32.mrb[0].mxu0
        %3641 = vmatprep.mubr.bf16.mxu0 0
        %3642 = vmatmul.mubr.bf16.gmra.mrb[0].mxu0 %v3469
        %v3643 = vpop.f32.mrb[0].mxu0
        %v3644 = vadd.f32 0.0, %v3643
        %v3645 = vpop.f32.mrb[0].mxu0
        %v3646 = vpop.f32.mrb[0].mxu0
        %v3647 = vadd.f32 0.0, %v3646
        %v3648 = vpop.f32.mrb[0].mxu0
        %3649 = vmatprep.mubr.bf16.mxu0 0
        %3650 = vmatmul.mubr.bf16.gmra.mrb[0].mxu0 %v3472
        %v3651 = vpop.f32.mrb[0].mxu0
        %v3652 = vadd.f32 0.0, %v3651
        %v3653 = vpop.f32.mrb[0].mxu0
        %v3654 = vpop.f32.mrb[0].mxu0
        %v3655 = vadd.f32 0.0, %v3654
        %v3656 = vpop.f32.mrb[0].mxu0
        %3657 = vmatprep.mubr.bf16.mxu0 0
        %3658 = vmatmul.mubr.bf16.gmra.mrb[0].mxu0 %v3475
        %v3659 = vpop.f32.mrb[0].mxu0
        %v3660 = vadd.f32 0.0, %v3659
        %v3661 = vpop.f32.mrb[0].mxu0
        %v3662 = vpop.f32.mrb[0].mxu0
        %v3663 = vadd.f32 0.0, %v3662
        %v3664 = vpop.f32.mrb[0].mxu0
        %3665 = vmatprep.mubr.bf16.mxu0 0
        %3666 = vmatmul.mubr.bf16.gmra.mrb[0].mxu0 %v3478
        %v3667 = vpop.f32.mrb[0].mxu0
        %v3668 = vadd.f32 0.0, %v3667
        %v3669 = vpop.f32.mrb[0].mxu0
        %v3670 = vpop.f32.mrb[0].mxu0
        %v3671 = vadd.f32 0.0, %v3670
        %v3672 = vpop.f32.mrb[0].mxu0
        %3673 = vmatprep.mubr.bf16.mxu0 0
        %3674 = vmatmul.mubr.bf16.gmra.mrb[0].mxu0 %v3481
        %v3675 = vpop.f32.mrb[0].mxu0
        %v3676 = vadd.f32 0.0, %v3675
        %v3677 = vpop.f32.mrb[0].mxu0
        %v3678 = vpop.f32.mrb[0].mxu0
        %v3679 = vadd.f32 0.0, %v3678
        %v3680 = vpop.f32.mrb[0].mxu0
        %3681 = vmatprep.mubr.bf16.mxu0 0
        %3682 = vmatmul.mubr.bf16.gmra.mrb[0].mxu0 %v3484
        %v3683 = vpop.f32.mrb[0].mxu0
        %v3684 = vadd.f32 0.0, %v3683
        %v3685 = vpop.f32.mrb[0].mxu0
        %v3686 = vpop.f32.mrb[0].mxu0
        %v3687 = vadd.f32 0.0, %v3686
        %v3688 = vpop.f32.mrb[0].mxu0
        %3689 = vmatprep.mubr.bf16.mxu0 0
        %3690 = vmatmul.mubr.bf16.gmra.mrb[0].mxu0 %v3487
        %v3691 = vpop.f32.mrb[0].mxu0
        %v3692 = vadd.f32 0.0, %v3691
        %v3693 = vpop.f32.mrb[0].mxu0
        %v3694 = vpop.f32.mrb[0].mxu0
        %v3695 = vadd.f32 0.0, %v3694
        %v3696 = vpop.f32.mrb[0].mxu0
        %3697 = vmatprep.mubr.bf16.mxu0 0
        %3698 = vmatmul.mubr.bf16.gmra.mrb[0].mxu0 %v3490
        %v3699 = vpop.f32.mrb[0].mxu0
        %v3700 = vadd.f32 0.0, %v3699
        %v3701 = vpop.f32.mrb[0].mxu0
        %v3702 = vpop.f32.mrb[0].mxu0
        %v3703 = vadd.f32 0.0, %v3702
        %v3704 = vpop.f32.mrb[0].mxu0
        %3705 = vmatprep.mubr.bf16.mxu0 0
        %3706 = vmatmul.mubr.bf16.gmra.mrb[0].mxu0 %v3493
        %v3707 = vpop.f32.mrb[0].mxu0
        %v3708 = vadd.f32 0.0, %v3707
        %v3709 = vpop.f32.mrb[0].mxu0
        %v3710 = vpop.f32.mrb[0].mxu0
        %v3711 = vadd.f32 0.0, %v3710
        %v3712 = vpop.f32.mrb[0].mxu0
        %3713 = vmatprep.mubr.bf16.mxu0 0
        %3714 = vmatmul.mubr.bf16.gmra.mrb[0].mxu0 %v3496
        %v3715 = vpop.f32.mrb[0].mxu0
        %v3716 = vadd.f32 0.0, %v3715
        %v3717 = vpop.f32.mrb[0].mxu0
        %v3718 = vpop.f32.mrb[0].mxu0
        %v3719 = vadd.f32 0.0, %v3718
        %v3720 = vpop.f32.mrb[0].mxu0
        %3721 = vmatprep.mubr.bf16.mxu0 0
        %3722 = vmatmul.mubr.bf16.gmra.mrb[0].mxu0 %v3499
        %v3723 = vpop.f32.mrb[0].mxu0
        %v3724 = vadd.f32 0.0, %v3723
        %v3725 = vpop.f32.mrb[0].mxu0
        %v3726 = vpop.f32.mrb[0].mxu0
        %v3727 = vadd.f32 0.0, %v3726
        %v3728 = vpop.f32.mrb[0].mxu0
        %3729 = vmatprep.mubr.bf16.mxu0 0
        %3730 = vmatmul.mubr.bf16.gmra.mrb[0].mxu0 %v3502
        %v3731 = vpop.f32.mrb[0].mxu0
        %v3732 = vadd.f32 0.0, %v3731
        %v3733 = vpop.f32.mrb[0].mxu0
        %v3734 = vpop.f32.mrb[0].mxu0
        %v3735 = vadd.f32 0.0, %v3734
        %v3736 = vpop.f32.mrb[0].mxu0
        %3737 = vmatprep.mubr.bf16.mxu0 0
        %3738 = vmatmul.mubr.bf16.gmra.mrb[0].mxu0 %v3505
        %v3739 = vpop.f32.mrb[0].mxu0
        %v3740 = vadd.f32 0.0, %v3739
        %v3741 = vpop.f32.mrb[0].mxu0
        %v3742 = vpop.f32.mrb[0].mxu0
        %v3743 = vadd.f32 0.0, %v3742
        %v3744 = vpop.f32.mrb[0].mxu0
        %3745 = vmatprep.mubr.bf16.mxu0 0
        %3746 = vmatmul.mubr.bf16.gmra.mrb[0].mxu0 %v3508
        %v3747 = vpop.f32.mrb[0].mxu0
        %v3748 = vadd.f32 0.0, %v3747
        %v3749 = vpop.f32.mrb[0].mxu0
        %v3750 = vpop.f32.mrb[0].mxu0
        %v3751 = vadd.f32 0.0, %v3750
        %v3752 = vpop.f32.mrb[0].mxu0
        %3753 = vmatprep.mubr.bf16.mxu0 0
        %3754 = vmatmul.mubr.bf16.gmra.mrb[0].mxu0 %v3511
        %v3755 = vpop.f32.mrb[0].mxu0
        %v3756 = vadd.f32 0.0, %v3755
        %v3757 = vpop.f32.mrb[0].mxu0
        %v3758 = vpop.f32.mrb[0].mxu0
        %v3759 = vadd.f32 0.0, %v3758
        %v3760 = vpop.f32.mrb[0].mxu0
        %3761 = vmatprep.mubr.bf16.mxu0 0
        %3762 = vmatmul.mubr.bf16.gmra.mrb[0].mxu0 %v3514
        %v3763 = vpop.f32.mrb[0].mxu0
        %v3764 = vadd.f32 0.0, %v3763
        %v3765 = vpop.f32.mrb[0].mxu0
        %v3766 = vpop.f32.mrb[0].mxu0
        %v3767 = vadd.f32 0.0, %v3766
        %v3768 = vpop.f32.mrb[0].mxu0
        %3769 = vmatprep.mubr.bf16.mxu0 0
        %3770 = vmatmul.mubr.bf16.gmra.mrb[0].mxu0 %v3517
        %v3771 = vpop.f32.mrb[0].mxu0
        %v3772 = vadd.f32 0.0, %v3771
        %v3773 = vpop.f32.mrb[0].mxu0
        %v3774 = vpop.f32.mrb[0].mxu0
        %v3775 = vadd.f32 0.0, %v3774
        %v3776 = vpop.f32.mrb[0].mxu0
        %3777 = vmatprep.mubr.bf16.mxu0 0
        %3778 = vmatmul.mubr.bf16.gmra.mrb[0].mxu0 %v3520
        %v3779 = vpop.f32.mrb[0].mxu0
        %v3780 = vadd.f32 0.0, %v3779
        %v3781 = vpop.f32.mrb[0].mxu0
        %v3782 = vpop.f32.mrb[0].mxu0
        %v3783 = vadd.f32 0.0, %v3782
        %v3784 = vpop.f32.mrb[0].mxu0
        %3785 = vmatprep.mubr.bf16.mxu0 0
        %3786 = vmatmul.mubr.bf16.gmra.mrb[0].mxu0 %v3523
        %v3787 = vpop.f32.mrb[0].mxu0
        %v3788 = vadd.f32 0.0, %v3787
        %v3789 = vpop.f32.mrb[0].mxu0
        %v3790 = vpop.f32.mrb[0].mxu0
        %v3791 = vadd.f32 0.0, %v3790
        %v3792 = vpop.f32.mrb[0].mxu0
        %3793 = vmatprep.mubr.bf16.mxu0 0
        %3794 = vmatmul.mubr.bf16.gmra.mrb[0].mxu0 %v3526
        %v3795 = vpop.f32.mrb[0].mxu0
        %v3796 = vadd.f32 0.0, %v3795
        %v3797 = vpop.f32.mrb[0].mxu0
        %v3798 = vpop.f32.mrb[0].mxu0
        %v3799 = vadd.f32 0.0, %v3798
        %v3800 = vpop.f32.mrb[0].mxu0
        %3801 = vmatprep.mubr.bf16.mxu0 0
        %3802 = vmatmul.mubr.bf16.gmra.mrb[0].mxu0 %v3529
        %v3803 = vpop.f32.mrb[0].mxu0
        %v3804 = vadd.f32 0.0, %v3803
        %v3805 = vpop.f32.mrb[0].mxu0
        %v3806 = vpop.f32.mrb[0].mxu0
        %v3807 = vadd.f32 0.0, %v3806
        %v3808 = vpop.f32.mrb[0].mxu0
        %3809 = vmatprep.mubr.bf16.mxu0 0
        %3810 = vmatmul.mubr.bf16.gmra.mrb[0].mxu0 %v3532
        %v3811 = vpop.f32.mrb[0].mxu0
        %v3812 = vadd.f32 0.0, %v3811
        %v3813 = vpop.f32.mrb[0].mxu0
        %v3814 = vpop.f32.mrb[0].mxu0
        %v3815 = vadd.f32 0.0, %v3814
        %v3816 = vpop.f32.mrb[0].mxu0
        %3817 = vmatprep.mubr.bf16.mxu0 0
        %3818 = vmatmul.mubr.bf16.gmra.mrb[0].mxu0 %v3535
        %v3819 = vpop.f32.mrb[0].mxu0
        %v3820 = vadd.f32 0.0, %v3819
        %v3821 = vpop.f32.mrb[0].mxu0
        %v3822 = vpop.f32.mrb[0].mxu0
        %v3823 = vadd.f32 0.0, %v3822
        %v3824 = vpop.f32.mrb[0].mxu0
        %3825 = vdwg.mxu0
        %v3826 = vmax.f32 %v3152, %v3572
        %v3827 = vmax.f32 %v3153, %v3575
        %v3828 = vmax.f32 %v3154, %v3580
        %v3829 = vmax.f32 %v3155, %v3583
        %v3830 = vmax.f32 %v3156, %v3588
        %v3831 = vmax.f32 %v3157, %v3591
        %v3832 = vmax.f32 %v3158, %v3596
        %v3833 = vmax.f32 %v3159, %v3599
        %v3834 = vmax.f32 %v3160, %v3604
        %v3835 = vmax.f32 %v3161, %v3607
        %v3836 = vmax.f32 %v3162, %v3612
        %v3837 = vmax.f32 %v3163, %v3615
        %v3838 = vmax.f32 %v3164, %v3620
        %v3839 = vmax.f32 %v3165, %v3623
        %v3840 = vmax.f32 %v3166, %v3628
        %v3841 = vmax.f32 %v3167, %v3631
        %v3842 = vmax.f32 %v3168, %v3636
        %v3843 = vmax.f32 %v3169, %v3639
        %v3844 = vmax.f32 %v3170, %v3644
        %v3845 = vmax.f32 %v3171, %v3647
        %v3846 = vmax.f32 %v3172, %v3652
        %v3847 = vmax.f32 %v3173, %v3655
        %v3848 = vmax.f32 %v3174, %v3660
        %v3849 = vmax.f32 %v3175, %v3663
        %v3850 = vmax.f32 %v3176, %v3668
        %v3851 = vmax.f32 %v3177, %v3671
        %v3852 = vmax.f32 %v3178, %v3676
        %v3853 = vmax.f32 %v3179, %v3679
        %v3854 = vmax.f32 %v3180, %v3684
        %v3855 = vmax.f32 %v3181, %v3687
        %v3856 = vmax.f32 %v3182, %v3692
        %v3857 = vmax.f32 %v3183, %v3695
        %v3858 = vmax.f32 %v3184, %v3700
        %v3859 = vmax.f32 %v3185, %v3703
        %v3860 = vmax.f32 %v3186, %v3708
        %v3861 = vmax.f32 %v3187, %v3711
        %v3862 = vmax.f32 %v3188, %v3716
        %v3863 = vmax.f32 %v3189, %v3719
        %v3864 = vmax.f32 %v3190, %v3724
        %v3865 = vmax.f32 %v3191, %v3727
        %v3866 = vmax.f32 %v3192, %v3732
        %v3867 = vmax.f32 %v3193, %v3735
        %v3868 = vmax.f32 %v3194, %v3740
        %v3869 = vmax.f32 %v3195, %v3743
        %v3870 = vmax.f32 %v3196, %v3748
        %v3871 = vmax.f32 %v3197, %v3751
        %v3872 = vmax.f32 %v3198, %v3756
        %v3873 = vmax.f32 %v3199, %v3759
        %v3874 = vmax.f32 %v3200, %v3764
        %v3875 = vmax.f32 %v3201, %v3767
        %v3876 = vmax.f32 %v3202, %v3772
        %v3877 = vmax.f32 %v3203, %v3775
        %v3878 = vmax.f32 %v3204, %v3780
        %v3879 = vmax.f32 %v3205, %v3783
        %v3880 = vmax.f32 %v3206, %v3788
        %v3881 = vmax.f32 %v3207, %v3791
        %v3882 = vmax.f32 %v3208, %v3796
        %v3883 = vmax.f32 %v3209, %v3799
        %v3884 = vmax.f32 %v3210, %v3804
        %v3885 = vmax.f32 %v3211, %v3807
        %v3886 = vmax.f32 %v3212, %v3812
        %v3887 = vmax.f32 %v3213, %v3815
        %v3888 = vmax.f32 %v3214, %v3820
        %v3889 = vmax.f32 %v3215, %v3823
        %v3890 = vld [vmem:[%s2] sm:$0x1]
        %v3892 = vlaneseq
        %v3893 = vshrl.u32 %v3892, 7
        %v3894 = vsub.s32 0, %v3893
        %v3895 = vrot.slane %v3890, %v3894
        %v3897 = vadd.f32 %v3826, %v3895
        %v3898 = vadd.f32 %v3827, %v3895
        %v3899 = vadd.f32 %v3828, %v3895
        %v3900 = vadd.f32 %v3829, %v3895
        %v3901 = vadd.f32 %v3830, %v3895
        %v3902 = vadd.f32 %v3831, %v3895
        %v3903 = vadd.f32 %v3832, %v3895
        %v3904 = vadd.f32 %v3833, %v3895
        %v3905 = vadd.f32 %v3834, %v3895
        %v3906 = vadd.f32 %v3835, %v3895
        %v3907 = vadd.f32 %v3836, %v3895
        %v3908 = vadd.f32 %v3837, %v3895
        %v3909 = vadd.f32 %v3838, %v3895
        %v3910 = vadd.f32 %v3839, %v3895
        %v3911 = vadd.f32 %v3840, %v3895
        %v3912 = vadd.f32 %v3841, %v3895
        %v3913 = vadd.f32 %v3842, %v3895
        %v3914 = vadd.f32 %v3843, %v3895
        %v3915 = vadd.f32 %v3844, %v3895
        %v3916 = vadd.f32 %v3845, %v3895
        %v3917 = vadd.f32 %v3846, %v3895
        %v3918 = vadd.f32 %v3847, %v3895
        %v3919 = vadd.f32 %v3848, %v3895
        %v3920 = vadd.f32 %v3849, %v3895
        %v3921 = vadd.f32 %v3850, %v3895
        %v3922 = vadd.f32 %v3851, %v3895
        %v3923 = vadd.f32 %v3852, %v3895
        %v3924 = vadd.f32 %v3853, %v3895
        %v3925 = vadd.f32 %v3854, %v3895
        %v3926 = vadd.f32 %v3855, %v3895
        %v3927 = vadd.f32 %v3856, %v3895
        %v3928 = vadd.f32 %v3857, %v3895
        %v3929 = vadd.f32 %v3858, %v3895
        %v3930 = vadd.f32 %v3859, %v3895
        %v3931 = vadd.f32 %v3860, %v3895
        %v3932 = vadd.f32 %v3861, %v3895
        %v3933 = vadd.f32 %v3862, %v3895
        %v3934 = vadd.f32 %v3863, %v3895
        %v3935 = vadd.f32 %v3864, %v3895
        %v3936 = vadd.f32 %v3865, %v3895
        %v3937 = vadd.f32 %v3866, %v3895
        %v3938 = vadd.f32 %v3867, %v3895
        %v3939 = vadd.f32 %v3868, %v3895
        %v3940 = vadd.f32 %v3869, %v3895
        %v3941 = vadd.f32 %v3870, %v3895
        %v3942 = vadd.f32 %v3871, %v3895
        %v3943 = vadd.f32 %v3872, %v3895
        %v3944 = vadd.f32 %v3873, %v3895
        %v3945 = vadd.f32 %v3874, %v3895
        %v3946 = vadd.f32 %v3875, %v3895
        %v3947 = vadd.f32 %v3876, %v3895
        %v3948 = vadd.f32 %v3877, %v3895
        %v3949 = vadd.f32 %v3878, %v3895
        %v3950 = vadd.f32 %v3879, %v3895
        %v3951 = vadd.f32 %v3880, %v3895
        %v3952 = vadd.f32 %v3881, %v3895
        %v3953 = vadd.f32 %v3882, %v3895
        %v3954 = vadd.f32 %v3883, %v3895
        %v3955 = vadd.f32 %v3884, %v3895
        %v3956 = vadd.f32 %v3885, %v3895
        %v3957 = vadd.f32 %v3886, %v3895
        %v3958 = vadd.f32 %v3887, %v3895
        %v3959 = vadd.f32 %v3888, %v3895
        %v3960 = vadd.f32 %v3889, %v3895
        %v3961 = vmax.f32 %v3897, 0.0
        %v3962 = vmax.f32 %v3898, 0.0
        %v3963 = vmax.f32 %v3899, 0.0
        %v3964 = vmax.f32 %v3900, 0.0
        %v3965 = vmax.f32 %v3901, 0.0
        %v3966 = vmax.f32 %v3902, 0.0
        %v3967 = vmax.f32 %v3903, 0.0
        %v3968 = vmax.f32 %v3904, 0.0
        %v3969 = vmax.f32 %v3905, 0.0
        %v3970 = vmax.f32 %v3906, 0.0
        %v3971 = vmax.f32 %v3907, 0.0
        %v3972 = vmax.f32 %v3908, 0.0
        %v3973 = vmax.f32 %v3909, 0.0
        %v3974 = vmax.f32 %v3910, 0.0
        %v3975 = vmax.f32 %v3911, 0.0
        %v3976 = vmax.f32 %v3912, 0.0
        %v3977 = vmax.f32 %v3913, 0.0
        %v3978 = vmax.f32 %v3914, 0.0
        %v3979 = vmax.f32 %v3915, 0.0
        %v3980 = vmax.f32 %v3916, 0.0
        %v3981 = vmax.f32 %v3917, 0.0
        %v3982 = vmax.f32 %v3918, 0.0
        %v3983 = vmax.f32 %v3919, 0.0
        %v3984 = vmax.f32 %v3920, 0.0
        %v3985 = vmax.f32 %v3921, 0.0
        %v3986 = vmax.f32 %v3922, 0.0
        %v3987 = vmax.f32 %v3923, 0.0
        %v3988 = vmax.f32 %v3924, 0.0
        %v3989 = vmax.f32 %v3925, 0.0
        %v3990 = vmax.f32 %v3926, 0.0
        %v3991 = vmax.f32 %v3927, 0.0
        %v3992 = vmax.f32 %v3928, 0.0
        %v3993 = vmax.f32 %v3929, 0.0
        %v3994 = vmax.f32 %v3930, 0.0
        %v3995 = vmax.f32 %v3931, 0.0
        %v3996 = vmax.f32 %v3932, 0.0
        %v3997 = vmax.f32 %v3933, 0.0
        %v3998 = vmax.f32 %v3934, 0.0
        %v3999 = vmax.f32 %v3935, 0.0
        %v4000 = vmax.f32 %v3936, 0.0
        %v4001 = vmax.f32 %v3937, 0.0
        %v4002 = vmax.f32 %v3938, 0.0
        %v4003 = vmax.f32 %v3939, 0.0
        %v4004 = vmax.f32 %v3940, 0.0
        %v4005 = vmax.f32 %v3941, 0.0
        %v4006 = vmax.f32 %v3942, 0.0
        %v4007 = vmax.f32 %v3943, 0.0
        %v4008 = vmax.f32 %v3944, 0.0
        %v4009 = vmax.f32 %v3945, 0.0
        %v4010 = vmax.f32 %v3946, 0.0
        %v4011 = vmax.f32 %v3947, 0.0
        %v4012 = vmax.f32 %v3948, 0.0
        %v4013 = vmax.f32 %v3949, 0.0
        %v4014 = vmax.f32 %v3950, 0.0
        %v4015 = vmax.f32 %v3951, 0.0
        %v4016 = vmax.f32 %v3952, 0.0
        %v4017 = vmax.f32 %v3953, 0.0
        %v4018 = vmax.f32 %v3954, 0.0
        %v4019 = vmax.f32 %v3955, 0.0
        %v4020 = vmax.f32 %v3956, 0.0
        %v4021 = vmax.f32 %v3957, 0.0
        %v4022 = vmax.f32 %v3958, 0.0
        %v4023 = vmax.f32 %v3959, 0.0
        %v4024 = vmax.f32 %v3960, 0.0
        %v4025 = vpack.c.bf16 %v3962, %v3961
        %v4026 = vpack.c.bf16 %v3964, %v3963
        %v4027 = vpack.c.bf16 %v3966, %v3965
        %v4028 = vpack.c.bf16 %v3968, %v3967
        %v4029 = vpack.c.bf16 %v3970, %v3969
        %v4030 = vpack.c.bf16 %v3972, %v3971
        %v4031 = vpack.c.bf16 %v3974, %v3973
        %v4032 = vpack.c.bf16 %v3976, %v3975
        %v4033 = vpack.c.bf16 %v3978, %v3977
        %v4034 = vpack.c.bf16 %v3980, %v3979
        %v4035 = vpack.c.bf16 %v3982, %v3981
        %v4036 = vpack.c.bf16 %v3984, %v3983
        %v4037 = vpack.c.bf16 %v3986, %v3985
        %v4038 = vpack.c.bf16 %v3988, %v3987
        %v4039 = vpack.c.bf16 %v3990, %v3989
        %v4040 = vpack.c.bf16 %v3992, %v3991
        %v4041 = vpack.c.bf16 %v3994, %v3993
        %v4042 = vpack.c.bf16 %v3996, %v3995
        %v4043 = vpack.c.bf16 %v3998, %v3997
        %v4044 = vpack.c.bf16 %v4000, %v3999
        %v4045 = vpack.c.bf16 %v4002, %v4001
        %v4046 = vpack.c.bf16 %v4004, %v4003
        %v4047 = vpack.c.bf16 %v4006, %v4005
        %v4048 = vpack.c.bf16 %v4008, %v4007
        %v4049 = vpack.c.bf16 %v4010, %v4009
        %v4050 = vpack.c.bf16 %v4012, %v4011
        %v4051 = vpack.c.bf16 %v4014, %v4013
        %v4052 = vpack.c.bf16 %v4016, %v4015
        %v4053 = vpack.c.bf16 %v4018, %v4017
        %v4054 = vpack.c.bf16 %v4020, %v4019
        %v4055 = vpack.c.bf16 %v4022, %v4021
        %v4056 = vpack.c.bf16 %v4024, %v4023
        %v4089 = vunpack.c.l.b16 %v4025
        %v4090 = vunpack.c.h.b16 %v4025
        %v4091 = vunpack.c.l.b16 %v4026
        %v4092 = vunpack.c.h.b16 %v4026
        %v4093 = vunpack.c.l.b16 %v4027
        %v4094 = vunpack.c.h.b16 %v4027
        %v4095 = vunpack.c.l.b16 %v4028
        %v4096 = vunpack.c.h.b16 %v4028
        %v4097 = vunpack.c.l.b16 %v4029
        %v4098 = vunpack.c.h.b16 %v4029
        %v4099 = vunpack.c.l.b16 %v4030
        %v4100 = vunpack.c.h.b16 %v4030
        %v4101 = vunpack.c.l.b16 %v4031
        %v4102 = vunpack.c.h.b16 %v4031
        %v4103 = vunpack.c.l.b16 %v4032
        %v4104 = vunpack.c.h.b16 %v4032
        %v4105 = vunpack.c.l.b16 %v4033
        %v4106 = vunpack.c.h.b16 %v4033
        %v4107 = vunpack.c.l.b16 %v4034
        %v4108 = vunpack.c.h.b16 %v4034
        %v4109 = vunpack.c.l.b16 %v4035
        %v4110 = vunpack.c.h.b16 %v4035
        %v4111 = vunpack.c.l.b16 %v4036
        %v4112 = vunpack.c.h.b16 %v4036
        %v4113 = vunpack.c.l.b16 %v4037
        %v4114 = vunpack.c.h.b16 %v4037
        %v4115 = vunpack.c.l.b16 %v4038
        %v4116 = vunpack.c.h.b16 %v4038
        %v4117 = vunpack.c.l.b16 %v4039
        %v4118 = vunpack.c.h.b16 %v4039
        %v4119 = vunpack.c.l.b16 %v4040
        %v4120 = vunpack.c.h.b16 %v4040
        %v4121 = vunpack.c.l.b16 %v4041
        %v4122 = vunpack.c.h.b16 %v4041
        %v4123 = vunpack.c.l.b16 %v4042
        %v4124 = vunpack.c.h.b16 %v4042
        %v4125 = vunpack.c.l.b16 %v4043
        %v4126 = vunpack.c.h.b16 %v4043
        %v4127 = vunpack.c.l.b16 %v4044
        %v4128 = vunpack.c.h.b16 %v4044
        %v4129 = vunpack.c.l.b16 %v4045
        %v4130 = vunpack.c.h.b16 %v4045
        %v4131 = vunpack.c.l.b16 %v4046
        %v4132 = vunpack.c.h.b16 %v4046
        %v4133 = vunpack.c.l.b16 %v4047
        %v4134 = vunpack.c.h.b16 %v4047
        %v4135 = vunpack.c.l.b16 %v4048
        %v4136 = vunpack.c.h.b16 %v4048
        %v4137 = vunpack.c.l.b16 %v4049
        %v4138 = vunpack.c.h.b16 %v4049
        %v4139 = vunpack.c.l.b16 %v4050
        %v4140 = vunpack.c.h.b16 %v4050
        %v4141 = vunpack.c.l.b16 %v4051
        %v4142 = vunpack.c.h.b16 %v4051
        %v4143 = vunpack.c.l.b16 %v4052
        %v4144 = vunpack.c.h.b16 %v4052
        %v4145 = vunpack.c.l.b16 %v4053
        %v4146 = vunpack.c.h.b16 %v4053
        %v4147 = vunpack.c.l.b16 %v4054
        %v4148 = vunpack.c.h.b16 %v4054
        %v4149 = vunpack.c.l.b16 %v4055
        %v4150 = vunpack.c.h.b16 %v4055
        %v4151 = vunpack.c.l.b16 %v4056
        %v4152 = vunpack.c.h.b16 %v4056
        %v4153 = vpack.c.b16 %v4089, %v4089
        %v4154 = vpack.c.b16 %v4090, %v4090
        %v4155 = vpack.c.b16 %v4091, %v4091
        %v4156 = vpack.c.b16 %v4092, %v4092
        %v4157 = vpack.c.b16 %v4093, %v4093
        %v4158 = vpack.c.b16 %v4094, %v4094
        %v4159 = vpack.c.b16 %v4095, %v4095
        %v4160 = vpack.c.b16 %v4096, %v4096
        %v4161 = vpack.c.b16 %v4097, %v4097
        %v4162 = vpack.c.b16 %v4098, %v4098
        %v4163 = vpack.c.b16 %v4099, %v4099
        %v4164 = vpack.c.b16 %v4100, %v4100
        %v4165 = vpack.c.b16 %v4101, %v4101
        %v4166 = vpack.c.b16 %v4102, %v4102
        %v4167 = vpack.c.b16 %v4103, %v4103
        %v4168 = vpack.c.b16 %v4104, %v4104
        %v4169 = vpack.c.b16 %v4105, %v4105
        %v4170 = vpack.c.b16 %v4106, %v4106
        %v4171 = vpack.c.b16 %v4107, %v4107
        %v4172 = vpack.c.b16 %v4108, %v4108
        %v4173 = vpack.c.b16 %v4109, %v4109
        %v4174 = vpack.c.b16 %v4110, %v4110
        %v4175 = vpack.c.b16 %v4111, %v4111
        %v4176 = vpack.c.b16 %v4112, %v4112
        %v4177 = vpack.c.b16 %v4113, %v4113
        %v4178 = vpack.c.b16 %v4114, %v4114
        %v4179 = vpack.c.b16 %v4115, %v4115
        %v4180 = vpack.c.b16 %v4116, %v4116
        %v4181 = vpack.c.b16 %v4117, %v4117
        %v4182 = vpack.c.b16 %v4118, %v4118
        %v4183 = vpack.c.b16 %v4119, %v4119
        %v4184 = vpack.c.b16 %v4120, %v4120
        %v4185 = vpack.c.b16 %v4121, %v4121
        %v4186 = vpack.c.b16 %v4122, %v4122
        %v4187 = vpack.c.b16 %v4123, %v4123
        %v4188 = vpack.c.b16 %v4124, %v4124
        %v4189 = vpack.c.b16 %v4125, %v4125
        %v4190 = vpack.c.b16 %v4126, %v4126
        %v4191 = vpack.c.b16 %v4127, %v4127
        %v4192 = vpack.c.b16 %v4128, %v4128
        %v4193 = vpack.c.b16 %v4129, %v4129
        %v4194 = vpack.c.b16 %v4130, %v4130
        %v4195 = vpack.c.b16 %v4131, %v4131
        %v4196 = vpack.c.b16 %v4132, %v4132
        %v4197 = vpack.c.b16 %v4133, %v4133
        %v4198 = vpack.c.b16 %v4134, %v4134
        %v4199 = vpack.c.b16 %v4135, %v4135
        %v4200 = vpack.c.b16 %v4136, %v4136
        %v4201 = vpack.c.b16 %v4137, %v4137
        %v4202 = vpack.c.b16 %v4138, %v4138
        %v4203 = vpack.c.b16 %v4139, %v4139
        %v4204 = vpack.c.b16 %v4140, %v4140
        %v4205 = vpack.c.b16 %v4141, %v4141
        %v4206 = vpack.c.b16 %v4142, %v4142
        %v4207 = vpack.c.b16 %v4143, %v4143
        %v4208 = vpack.c.b16 %v4144, %v4144
        %v4209 = vpack.c.b16 %v4145, %v4145
        %v4210 = vpack.c.b16 %v4146, %v4146
        %v4211 = vpack.c.b16 %v4147, %v4147
        %v4212 = vpack.c.b16 %v4148, %v4148
        %v4213 = vpack.c.b16 %v4149, %v4149
        %v4214 = vpack.c.b16 %v4150, %v4150
        %v4215 = vpack.c.b16 %v4151, %v4151
        %v4216 = vpack.c.b16 %v4152, %v4152
        %vm4281 = vcmask 125952
        %4282 = vst.msk [vmem:[%s1233] sm:$0xf] %vm4281, %v4153
        %4283 = vst.msk [vmem:[%s1233 + $0x4] sm:$0xf] %vm4281, %v4154
        %4284 = vst.msk [vmem:[%s1233 + $0x8] sm:$0xf] %vm4281, %v4155
        %4285 = vst.msk [vmem:[%s1233 + $0xc] sm:$0xf] %vm4281, %v4156
        %4286 = vst.msk [vmem:[%s1233 + $0x10] sm:$0xf] %vm4281, %v4157
        %4287 = vst.msk [vmem:[%s1233 + $0x14] sm:$0xf] %vm4281, %v4158
        %4288 = vst.msk [vmem:[%s1233 + $0x18] sm:$0xf] %vm4281, %v4159
        %4289 = vst.msk [vmem:[%s1233 + $0x1c] sm:$0xf] %vm4281, %v4160
        %4290 = vst.msk [vmem:[%s1233 + $0x20] sm:$0xf] %vm4281, %v4161
        %4291 = vst.msk [vmem:[%s1233 + $0x24] sm:$0xf] %vm4281, %v4162
        %4292 = vst.msk [vmem:[%s1233 + $0x28] sm:$0xf] %vm4281, %v4163
        %4293 = vst.msk [vmem:[%s1233 + $0x2c] sm:$0xf] %vm4281, %v4164
        %4294 = vst.msk [vmem:[%s1233 + $0x30] sm:$0xf] %vm4281, %v4165
        %4295 = vst.msk [vmem:[%s1233 + $0x34] sm:$0xf] %vm4281, %v4166
        %4296 = vst.msk [vmem:[%s1233 + $0x38] sm:$0xf] %vm4281, %v4167
        %4297 = vst.msk [vmem:[%s1233 + $0x3c] sm:$0xf] %vm4281, %v4168
        %4298 = vst.msk [vmem:[%s1233 + $0x40] sm:$0xf] %vm4281, %v4169
        %4299 = vst.msk [vmem:[%s1233 + $0x44] sm:$0xf] %vm4281, %v4170
        %4300 = vst.msk [vmem:[%s1233 + $0x48] sm:$0xf] %vm4281, %v4171
        %4301 = vst.msk [vmem:[%s1233 + $0x4c] sm:$0xf] %vm4281, %v4172
        %4302 = vst.msk [vmem:[%s1233 + $0x50] sm:$0xf] %vm4281, %v4173
        %4303 = vst.msk [vmem:[%s1233 + $0x54] sm:$0xf] %vm4281, %v4174
        %4304 = vst.msk [vmem:[%s1233 + $0x58] sm:$0xf] %vm4281, %v4175
        %4305 = vst.msk [vmem:[%s1233 + $0x5c] sm:$0xf] %vm4281, %v4176
        %4306 = vst.msk [vmem:[%s1233 + $0x60] sm:$0xf] %vm4281, %v4177
        %4307 = vst.msk [vmem:[%s1233 + $0x64] sm:$0xf] %vm4281, %v4178
        %4308 = vst.msk [vmem:[%s1233 + $0x68] sm:$0xf] %vm4281, %v4179
        %4309 = vst.msk [vmem:[%s1233 + $0x6c] sm:$0xf] %vm4281, %v4180
        %4310 = vst.msk [vmem:[%s1233 + $0x70] sm:$0xf] %vm4281, %v4181
        %4311 = vst.msk [vmem:[%s1233 + $0x74] sm:$0xf] %vm4281, %v4182
        %4312 = vst.msk [vmem:[%s1233 + $0x78] sm:$0xf] %vm4281, %v4183
        %4313 = vst.msk [vmem:[%s1233 + $0x7c] sm:$0xf] %vm4281, %v4184
        %4314 = vst.msk [vmem:[%s1233 + $0x80] sm:$0xf] %vm4281, %v4185
        %4315 = vst.msk [vmem:[%s1233 + $0x84] sm:$0xf] %vm4281, %v4186
        %4316 = vst.msk [vmem:[%s1233 + $0x88] sm:$0xf] %vm4281, %v4187
        %4317 = vst.msk [vmem:[%s1233 + $0x8c] sm:$0xf] %vm4281, %v4188
        %4318 = vst.msk [vmem:[%s1233 + $0x90] sm:$0xf] %vm4281, %v4189
        %4319 = vst.msk [vmem:[%s1233 + $0x94] sm:$0xf] %vm4281, %v4190
        %4320 = vst.msk [vmem:[%s1233 + $0x98] sm:$0xf] %vm4281, %v4191
        %4321 = vst.msk [vmem:[%s1233 + $0x9c] sm:$0xf] %vm4281, %v4192
        %4322 = vst.msk [vmem:[%s1233 + $0xa0] sm:$0xf] %vm4281, %v4193
        %4323 = vst.msk [vmem:[%s1233 + $0xa4] sm:$0xf] %vm4281, %v4194
        %4324 = vst.msk [vmem:[%s1233 + $0xa8] sm:$0xf] %vm4281, %v4195
        %4325 = vst.msk [vmem:[%s1233 + $0xac] sm:$0xf] %vm4281, %v4196
        %4326 = vst.msk [vmem:[%s1233 + $0xb0] sm:$0xf] %vm4281, %v4197
        %4327 = vst.msk [vmem:[%s1233 + $0xb4] sm:$0xf] %vm4281, %v4198
        %4328 = vst.msk [vmem:[%s1233 + $0xb8] sm:$0xf] %vm4281, %v4199
        %4329 = vst.msk [vmem:[%s1233 + $0xbc] sm:$0xf] %vm4281, %v4200
        %4330 = vst.msk [vmem:[%s1233 + $0xc0] sm:$0xf] %vm4281, %v4201
        %4331 = vst.msk [vmem:[%s1233 + $0xc4] sm:$0xf] %vm4281, %v4202
        %4332 = vst.msk [vmem:[%s1233 + $0xc8] sm:$0xf] %vm4281, %v4203
        %4333 = vst.msk [vmem:[%s1233 + $0xcc] sm:$0xf] %vm4281, %v4204
        %4334 = vst.msk [vmem:[%s1233 + $0xd0] sm:$0xf] %vm4281, %v4205
        %4335 = vst.msk [vmem:[%s1233 + $0xd4] sm:$0xf] %vm4281, %v4206
        %4336 = vst.msk [vmem:[%s1233 + $0xd8] sm:$0xf] %vm4281, %v4207
        %4337 = vst.msk [vmem:[%s1233 + $0xdc] sm:$0xf] %vm4281, %v4208
        %4338 = vst.msk [vmem:[%s1233 + $0xe0] sm:$0xf] %vm4281, %v4209
        %4339 = vst.msk [vmem:[%s1233 + $0xe4] sm:$0xf] %vm4281, %v4210
        %4340 = vst.msk [vmem:[%s1233 + $0xe8] sm:$0xf] %vm4281, %v4211
        %4341 = vst.msk [vmem:[%s1233 + $0xec] sm:$0xf] %vm4281, %v4212
        %4342 = vst.msk [vmem:[%s1233 + $0xf0] sm:$0xf] %vm4281, %v4213
        %4343 = vst.msk [vmem:[%s1233 + $0xf4] sm:$0xf] %vm4281, %v4214
        %4344 = vst.msk [vmem:[%s1233 + $0xf8] sm:$0xf] %vm4281, %v4215
        %4345 = vst.msk [vmem:[%s1233 + $0xfc] sm:$0xf] %vm4281, %v4216
        %s4346 = smul.u32 64, %s14
        %p4347 = scmp.lt.s32.totalorder %s4346, 127
        %s4348 = scalar_select %p4347, %s4346, 127
        %s4349 = smul.addr %s4348, 4
        %s4350 = scalar_lea.vmem %s3, %s4349
        // Predicated region
        $region74: #{net_forward.3} parent=68 // pred_check
          %p4351 = pneg %p100
        $region75: #{net_forward.3} parent=68 // pred_check_branch
          %4353 = sbr.rel (%p4351) target = $region77
        $region76: #{net_forward.3} parent=68 // pred_region
          %s4354 = smul.u32 64, %s14
        $region77: #{net_forward.3} parent=68 // pred_fallthru
          _
      $region69: #{net_forward.3} parent=5 // pred_fallthru
        _
      %p4355 = scmp.le.s32.totalorder 2, %s9
      // Predicated region
      $region78: #{net_forward.3} parent=5 // pred_check
        %p4356 = pneg %p4355
      $region79: #{net_forward.3} parent=5 // pred_check_branch
        %4358 = sbr.rel (%p4356) target = $region81
      $region80: #{net_forward.3} parent=5 // pred_region
        %s4359 = ssub.s32 %s9, 2
        // Predicated region
        $region82: #{net_forward.3} parent=80 // pred_check
          %p4360 = pneg %p106
        $region83: #{net_forward.3} parent=80 // pred_check_branch
          %4362 = sbr.rel (%p4360) target = $region85
        $region84: #{net_forward.3} parent=80 // pred_region
          %s4363 = smul.u32 64, %s15
          %p4364 = scmp.lt.s32.totalorder %s4363, 127
          %s4365 = scalar_select %p4364, %s4363, 127
          %s4366 = smul.addr %s4365, 4
          %s4367 = scalar_lea.vmem %s3, %s4366
        $region85: #{net_forward.3} parent=80 // pred_fallthru
          _
      $region81: #{net_forward.3} parent=5 // pred_fallthru
        _
    $region6: #{net_forward.3} parent=1 // loop_footer
      %s13 = sadd.s32 1, %s9
    $region7: #{net_forward.3} parent=1 // loop_footer_branch
      %8 = sbr.rel target = $region3
    $region8: #{net_forward.3} parent=1 // loop_exit
      _

// kernel: net_forward.4
$region0: #{net_forward.4}
  #allocation0 [shape = 'u32[]', space=smem, size = 0x4, offset = 0x4, fixed_abs, tag = 'smem constant byte address 0x4 - core index']
  #allocation1 [shape = 'u32[144,128]{1,0:T(1,128)}', space=vmem, size = 0x12000, scoped, tag = 'internal scratch']
  %s0 = inlined_call_operand.vmem [shape: bf16[4,162,400], index: 0, kind: input, shape index: {}]
  %s1 = inlined_call_operand.vmem [shape: bf16[400,16], index: 1, kind: input, shape index: {}]
  %s2 = inlined_call_operand.vmem [shape: f32[1,16], index: 2, kind: input, shape index: {}]
  %s3 = inlined_call_operand.vmem [shape: bf16[162,16], index: 3, kind: output, shape index: {}]
  %s4 = sld [smem:[#allocation0]]
  $region22: #{net_forward.4} parent=0
    _
  %s6 = ssub.s32 1, %s4
  %s7 = scalar_select 0, %s6, %s4
  // Predicated region
  $region2: #{net_forward.4} parent=0 // pred_check
    _
  $region3: #{net_forward.4} parent=0 // pred_check_branch
    %9 = sbr.rel (0) target = $region5
  $region4: #{net_forward.4} parent=0 // pred_region
    _
  $region5: #{net_forward.4} parent=0 // pred_fallthru
    _
  // Predicated region
  $region6: #{net_forward.4} parent=0 // pred_check
    _
  $region7: #{net_forward.4} parent=0 // pred_check_branch
    %11 = sbr.rel (0) target = $region9
  $region8: #{net_forward.4} parent=0 // pred_region
    _
  $region9: #{net_forward.4} parent=0 // pred_fallthru
    _
  // Predicated region
  $region10: #{net_forward.4} parent=0 // pred_check
    _
  $region11: #{net_forward.4} parent=0 // pred_check_branch
    %13 = sbr.rel (0) target = $region13
  $region12: #{net_forward.4} parent=0 // pred_region
    _
  $region13: #{net_forward.4} parent=0 // pred_fallthru
    _
  %v15 = vld [vmem:[%s1] sm:$0xf]
  %v16 = vld [vmem:[%s1 + $0x4] sm:$0xf]
  %v17 = vld [vmem:[%s1 + $0x8] sm:$0xf]
  %v18 = vld [vmem:[%s1 + $0xc] sm:$0xf]
  %v19 = vld [vmem:[%s1 + $0x10] sm:$0xf]
  %v20 = vld [vmem:[%s1 + $0x14] sm:$0xf]
  %v21 = vld [vmem:[%s1 + $0x18] sm:$0xf]
  %v22 = vld [vmem:[%s1 + $0x1c] sm:$0xf]
  %v23 = vld [vmem:[%s1 + $0x20] sm:$0xf]
  %v24 = vld [vmem:[%s1 + $0x24] sm:$0xf]
  %v25 = vld [vmem:[%s1 + $0x28] sm:$0xf]
  %v26 = vld [vmem:[%s1 + $0x2c] sm:$0xf]
  %v27 = vld [vmem:[%s1 + $0x30] sm:$0xf]
  %v28 = vld [vmem:[%s1 + $0x34] sm:$0xf]
  %v29 = vld [vmem:[%s1 + $0x38] sm:$0xf]
  %v30 = vld [vmem:[%s1 + $0x3c] sm:$0xf]
  %v31 = vld [vmem:[%s1 + $0x40] sm:$0xf]
  %v32 = vld [vmem:[%s1 + $0x44] sm:$0xf]
  %v33 = vld [vmem:[%s1 + $0x48] sm:$0xf]
  %v34 = vld [vmem:[%s1 + $0x4c] sm:$0xf]
  %v35 = vld [vmem:[%s1 + $0x50] sm:$0xf]
  %v36 = vld [vmem:[%s1 + $0x54] sm:$0xf]
  %v37 = vld [vmem:[%s1 + $0x58] sm:$0xf]
  %v38 = vld [vmem:[%s1 + $0x5c] sm:$0xf]
  %v39 = vld [vmem:[%s1 + $0x60] sm:$0xf]
  %v40 = vld [vmem:[%s1 + $0x64] sm:$0xf]
  %v41 = vld [vmem:[%s1 + $0x68] sm:$0xf]
  %v42 = vld [vmem:[%s1 + $0x6c] sm:$0xf]
  %v43 = vld [vmem:[%s1 + $0x70] sm:$0xf]
  %v44 = vld [vmem:[%s1 + $0x74] sm:$0xf]
  %v45 = vld [vmem:[%s1 + $0x78] sm:$0xf]
  %v46 = vld [vmem:[%s1 + $0x7c] sm:$0xf]
  %v47 = vld [vmem:[%s1 + $0x80] sm:$0xf]
  %v48 = vld [vmem:[%s1 + $0x84] sm:$0xf]
  %v49 = vld [vmem:[%s1 + $0x88] sm:$0xf]
  %v50 = vld [vmem:[%s1 + $0x8c] sm:$0xf]
  %v51 = vld [vmem:[%s1 + $0x90] sm:$0xf]
  %v52 = vld [vmem:[%s1 + $0x94] sm:$0xf]
  %v53 = vld [vmem:[%s1 + $0x98] sm:$0xf]
  %v54 = vld [vmem:[%s1 + $0x9c] sm:$0xf]
  %v55 = vld [vmem:[%s1 + $0xa0] sm:$0xf]
  %v56 = vld [vmem:[%s1 + $0xa4] sm:$0xf]
  %v57 = vld [vmem:[%s1 + $0xa8] sm:$0xf]
  %v58 = vld [vmem:[%s1 + $0xac] sm:$0xf]
  %v59 = vld [vmem:[%s1 + $0xb0] sm:$0xf]
  %v60 = vld [vmem:[%s1 + $0xb4] sm:$0xf]
  %v61 = vld [vmem:[%s1 + $0xb8] sm:$0xf]
  %v62 = vld [vmem:[%s1 + $0xbc] sm:$0xf]
  %v63 = vld [vmem:[%s1 + $0xc0] sm:$0xf]
  %v64 = vld [vmem:[%s1 + $0xc4] sm:$0xf]
  %v65 = vld [vmem:[%s0] sm:$0xff]
  %v66 = vld [vmem:[%s0 + $0x8] sm:$0xff]
  %v67 = vld [vmem:[%s0 + $0x10] sm:$0xff]
  %v68 = vld [vmem:[%s0 + $0x18] sm:$0xff]
  %v69 = vld [vmem:[%s0 + $0x20] sm:$0xff]
  %v70 = vld [vmem:[%s0 + $0x28] sm:$0xff]
  %v71 = vld [vmem:[%s0 + $0x30] sm:$0xff]
  %v72 = vld [vmem:[%s0 + $0x38] sm:$0xff]
  %v73 = vld [vmem:[%s0 + $0x40] sm:$0xff]
  %v74 = vld [vmem:[%s0 + $0x48] sm:$0xff]
  %v75 = vld [vmem:[%s0 + $0x50] sm:$0xff]
  %v76 = vld [vmem:[%s0 + $0x58] sm:$0xff]
  %v77 = vld [vmem:[%s0 + $0x60] sm:$0xff]
  %v78 = vld [vmem:[%s0 + $0x68] sm:$0xff]
  %v79 = vld [vmem:[%s0 + $0x70] sm:$0xff]
  %v80 = vld [vmem:[%s0 + $0x78] sm:$0xff]
  %v81 = vld [vmem:[%s0 + $0x80] sm:$0xff]
  %v82 = vld [vmem:[%s0 + $0x88] sm:$0xff]
  %v83 = vld [vmem:[%s0 + $0x90] sm:$0xff]
  %v84 = vld [vmem:[%s0 + $0x98] sm:$0xff]
  %v85 = vld [vmem:[%s0 + $0xa0] sm:$0xff]
  %v86 = vld [vmem:[%s0 + $0xa8] sm:$0xff]
  %v87 = vld [vmem:[%s0 + $0xb0] sm:$0xff]
  %v88 = vld [vmem:[%s0 + $0xb8] sm:$0xff]
  %v89 = vld [vmem:[%s0 + $0xc0] sm:$0xff]
  %v90 = vld [vmem:[%s0 + $0xc8] sm:$0xff]
  %v91 = vld [vmem:[%s0 + $0xd0] sm:$0xff]
  %v92 = vld [vmem:[%s0 + $0xd8] sm:$0xff]
  %v93 = vld [vmem:[%s0 + $0xe0] sm:$0xff]
  %v94 = vld [vmem:[%s0 + $0xe8] sm:$0xff]
  %v95 = vld [vmem:[%s0 + $0xf0] sm:$0xff]
  %v96 = vld [vmem:[%s0 + $0xf8] sm:$0xff]
  %v97 = vld [vmem:[%s0 + $0x100] sm:$0xff]
  %v98 = vld [vmem:[%s0 + $0x108] sm:$0xff]
  %v99 = vld [vmem:[%s0 + $0x110] sm:$0xff]
  %v100 = vld [vmem:[%s0 + $0x118] sm:$0xff]
  %v101 = vld [vmem:[%s0 + $0x120] sm:$0xff]
  %v102 = vld [vmem:[%s0 + $0x128] sm:$0xff]
  %v103 = vld [vmem:[%s0 + $0x130] sm:$0xff]
  %v104 = vld [vmem:[%s0 + $0x138] sm:$0xff]
  %v105 = vld [vmem:[%s0 + $0x140] sm:$0x11]
  %v106 = vld [vmem:[%s0 + $0x148] sm:$0x11]
  %v149 = vunpack.c.l.b16 %v65
  %v150 = vunpack.c.h.b16 %v65
  %v151 = vunpack.c.l.b16 %v66
  %v152 = vunpack.c.h.b16 %v66
  %v153 = vunpack.c.l.b16 %v67
  %v154 = vunpack.c.h.b16 %v67
  %v155 = vunpack.c.l.b16 %v68
  %v156 = vunpack.c.h.b16 %v68
  %v157 = vunpack.c.l.b16 %v69
  %v158 = vunpack.c.h.b16 %v69
  %v159 = vunpack.c.l.b16 %v70
  %v160 = vunpack.c.h.b16 %v70
  %v161 = vunpack.c.l.b16 %v71
  %v162 = vunpack.c.h.b16 %v71
  %v163 = vunpack.c.l.b16 %v72
  %v164 = vunpack.c.h.b16 %v72
  %v165 = vunpack.c.l.b16 %v73
  %v166 = vunpack.c.h.b16 %v73
  %v167 = vunpack.c.l.b16 %v74
  %v168 = vunpack.c.h.b16 %v74
  %v169 = vunpack.c.l.b16 %v75
  %v170 = vunpack.c.h.b16 %v75
  %v171 = vunpack.c.l.b16 %v76
  %v172 = vunpack.c.h.b16 %v76
  %v173 = vunpack.c.l.b16 %v77
  %v174 = vunpack.c.h.b16 %v77
  %v175 = vunpack.c.l.b16 %v78
  %v176 = vunpack.c.h.b16 %v78
  %v177 = vunpack.c.l.b16 %v79
  %v178 = vunpack.c.h.b16 %v79
  %v179 = vunpack.c.l.b16 %v80
  %v180 = vunpack.c.h.b16 %v80
  %v181 = vunpack.c.l.b16 %v81
  %v182 = vunpack.c.h.b16 %v81
  %v183 = vunpack.c.l.b16 %v82
  %v184 = vunpack.c.h.b16 %v82
  %v185 = vunpack.c.l.b16 %v83
  %v186 = vunpack.c.h.b16 %v83
  %v187 = vunpack.c.l.b16 %v84
  %v188 = vunpack.c.h.b16 %v84
  %v189 = vunpack.c.l.b16 %v85
  %v190 = vunpack.c.h.b16 %v85
  %v191 = vunpack.c.l.b16 %v86
  %v192 = vunpack.c.h.b16 %v86
  %v193 = vunpack.c.l.b16 %v87
  %v194 = vunpack.c.h.b16 %v87
  %v195 = vunpack.c.l.b16 %v88
  %v196 = vunpack.c.h.b16 %v88
  %v197 = vunpack.c.l.b16 %v89
  %v198 = vunpack.c.h.b16 %v89
  %v199 = vunpack.c.l.b16 %v90
  %v200 = vunpack.c.h.b16 %v90
  %v201 = vunpack.c.l.b16 %v91
  %v202 = vunpack.c.h.b16 %v91
  %v203 = vunpack.c.l.b16 %v92
  %v204 = vunpack.c.h.b16 %v92
  %v205 = vunpack.c.l.b16 %v93
  %v206 = vunpack.c.h.b16 %v93
  %v207 = vunpack.c.l.b16 %v94
  %v208 = vunpack.c.h.b16 %v94
  %v209 = vunpack.c.l.b16 %v95
  %v210 = vunpack.c.h.b16 %v95
  %v211 = vunpack.c.l.b16 %v96
  %v212 = vunpack.c.h.b16 %v96
  %v213 = vunpack.c.l.b16 %v97
  %v214 = vunpack.c.h.b16 %v97
  %v215 = vunpack.c.l.b16 %v98
  %v216 = vunpack.c.h.b16 %v98
  %v217 = vunpack.c.l.b16 %v99
  %v218 = vunpack.c.h.b16 %v99
  %v219 = vunpack.c.l.b16 %v100
  %v220 = vunpack.c.h.b16 %v100
  %v221 = vunpack.c.l.b16 %v101
  %v222 = vunpack.c.h.b16 %v101
  %v223 = vunpack.c.l.b16 %v102
  %v224 = vunpack.c.h.b16 %v102
  %v225 = vunpack.c.l.b16 %v103
  %v226 = vunpack.c.h.b16 %v103
  %v227 = vunpack.c.l.b16 %v104
  %v228 = vunpack.c.h.b16 %v104
  %v229 = vunpack.c.l.b16 %v105
  %v230 = vunpack.c.h.b16 %v105
  %v231 = vunpack.c.l.b16 %v106
  %v232 = vunpack.c.h.b16 %v106
  %v233 = vpack.c.b16 %v153, %v149
  %v234 = vpack.c.b16 %v154, %v150
  %v235 = vpack.c.b16 %v155, %v151
  %v236 = vpack.c.b16 %v156, %v152
  %v237 = vpack.c.b16 %v161, %v157
  %v238 = vpack.c.b16 %v162, %v158
  %v239 = vpack.c.b16 %v163, %v159
  %v240 = vpack.c.b16 %v164, %v160
  %v241 = vpack.c.b16 %v169, %v165
  %v242 = vpack.c.b16 %v170, %v166
  %v243 = vpack.c.b16 %v171, %v167
  %v244 = vpack.c.b16 %v172, %v168
  %v245 = vpack.c.b16 %v177, %v173
  %v246 = vpack.c.b16 %v178, %v174
  %v247 = vpack.c.b16 %v179, %v175
  %v248 = vpack.c.b16 %v180, %v176
  %v249 = vpack.c.b16 %v185, %v181
  %v250 = vpack.c.b16 %v186, %v182
  %v251 = vpack.c.b16 %v187, %v183
  %v252 = vpack.c.b16 %v188, %v184
  %v253 = vpack.c.b16 %v193, %v189
  %v254 = vpack.c.b16 %v194, %v190
  %v255 = vpack.c.b16 %v195, %v191
  %v256 = vpack.c.b16 %v196, %v192
  %v257 = vpack.c.b16 %v201, %v197
  %v258 = vpack.c.b16 %v202, %v198
  %v259 = vpack.c.b16 %v203, %v199
  %v260 = vpack.c.b16 %v204, %v200
  %v261 = vpack.c.b16 %v209, %v205
  %v262 = vpack.c.b16 %v210, %v206
  %v263 = vpack.c.b16 %v211, %v207
  %v264 = vpack.c.b16 %v212, %v208
  %v265 = vpack.c.b16 %v217, %v213
  %v266 = vpack.c.b16 %v218, %v214
  %v267 = vpack.c.b16 %v219, %v215
  %v268 = vpack.c.b16 %v220, %v216
  %v269 = vpack.c.b16 %v225, %v221
  %v270 = vpack.c.b16 %v226, %v222
  %v271 = vpack.c.b16 %v227, %v223
  %v272 = vpack.c.b16 %v228, %v224
  %v273 = vpack.c.b16 %v229, %v229
  %v274 = vpack.c.b16 %v230, %v230
  %v275 = vpack.c.b16 %v231, %v231
  %v276 = vpack.c.b16 %v232, %v232
  %v360 = vunpack.c.l.b16 %v15
  %v361 = vunpack.c.l.b16 %v16
  %v362 = vunpack.c.l.b16 %v17
  %v363 = vunpack.c.l.b16 %v18
  %v364 = vunpack.c.l.b16 %v19
  %v365 = vunpack.c.l.b16 %v20
  %v366 = vunpack.c.l.b16 %v21
  %v367 = vunpack.c.l.b16 %v22
  %v368 = vunpack.c.l.b16 %v23
  %v369 = vunpack.c.l.b16 %v24
  %v370 = vunpack.c.l.b16 %v25
  %v371 = vunpack.c.l.b16 %v26
  %v372 = vunpack.c.l.b16 %v27
  %v373 = vunpack.c.l.b16 %v28
  %v374 = vunpack.c.l.b16 %v29
  %v375 = vunpack.c.l.b16 %v30
  %v376 = vunpack.c.l.b16 %v31
  %v377 = vunpack.c.l.b16 %v32
  %v378 = vunpack.c.l.b16 %v33
  %v379 = vunpack.c.l.b16 %v34
  %v380 = vunpack.c.l.b16 %v35
  %v381 = vunpack.c.l.b16 %v36
  %v382 = vunpack.c.l.b16 %v37
  %v383 = vunpack.c.l.b16 %v38
  %v384 = vunpack.c.l.b16 %v39
  %v385 = vunpack.c.l.b16 %v40
  %v386 = vunpack.c.l.b16 %v41
  %v387 = vunpack.c.l.b16 %v42
  %v388 = vunpack.c.l.b16 %v43
  %v389 = vunpack.c.l.b16 %v44
  %v390 = vunpack.c.l.b16 %v45
  %v391 = vunpack.c.l.b16 %v46
  %v392 = vunpack.c.l.b16 %v47
  %v393 = vunpack.c.l.b16 %v48
  %v394 = vunpack.c.l.b16 %v49
  %v395 = vunpack.c.l.b16 %v50
  %v396 = vunpack.c.l.b16 %v51
  %v397 = vunpack.c.l.b16 %v52
  %v398 = vunpack.c.l.b16 %v53
  %v399 = vunpack.c.l.b16 %v54
  %v400 = vunpack.c.l.b16 %v55
  %v401 = vunpack.c.l.b16 %v56
  %v402 = vunpack.c.l.b16 %v57
  %v403 = vunpack.c.l.b16 %v58
  %v404 = vunpack.c.l.b16 %v59
  %v405 = vunpack.c.l.b16 %v60
  %v406 = vunpack.c.l.b16 %v61
  %v407 = vunpack.c.l.b16 %v62
  %v408 = vunpack.c.l.b16 %v63
  %v409 = vunpack.c.l.b16 %v64
  %v410 = vpack.c.b16 %v361, %v360
  %v411 = vpack.c.b16 %v363, %v362
  %v412 = vpack.c.b16 %v365, %v364
  %v413 = vpack.c.b16 %v367, %v366
  %v414 = vpack.c.b16 %v369, %v368
  %v415 = vpack.c.b16 %v371, %v370
  %v416 = vpack.c.b16 %v373, %v372
  %v417 = vpack.c.b16 %v375, %v374
  %v418 = vpack.c.b16 %v377, %v376
  %v419 = vpack.c.b16 %v379, %v378
  %v420 = vpack.c.b16 %v381, %v380
  %v421 = vpack.c.b16 %v383, %v382
  %v422 = vpack.c.b16 %v385, %v384
  %v423 = vpack.c.b16 %v387, %v386
  %v424 = vpack.c.b16 %v389, %v388
  %v425 = vpack.c.b16 %v391, %v390
  %v426 = vpack.c.b16 %v393, %v392
  %v427 = vpack.c.b16 %v395, %v394
  %v428 = vpack.c.b16 %v397, %v396
  %v429 = vpack.c.b16 %v399, %v398
  %v430 = vpack.c.b16 %v401, %v400
  %v431 = vpack.c.b16 %v403, %v402
  %v432 = vpack.c.b16 %v405, %v404
  %v433 = vpack.c.b16 %v407, %v406
  %v434 = vpack.c.b16 %v409, %v408
  %vm460 = vcmask 130048
  %v462 = vsel %vm460, %v236, 0
  %v465 = vsel %vm460, %v240, 0
  %v468 = vsel %vm460, %v244, 0
  %v471 = vsel %vm460, %v248, 0
  %v474 = vsel %vm460, %v252, 0
  %v477 = vsel %vm460, %v256, 0
  %v480 = vsel %vm460, %v260, 0
  %v483 = vsel %vm460, %v264, 0
  %v486 = vsel %vm460, %v268, 0
  %v489 = vsel %vm460, %v272, 0
  %v492 = vsel %vm460, %v276, 0
  %494 = vmatprep.subr.bf16.mxu0 0
  %495 = vmatpush1.bf16.msra.mxu0 %v410
  %496 = vmatprep.subr.bf16.mxu0 0
  %497 = vmatpush1.bf16.msra.mxu0 %v411
  %498 = vmatprep.subr.bf16.mxu0 0
  %499 = vmatpush1.bf16.msra.mxu0 %v412
  %500 = vmatprep.subr.bf16.mxu0 0
  %501 = vmatpush1.bf16.msra.mxu0 %v413
  %502 = vmatprep.subr.bf16.mxu0 0
  %503 = vmatpush1.bf16.msra.mxu0 %v414
  %504 = vmatprep.subr.bf16.mxu0 0
  %505 = vmatpush1.bf16.msra.mxu0 %v415
  %506 = vmatprep.subr.bf16.mxu0 0
  %507 = vmatpush1.bf16.msra.mxu0 %v416
  %508 = vmatprep.subr.bf16.mxu0 0
  %509 = vmatpush1.bf16.msra.mxu0 %v417
  %510 = vmatprep.subr.bf16.mxu0 0
  %511 = vmatpush1.bf16.msra.mxu0 %v418
  %512 = vmatprep.subr.bf16.mxu0 0
  %513 = vmatpush1.bf16.msra.mxu0 %v419
  %514 = vmatprep.subr.bf16.mxu0 0
  %515 = vmatpush1.bf16.msra.mxu0 %v420
  %516 = vmatprep.subr.bf16.mxu0 0
  %517 = vmatpush1.bf16.msra.mxu0 %v421
  %518 = vmatprep.subr.bf16.mxu0 0
  %519 = vmatpush1.bf16.msra.mxu0 %v422
  %520 = vmatprep.subr.bf16.mxu0 0
  %521 = vmatpush1.bf16.msra.mxu0 %v423
  %522 = vmatprep.subr.bf16.mxu0 0
  %523 = vmatpush1.bf16.msra.mxu0 %v424
  %524 = vmatprep.subr.bf16.mxu0 0
  %525 = vmatpush1.bf16.msra.mxu0 %v425
  %526 = vmatprep.mubr.bf16.mxu0 %v234
  %527 = vmatmul.mubr.bf16.gmra.mrb[0].mxu0 %v233
  %v528 = vpop.f32.mrb[0].mxu0
  %v529 = vadd.f32 0.0, %v528
  %v530 = vpop.f32.mrb[0].mxu0
  %v531 = vpop.f32.mrb[0].mxu0
  %v532 = vadd.f32 0.0, %v531
  %v533 = vpop.f32.mrb[0].mxu0
  %534 = vmatprep.mubr.bf16.mxu0 %v238
  %535 = vmatmul.mubr.bf16.gmra.mrb[0].mxu0 %v237
  %v536 = vpop.f32.mrb[0].mxu0
  %v537 = vadd.f32 0.0, %v536
  %v538 = vpop.f32.mrb[0].mxu0
  %v539 = vpop.f32.mrb[0].mxu0
  %v540 = vadd.f32 0.0, %v539
  %v541 = vpop.f32.mrb[0].mxu0
  %542 = vmatprep.mubr.bf16.mxu0 %v242
  %543 = vmatmul.mubr.bf16.gmra.mrb[0].mxu0 %v241
  %v544 = vpop.f32.mrb[0].mxu0
  %v545 = vadd.f32 0.0, %v544
  %v546 = vpop.f32.mrb[0].mxu0
  %v547 = vpop.f32.mrb[0].mxu0
  %v548 = vadd.f32 0.0, %v547
  %v549 = vpop.f32.mrb[0].mxu0
  %550 = vmatprep.mubr.bf16.mxu0 %v246
  %551 = vmatmul.mubr.bf16.gmra.mrb[0].mxu0 %v245
  %v552 = vpop.f32.mrb[0].mxu0
  %v553 = vadd.f32 0.0, %v552
  %v554 = vpop.f32.mrb[0].mxu0
  %v555 = vpop.f32.mrb[0].mxu0
  %v556 = vadd.f32 0.0, %v555
  %v557 = vpop.f32.mrb[0].mxu0
  %558 = vmatprep.mubr.bf16.mxu0 %v250
  %559 = vmatmul.mubr.bf16.gmra.mrb[0].mxu0 %v249
  %v560 = vpop.f32.mrb[0].mxu0
  %v561 = vadd.f32 0.0, %v560
  %v562 = vpop.f32.mrb[0].mxu0
  %v563 = vpop.f32.mrb[0].mxu0
  %v564 = vadd.f32 0.0, %v563
  %v565 = vpop.f32.mrb[0].mxu0
  %566 = vmatprep.mubr.bf16.mxu0 %v254
  %567 = vmatmul.mubr.bf16.gmra.mrb[0].mxu0 %v253
  %v568 = vpop.f32.mrb[0].mxu0
  %v569 = vadd.f32 0.0, %v568
  %v570 = vpop.f32.mrb[0].mxu0
  %v571 = vpop.f32.mrb[0].mxu0
  %v572 = vadd.f32 0.0, %v571
  %v573 = vpop.f32.mrb[0].mxu0
  %574 = vmatprep.mubr.bf16.mxu0 %v258
  %575 = vmatmul.mubr.bf16.gmra.mrb[0].mxu0 %v257
  %v576 = vpop.f32.mrb[0].mxu0
  %v577 = vadd.f32 0.0, %v576
  %v578 = vpop.f32.mrb[0].mxu0
  %v579 = vpop.f32.mrb[0].mxu0
  %v580 = vadd.f32 0.0, %v579
  %v581 = vpop.f32.mrb[0].mxu0
  %582 = vmatprep.mubr.bf16.mxu0 %v262
  %583 = vmatmul.mubr.bf16.gmra.mrb[0].mxu0 %v261
  %v584 = vpop.f32.mrb[0].mxu0
  %v585 = vadd.f32 0.0, %v584
  %v586 = vpop.f32.mrb[0].mxu0
  %v587 = vpop.f32.mrb[0].mxu0
  %v588 = vadd.f32 0.0, %v587
  %v589 = vpop.f32.mrb[0].mxu0
  %590 = vmatprep.mubr.bf16.mxu0 %v266
  %591 = vmatmul.mubr.bf16.gmra.mrb[0].mxu0 %v265
  %v592 = vpop.f32.mrb[0].mxu0
  %v593 = vadd.f32 0.0, %v592
  %v594 = vpop.f32.mrb[0].mxu0
  %v595 = vpop.f32.mrb[0].mxu0
  %v596 = vadd.f32 0.0, %v595
  %v597 = vpop.f32.mrb[0].mxu0
  %598 = vmatprep.mubr.bf16.mxu0 %v270
  %599 = vmatmul.mubr.bf16.gmra.mrb[0].mxu0 %v269
  %v600 = vpop.f32.mrb[0].mxu0
  %v601 = vadd.f32 0.0, %v600
  %v602 = vpop.f32.mrb[0].mxu0
  %v603 = vpop.f32.mrb[0].mxu0
  %v604 = vadd.f32 0.0, %v603
  %v605 = vpop.f32.mrb[0].mxu0
  %606 = vmatprep.mubr.bf16.mxu0 %v274
  %607 = vmatmul.mubr.bf16.gmra.mrb[0].mxu0 %v273
  %v608 = vpop.f32.mrb[0].mxu0
  %v609 = vadd.f32 0.0, %v608
  %v610 = vpop.f32.mrb[0].mxu0
  %v611 = vpop.f32.mrb[0].mxu0
  %v612 = vpop.f32.mrb[0].mxu0
  %613 = vdwg.mxu0
  %614 = vmatprep.subr.bf16.mxu0 0
  %615 = vmatpush1.bf16.msra.mxu0 %v426
  %616 = vmatprep.subr.bf16.mxu0 0
  %617 = vmatpush1.bf16.msra.mxu0 %v427
  %618 = vmatprep.subr.bf16.mxu0 0
  %619 = vmatpush1.bf16.msra.mxu0 %v428
  %620 = vmatprep.subr.bf16.mxu0 0
  %621 = vmatpush1.bf16.msra.mxu0 %v429
  %622 = vmatprep.subr.bf16.mxu0 0
  %623 = vmatpush1.bf16.msra.mxu0 %v430
  %624 = vmatprep.subr.bf16.mxu0 0
  %625 = vmatpush1.bf16.msra.mxu0 %v431
  %626 = vmatprep.subr.bf16.mxu0 0
  %627 = vmatpush1.bf16.msra.mxu0 %v432
  %628 = vmatprep.subr.bf16.mxu0 0
  %629 = vmatpush1.bf16.msra.mxu0 %v433
  %630 = vmatprep.subr.bf16.mxu0 0
  %631 = vmatpush1.bf16.msra.mxu0 %v434
  %632 = vmatprep.subr.bf16.mxu0 0
  %633 = vmatpush1.bf16.msra.mxu0 0
  %634 = vmatprep.subr.bf16.mxu0 0
  %635 = vmatpush1.bf16.msra.mxu0 0
  %636 = vmatprep.subr.bf16.mxu0 0
  %637 = vmatpush1.bf16.msra.mxu0 0
  %638 = vmatprep.subr.bf16.mxu0 0
  %639 = vmatpush1.bf16.msra.mxu0 0
  %640 = vmatprep.subr.bf16.mxu0 0
  %641 = vmatpush1.bf16.msra.mxu0 0
  %642 = vmatprep.subr.bf16.mxu0 0
  %643 = vmatpush1.bf16.msra.mxu0 0
  %644 = vmatprep.subr.bf16.mxu0 0
  %645 = vmatpush1.bf16.msra.mxu0 0
  %646 = vmatprep.mubr.bf16.mxu0 %v462
  %647 = vmatmul.mubr.bf16.gmra.mrb[0].mxu0 %v235
  %v648 = vpop.f32.mrb[0].mxu0
  %v649 = vadd.f32 %v529, %v648
  %v650 = vpop.f32.mrb[0].mxu0
  %v651 = vpop.f32.mrb[0].mxu0
  %v652 = vadd.f32 %v532, %v651
  %v653 = vpop.f32.mrb[0].mxu0
  %654 = vmatprep.mubr.bf16.mxu0 %v465
  %655 = vmatmul.mubr.bf16.gmra.mrb[0].mxu0 %v239
  %v656 = vpop.f32.mrb[0].mxu0
  %v657 = vadd.f32 %v537, %v656
  %v658 = vpop.f32.mrb[0].mxu0
  %v659 = vpop.f32.mrb[0].mxu0
  %v660 = vadd.f32 %v540, %v659
  %v661 = vpop.f32.mrb[0].mxu0
  %662 = vmatprep.mubr.bf16.mxu0 %v468
  %663 = vmatmul.mubr.bf16.gmra.mrb[0].mxu0 %v243
  %v664 = vpop.f32.mrb[0].mxu0
  %v665 = vadd.f32 %v545, %v664
  %v666 = vpop.f32.mrb[0].mxu0
  %v667 = vpop.f32.mrb[0].mxu0
  %v668 = vadd.f32 %v548, %v667
  %v669 = vpop.f32.mrb[0].mxu0
  %670 = vmatprep.mubr.bf16.mxu0 %v471
  %671 = vmatmul.mubr.bf16.gmra.mrb[0].mxu0 %v247
  %v672 = vpop.f32.mrb[0].mxu0
  %v673 = vadd.f32 %v553, %v672
  %v674 = vpop.f32.mrb[0].mxu0
  %v675 = vpop.f32.mrb[0].mxu0
  %v676 = vadd.f32 %v556, %v675
  %v677 = vpop.f32.mrb[0].mxu0
  %678 = vmatprep.mubr.bf16.mxu0 %v474
  %679 = vmatmul.mubr.bf16.gmra.mrb[0].mxu0 %v251
  %v680 = vpop.f32.mrb[0].mxu0
  %v681 = vadd.f32 %v561, %v680
  %v682 = vpop.f32.mrb[0].mxu0
  %v683 = vpop.f32.mrb[0].mxu0
  %v684 = vadd.f32 %v564, %v683
  %v685 = vpop.f32.mrb[0].mxu0
  %686 = vmatprep.mubr.bf16.mxu0 %v477
  %687 = vmatmul.mubr.bf16.gmra.mrb[0].mxu0 %v255
  %v688 = vpop.f32.mrb[0].mxu0
  %v689 = vadd.f32 %v569, %v688
  %v690 = vpop.f32.mrb[0].mxu0
  %v691 = vpop.f32.mrb[0].mxu0
  %v692 = vadd.f32 %v572, %v691
  %v693 = vpop.f32.mrb[0].mxu0
  %694 = vmatprep.mubr.bf16.mxu0 %v480
  %695 = vmatmul.mubr.bf16.gmra.mrb[0].mxu0 %v259
  %v696 = vpop.f32.mrb[0].mxu0
  %v697 = vadd.f32 %v577, %v696
  %v698 = vpop.f32.mrb[0].mxu0
  %v699 = vpop.f32.mrb[0].mxu0
  %v700 = vadd.f32 %v580, %v699
  %v701 = vpop.f32.mrb[0].mxu0
  %702 = vmatprep.mubr.bf16.mxu0 %v483
  %703 = vmatmul.mubr.bf16.gmra.mrb[0].mxu0 %v263
  %v704 = vpop.f32.mrb[0].mxu0
  %v705 = vadd.f32 %v585, %v704
  %v706 = vpop.f32.mrb[0].mxu0
  %v707 = vpop.f32.mrb[0].mxu0
  %v708 = vadd.f32 %v588, %v707
  %v709 = vpop.f32.mrb[0].mxu0
  %710 = vmatprep.mubr.bf16.mxu0 %v486
  %711 = vmatmul.mubr.bf16.gmra.mrb[0].mxu0 %v267
  %v712 = vpop.f32.mrb[0].mxu0
  %v713 = vadd.f32 %v593, %v712
  %v714 = vpop.f32.mrb[0].mxu0
  %v715 = vpop.f32.mrb[0].mxu0
  %v716 = vadd.f32 %v596, %v715
  %v717 = vpop.f32.mrb[0].mxu0
  %718 = vmatprep.mubr.bf16.mxu0 %v489
  %719 = vmatmul.mubr.bf16.gmra.mrb[0].mxu0 %v271
  %v720 = vpop.f32.mrb[0].mxu0
  %v721 = vadd.f32 %v601, %v720
  %v722 = vpop.f32.mrb[0].mxu0
  %v723 = vpop.f32.mrb[0].mxu0
  %v724 = vadd.f32 %v604, %v723
  %v725 = vpop.f32.mrb[0].mxu0
  %726 = vmatprep.mubr.bf16.mxu0 %v492
  %727 = vmatmul.mubr.bf16.gmra.mrb[0].mxu0 %v275
  %v728 = vpop.f32.mrb[0].mxu0
  %v729 = vadd.f32 %v609, %v728
  %v730 = vpop.f32.mrb[0].mxu0
  %v731 = vpop.f32.mrb[0].mxu0
  %v732 = vpop.f32.mrb[0].mxu0
  %733 = vdwg.mxu0
  %s734 = scalar_lea.vmem %s0, 336
  %v735 = vld [vmem:[%s734] sm:$0xff]
  %v736 = vld [vmem:[%s734 + $0x8] sm:$0xff]
  %v737 = vld [vmem:[%s734 + $0x10] sm:$0xff]
  %v738 = vld [vmem:[%s734 + $0x18] sm:$0xff]
  %v739 = vld [vmem:[%s734 + $0x20] sm:$0xff]
  %v740 = vld [vmem:[%s734 + $0x28] sm:$0xff]
  %v741 = vld [vmem:[%s734 + $0x30] sm:$0xff]
  %v742 = vld [vmem:[%s734 + $0x38] sm:$0xff]
  %v743 = vld [vmem:[%s734 + $0x40] sm:$0xff]
  %v744 = vld [vmem:[%s734 + $0x48] sm:$0xff]
  %v745 = vld [vmem:[%s734 + $0x50] sm:$0xff]
  %v746 = vld [vmem:[%s734 + $0x58] sm:$0xff]
  %v747 = vld [vmem:[%s734 + $0x60] sm:$0xff]
  %v748 = vld [vmem:[%s734 + $0x68] sm:$0xff]
  %v749 = vld [vmem:[%s734 + $0x70] sm:$0xff]
  %v750 = vld [vmem:[%s734 + $0x78] sm:$0xff]
  %v751 = vld [vmem:[%s734 + $0x80] sm:$0xff]
  %v752 = vld [vmem:[%s734 + $0x88] sm:$0xff]
  %v753 = vld [vmem:[%s734 + $0x90] sm:$0xff]
  %v754 = vld [vmem:[%s734 + $0x98] sm:$0xff]
  %v755 = vld [vmem:[%s734 + $0xa0] sm:$0xff]
  %v756 = vld [vmem:[%s734 + $0xa8] sm:$0xff]
  %v757 = vld [vmem:[%s734 + $0xb0] sm:$0xff]
  %v758 = vld [vmem:[%s734 + $0xb8] sm:$0xff]
  %v759 = vld [vmem:[%s734 + $0xc0] sm:$0xff]
  %v760 = vld [vmem:[%s734 + $0xc8] sm:$0xff]
  %v761 = vld [vmem:[%s734 + $0xd0] sm:$0xff]
  %v762 = vld [vmem:[%s734 + $0xd8] sm:$0xff]
  %v763 = vld [vmem:[%s734 + $0xe0] sm:$0xff]
  %v764 = vld [vmem:[%s734 + $0xe8] sm:$0xff]
  %v765 = vld [vmem:[%s734 + $0xf0] sm:$0xff]
  %v766 = vld [vmem:[%s734 + $0xf8] sm:$0xff]
  %v767 = vld [vmem:[%s734 + $0x100] sm:$0xff]
  %v768 = vld [vmem:[%s734 + $0x108] sm:$0xff]
  %v769 = vld [vmem:[%s734 + $0x110] sm:$0xff]
  %v770 = vld [vmem:[%s734 + $0x118] sm:$0xff]
  %v771 = vld [vmem:[%s734 + $0x120] sm:$0xff]
  %v772 = vld [vmem:[%s734 + $0x128] sm:$0xff]
  %v773 = vld [vmem:[%s734 + $0x130] sm:$0xff]
  %v774 = vld [vmem:[%s734 + $0x138] sm:$0xff]
  %v775 = vld [vmem:[%s734 + $0x140] sm:$0x11]
  %v776 = vld [vmem:[%s734 + $0x148] sm:$0x11]
  %v819 = vunpack.c.l.b16 %v735
  %v820 = vunpack.c.h.b16 %v735
  %v821 = vunpack.c.l.b16 %v736
  %v822 = vunpack.c.h.b16 %v736
  %v823 = vunpack.c.l.b16 %v737
  %v824 = vunpack.c.h.b16 %v737
  %v825 = vunpack.c.l.b16 %v738
  %v826 = vunpack.c.h.b16 %v738
  %v827 = vunpack.c.l.b16 %v739
  %v828 = vunpack.c.h.b16 %v739
  %v829 = vunpack.c.l.b16 %v740
  %v830 = vunpack.c.h.b16 %v740
  %v831 = vunpack.c.l.b16 %v741
  %v832 = vunpack.c.h.b16 %v741
  %v833 = vunpack.c.l.b16 %v742
  %v834 = vunpack.c.h.b16 %v742
  %v835 = vunpack.c.l.b16 %v743
  %v836 = vunpack.c.h.b16 %v743
  %v837 = vunpack.c.l.b16 %v744
  %v838 = vunpack.c.h.b16 %v744
  %v839 = vunpack.c.l.b16 %v745
  %v840 = vunpack.c.h.b16 %v745
  %v841 = vunpack.c.l.b16 %v746
  %v842 = vunpack.c.h.b16 %v746
  %v843 = vunpack.c.l.b16 %v747
  %v844 = vunpack.c.h.b16 %v747
  %v845 = vunpack.c.l.b16 %v748
  %v846 = vunpack.c.h.b16 %v748
  %v847 = vunpack.c.l.b16 %v749
  %v848 = vunpack.c.h.b16 %v749
  %v849 = vunpack.c.l.b16 %v750
  %v850 = vunpack.c.h.b16 %v750
  %v851 = vunpack.c.l.b16 %v751
  %v852 = vunpack.c.h.b16 %v751
  %v853 = vunpack.c.l.b16 %v752
  %v854 = vunpack.c.h.b16 %v752
  %v855 = vunpack.c.l.b16 %v753
  %v856 = vunpack.c.h.b16 %v753
  %v857 = vunpack.c.l.b16 %v754
  %v858 = vunpack.c.h.b16 %v754
  %v859 = vunpack.c.l.b16 %v755
  %v860 = vunpack.c.h.b16 %v755
  %v861 = vunpack.c.l.b16 %v756
  %v862 = vunpack.c.h.b16 %v756
  %v863 = vunpack.c.l.b16 %v757
  %v864 = vunpack.c.h.b16 %v757
  %v865 = vunpack.c.l.b16 %v758
  %v866 = vunpack.c.h.b16 %v758
  %v867 = vunpack.c.l.b16 %v759
  %v868 = vunpack.c.h.b16 %v759
  %v869 = vunpack.c.l.b16 %v760
  %v870 = vunpack.c.h.b16 %v760
  %v871 = vunpack.c.l.b16 %v761
  %v872 = vunpack.c.h.b16 %v761
  %v873 = vunpack.c.l.b16 %v762
  %v874 = vunpack.c.h.b16 %v762
  %v875 = vunpack.c.l.b16 %v763
  %v876 = vunpack.c.h.b16 %v763
  %v877 = vunpack.c.l.b16 %v764
  %v878 = vunpack.c.h.b16 %v764
  %v879 = vunpack.c.l.b16 %v765
  %v880 = vunpack.c.h.b16 %v765
  %v881 = vunpack.c.l.b16 %v766
  %v882 = vunpack.c.h.b16 %v766
  %v883 = vunpack.c.l.b16 %v767
  %v884 = vunpack.c.h.b16 %v767
  %v885 = vunpack.c.l.b16 %v768
  %v886 = vunpack.c.h.b16 %v768
  %v887 = vunpack.c.l.b16 %v769
  %v888 = vunpack.c.h.b16 %v769
  %v889 = vunpack.c.l.b16 %v770
  %v890 = vunpack.c.h.b16 %v770
  %v891 = vunpack.c.l.b16 %v771
  %v892 = vunpack.c.h.b16 %v771
  %v893 = vunpack.c.l.b16 %v772
  %v894 = vunpack.c.h.b16 %v772
  %v895 = vunpack.c.l.b16 %v773
  %v896 = vunpack.c.h.b16 %v773
  %v897 = vunpack.c.l.b16 %v774
  %v898 = vunpack.c.h.b16 %v774
  %v899 = vunpack.c.l.b16 %v775
  %v900 = vunpack.c.h.b16 %v775
  %v901 = vunpack.c.l.b16 %v776
  %v902 = vunpack.c.h.b16 %v776
  %v903 = vpack.c.b16 %v823, %v819
  %v904 = vpack.c.b16 %v824, %v820
  %v905 = vpack.c.b16 %v825, %v821
  %v906 = vpack.c.b16 %v826, %v822
  %v907 = vpack.c.b16 %v831, %v827
  %v908 = vpack.c.b16 %v832, %v828
  %v909 = vpack.c.b16 %v833, %v829
  %v910 = vpack.c.b16 %v834, %v830
  %v911 = vpack.c.b16 %v839, %v835
  %v912 = vpack.c.b16 %v840, %v836
  %v913 = vpack.c.b16 %v841, %v837
  %v914 = vpack.c.b16 %v842, %v838
  %v915 = vpack.c.b16 %v847, %v843
  %v916 = vpack.c.b16 %v848, %v844
  %v917 = vpack.c.b16 %v849, %v845
  %v918 = vpack.c.b16 %v850, %v846
  %v919 = vpack.c.b16 %v855, %v851
  %v920 = vpack.c.b16 %v856, %v852
  %v921 = vpack.c.b16 %v857, %v853
  %v922 = vpack.c.b16 %v858, %v854
  %v923 = vpack.c.b16 %v863, %v859
  %v924 = vpack.c.b16 %v864, %v860
  %v925 = vpack.c.b16 %v865, %v861
  %v926 = vpack.c.b16 %v866, %v862
  %v927 = vpack.c.b16 %v871, %v867
  %v928 = vpack.c.b16 %v872, %v868
  %v929 = vpack.c.b16 %v873, %v869
  %v930 = vpack.c.b16 %v874, %v870
  %v931 = vpack.c.b16 %v879, %v875
  %v932 = vpack.c.b16 %v880, %v876
  %v933 = vpack.c.b16 %v881, %v877
  %v934 = vpack.c.b16 %v882, %v878
  %v935 = vpack.c.b16 %v887, %v883
  %v936 = vpack.c.b16 %v888, %v884
  %v937 = vpack.c.b16 %v889, %v885
  %v938 = vpack.c.b16 %v890, %v886
  %v939 = vpack.c.b16 %v895, %v891
  %v940 = vpack.c.b16 %v896, %v892
  %v941 = vpack.c.b16 %v897, %v893
  %v942 = vpack.c.b16 %v898, %v894
  %v943 = vpack.c.b16 %v899, %v899
  %v944 = vpack.c.b16 %v900, %v900
  %v945 = vpack.c.b16 %v901, %v901
  %v946 = vpack.c.b16 %v902, %v902
  %v981 = vsel %vm460, %v906, 0
  %v984 = vsel %vm460, %v910, 0
  %v987 = vsel %vm460, %v914, 0
  %v990 = vsel %vm460, %v918, 0
  %v993 = vsel %vm460, %v922, 0
  %v996 = vsel %vm460, %v926, 0
  %v999 = vsel %vm460, %v930, 0
  %v1002 = vsel %vm460, %v934, 0
  %v1005 = vsel %vm460, %v938, 0
  %v1008 = vsel %vm460, %v942, 0
  %v1011 = vsel %vm460, %v946, 0
  %1013 = vmatprep.subr.bf16.mxu0 0
  %1014 = vmatpush1.bf16.msra.mxu0 %v410
  %1015 = vmatprep.subr.bf16.mxu0 0
  %1016 = vmatpush1.bf16.msra.mxu0 %v411
  %1017 = vmatprep.subr.bf16.mxu0 0
  %1018 = vmatpush1.bf16.msra.mxu0 %v412
  %1019 = vmatprep.subr.bf16.mxu0 0
  %1020 = vmatpush1.bf16.msra.mxu0 %v413
  %1021 = vmatprep.subr.bf16.mxu0 0
  %1022 = vmatpush1.bf16.msra.mxu0 %v414
  %1023 = vmatprep.subr.bf16.mxu0 0
  %1024 = vmatpush1.bf16.msra.mxu0 %v415
  %1025 = vmatprep.subr.bf16.mxu0 0
  %1026 = vmatpush1.bf16.msra.mxu0 %v416
  %1027 = vmatprep.subr.bf16.mxu0 0
  %1028 = vmatpush1.bf16.msra.mxu0 %v417
  %1029 = vmatprep.subr.bf16.mxu0 0
  %1030 = vmatpush1.bf16.msra.mxu0 %v418
  %1031 = vmatprep.subr.bf16.mxu0 0
  %1032 = vmatpush1.bf16.msra.mxu0 %v419
  %1033 = vmatprep.subr.bf16.mxu0 0
  %1034 = vmatpush1.bf16.msra.mxu0 %v420
  %1035 = vmatprep.subr.bf16.mxu0 0
  %1036 = vmatpush1.bf16.msra.mxu0 %v421
  %1037 = vmatprep.subr.bf16.mxu0 0
  %1038 = vmatpush1.bf16.msra.mxu0 %v422
  %1039 = vmatprep.subr.bf16.mxu0 0
  %1040 = vmatpush1.bf16.msra.mxu0 %v423
  %1041 = vmatprep.subr.bf16.mxu0 0
  %1042 = vmatpush1.bf16.msra.mxu0 %v424
  %1043 = vmatprep.subr.bf16.mxu0 0
  %1044 = vmatpush1.bf16.msra.mxu0 %v425
  %1045 = vmatprep.mubr.bf16.mxu0 %v904
  %1046 = vmatmul.mubr.bf16.gmra.mrb[0].mxu0 %v903
  %v1047 = vpop.f32.mrb[0].mxu0
  %v1048 = vadd.f32 0.0, %v1047
  %v1049 = vpop.f32.mrb[0].mxu0
  %v1050 = vpop.f32.mrb[0].mxu0
  %v1051 = vadd.f32 0.0, %v1050
  %v1052 = vpop.f32.mrb[0].mxu0
  %1053 = vmatprep.mubr.bf16.mxu0 %v908
  %1054 = vmatmul.mubr.bf16.gmra.mrb[0].mxu0 %v907
  %v1055 = vpop.f32.mrb[0].mxu0
  %v1056 = vadd.f32 0.0, %v1055
  %v1057 = vpop.f32.mrb[0].mxu0
  %v1058 = vpop.f32.mrb[0].mxu0
  %v1059 = vadd.f32 0.0, %v1058
  %v1060 = vpop.f32.mrb[0].mxu0
  %1061 = vmatprep.mubr.bf16.mxu0 %v912
  %1062 = vmatmul.mubr.bf16.gmra.mrb[0].mxu0 %v911
  %v1063 = vpop.f32.mrb[0].mxu0
  %v1064 = vadd.f32 0.0, %v1063
  %v1065 = vpop.f32.mrb[0].mxu0
  %v1066 = vpop.f32.mrb[0].mxu0
  %v1067 = vadd.f32 0.0, %v1066
  %v1068 = vpop.f32.mrb[0].mxu0
  %1069 = vmatprep.mubr.bf16.mxu0 %v916
  %1070 = vmatmul.mubr.bf16.gmra.mrb[0].mxu0 %v915
  %v1071 = vpop.f32.mrb[0].mxu0
  %v1072 = vadd.f32 0.0, %v1071
  %v1073 = vpop.f32.mrb[0].mxu0
  %v1074 = vpop.f32.mrb[0].mxu0
  %v1075 = vadd.f32 0.0, %v1074
  %v1076 = vpop.f32.mrb[0].mxu0
  %1077 = vmatprep.mubr.bf16.mxu0 %v920
  %1078 = vmatmul.mubr.bf16.gmra.mrb[0].mxu0 %v919
  %v1079 = vpop.f32.mrb[0].mxu0
  %v1080 = vadd.f32 0.0, %v1079
  %v1081 = vpop.f32.mrb[0].mxu0
  %v1082 = vpop.f32.mrb[0].mxu0
  %v1083 = vadd.f32 0.0, %v1082
  %v1084 = vpop.f32.mrb[0].mxu0
  %1085 = vmatprep.mubr.bf16.mxu0 %v924
  %1086 = vmatmul.mubr.bf16.gmra.mrb[0].mxu0 %v923
  %v1087 = vpop.f32.mrb[0].mxu0
  %v1088 = vadd.f32 0.0, %v1087
  %v1089 = vpop.f32.mrb[0].mxu0
  %v1090 = vpop.f32.mrb[0].mxu0
  %v1091 = vadd.f32 0.0, %v1090
  %v1092 = vpop.f32.mrb[0].mxu0
  %1093 = vmatprep.mubr.bf16.mxu0 %v928
  %1094 = vmatmul.mubr.bf16.gmra.mrb[0].mxu0 %v927
  %v1095 = vpop.f32.mrb[0].mxu0
  %v1096 = vadd.f32 0.0, %v1095
  %v1097 = vpop.f32.mrb[0].mxu0
  %v1098 = vpop.f32.mrb[0].mxu0
  %v1099 = vadd.f32 0.0, %v1098
  %v1100 = vpop.f32.mrb[0].mxu0
  %1101 = vmatprep.mubr.bf16.mxu0 %v932
  %1102 = vmatmul.mubr.bf16.gmra.mrb[0].mxu0 %v931
  %v1103 = vpop.f32.mrb[0].mxu0
  %v1104 = vadd.f32 0.0, %v1103
  %v1105 = vpop.f32.mrb[0].mxu0
  %v1106 = vpop.f32.mrb[0].mxu0
  %v1107 = vadd.f32 0.0, %v1106
  %v1108 = vpop.f32.mrb[0].mxu0
  %1109 = vmatprep.mubr.bf16.mxu0 %v936
  %1110 = vmatmul.mubr.bf16.gmra.mrb[0].mxu0 %v935
  %v1111 = vpop.f32.mrb[0].mxu0
  %v1112 = vadd.f32 0.0, %v1111
  %v1113 = vpop.f32.mrb[0].mxu0
  %v1114 = vpop.f32.mrb[0].mxu0
  %v1115 = vadd.f32 0.0, %v1114
  %v1116 = vpop.f32.mrb[0].mxu0
  %1117 = vmatprep.mubr.bf16.mxu0 %v940
  %1118 = vmatmul.mubr.bf16.gmra.mrb[0].mxu0 %v939
  %v1119 = vpop.f32.mrb[0].mxu0
  %v1120 = vadd.f32 0.0, %v1119
  %v1121 = vpop.f32.mrb[0].mxu0
  %v1122 = vpop.f32.mrb[0].mxu0
  %v1123 = vadd.f32 0.0, %v1122
  %v1124 = vpop.f32.mrb[0].mxu0
  %1125 = vmatprep.mubr.bf16.mxu0 %v944
  %1126 = vmatmul.mubr.bf16.gmra.mrb[0].mxu0 %v943
  %v1127 = vpop.f32.mrb[0].mxu0
  %v1128 = vadd.f32 0.0, %v1127
  %v1129 = vpop.f32.mrb[0].mxu0
  %v1130 = vpop.f32.mrb[0].mxu0
  %v1131 = vpop.f32.mrb[0].mxu0
  %1132 = vdwg.mxu0
  %1133 = vmatprep.subr.bf16.mxu0 0
  %1134 = vmatpush1.bf16.msra.mxu0 %v426
  %1135 = vmatprep.subr.bf16.mxu0 0
  %1136 = vmatpush1.bf16.msra.mxu0 %v427
  %1137 = vmatprep.subr.bf16.mxu0 0
  %1138 = vmatpush1.bf16.msra.mxu0 %v428
  %1139 = vmatprep.subr.bf16.mxu0 0
  %1140 = vmatpush1.bf16.msra.mxu0 %v429
  %1141 = vmatprep.subr.bf16.mxu0 0
  %1142 = vmatpush1.bf16.msra.mxu0 %v430
  %1143 = vmatprep.subr.bf16.mxu0 0
  %1144 = vmatpush1.bf16.msra.mxu0 %v431
  %1145 = vmatprep.subr.bf16.mxu0 0
  %1146 = vmatpush1.bf16.msra.mxu0 %v432
  %1147 = vmatprep.subr.bf16.mxu0 0
  %1148 = vmatpush1.bf16.msra.mxu0 %v433
  %1149 = vmatprep.subr.bf16.mxu0 0
  %1150 = vmatpush1.bf16.msra.mxu0 %v434
  %1151 = vmatprep.subr.bf16.mxu0 0
  %1152 = vmatpush1.bf16.msra.mxu0 0
  %1153 = vmatprep.subr.bf16.mxu0 0
  %1154 = vmatpush1.bf16.msra.mxu0 0
  %1155 = vmatprep.subr.bf16.mxu0 0
  %1156 = vmatpush1.bf16.msra.mxu0 0
  %1157 = vmatprep.subr.bf16.mxu0 0
  %1158 = vmatpush1.bf16.msra.mxu0 0
  %1159 = vmatprep.subr.bf16.mxu0 0
  %1160 = vmatpush1.bf16.msra.mxu0 0
  %1161 = vmatprep.subr.bf16.mxu0 0
  %1162 = vmatpush1.bf16.msra.mxu0 0
  %1163 = vmatprep.subr.bf16.mxu0 0
  %1164 = vmatpush1.bf16.msra.mxu0 0
  %1165 = vmatprep.mubr.bf16.mxu0 %v981
  %1166 = vmatmul.mubr.bf16.gmra.mrb[0].mxu0 %v905
  %v1167 = vpop.f32.mrb[0].mxu0
  %v1168 = vadd.f32 %v1048, %v1167
  %v1169 = vpop.f32.mrb[0].mxu0
  %v1170 = vpop.f32.mrb[0].mxu0
  %v1171 = vadd.f32 %v1051, %v1170
  %v1172 = vpop.f32.mrb[0].mxu0
  %1173 = vmatprep.mubr.bf16.mxu0 %v984
  %1174 = vmatmul.mubr.bf16.gmra.mrb[0].mxu0 %v909
  %v1175 = vpop.f32.mrb[0].mxu0
  %v1176 = vadd.f32 %v1056, %v1175
  %v1177 = vpop.f32.mrb[0].mxu0
  %v1178 = vpop.f32.mrb[0].mxu0
  %v1179 = vadd.f32 %v1059, %v1178
  %v1180 = vpop.f32.mrb[0].mxu0
  %1181 = vmatprep.mubr.bf16.mxu0 %v987
  %1182 = vmatmul.mubr.bf16.gmra.mrb[0].mxu0 %v913
  %v1183 = vpop.f32.mrb[0].mxu0
  %v1184 = vadd.f32 %v1064, %v1183
  %v1185 = vpop.f32.mrb[0].mxu0
  %v1186 = vpop.f32.mrb[0].mxu0
  %v1187 = vadd.f32 %v1067, %v1186
  %v1188 = vpop.f32.mrb[0].mxu0
  %1189 = vmatprep.mubr.bf16.mxu0 %v990
  %1190 = vmatmul.mubr.bf16.gmra.mrb[0].mxu0 %v917
  %v1191 = vpop.f32.mrb[0].mxu0
  %v1192 = vadd.f32 %v1072, %v1191
  %v1193 = vpop.f32.mrb[0].mxu0
  %v1194 = vpop.f32.mrb[0].mxu0
  %v1195 = vadd.f32 %v1075, %v1194
  %v1196 = vpop.f32.mrb[0].mxu0
  %1197 = vmatprep.mubr.bf16.mxu0 %v993
  %1198 = vmatmul.mubr.bf16.gmra.mrb[0].mxu0 %v921
  %v1199 = vpop.f32.mrb[0].mxu0
  %v1200 = vadd.f32 %v1080, %v1199
  %v1201 = vpop.f32.mrb[0].mxu0
  %v1202 = vpop.f32.mrb[0].mxu0
  %v1203 = vadd.f32 %v1083, %v1202
  %v1204 = vpop.f32.mrb[0].mxu0
  %1205 = vmatprep.mubr.bf16.mxu0 %v996
  %1206 = vmatmul.mubr.bf16.gmra.mrb[0].mxu0 %v925
  %v1207 = vpop.f32.mrb[0].mxu0
  %v1208 = vadd.f32 %v1088, %v1207
  %v1209 = vpop.f32.mrb[0].mxu0
  %v1210 = vpop.f32.mrb[0].mxu0
  %v1211 = vadd.f32 %v1091, %v1210
  %v1212 = vpop.f32.mrb[0].mxu0
  %1213 = vmatprep.mubr.bf16.mxu0 %v999
  %1214 = vmatmul.mubr.bf16.gmra.mrb[0].mxu0 %v929
  %v1215 = vpop.f32.mrb[0].mxu0
  %v1216 = vadd.f32 %v1096, %v1215
  %v1217 = vpop.f32.mrb[0].mxu0
  %v1218 = vpop.f32.mrb[0].mxu0
  %v1219 = vadd.f32 %v1099, %v1218
  %v1220 = vpop.f32.mrb[0].mxu0
  %1221 = vmatprep.mubr.bf16.mxu0 %v1002
  %1222 = vmatmul.mubr.bf16.gmra.mrb[0].mxu0 %v933
  %v1223 = vpop.f32.mrb[0].mxu0
  %v1224 = vadd.f32 %v1104, %v1223
  %v1225 = vpop.f32.mrb[0].mxu0
  %v1226 = vpop.f32.mrb[0].mxu0
  %v1227 = vadd.f32 %v1107, %v1226
  %v1228 = vpop.f32.mrb[0].mxu0
  %1229 = vmatprep.mubr.bf16.mxu0 %v1005
  %1230 = vmatmul.mubr.bf16.gmra.mrb[0].mxu0 %v937
  %v1231 = vpop.f32.mrb[0].mxu0
  %v1232 = vadd.f32 %v1112, %v1231
  %v1233 = vpop.f32.mrb[0].mxu0
  %v1234 = vpop.f32.mrb[0].mxu0
  %v1235 = vadd.f32 %v1115, %v1234
  %v1236 = vpop.f32.mrb[0].mxu0
  %1237 = vmatprep.mubr.bf16.mxu0 %v1008
  %1238 = vmatmul.mubr.bf16.gmra.mrb[0].mxu0 %v941
  %v1239 = vpop.f32.mrb[0].mxu0
  %v1240 = vadd.f32 %v1120, %v1239
  %v1241 = vpop.f32.mrb[0].mxu0
  %v1242 = vpop.f32.mrb[0].mxu0
  %v1243 = vadd.f32 %v1123, %v1242
  %v1244 = vpop.f32.mrb[0].mxu0
  %1245 = vmatprep.mubr.bf16.mxu0 %v1011
  %1246 = vmatmul.mubr.bf16.gmra.mrb[0].mxu0 %v945
  %v1247 = vpop.f32.mrb[0].mxu0
  %v1248 = vadd.f32 %v1128, %v1247
  %v1249 = vpop.f32.mrb[0].mxu0
  %v1250 = vpop.f32.mrb[0].mxu0
  %v1251 = vpop.f32.mrb[0].mxu0
  %1252 = vdwg.mxu0
  %v1253 = vmax.f32 %v649, %v1168
  %v1254 = vmax.f32 %v652, %v1171
  %v1255 = vmax.f32 %v657, %v1176
  %v1256 = vmax.f32 %v660, %v1179
  %v1257 = vmax.f32 %v665, %v1184
  %v1258 = vmax.f32 %v668, %v1187
  %v1259 = vmax.f32 %v673, %v1192
  %v1260 = vmax.f32 %v676, %v1195
  %v1261 = vmax.f32 %v681, %v1200
  %v1262 = vmax.f32 %v684, %v1203
  %v1263 = vmax.f32 %v689, %v1208
  %v1264 = vmax.f32 %v692, %v1211
  %v1265 = vmax.f32 %v697, %v1216
  %v1266 = vmax.f32 %v700, %v1219
  %v1267 = vmax.f32 %v705, %v1224
  %v1268 = vmax.f32 %v708, %v1227
  %v1269 = vmax.f32 %v713, %v1232
  %v1270 = vmax.f32 %v716, %v1235
  %v1271 = vmax.f32 %v721, %v1240
  %v1272 = vmax.f32 %v724, %v1243
  %v1273 = vmax.f32 %v729, %v1248
  %s1274 = scalar_lea.vmem %s0, 672
  %v1275 = vld [vmem:[%s1274] sm:$0xff]
  %v1276 = vld [vmem:[%s1274 + $0x8] sm:$0xff]
  %v1277 = vld [vmem:[%s1274 + $0x10] sm:$0xff]
  %v1278 = vld [vmem:[%s1274 + $0x18] sm:$0xff]
  %v1279 = vld [vmem:[%s1274 + $0x20] sm:$0xff]
  %v1280 = vld [vmem:[%s1274 + $0x28] sm:$0xff]
  %v1281 = vld [vmem:[%s1274 + $0x30] sm:$0xff]
  %v1282 = vld [vmem:[%s1274 + $0x38] sm:$0xff]
  %v1283 = vld [vmem:[%s1274 + $0x40] sm:$0xff]
  %v1284 = vld [vmem:[%s1274 + $0x48] sm:$0xff]
  %v1285 = vld [vmem:[%s1274 + $0x50] sm:$0xff]
  %v1286 = vld [vmem:[%s1274 + $0x58] sm:$0xff]
  %v1287 = vld [vmem:[%s1274 + $0x60] sm:$0xff]
  %v1288 = vld [vmem:[%s1274 + $0x68] sm:$0xff]
  %v1289 = vld [vmem:[%s1274 + $0x70] sm:$0xff]
  %v1290 = vld [vmem:[%s1274 + $0x78] sm:$0xff]
  %v1291 = vld [vmem:[%s1274 + $0x80] sm:$0xff]
  %v1292 = vld [vmem:[%s1274 + $0x88] sm:$0xff]
  %v1293 = vld [vmem:[%s1274 + $0x90] sm:$0xff]
  %v1294 = vld [vmem:[%s1274 + $0x98] sm:$0xff]
  %v1295 = vld [vmem:[%s1274 + $0xa0] sm:$0xff]
  %v1296 = vld [vmem:[%s1274 + $0xa8] sm:$0xff]
  %v1297 = vld [vmem:[%s1274 + $0xb0] sm:$0xff]
  %v1298 = vld [vmem:[%s1274 + $0xb8] sm:$0xff]
  %v1299 = vld [vmem:[%s1274 + $0xc0] sm:$0xff]
  %v1300 = vld [vmem:[%s1274 + $0xc8] sm:$0xff]
  %v1301 = vld [vmem:[%s1274 + $0xd0] sm:$0xff]
  %v1302 = vld [vmem:[%s1274 + $0xd8] sm:$0xff]
  %v1303 = vld [vmem:[%s1274 + $0xe0] sm:$0xff]
  %v1304 = vld [vmem:[%s1274 + $0xe8] sm:$0xff]
  %v1305 = vld [vmem:[%s1274 + $0xf0] sm:$0xff]
  %v1306 = vld [vmem:[%s1274 + $0xf8] sm:$0xff]
  %v1307 = vld [vmem:[%s1274 + $0x100] sm:$0xff]
  %v1308 = vld [vmem:[%s1274 + $0x108] sm:$0xff]
  %v1309 = vld [vmem:[%s1274 + $0x110] sm:$0xff]
  %v1310 = vld [vmem:[%s1274 + $0x118] sm:$0xff]
  %v1311 = vld [vmem:[%s1274 + $0x120] sm:$0xff]
  %v1312 = vld [vmem:[%s1274 + $0x128] sm:$0xff]
  %v1313 = vld [vmem:[%s1274 + $0x130] sm:$0xff]
  %v1314 = vld [vmem:[%s1274 + $0x138] sm:$0xff]
  %v1315 = vld [vmem:[%s1274 + $0x140] sm:$0x11]
  %v1316 = vld [vmem:[%s1274 + $0x148] sm:$0x11]
  %v1359 = vunpack.c.l.b16 %v1275
  %v1360 = vunpack.c.h.b16 %v1275
  %v1361 = vunpack.c.l.b16 %v1276
  %v1362 = vunpack.c.h.b16 %v1276
  %v1363 = vunpack.c.l.b16 %v1277
  %v1364 = vunpack.c.h.b16 %v1277
  %v1365 = vunpack.c.l.b16 %v1278
  %v1366 = vunpack.c.h.b16 %v1278
  %v1367 = vunpack.c.l.b16 %v1279
  %v1368 = vunpack.c.h.b16 %v1279
  %v1369 = vunpack.c.l.b16 %v1280
  %v1370 = vunpack.c.h.b16 %v1280
  %v1371 = vunpack.c.l.b16 %v1281
  %v1372 = vunpack.c.h.b16 %v1281
  %v1373 = vunpack.c.l.b16 %v1282
  %v1374 = vunpack.c.h.b16 %v1282
  %v1375 = vunpack.c.l.b16 %v1283
  %v1376 = vunpack.c.h.b16 %v1283
  %v1377 = vunpack.c.l.b16 %v1284
  %v1378 = vunpack.c.h.b16 %v1284
  %v1379 = vunpack.c.l.b16 %v1285
  %v1380 = vunpack.c.h.b16 %v1285
  %v1381 = vunpack.c.l.b16 %v1286
  %v1382 = vunpack.c.h.b16 %v1286
  %v1383 = vunpack.c.l.b16 %v1287
  %v1384 = vunpack.c.h.b16 %v1287
  %v1385 = vunpack.c.l.b16 %v1288
  %v1386 = vunpack.c.h.b16 %v1288
  %v1387 = vunpack.c.l.b16 %v1289
  %v1388 = vunpack.c.h.b16 %v1289
  %v1389 = vunpack.c.l.b16 %v1290
  %v1390 = vunpack.c.h.b16 %v1290
  %v1391 = vunpack.c.l.b16 %v1291
  %v1392 = vunpack.c.h.b16 %v1291
  %v1393 = vunpack.c.l.b16 %v1292
  %v1394 = vunpack.c.h.b16 %v1292
  %v1395 = vunpack.c.l.b16 %v1293
  %v1396 = vunpack.c.h.b16 %v1293
  %v1397 = vunpack.c.l.b16 %v1294
  %v1398 = vunpack.c.h.b16 %v1294
  %v1399 = vunpack.c.l.b16 %v1295
  %v1400 = vunpack.c.h.b16 %v1295
  %v1401 = vunpack.c.l.b16 %v1296
  %v1402 = vunpack.c.h.b16 %v1296
  %v1403 = vunpack.c.l.b16 %v1297
  %v1404 = vunpack.c.h.b16 %v1297
  %v1405 = vunpack.c.l.b16 %v1298
  %v1406 = vunpack.c.h.b16 %v1298
  %v1407 = vunpack.c.l.b16 %v1299
  %v1408 = vunpack.c.h.b16 %v1299
  %v1409 = vunpack.c.l.b16 %v1300
  %v1410 = vunpack.c.h.b16 %v1300
  %v1411 = vunpack.c.l.b16 %v1301
  %v1412 = vunpack.c.h.b16 %v1301
  %v1413 = vunpack.c.l.b16 %v1302
  %v1414 = vunpack.c.h.b16 %v1302
  %v1415 = vunpack.c.l.b16 %v1303
  %v1416 = vunpack.c.h.b16 %v1303
  %v1417 = vunpack.c.l.b16 %v1304
  %v1418 = vunpack.c.h.b16 %v1304
  %v1419 = vunpack.c.l.b16 %v1305
  %v1420 = vunpack.c.h.b16 %v1305
  %v1421 = vunpack.c.l.b16 %v1306
  %v1422 = vunpack.c.h.b16 %v1306
  %v1423 = vunpack.c.l.b16 %v1307
  %v1424 = vunpack.c.h.b16 %v1307
  %v1425 = vunpack.c.l.b16 %v1308
  %v1426 = vunpack.c.h.b16 %v1308
  %v1427 = vunpack.c.l.b16 %v1309
  %v1428 = vunpack.c.h.b16 %v1309
  %v1429 = vunpack.c.l.b16 %v1310
  %v1430 = vunpack.c.h.b16 %v1310
  %v1431 = vunpack.c.l.b16 %v1311
  %v1432 = vunpack.c.h.b16 %v1311
  %v1433 = vunpack.c.l.b16 %v1312
  %v1434 = vunpack.c.h.b16 %v1312
  %v1435 = vunpack.c.l.b16 %v1313
  %v1436 = vunpack.c.h.b16 %v1313
  %v1437 = vunpack.c.l.b16 %v1314
  %v1438 = vunpack.c.h.b16 %v1314
  %v1439 = vunpack.c.l.b16 %v1315
  %v1440 = vunpack.c.h.b16 %v1315
  %v1441 = vunpack.c.l.b16 %v1316
  %v1442 = vunpack.c.h.b16 %v1316
  %v1443 = vpack.c.b16 %v1363, %v1359
  %v1444 = vpack.c.b16 %v1364, %v1360
  %v1445 = vpack.c.b16 %v1365, %v1361
  %v1446 = vpack.c.b16 %v1366, %v1362
  %v1447 = vpack.c.b16 %v1371, %v1367
  %v1448 = vpack.c.b16 %v1372, %v1368
  %v1449 = vpack.c.b16 %v1373, %v1369
  %v1450 = vpack.c.b16 %v1374, %v1370
  %v1451 = vpack.c.b16 %v1379, %v1375
  %v1452 = vpack.c.b16 %v1380, %v1376
  %v1453 = vpack.c.b16 %v1381, %v1377
  %v1454 = vpack.c.b16 %v1382, %v1378
  %v1455 = vpack.c.b16 %v1387, %v1383
  %v1456 = vpack.c.b16 %v1388, %v1384
  %v1457 = vpack.c.b16 %v1389, %v1385
  %v1458 = vpack.c.b16 %v1390, %v1386
  %v1459 = vpack.c.b16 %v1395, %v1391
  %v1460 = vpack.c.b16 %v1396, %v1392
  %v1461 = vpack.c.b16 %v1397, %v1393
  %v1462 = vpack.c.b16 %v1398, %v1394
  %v1463 = vpack.c.b16 %v1403, %v1399
  %v1464 = vpack.c.b16 %v1404, %v1400
  %v1465 = vpack.c.b16 %v1405, %v1401
  %v1466 = vpack.c.b16 %v1406, %v1402
  %v1467 = vpack.c.b16 %v1411, %v1407
  %v1468 = vpack.c.b16 %v1412, %v1408
  %v1469 = vpack.c.b16 %v1413, %v1409
  %v1470 = vpack.c.b16 %v1414, %v1410
  %v1471 = vpack.c.b16 %v1419, %v1415
  %v1472 = vpack.c.b16 %v1420, %v1416
  %v1473 = vpack.c.b16 %v1421, %v1417
  %v1474 = vpack.c.b16 %v1422, %v1418
  %v1475 = vpack.c.b16 %v1427, %v1423
  %v1476 = vpack.c.b16 %v1428, %v1424
  %v1477 = vpack.c.b16 %v1429, %v1425
  %v1478 = vpack.c.b16 %v1430, %v1426
  %v1479 = vpack.c.b16 %v1435, %v1431
  %v1480 = vpack.c.b16 %v1436, %v1432
  %v1481 = vpack.c.b16 %v1437, %v1433
  %v1482 = vpack.c.b16 %v1438, %v1434
  %v1483 = vpack.c.b16 %v1439, %v1439
  %v1484 = vpack.c.b16 %v1440, %v1440
  %v1485 = vpack.c.b16 %v1441, %v1441
  %v1486 = vpack.c.b16 %v1442, %v1442
  %v1521 = vsel %vm460, %v1446, 0
  %v1524 = vsel %vm460, %v1450, 0
  %v1527 = vsel %vm460, %v1454, 0
  %v1530 = vsel %vm460, %v1458, 0
  %v1533 = vsel %vm460, %v1462, 0
  %v1536 = vsel %vm460, %v1466, 0
  %v1539 = vsel %vm460, %v1470, 0
  %v1542 = vsel %vm460, %v1474, 0
  %v1545 = vsel %vm460, %v1478, 0
  %v1548 = vsel %vm460, %v1482, 0
  %v1551 = vsel %vm460, %v1486, 0
  %1553 = vmatprep.subr.bf16.mxu0 0
  %1554 = vmatpush1.bf16.msra.mxu0 %v410
  %1555 = vmatprep.subr.bf16.mxu0 0
  %1556 = vmatpush1.bf16.msra.mxu0 %v411
  %1557 = vmatprep.subr.bf16.mxu0 0
  %1558 = vmatpush1.bf16.msra.mxu0 %v412
  %1559 = vmatprep.subr.bf16.mxu0 0
  %1560 = vmatpush1.bf16.msra.mxu0 %v413
  %1561 = vmatprep.subr.bf16.mxu0 0
  %1562 = vmatpush1.bf16.msra.mxu0 %v414
  %1563 = vmatprep.subr.bf16.mxu0 0
  %1564 = vmatpush1.bf16.msra.mxu0 %v415
  %1565 = vmatprep.subr.bf16.mxu0 0
  %1566 = vmatpush1.bf16.msra.mxu0 %v416
  %1567 = vmatprep.subr.bf16.mxu0 0
  %1568 = vmatpush1.bf16.msra.mxu0 %v417
  %1569 = vmatprep.subr.bf16.mxu0 0
  %1570 = vmatpush1.bf16.msra.mxu0 %v418
  %1571 = vmatprep.subr.bf16.mxu0 0
  %1572 = vmatpush1.bf16.msra.mxu0 %v419
  %1573 = vmatprep.subr.bf16.mxu0 0
  %1574 = vmatpush1.bf16.msra.mxu0 %v420
  %1575 = vmatprep.subr.bf16.mxu0 0
  %1576 = vmatpush1.bf16.msra.mxu0 %v421
  %1577 = vmatprep.subr.bf16.mxu0 0
  %1578 = vmatpush1.bf16.msra.mxu0 %v422
  %1579 = vmatprep.subr.bf16.mxu0 0
  %1580 = vmatpush1.bf16.msra.mxu0 %v423
  %1581 = vmatprep.subr.bf16.mxu0 0
  %1582 = vmatpush1.bf16.msra.mxu0 %v424
  %1583 = vmatprep.subr.bf16.mxu0 0
  %1584 = vmatpush1.bf16.msra.mxu0 %v425
  %1585 = vmatprep.mubr.bf16.mxu0 %v1444
  %1586 = vmatmul.mubr.bf16.gmra.mrb[0].mxu0 %v1443
  %v1587 = vpop.f32.mrb[0].mxu0
  %v1588 = vadd.f32 0.0, %v1587
  %v1589 = vpop.f32.mrb[0].mxu0
  %v1590 = vpop.f32.mrb[0].mxu0
  %v1591 = vadd.f32 0.0, %v1590
  %v1592 = vpop.f32.mrb[0].mxu0
  %1593 = vmatprep.mubr.bf16.mxu0 %v1448
  %1594 = vmatmul.mubr.bf16.gmra.mrb[0].mxu0 %v1447
  %v1595 = vpop.f32.mrb[0].mxu0
  %v1596 = vadd.f32 0.0, %v1595
  %v1597 = vpop.f32.mrb[0].mxu0
  %v1598 = vpop.f32.mrb[0].mxu0
  %v1599 = vadd.f32 0.0, %v1598
  %v1600 = vpop.f32.mrb[0].mxu0
  %1601 = vmatprep.mubr.bf16.mxu0 %v1452
  %1602 = vmatmul.mubr.bf16.gmra.mrb[0].mxu0 %v1451
  %v1603 = vpop.f32.mrb[0].mxu0
  %v1604 = vadd.f32 0.0, %v1603
  %v1605 = vpop.f32.mrb[0].mxu0
  %v1606 = vpop.f32.mrb[0].mxu0
  %v1607 = vadd.f32 0.0, %v1606
  %v1608 = vpop.f32.mrb[0].mxu0
  %1609 = vmatprep.mubr.bf16.mxu0 %v1456
  %1610 = vmatmul.mubr.bf16.gmra.mrb[0].mxu0 %v1455
  %v1611 = vpop.f32.mrb[0].mxu0
  %v1612 = vadd.f32 0.0, %v1611
  %v1613 = vpop.f32.mrb[0].mxu0
  %v1614 = vpop.f32.mrb[0].mxu0
  %v1615 = vadd.f32 0.0, %v1614
  %v1616 = vpop.f32.mrb[0].mxu0
  %1617 = vmatprep.mubr.bf16.mxu0 %v1460
  %1618 = vmatmul.mubr.bf16.gmra.mrb[0].mxu0 %v1459
  %v1619 = vpop.f32.mrb[0].mxu0
  %v1620 = vadd.f32 0.0, %v1619
  %v1621 = vpop.f32.mrb[0].mxu0
  %v1622 = vpop.f32.mrb[0].mxu0
  %v1623 = vadd.f32 0.0, %v1622
  %v1624 = vpop.f32.mrb[0].mxu0
  %1625 = vmatprep.mubr.bf16.mxu0 %v1464
  %1626 = vmatmul.mubr.bf16.gmra.mrb[0].mxu0 %v1463
  %v1627 = vpop.f32.mrb[0].mxu0
  %v1628 = vadd.f32 0.0, %v1627
  %v1629 = vpop.f32.mrb[0].mxu0
  %v1630 = vpop.f32.mrb[0].mxu0
  %v1631 = vadd.f32 0.0, %v1630
  %v1632 = vpop.f32.mrb[0].mxu0
  %1633 = vmatprep.mubr.bf16.mxu0 %v1468
  %1634 = vmatmul.mubr.bf16.gmra.mrb[0].mxu0 %v1467
  %v1635 = vpop.f32.mrb[0].mxu0
  %v1636 = vadd.f32 0.0, %v1635
  %v1637 = vpop.f32.mrb[0].mxu0
  %v1638 = vpop.f32.mrb[0].mxu0
  %v1639 = vadd.f32 0.0, %v1638
  %v1640 = vpop.f32.mrb[0].mxu0
  %1641 = vmatprep.mubr.bf16.mxu0 %v1472
  %1642 = vmatmul.mubr.bf16.gmra.mrb[0].mxu0 %v1471
  %v1643 = vpop.f32.mrb[0].mxu0
  %v1644 = vadd.f32 0.0, %v1643
  %v1645 = vpop.f32.mrb[0].mxu0
  %v1646 = vpop.f32.mrb[0].mxu0
  %v1647 = vadd.f32 0.0, %v1646
  %v1648 = vpop.f32.mrb[0].mxu0
  %1649 = vmatprep.mubr.bf16.mxu0 %v1476
  %1650 = vmatmul.mubr.bf16.gmra.mrb[0].mxu0 %v1475
  %v1651 = vpop.f32.mrb[0].mxu0
  %v1652 = vadd.f32 0.0, %v1651
  %v1653 = vpop.f32.mrb[0].mxu0
  %v1654 = vpop.f32.mrb[0].mxu0
  %v1655 = vadd.f32 0.0, %v1654
  %v1656 = vpop.f32.mrb[0].mxu0
  %1657 = vmatprep.mubr.bf16.mxu0 %v1480
  %1658 = vmatmul.mubr.bf16.gmra.mrb[0].mxu0 %v1479
  %v1659 = vpop.f32.mrb[0].mxu0
  %v1660 = vadd.f32 0.0, %v1659
  %v1661 = vpop.f32.mrb[0].mxu0
  %v1662 = vpop.f32.mrb[0].mxu0
  %v1663 = vadd.f32 0.0, %v1662
  %v1664 = vpop.f32.mrb[0].mxu0
  %1665 = vmatprep.mubr.bf16.mxu0 %v1484
  %1666 = vmatmul.mubr.bf16.gmra.mrb[0].mxu0 %v1483
  %v1667 = vpop.f32.mrb[0].mxu0
  %v1668 = vadd.f32 0.0, %v1667
  %v1669 = vpop.f32.mrb[0].mxu0
  %v1670 = vpop.f32.mrb[0].mxu0
  %v1671 = vpop.f32.mrb[0].mxu0
  %1672 = vdwg.mxu0
  %1673 = vmatprep.subr.bf16.mxu0 0
  %1674 = vmatpush1.bf16.msra.mxu0 %v426
  %1675 = vmatprep.subr.bf16.mxu0 0
  %1676 = vmatpush1.bf16.msra.mxu0 %v427
  %1677 = vmatprep.subr.bf16.mxu0 0
  %1678 = vmatpush1.bf16.msra.mxu0 %v428
  %1679 = vmatprep.subr.bf16.mxu0 0
  %1680 = vmatpush1.bf16.msra.mxu0 %v429
  %1681 = vmatprep.subr.bf16.mxu0 0
  %1682 = vmatpush1.bf16.msra.mxu0 %v430
  %1683 = vmatprep.subr.bf16.mxu0 0
  %1684 = vmatpush1.bf16.msra.mxu0 %v431
  %1685 = vmatprep.subr.bf16.mxu0 0
  %1686 = vmatpush1.bf16.msra.mxu0 %v432
  %1687 = vmatprep.subr.bf16.mxu0 0
  %1688 = vmatpush1.bf16.msra.mxu0 %v433
  %1689 = vmatprep.subr.bf16.mxu0 0
  %1690 = vmatpush1.bf16.msra.mxu0 %v434
  %1691 = vmatprep.subr.bf16.mxu0 0
  %1692 = vmatpush1.bf16.msra.mxu0 0
  %1693 = vmatprep.subr.bf16.mxu0 0
  %1694 = vmatpush1.bf16.msra.mxu0 0
  %1695 = vmatprep.subr.bf16.mxu0 0
  %1696 = vmatpush1.bf16.msra.mxu0 0
  %1697 = vmatprep.subr.bf16.mxu0 0
  %1698 = vmatpush1.bf16.msra.mxu0 0
  %1699 = vmatprep.subr.bf16.mxu0 0
  %1700 = vmatpush1.bf16.msra.mxu0 0
  %1701 = vmatprep.subr.bf16.mxu0 0
  %1702 = vmatpush1.bf16.msra.mxu0 0
  %1703 = vmatprep.subr.bf16.mxu0 0
  %1704 = vmatpush1.bf16.msra.mxu0 0
  %1705 = vmatprep.mubr.bf16.mxu0 %v1521
  %1706 = vmatmul.mubr.bf16.gmra.mrb[0].mxu0 %v1445
  %v1707 = vpop.f32.mrb[0].mxu0
  %v1708 = vadd.f32 %v1588, %v1707
  %v1709 = vpop.f32.mrb[0].mxu0
  %v1710 = vpop.f32.mrb[0].mxu0
  %v1711 = vadd.f32 %v1591, %v1710
  %v1712 = vpop.f32.mrb[0].mxu0
  %1713 = vmatprep.mubr.bf16.mxu0 %v1524
  %1714 = vmatmul.mubr.bf16.gmra.mrb[0].mxu0 %v1449
  %v1715 = vpop.f32.mrb[0].mxu0
  %v1716 = vadd.f32 %v1596, %v1715
  %v1717 = vpop.f32.mrb[0].mxu0
  %v1718 = vpop.f32.mrb[0].mxu0
  %v1719 = vadd.f32 %v1599, %v1718
  %v1720 = vpop.f32.mrb[0].mxu0
  %1721 = vmatprep.mubr.bf16.mxu0 %v1527
  %1722 = vmatmul.mubr.bf16.gmra.mrb[0].mxu0 %v1453
  %v1723 = vpop.f32.mrb[0].mxu0
  %v1724 = vadd.f32 %v1604, %v1723
  %v1725 = vpop.f32.mrb[0].mxu0
  %v1726 = vpop.f32.mrb[0].mxu0
  %v1727 = vadd.f32 %v1607, %v1726
  %v1728 = vpop.f32.mrb[0].mxu0
  %1729 = vmatprep.mubr.bf16.mxu0 %v1530
  %1730 = vmatmul.mubr.bf16.gmra.mrb[0].mxu0 %v1457
  %v1731 = vpop.f32.mrb[0].mxu0
  %v1732 = vadd.f32 %v1612, %v1731
  %v1733 = vpop.f32.mrb[0].mxu0
  %v1734 = vpop.f32.mrb[0].mxu0
  %v1735 = vadd.f32 %v1615, %v1734
  %v1736 = vpop.f32.mrb[0].mxu0
  %1737 = vmatprep.mubr.bf16.mxu0 %v1533
  %1738 = vmatmul.mubr.bf16.gmra.mrb[0].mxu0 %v1461
  %v1739 = vpop.f32.mrb[0].mxu0
  %v1740 = vadd.f32 %v1620, %v1739
  %v1741 = vpop.f32.mrb[0].mxu0
  %v1742 = vpop.f32.mrb[0].mxu0
  %v1743 = vadd.f32 %v1623, %v1742
  %v1744 = vpop.f32.mrb[0].mxu0
  %1745 = vmatprep.mubr.bf16.mxu0 %v1536
  %1746 = vmatmul.mubr.bf16.gmra.mrb[0].mxu0 %v1465
  %v1747 = vpop.f32.mrb[0].mxu0
  %v1748 = vadd.f32 %v1628, %v1747
  %v1749 = vpop.f32.mrb[0].mxu0
  %v1750 = vpop.f32.mrb[0].mxu0
  %v1751 = vadd.f32 %v1631, %v1750
  %v1752 = vpop.f32.mrb[0].mxu0
  %1753 = vmatprep.mubr.bf16.mxu0 %v1539
  %1754 = vmatmul.mubr.bf16.gmra.mrb[0].mxu0 %v1469
  %v1755 = vpop.f32.mrb[0].mxu0
  %v1756 = vadd.f32 %v1636, %v1755
  %v1757 = vpop.f32.mrb[0].mxu0
  %v1758 = vpop.f32.mrb[0].mxu0
  %v1759 = vadd.f32 %v1639, %v1758
  %v1760 = vpop.f32.mrb[0].mxu0
  %1761 = vmatprep.mubr.bf16.mxu0 %v1542
  %1762 = vmatmul.mubr.bf16.gmra.mrb[0].mxu0 %v1473
  %v1763 = vpop.f32.mrb[0].mxu0
  %v1764 = vadd.f32 %v1644, %v1763
  %v1765 = vpop.f32.mrb[0].mxu0
  %v1766 = vpop.f32.mrb[0].mxu0
  %v1767 = vadd.f32 %v1647, %v1766
  %v1768 = vpop.f32.mrb[0].mxu0
  %1769 = vmatprep.mubr.bf16.mxu0 %v1545
  %1770 = vmatmul.mubr.bf16.gmra.mrb[0].mxu0 %v1477
  %v1771 = vpop.f32.mrb[0].mxu0
  %v1772 = vadd.f32 %v1652, %v1771
  %v1773 = vpop.f32.mrb[0].mxu0
  %v1774 = vpop.f32.mrb[0].mxu0
  %v1775 = vadd.f32 %v1655, %v1774
  %v1776 = vpop.f32.mrb[0].mxu0
  %1777 = vmatprep.mubr.bf16.mxu0 %v1548
  %1778 = vmatmul.mubr.bf16.gmra.mrb[0].mxu0 %v1481
  %v1779 = vpop.f32.mrb[0].mxu0
  %v1780 = vadd.f32 %v1660, %v1779
  %v1781 = vpop.f32.mrb[0].mxu0
  %v1782 = vpop.f32.mrb[0].mxu0
  %v1783 = vadd.f32 %v1663, %v1782
  %v1784 = vpop.f32.mrb[0].mxu0
  %1785 = vmatprep.mubr.bf16.mxu0 %v1551
  %1786 = vmatmul.mubr.bf16.gmra.mrb[0].mxu0 %v1485
  %v1787 = vpop.f32.mrb[0].mxu0
  %v1788 = vadd.f32 %v1668, %v1787
  %v1789 = vpop.f32.mrb[0].mxu0
  %v1790 = vpop.f32.mrb[0].mxu0
  %v1791 = vpop.f32.mrb[0].mxu0
  %1792 = vdwg.mxu0
  %v1793 = vmax.f32 %v1253, %v1708
  %v1794 = vmax.f32 %v1254, %v1711
  %v1795 = vmax.f32 %v1255, %v1716
  %v1796 = vmax.f32 %v1256, %v1719
  %v1797 = vmax.f32 %v1257, %v1724
  %v1798 = vmax.f32 %v1258, %v1727
  %v1799 = vmax.f32 %v1259, %v1732
  %v1800 = vmax.f32 %v1260, %v1735
  %v1801 = vmax.f32 %v1261, %v1740
  %v1802 = vmax.f32 %v1262, %v1743
  %v1803 = vmax.f32 %v1263, %v1748
  %v1804 = vmax.f32 %v1264, %v1751
  %v1805 = vmax.f32 %v1265, %v1756
  %v1806 = vmax.f32 %v1266, %v1759
  %v1807 = vmax.f32 %v1267, %v1764
  %v1808 = vmax.f32 %v1268, %v1767
  %v1809 = vmax.f32 %v1269, %v1772
  %v1810 = vmax.f32 %v1270, %v1775
  %v1811 = vmax.f32 %v1271, %v1780
  %v1812 = vmax.f32 %v1272, %v1783
  %v1813 = vmax.f32 %v1273, %v1788
  %s1814 = scalar_lea.vmem %s0, 1008
  %v1815 = vld [vmem:[%s1814] sm:$0xff]
  %v1816 = vld [vmem:[%s1814 + $0x8] sm:$0xff]
  %v1817 = vld [vmem:[%s1814 + $0x10] sm:$0xff]
  %v1818 = vld [vmem:[%s1814 + $0x18] sm:$0xff]
  %v1819 = vld [vmem:[%s1814 + $0x20] sm:$0xff]
  %v1820 = vld [vmem:[%s1814 + $0x28] sm:$0xff]
  %v1821 = vld [vmem:[%s1814 + $0x30] sm:$0xff]
  %v1822 = vld [vmem:[%s1814 + $0x38] sm:$0xff]
  %v1823 = vld [vmem:[%s1814 + $0x40] sm:$0xff]
  %v1824 = vld [vmem:[%s1814 + $0x48] sm:$0xff]
  %v1825 = vld [vmem:[%s1814 + $0x50] sm:$0xff]
  %v1826 = vld [vmem:[%s1814 + $0x58] sm:$0xff]
  %v1827 = vld [vmem:[%s1814 + $0x60] sm:$0xff]
  %v1828 = vld [vmem:[%s1814 + $0x68] sm:$0xff]
  %v1829 = vld [vmem:[%s1814 + $0x70] sm:$0xff]
  %v1830 = vld [vmem:[%s1814 + $0x78] sm:$0xff]
  %v1831 = vld [vmem:[%s1814 + $0x80] sm:$0xff]
  %v1832 = vld [vmem:[%s1814 + $0x88] sm:$0xff]
  %v1833 = vld [vmem:[%s1814 + $0x90] sm:$0xff]
  %v1834 = vld [vmem:[%s1814 + $0x98] sm:$0xff]
  %v1835 = vld [vmem:[%s1814 + $0xa0] sm:$0xff]
  %v1836 = vld [vmem:[%s1814 + $0xa8] sm:$0xff]
  %v1837 = vld [vmem:[%s1814 + $0xb0] sm:$0xff]
  %v1838 = vld [vmem:[%s1814 + $0xb8] sm:$0xff]
  %v1839 = vld [vmem:[%s1814 + $0xc0] sm:$0xff]
  %v1840 = vld [vmem:[%s1814 + $0xc8] sm:$0xff]
  %v1841 = vld [vmem:[%s1814 + $0xd0] sm:$0xff]
  %v1842 = vld [vmem:[%s1814 + $0xd8] sm:$0xff]
  %v1843 = vld [vmem:[%s1814 + $0xe0] sm:$0xff]
  %v1844 = vld [vmem:[%s1814 + $0xe8] sm:$0xff]
  %v1845 = vld [vmem:[%s1814 + $0xf0] sm:$0xff]
  %v1846 = vld [vmem:[%s1814 + $0xf8] sm:$0xff]
  %v1847 = vld [vmem:[%s1814 + $0x100] sm:$0xff]
  %v1848 = vld [vmem:[%s1814 + $0x108] sm:$0xff]
  %v1849 = vld [vmem:[%s1814 + $0x110] sm:$0xff]
  %v1850 = vld [vmem:[%s1814 + $0x118] sm:$0xff]
  %v1851 = vld [vmem:[%s1814 + $0x120] sm:$0xff]
  %v1852 = vld [vmem:[%s1814 + $0x128] sm:$0xff]
  %v1853 = vld [vmem:[%s1814 + $0x130] sm:$0xff]
  %v1854 = vld [vmem:[%s1814 + $0x138] sm:$0xff]
  %v1855 = vld [vmem:[%s1814 + $0x140] sm:$0x11]
  %v1856 = vld [vmem:[%s1814 + $0x148] sm:$0x11]
  %v1899 = vunpack.c.l.b16 %v1815
  %v1900 = vunpack.c.h.b16 %v1815
  %v1901 = vunpack.c.l.b16 %v1816
  %v1902 = vunpack.c.h.b16 %v1816
  %v1903 = vunpack.c.l.b16 %v1817
  %v1904 = vunpack.c.h.b16 %v1817
  %v1905 = vunpack.c.l.b16 %v1818
  %v1906 = vunpack.c.h.b16 %v1818
  %v1907 = vunpack.c.l.b16 %v1819
  %v1908 = vunpack.c.h.b16 %v1819
  %v1909 = vunpack.c.l.b16 %v1820
  %v1910 = vunpack.c.h.b16 %v1820
  %v1911 = vunpack.c.l.b16 %v1821
  %v1912 = vunpack.c.h.b16 %v1821
  %v1913 = vunpack.c.l.b16 %v1822
  %v1914 = vunpack.c.h.b16 %v1822
  %v1915 = vunpack.c.l.b16 %v1823
  %v1916 = vunpack.c.h.b16 %v1823
  %v1917 = vunpack.c.l.b16 %v1824
  %v1918 = vunpack.c.h.b16 %v1824
  %v1919 = vunpack.c.l.b16 %v1825
  %v1920 = vunpack.c.h.b16 %v1825
  %v1921 = vunpack.c.l.b16 %v1826
  %v1922 = vunpack.c.h.b16 %v1826
  %v1923 = vunpack.c.l.b16 %v1827
  %v1924 = vunpack.c.h.b16 %v1827
  %v1925 = vunpack.c.l.b16 %v1828
  %v1926 = vunpack.c.h.b16 %v1828
  %v1927 = vunpack.c.l.b16 %v1829
  %v1928 = vunpack.c.h.b16 %v1829
  %v1929 = vunpack.c.l.b16 %v1830
  %v1930 = vunpack.c.h.b16 %v1830
  %v1931 = vunpack.c.l.b16 %v1831
  %v1932 = vunpack.c.h.b16 %v1831
  %v1933 = vunpack.c.l.b16 %v1832
  %v1934 = vunpack.c.h.b16 %v1832
  %v1935 = vunpack.c.l.b16 %v1833
  %v1936 = vunpack.c.h.b16 %v1833
  %v1937 = vunpack.c.l.b16 %v1834
  %v1938 = vunpack.c.h.b16 %v1834
  %v1939 = vunpack.c.l.b16 %v1835
  %v1940 = vunpack.c.h.b16 %v1835
  %v1941 = vunpack.c.l.b16 %v1836
  %v1942 = vunpack.c.h.b16 %v1836
  %v1943 = vunpack.c.l.b16 %v1837
  %v1944 = vunpack.c.h.b16 %v1837
  %v1945 = vunpack.c.l.b16 %v1838
  %v1946 = vunpack.c.h.b16 %v1838
  %v1947 = vunpack.c.l.b16 %v1839
  %v1948 = vunpack.c.h.b16 %v1839
  %v1949 = vunpack.c.l.b16 %v1840
  %v1950 = vunpack.c.h.b16 %v1840
  %v1951 = vunpack.c.l.b16 %v1841
  %v1952 = vunpack.c.h.b16 %v1841
  %v1953 = vunpack.c.l.b16 %v1842
  %v1954 = vunpack.c.h.b16 %v1842
  %v1955 = vunpack.c.l.b16 %v1843
  %v1956 = vunpack.c.h.b16 %v1843
  %v1957 = vunpack.c.l.b16 %v1844
  %v1958 = vunpack.c.h.b16 %v1844
  %v1959 = vunpack.c.l.b16 %v1845
  %v1960 = vunpack.c.h.b16 %v1845
  %v1961 = vunpack.c.l.b16 %v1846
  %v1962 = vunpack.c.h.b16 %v1846
  %v1963 = vunpack.c.l.b16 %v1847
  %v1964 = vunpack.c.h.b16 %v1847
  %v1965 = vunpack.c.l.b16 %v1848
  %v1966 = vunpack.c.h.b16 %v1848
  %v1967 = vunpack.c.l.b16 %v1849
  %v1968 = vunpack.c.h.b16 %v1849
  %v1969 = vunpack.c.l.b16 %v1850
  %v1970 = vunpack.c.h.b16 %v1850
  %v1971 = vunpack.c.l.b16 %v1851
  %v1972 = vunpack.c.h.b16 %v1851
  %v1973 = vunpack.c.l.b16 %v1852
  %v1974 = vunpack.c.h.b16 %v1852
  %v1975 = vunpack.c.l.b16 %v1853
  %v1976 = vunpack.c.h.b16 %v1853
  %v1977 = vunpack.c.l.b16 %v1854
  %v1978 = vunpack.c.h.b16 %v1854
  %v1979 = vunpack.c.l.b16 %v1855
  %v1980 = vunpack.c.h.b16 %v1855
  %v1981 = vunpack.c.l.b16 %v1856
  %v1982 = vunpack.c.h.b16 %v1856
  %v1983 = vpack.c.b16 %v1903, %v1899
  %v1984 = vpack.c.b16 %v1904, %v1900
  %v1985 = vpack.c.b16 %v1905, %v1901
  %v1986 = vpack.c.b16 %v1906, %v1902
  %v1987 = vpack.c.b16 %v1911, %v1907
  %v1988 = vpack.c.b16 %v1912, %v1908
  %v1989 = vpack.c.b16 %v1913, %v1909
  %v1990 = vpack.c.b16 %v1914, %v1910
  %v1991 = vpack.c.b16 %v1919, %v1915
  %v1992 = vpack.c.b16 %v1920, %v1916
  %v1993 = vpack.c.b16 %v1921, %v1917
  %v1994 = vpack.c.b16 %v1922, %v1918
  %v1995 = vpack.c.b16 %v1927, %v1923
  %v1996 = vpack.c.b16 %v1928, %v1924
  %v1997 = vpack.c.b16 %v1929, %v1925
  %v1998 = vpack.c.b16 %v1930, %v1926
  %v1999 = vpack.c.b16 %v1935, %v1931
  %v2000 = vpack.c.b16 %v1936, %v1932
  %v2001 = vpack.c.b16 %v1937, %v1933
  %v2002 = vpack.c.b16 %v1938, %v1934
  %v2003 = vpack.c.b16 %v1943, %v1939
  %v2004 = vpack.c.b16 %v1944, %v1940
  %v2005 = vpack.c.b16 %v1945, %v1941
  %v2006 = vpack.c.b16 %v1946, %v1942
  %v2007 = vpack.c.b16 %v1951, %v1947
  %v2008 = vpack.c.b16 %v1952, %v1948
  %v2009 = vpack.c.b16 %v1953, %v1949
  %v2010 = vpack.c.b16 %v1954, %v1950
  %v2011 = vpack.c.b16 %v1959, %v1955
  %v2012 = vpack.c.b16 %v1960, %v1956
  %v2013 = vpack.c.b16 %v1961, %v1957
  %v2014 = vpack.c.b16 %v1962, %v1958
  %v2015 = vpack.c.b16 %v1967, %v1963
  %v2016 = vpack.c.b16 %v1968, %v1964
  %v2017 = vpack.c.b16 %v1969, %v1965
  %v2018 = vpack.c.b16 %v1970, %v1966
  %v2019 = vpack.c.b16 %v1975, %v1971
  %v2020 = vpack.c.b16 %v1976, %v1972
  %v2021 = vpack.c.b16 %v1977, %v1973
  %v2022 = vpack.c.b16 %v1978, %v1974
  %v2023 = vpack.c.b16 %v1979, %v1979
  %v2024 = vpack.c.b16 %v1980, %v1980
  %v2025 = vpack.c.b16 %v1981, %v1981
  %v2026 = vpack.c.b16 %v1982, %v1982
  %v2061 = vsel %vm460, %v1986, 0
  %v2064 = vsel %vm460, %v1990, 0
  %v2067 = vsel %vm460, %v1994, 0
  %v2070 = vsel %vm460, %v1998, 0
  %v2073 = vsel %vm460, %v2002, 0
  %v2076 = vsel %vm460, %v2006, 0
  %v2079 = vsel %vm460, %v2010, 0
  %v2082 = vsel %vm460, %v2014, 0
  %v2085 = vsel %vm460, %v2018, 0
  %v2088 = vsel %vm460, %v2022, 0
  %v2091 = vsel %vm460, %v2026, 0
  %2093 = vmatprep.subr.bf16.mxu0 0
  %2094 = vmatpush1.bf16.msra.mxu0 %v410
  %2095 = vmatprep.subr.bf16.mxu0 0
  %2096 = vmatpush1.bf16.msra.mxu0 %v411
  %2097 = vmatprep.subr.bf16.mxu0 0
  %2098 = vmatpush1.bf16.msra.mxu0 %v412
  %2099 = vmatprep.subr.bf16.mxu0 0
  %2100 = vmatpush1.bf16.msra.mxu0 %v413
  %2101 = vmatprep.subr.bf16.mxu0 0
  %2102 = vmatpush1.bf16.msra.mxu0 %v414
  %2103 = vmatprep.subr.bf16.mxu0 0
  %2104 = vmatpush1.bf16.msra.mxu0 %v415
  %2105 = vmatprep.subr.bf16.mxu0 0
  %2106 = vmatpush1.bf16.msra.mxu0 %v416
  %2107 = vmatprep.subr.bf16.mxu0 0
  %2108 = vmatpush1.bf16.msra.mxu0 %v417
  %2109 = vmatprep.subr.bf16.mxu0 0
  %2110 = vmatpush1.bf16.msra.mxu0 %v418
  %2111 = vmatprep.subr.bf16.mxu0 0
  %2112 = vmatpush1.bf16.msra.mxu0 %v419
  %2113 = vmatprep.subr.bf16.mxu0 0
  %2114 = vmatpush1.bf16.msra.mxu0 %v420
  %2115 = vmatprep.subr.bf16.mxu0 0
  %2116 = vmatpush1.bf16.msra.mxu0 %v421
  %2117 = vmatprep.subr.bf16.mxu0 0
  %2118 = vmatpush1.bf16.msra.mxu0 %v422
  %2119 = vmatprep.subr.bf16.mxu0 0
  %2120 = vmatpush1.bf16.msra.mxu0 %v423
  %2121 = vmatprep.subr.bf16.mxu0 0
  %2122 = vmatpush1.bf16.msra.mxu0 %v424
  %2123 = vmatprep.subr.bf16.mxu0 0
  %2124 = vmatpush1.bf16.msra.mxu0 %v425
  %2125 = vmatprep.mubr.bf16.mxu0 %v1984
  %2126 = vmatmul.mubr.bf16.gmra.mrb[0].mxu0 %v1983
  %v2127 = vpop.f32.mrb[0].mxu0
  %v2128 = vadd.f32 0.0, %v2127
  %v2129 = vpop.f32.mrb[0].mxu0
  %v2130 = vpop.f32.mrb[0].mxu0
  %v2131 = vadd.f32 0.0, %v2130
  %v2132 = vpop.f32.mrb[0].mxu0
  %2133 = vmatprep.mubr.bf16.mxu0 %v1988
  %2134 = vmatmul.mubr.bf16.gmra.mrb[0].mxu0 %v1987
  %v2135 = vpop.f32.mrb[0].mxu0
  %v2136 = vadd.f32 0.0, %v2135
  %v2137 = vpop.f32.mrb[0].mxu0
  %v2138 = vpop.f32.mrb[0].mxu0
  %v2139 = vadd.f32 0.0, %v2138
  %v2140 = vpop.f32.mrb[0].mxu0
  %2141 = vmatprep.mubr.bf16.mxu0 %v1992
  %2142 = vmatmul.mubr.bf16.gmra.mrb[0].mxu0 %v1991
  %v2143 = vpop.f32.mrb[0].mxu0
  %v2144 = vadd.f32 0.0, %v2143
  %v2145 = vpop.f32.mrb[0].mxu0
  %v2146 = vpop.f32.mrb[0].mxu0
  %v2147 = vadd.f32 0.0, %v2146
  %v2148 = vpop.f32.mrb[0].mxu0
  %2149 = vmatprep.mubr.bf16.mxu0 %v1996
  %2150 = vmatmul.mubr.bf16.gmra.mrb[0].mxu0 %v1995
  %v2151 = vpop.f32.mrb[0].mxu0
  %v2152 = vadd.f32 0.0, %v2151
  %v2153 = vpop.f32.mrb[0].mxu0
  %v2154 = vpop.f32.mrb[0].mxu0
  %v2155 = vadd.f32 0.0, %v2154
  %v2156 = vpop.f32.mrb[0].mxu0
  %2157 = vmatprep.mubr.bf16.mxu0 %v2000
  %2158 = vmatmul.mubr.bf16.gmra.mrb[0].mxu0 %v1999
  %v2159 = vpop.f32.mrb[0].mxu0
  %v2160 = vadd.f32 0.0, %v2159
  %v2161 = vpop.f32.mrb[0].mxu0
  %v2162 = vpop.f32.mrb[0].mxu0
  %v2163 = vadd.f32 0.0, %v2162
  %v2164 = vpop.f32.mrb[0].mxu0
  %2165 = vmatprep.mubr.bf16.mxu0 %v2004
  %2166 = vmatmul.mubr.bf16.gmra.mrb[0].mxu0 %v2003
  %v2167 = vpop.f32.mrb[0].mxu0
  %v2168 = vadd.f32 0.0, %v2167
  %v2169 = vpop.f32.mrb[0].mxu0
  %v2170 = vpop.f32.mrb[0].mxu0
  %v2171 = vadd.f32 0.0, %v2170
  %v2172 = vpop.f32.mrb[0].mxu0
  %2173 = vmatprep.mubr.bf16.mxu0 %v2008
  %2174 = vmatmul.mubr.bf16.gmra.mrb[0].mxu0 %v2007
  %v2175 = vpop.f32.mrb[0].mxu0
  %v2176 = vadd.f32 0.0, %v2175
  %v2177 = vpop.f32.mrb[0].mxu0
  %v2178 = vpop.f32.mrb[0].mxu0
  %v2179 = vadd.f32 0.0, %v2178
  %v2180 = vpop.f32.mrb[0].mxu0
  %2181 = vmatprep.mubr.bf16.mxu0 %v2012
  %2182 = vmatmul.mubr.bf16.gmra.mrb[0].mxu0 %v2011
  %v2183 = vpop.f32.mrb[0].mxu0
  %v2184 = vadd.f32 0.0, %v2183
  %v2185 = vpop.f32.mrb[0].mxu0
  %v2186 = vpop.f32.mrb[0].mxu0
  %v2187 = vadd.f32 0.0, %v2186
  %v2188 = vpop.f32.mrb[0].mxu0
  %2189 = vmatprep.mubr.bf16.mxu0 %v2016
  %2190 = vmatmul.mubr.bf16.gmra.mrb[0].mxu0 %v2015
  %v2191 = vpop.f32.mrb[0].mxu0
  %v2192 = vadd.f32 0.0, %v2191
  %v2193 = vpop.f32.mrb[0].mxu0
  %v2194 = vpop.f32.mrb[0].mxu0
  %v2195 = vadd.f32 0.0, %v2194
  %v2196 = vpop.f32.mrb[0].mxu0
  %2197 = vmatprep.mubr.bf16.mxu0 %v2020
  %2198 = vmatmul.mubr.bf16.gmra.mrb[0].mxu0 %v2019
  %v2199 = vpop.f32.mrb[0].mxu0
  %v2200 = vadd.f32 0.0, %v2199
  %v2201 = vpop.f32.mrb[0].mxu0
  %v2202 = vpop.f32.mrb[0].mxu0
  %v2203 = vadd.f32 0.0, %v2202
  %v2204 = vpop.f32.mrb[0].mxu0
  %2205 = vmatprep.mubr.bf16.mxu0 %v2024
  %2206 = vmatmul.mubr.bf16.gmra.mrb[0].mxu0 %v2023
  %v2207 = vpop.f32.mrb[0].mxu0
  %v2208 = vadd.f32 0.0, %v2207
  %v2209 = vpop.f32.mrb[0].mxu0
  %v2210 = vpop.f32.mrb[0].mxu0
  %v2211 = vpop.f32.mrb[0].mxu0
  %2212 = vdwg.mxu0
  %2213 = vmatprep.subr.bf16.mxu0 0
  %2214 = vmatpush1.bf16.msra.mxu0 %v426
  %2215 = vmatprep.subr.bf16.mxu0 0
  %2216 = vmatpush1.bf16.msra.mxu0 %v427
  %2217 = vmatprep.subr.bf16.mxu0 0
  %2218 = vmatpush1.bf16.msra.mxu0 %v428
  %2219 = vmatprep.subr.bf16.mxu0 0
  %2220 = vmatpush1.bf16.msra.mxu0 %v429
  %2221 = vmatprep.subr.bf16.mxu0 0
  %2222 = vmatpush1.bf16.msra.mxu0 %v430
  %2223 = vmatprep.subr.bf16.mxu0 0
  %2224 = vmatpush1.bf16.msra.mxu0 %v431
  %2225 = vmatprep.subr.bf16.mxu0 0
  %2226 = vmatpush1.bf16.msra.mxu0 %v432
  %2227 = vmatprep.subr.bf16.mxu0 0
  %2228 = vmatpush1.bf16.msra.mxu0 %v433
  %2229 = vmatprep.subr.bf16.mxu0 0
  %2230 = vmatpush1.bf16.msra.mxu0 %v434
  %2231 = vmatprep.subr.bf16.mxu0 0
  %2232 = vmatpush1.bf16.msra.mxu0 0
  %2233 = vmatprep.subr.bf16.mxu0 0
  %2234 = vmatpush1.bf16.msra.mxu0 0
  %2235 = vmatprep.subr.bf16.mxu0 0
  %2236 = vmatpush1.bf16.msra.mxu0 0
  %2237 = vmatprep.subr.bf16.mxu0 0
  %2238 = vmatpush1.bf16.msra.mxu0 0
  %2239 = vmatprep.subr.bf16.mxu0 0
  %2240 = vmatpush1.bf16.msra.mxu0 0
  %2241 = vmatprep.subr.bf16.mxu0 0
  %2242 = vmatpush1.bf16.msra.mxu0 0
  %2243 = vmatprep.subr.bf16.mxu0 0
  %2244 = vmatpush1.bf16.msra.mxu0 0
  %2245 = vmatprep.mubr.bf16.mxu0 %v2061
  %2246 = vmatmul.mubr.bf16.gmra.mrb[0].mxu0 %v1985
  %v2247 = vpop.f32.mrb[0].mxu0
  %v2248 = vadd.f32 %v2128, %v2247
  %v2249 = vpop.f32.mrb[0].mxu0
  %v2250 = vpop.f32.mrb[0].mxu0
  %v2251 = vadd.f32 %v2131, %v2250
  %v2252 = vpop.f32.mrb[0].mxu0
  %2253 = vmatprep.mubr.bf16.mxu0 %v2064
  %2254 = vmatmul.mubr.bf16.gmra.mrb[0].mxu0 %v1989
  %v2255 = vpop.f32.mrb[0].mxu0
  %v2256 = vadd.f32 %v2136, %v2255
  %v2257 = vpop.f32.mrb[0].mxu0
  %v2258 = vpop.f32.mrb[0].mxu0
  %v2259 = vadd.f32 %v2139, %v2258
  %v2260 = vpop.f32.mrb[0].mxu0
  %2261 = vmatprep.mubr.bf16.mxu0 %v2067
  %2262 = vmatmul.mubr.bf16.gmra.mrb[0].mxu0 %v1993
  %v2263 = vpop.f32.mrb[0].mxu0
  %v2264 = vadd.f32 %v2144, %v2263
  %v2265 = vpop.f32.mrb[0].mxu0
  %v2266 = vpop.f32.mrb[0].mxu0
  %v2267 = vadd.f32 %v2147, %v2266
  %v2268 = vpop.f32.mrb[0].mxu0
  %2269 = vmatprep.mubr.bf16.mxu0 %v2070
  %2270 = vmatmul.mubr.bf16.gmra.mrb[0].mxu0 %v1997
  %v2271 = vpop.f32.mrb[0].mxu0
  %v2272 = vadd.f32 %v2152, %v2271
  %v2273 = vpop.f32.mrb[0].mxu0
  %v2274 = vpop.f32.mrb[0].mxu0
  %v2275 = vadd.f32 %v2155, %v2274
  %v2276 = vpop.f32.mrb[0].mxu0
  %2277 = vmatprep.mubr.bf16.mxu0 %v2073
  %2278 = vmatmul.mubr.bf16.gmra.mrb[0].mxu0 %v2001
  %v2279 = vpop.f32.mrb[0].mxu0
  %v2280 = vadd.f32 %v2160, %v2279
  %v2281 = vpop.f32.mrb[0].mxu0
  %v2282 = vpop.f32.mrb[0].mxu0
  %v2283 = vadd.f32 %v2163, %v2282
  %v2284 = vpop.f32.mrb[0].mxu0
  %2285 = vmatprep.mubr.bf16.mxu0 %v2076
  %2286 = vmatmul.mubr.bf16.gmra.mrb[0].mxu0 %v2005
  %v2287 = vpop.f32.mrb[0].mxu0
  %v2288 = vadd.f32 %v2168, %v2287
  %v2289 = vpop.f32.mrb[0].mxu0
  %v2290 = vpop.f32.mrb[0].mxu0
  %v2291 = vadd.f32 %v2171, %v2290
  %v2292 = vpop.f32.mrb[0].mxu0
  %2293 = vmatprep.mubr.bf16.mxu0 %v2079
  %2294 = vmatmul.mubr.bf16.gmra.mrb[0].mxu0 %v2009
  %v2295 = vpop.f32.mrb[0].mxu0
  %v2296 = vadd.f32 %v2176, %v2295
  %v2297 = vpop.f32.mrb[0].mxu0
  %v2298 = vpop.f32.mrb[0].mxu0
  %v2299 = vadd.f32 %v2179, %v2298
  %v2300 = vpop.f32.mrb[0].mxu0
  %2301 = vmatprep.mubr.bf16.mxu0 %v2082
  %2302 = vmatmul.mubr.bf16.gmra.mrb[0].mxu0 %v2013
  %v2303 = vpop.f32.mrb[0].mxu0
  %v2304 = vadd.f32 %v2184, %v2303
  %v2305 = vpop.f32.mrb[0].mxu0
  %v2306 = vpop.f32.mrb[0].mxu0
  %v2307 = vadd.f32 %v2187, %v2306
  %v2308 = vpop.f32.mrb[0].mxu0
  %2309 = vmatprep.mubr.bf16.mxu0 %v2085
  %2310 = vmatmul.mubr.bf16.gmra.mrb[0].mxu0 %v2017
  %v2311 = vpop.f32.mrb[0].mxu0
  %v2312 = vadd.f32 %v2192, %v2311
  %v2313 = vpop.f32.mrb[0].mxu0
  %v2314 = vpop.f32.mrb[0].mxu0
  %v2315 = vadd.f32 %v2195, %v2314
  %v2316 = vpop.f32.mrb[0].mxu0
  %2317 = vmatprep.mubr.bf16.mxu0 %v2088
  %2318 = vmatmul.mubr.bf16.gmra.mrb[0].mxu0 %v2021
  %v2319 = vpop.f32.mrb[0].mxu0
  %v2320 = vadd.f32 %v2200, %v2319
  %v2321 = vpop.f32.mrb[0].mxu0
  %v2322 = vpop.f32.mrb[0].mxu0
  %v2323 = vadd.f32 %v2203, %v2322
  %v2324 = vpop.f32.mrb[0].mxu0
  %2325 = vmatprep.mubr.bf16.mxu0 %v2091
  %2326 = vmatmul.mubr.bf16.gmra.mrb[0].mxu0 %v2025
  %v2327 = vpop.f32.mrb[0].mxu0
  %v2328 = vadd.f32 %v2208, %v2327
  %v2329 = vpop.f32.mrb[0].mxu0
  %v2330 = vpop.f32.mrb[0].mxu0
  %v2331 = vpop.f32.mrb[0].mxu0
  %2332 = vdwg.mxu0
  %v2333 = vmax.f32 %v1793, %v2248
  %v2334 = vmax.f32 %v1794, %v2251
  %v2335 = vmax.f32 %v1795, %v2256
  %v2336 = vmax.f32 %v1796, %v2259
  %v2337 = vmax.f32 %v1797, %v2264
  %v2338 = vmax.f32 %v1798, %v2267
  %v2339 = vmax.f32 %v1799, %v2272
  %v2340 = vmax.f32 %v1800, %v2275
  %v2341 = vmax.f32 %v1801, %v2280
  %v2342 = vmax.f32 %v1802, %v2283
  %v2343 = vmax.f32 %v1803, %v2288
  %v2344 = vmax.f32 %v1804, %v2291
  %v2345 = vmax.f32 %v1805, %v2296
  %v2346 = vmax.f32 %v1806, %v2299
  %v2347 = vmax.f32 %v1807, %v2304
  %v2348 = vmax.f32 %v1808, %v2307
  %v2349 = vmax.f32 %v1809, %v2312
  %v2350 = vmax.f32 %v1810, %v2315
  %v2351 = vmax.f32 %v1811, %v2320
  %v2352 = vmax.f32 %v1812, %v2323
  %v2353 = vmax.f32 %v1813, %v2328
  %v2354 = vld [vmem:[%s2] sm:$0x1]
  %v2356 = vlaneseq
  %v2357 = vshrl.u32 %v2356, 7
  %v2358 = vsub.s32 0, %v2357
  %v2359 = vrot.slane %v2354, %v2358
  %v2361 = vadd.f32 %v2333, %v2359
  %v2362 = vadd.f32 %v2334, %v2359
  %v2363 = vadd.f32 %v2335, %v2359
  %v2364 = vadd.f32 %v2336, %v2359
  %v2365 = vadd.f32 %v2337, %v2359
  %v2366 = vadd.f32 %v2338, %v2359
  %v2367 = vadd.f32 %v2339, %v2359
  %v2368 = vadd.f32 %v2340, %v2359
  %v2369 = vadd.f32 %v2341, %v2359
  %v2370 = vadd.f32 %v2342, %v2359
  %v2371 = vadd.f32 %v2343, %v2359
  %v2372 = vadd.f32 %v2344, %v2359
  %v2373 = vadd.f32 %v2345, %v2359
  %v2374 = vadd.f32 %v2346, %v2359
  %v2375 = vadd.f32 %v2347, %v2359
  %v2376 = vadd.f32 %v2348, %v2359
  %v2377 = vadd.f32 %v2349, %v2359
  %v2378 = vadd.f32 %v2350, %v2359
  %v2379 = vadd.f32 %v2351, %v2359
  %v2380 = vadd.f32 %v2352, %v2359
  %v2381 = vadd.f32 %v2353, %v2359
  %v2382 = vmax.f32 %v2361, 0.0
  %v2383 = vmax.f32 %v2362, 0.0
  %v2384 = vmax.f32 %v2363, 0.0
  %v2385 = vmax.f32 %v2364, 0.0
  %v2386 = vmax.f32 %v2365, 0.0
  %v2387 = vmax.f32 %v2366, 0.0
  %v2388 = vmax.f32 %v2367, 0.0
  %v2389 = vmax.f32 %v2368, 0.0
  %v2390 = vmax.f32 %v2369, 0.0
  %v2391 = vmax.f32 %v2370, 0.0
  %v2392 = vmax.f32 %v2371, 0.0
  %v2393 = vmax.f32 %v2372, 0.0
  %v2394 = vmax.f32 %v2373, 0.0
  %v2395 = vmax.f32 %v2374, 0.0
  %v2396 = vmax.f32 %v2375, 0.0
  %v2397 = vmax.f32 %v2376, 0.0
  %v2398 = vmax.f32 %v2377, 0.0
  %v2399 = vmax.f32 %v2378, 0.0
  %v2400 = vmax.f32 %v2379, 0.0
  %v2401 = vmax.f32 %v2380, 0.0
  %v2402 = vmax.f32 %v2381, 0.0
  %v2403 = vpack.c.bf16 %v2383, %v2382
  %v2404 = vpack.c.bf16 %v2385, %v2384
  %v2405 = vpack.c.bf16 %v2387, %v2386
  %v2406 = vpack.c.bf16 %v2389, %v2388
  %v2407 = vpack.c.bf16 %v2391, %v2390
  %v2408 = vpack.c.bf16 %v2393, %v2392
  %v2409 = vpack.c.bf16 %v2395, %v2394
  %v2410 = vpack.c.bf16 %v2397, %v2396
  %v2411 = vpack.c.bf16 %v2399, %v2398
  %v2412 = vpack.c.bf16 %v2401, %v2400
  %v2413 = vpack.c.bf16 %v2402, %v2402
  %v2425 = vunpack.c.l.b16 %v2403
  %v2426 = vunpack.c.h.b16 %v2403
  %v2427 = vunpack.c.l.b16 %v2404
  %v2428 = vunpack.c.h.b16 %v2404
  %v2429 = vunpack.c.l.b16 %v2405
  %v2430 = vunpack.c.h.b16 %v2405
  %v2431 = vunpack.c.l.b16 %v2406
  %v2432 = vunpack.c.h.b16 %v2406
  %v2433 = vunpack.c.l.b16 %v2407
  %v2434 = vunpack.c.h.b16 %v2407
  %v2435 = vunpack.c.l.b16 %v2408
  %v2436 = vunpack.c.h.b16 %v2408
  %v2437 = vunpack.c.l.b16 %v2409
  %v2438 = vunpack.c.h.b16 %v2409
  %v2439 = vunpack.c.l.b16 %v2410
  %v2440 = vunpack.c.h.b16 %v2410
  %v2441 = vunpack.c.l.b16 %v2411
  %v2442 = vunpack.c.h.b16 %v2411
  %v2443 = vunpack.c.l.b16 %v2412
  %v2444 = vunpack.c.h.b16 %v2412
  %v2445 = vunpack.c.l.b16 %v2413
  %v2446 = vpack.c.b16 %v2425, %v2425
  %v2447 = vpack.c.b16 %v2426, %v2426
  %v2448 = vpack.c.b16 %v2427, %v2427
  %v2449 = vpack.c.b16 %v2428, %v2428
  %v2450 = vpack.c.b16 %v2429, %v2429
  %v2451 = vpack.c.b16 %v2430, %v2430
  %v2452 = vpack.c.b16 %v2431, %v2431
  %v2453 = vpack.c.b16 %v2432, %v2432
  %v2454 = vpack.c.b16 %v2433, %v2433
  %v2455 = vpack.c.b16 %v2434, %v2434
  %v2456 = vpack.c.b16 %v2435, %v2435
  %v2457 = vpack.c.b16 %v2436, %v2436
  %v2458 = vpack.c.b16 %v2437, %v2437
  %v2459 = vpack.c.b16 %v2438, %v2438
  %v2460 = vpack.c.b16 %v2439, %v2439
  %v2461 = vpack.c.b16 %v2440, %v2440
  %v2462 = vpack.c.b16 %v2441, %v2441
  %v2463 = vpack.c.b16 %v2442, %v2442
  %v2464 = vpack.c.b16 %v2443, %v2443
  %v2465 = vpack.c.b16 %v2444, %v2444
  %v2466 = vpack.c.b16 %v2445, %v2445
  %vm2488 = vcmask 125952
  %2489 = vst.msk [vmem:[%s3] sm:$0xf] %vm2488, %v2446
  %2490 = vst.msk [vmem:[%s3 + $0x4] sm:$0xf] %vm2488, %v2447
  %2491 = vst.msk [vmem:[%s3 + $0x8] sm:$0xf] %vm2488, %v2448
  %2492 = vst.msk [vmem:[%s3 + $0xc] sm:$0xf] %vm2488, %v2449
  %2493 = vst.msk [vmem:[%s3 + $0x10] sm:$0xf] %vm2488, %v2450
  %2494 = vst.msk [vmem:[%s3 + $0x14] sm:$0xf] %vm2488, %v2451
  %2495 = vst.msk [vmem:[%s3 + $0x18] sm:$0xf] %vm2488, %v2452
  %2496 = vst.msk [vmem:[%s3 + $0x1c] sm:$0xf] %vm2488, %v2453
  %2497 = vst.msk [vmem:[%s3 + $0x20] sm:$0xf] %vm2488, %v2454
  %2498 = vst.msk [vmem:[%s3 + $0x24] sm:$0xf] %vm2488, %v2455
  %2499 = vst.msk [vmem:[%s3 + $0x28] sm:$0xf] %vm2488, %v2456
  %2500 = vst.msk [vmem:[%s3 + $0x2c] sm:$0xf] %vm2488, %v2457
  %2501 = vst.msk [vmem:[%s3 + $0x30] sm:$0xf] %vm2488, %v2458
  %2502 = vst.msk [vmem:[%s3 + $0x34] sm:$0xf] %vm2488, %v2459
  %2503 = vst.msk [vmem:[%s3 + $0x38] sm:$0xf] %vm2488, %v2460
  %2504 = vst.msk [vmem:[%s3 + $0x3c] sm:$0xf] %vm2488, %v2461
  %2505 = vst.msk [vmem:[%s3 + $0x40] sm:$0xf] %vm2488, %v2462
  %2506 = vst.msk [vmem:[%s3 + $0x44] sm:$0xf] %vm2488, %v2463
  %2507 = vst.msk [vmem:[%s3 + $0x48] sm:$0xf] %vm2488, %v2464
  %2508 = vst.msk [vmem:[%s3 + $0x4c] sm:$0xf] %vm2488, %v2465
  %vm2509 = vcmask 122880
  %2510 = vst.msk [vmem:[%s3 + $0x50] sm:$0x1] %vm2509, %v2466
  // Predicated region
  $region14: #{net_forward.4} parent=0 // pred_check
    _
  $region15: #{net_forward.4} parent=0 // pred_check_branch
    %2512 = sbr.rel (0) target = $region17
  $region16: #{net_forward.4} parent=0 // pred_region
    _
  $region17: #{net_forward.4} parent=0 // pred_fallthru
    _
  // Predicated region
  $region18: #{net_forward.4} parent=0 // pred_check
    _
  $region19: #{net_forward.4} parent=0 // pred_check_branch
    %2514 = sbr.rel (0) target = $region21
  $region20: #{net_forward.4} parent=0 // pred_region
    _
  $region21: #{net_forward.4} parent=0 // pred_fallthru
    _

// kernel: net_forward.5
$region0: #{net_forward.5}
  #allocation0 [shape = 'u32[]', space=smem, size = 0x4, offset = 0x4, fixed_abs, tag = 'smem constant byte address 0x4 - core index']
  #allocation1 [shape = 'u32[144,128]{1,0:T(1,128)}', space=vmem, size = 0x12000, scoped, tag = 'internal scratch']
  %s0 = inlined_call_operand.vmem [shape: bf16[2,1296], index: 0, kind: input, shape index: {}]
  %s1 = inlined_call_operand.vmem [shape: bf16[1296,256], index: 1, kind: input, shape index: {}]
  %s2 = inlined_call_operand.vmem [shape: f32[1,256], index: 2, kind: input, shape index: {}]
  %s3 = inlined_call_operand.vmem [shape: bf16[256,256], index: 3, kind: input, shape index: {}]
  %s4 = inlined_call_operand.vmem [shape: f32[1,256], index: 4, kind: input, shape index: {}]
  %s5 = inlined_call_operand.vmem [shape: bf16[256,128], index: 5, kind: input, shape index: {}]
  %s6 = inlined_call_operand.vmem [shape: f32[1,128], index: 6, kind: input, shape index: {}]
  %s7 = inlined_call_operand.hbm [shape: f32[2,128], index: 7, kind: output, shape index: {}]
  %s8 = sld [smem:[#allocation0]]
  $region38: #{net_forward.5} parent=0
    _
  %s10 = ssub.s32 1, %s8
  %s11 = scalar_select 0, %s10, %s8
  $region1: #{net_forward.5} parent=0
    #allocation2 [shape = 'u8[1024]{0}', space=vmem, size = 0x400, scoped, tag = 'output window, operand 0, single buffered']
    #allocation3 [shape = 's32[1]{0}', space=sflag, size = 0x4, scoped, tag = 'scoped memory for net_forward.5']
    %12 = vsyncpa [#allocation3], 0
    // Predicated region
    $region2: #{net_forward.5} parent=1 // pred_check
      _
    $region3: #{net_forward.5} parent=1 // pred_check_branch
      %14 = sbr.rel (0) target = $region5
    $region4: #{net_forward.5} parent=1 // pred_region
      _
    $region5: #{net_forward.5} parent=1 // pred_fallthru
      _
    // Predicated region
    $region6: #{net_forward.5} parent=1 // pred_check
      _
    $region7: #{net_forward.5} parent=1 // pred_check_branch
      %16 = sbr.rel (0) target = $region9
    $region8: #{net_forward.5} parent=1 // pred_region
      _
    $region9: #{net_forward.5} parent=1 // pred_fallthru
      _
    // Predicated region
    $region10: #{net_forward.5} parent=1 // pred_check
      _
    $region11: #{net_forward.5} parent=1 // pred_check_branch
      %18 = sbr.rel (0) target = $region13
    $region12: #{net_forward.5} parent=1 // pred_region
      _
    $region13: #{net_forward.5} parent=1 // pred_fallthru
      _
    // Predicated region
    $region14: #{net_forward.5} parent=1 // pred_check
      _
    $region15: #{net_forward.5} parent=1 // pred_check_branch
      %20 = sbr.rel (0) target = $region17
    $region16: #{net_forward.5} parent=1 // pred_region
      _
    $region17: #{net_forward.5} parent=1 // pred_fallthru
      _
    // Predicated region
    $region18: #{net_forward.5} parent=1 // pred_check
      _
    $region19: #{net_forward.5} parent=1 // pred_check_branch
      %22 = sbr.rel (0) target = $region21
    $region20: #{net_forward.5} parent=1 // pred_region
      _
    $region21: #{net_forward.5} parent=1 // pred_fallthru
      _
    // Predicated region
    $region22: #{net_forward.5} parent=1 // pred_check
      _
    $region23: #{net_forward.5} parent=1 // pred_check_branch
      %24 = sbr.rel (0) target = $region25
    $region24: #{net_forward.5} parent=1 // pred_region
      _
    $region25: #{net_forward.5} parent=1 // pred_fallthru
      _
    // Predicated region
    $region26: #{net_forward.5} parent=1 // pred_check
      _
    $region27: #{net_forward.5} parent=1 // pred_check_branch
      %26 = sbr.rel (0) target = $region29
    $region28: #{net_forward.5} parent=1 // pred_region
      _
    $region29: #{net_forward.5} parent=1 // pred_fallthru
      _
    %v28 = vld [vmem:[%s0] sm:$0xff]
    %v29 = vld [vmem:[%s0 + $0x8] sm:$0x7]
    %v30 = vld [vmem:[%s1] sm:$0xff]
    %v31 = vld [vmem:[%s1 + $0x8] sm:$0xff]
    %v32 = vld [vmem:[%s1 + $0x10] sm:$0xff]
    %v33 = vld [vmem:[%s1 + $0x18] sm:$0xff]
    %v34 = vld [vmem:[%s1 + $0x20] sm:$0xff]
    %v35 = vld [vmem:[%s1 + $0x28] sm:$0xff]
    %v36 = vld [vmem:[%s1 + $0x30] sm:$0xff]
    %v37 = vld [vmem:[%s1 + $0x38] sm:$0xff]
    %v38 = vld [vmem:[%s1 + $0x40] sm:$0xff]
    %v39 = vld [vmem:[%s1 + $0x48] sm:$0xff]
    %v40 = vld [vmem:[%s1 + $0x50] sm:$0xff]
    %v41 = vld [vmem:[%s1 + $0x58] sm:$0xff]
    %v42 = vld [vmem:[%s1 + $0x60] sm:$0xff]
    %v43 = vld [vmem:[%s1 + $0x68] sm:$0xff]
    %v44 = vld [vmem:[%s1 + $0x70] sm:$0xff]
    %v45 = vld [vmem:[%s1 + $0x78] sm:$0xff]
    %v46 = vld [vmem:[%s1 + $0x80] sm:$0xff]
    %v47 = vld [vmem:[%s1 + $0x88] sm:$0xff]
    %v48 = vld [vmem:[%s1 + $0x90] sm:$0xff]
    %v49 = vld [vmem:[%s1 + $0x98] sm:$0xff]
    %v50 = vld [vmem:[%s1 + $0xa0] sm:$0xff]
    %v51 = vld [vmem:[%s1 + $0xa8] sm:$0xff]
    %v52 = vld [vmem:[%s1 + $0xb0] sm:$0xff]
    %v53 = vld [vmem:[%s1 + $0xb8] sm:$0xff]
    %v54 = vld [vmem:[%s1 + $0xc0] sm:$0xff]
    %v55 = vld [vmem:[%s1 + $0xc8] sm:$0xff]
    %v56 = vld [vmem:[%s1 + $0xd0] sm:$0xff]
    %v57 = vld [vmem:[%s1 + $0xd8] sm:$0xff]
    %v58 = vld [vmem:[%s1 + $0xe0] sm:$0xff]
    %v59 = vld [vmem:[%s1 + $0xe8] sm:$0xff]
    %v60 = vld [vmem:[%s1 + $0xf0] sm:$0xff]
    %v61 = vld [vmem:[%s1 + $0xf8] sm:$0xff]
    %v62 = vld [vmem:[%s1 + $0x100] sm:$0xff]
    %v63 = vld [vmem:[%s1 + $0x108] sm:$0xff]
    %v64 = vld [vmem:[%s1 + $0x110] sm:$0xff]
    %v65 = vld [vmem:[%s1 + $0x118] sm:$0xff]
    %v66 = vld [vmem:[%s1 + $0x120] sm:$0xff]
    %v67 = vld [vmem:[%s1 + $0x128] sm:$0xff]
    %v68 = vld [vmem:[%s1 + $0x130] sm:$0xff]
    %v69 = vld [vmem:[%s1 + $0x138] sm:$0xff]
    %v70 = vld [vmem:[%s1 + $0x140] sm:$0xff]
    %v71 = vld [vmem:[%s1 + $0x148] sm:$0xff]
    %v72 = vld [vmem:[%s1 + $0x150] sm:$0xff]
    %v73 = vld [vmem:[%s1 + $0x158] sm:$0xff]
    %v74 = vld [vmem:[%s1 + $0x160] sm:$0xff]
    %v75 = vld [vmem:[%s1 + $0x168] sm:$0xff]
    %v76 = vld [vmem:[%s1 + $0x170] sm:$0xff]
    %v77 = vld [vmem:[%s1 + $0x178] sm:$0xff]
    %v78 = vld [vmem:[%s1 + $0x180] sm:$0xff]
    %v79 = vld [vmem:[%s1 + $0x188] sm:$0xff]
    %v80 = vld [vmem:[%s1 + $0x190] sm:$0xff]
    %v81 = vld [vmem:[%s1 + $0x198] sm:$0xff]
    %v82 = vld [vmem:[%s1 + $0x1a0] sm:$0xff]
    %v83 = vld [vmem:[%s1 + $0x1a8] sm:$0xff]
    %v84 = vld [vmem:[%s1 + $0x1b0] sm:$0xff]
    %v85 = vld [vmem:[%s1 + $0x1b8] sm:$0xff]
    %v86 = vld [vmem:[%s1 + $0x1c0] sm:$0xff]
    %v87 = vld [vmem:[%s1 + $0x1c8] sm:$0xff]
    %v88 = vld [vmem:[%s1 + $0x1d0] sm:$0xff]
    %v89 = vld [vmem:[%s1 + $0x1d8] sm:$0xff]
    %v90 = vld [vmem:[%s1 + $0x1e0] sm:$0xff]
    %v91 = vld [vmem:[%s1 + $0x1e8] sm:$0xff]
    %v92 = vld [vmem:[%s1 + $0x1f0] sm:$0xff]
    %v93 = vld [vmem:[%s1 + $0x1f8] sm:$0xff]
    %v94 = vld [vmem:[%s1 + $0x200] sm:$0xff]
    %v95 = vld [vmem:[%s1 + $0x208] sm:$0xff]
    %v96 = vld [vmem:[%s1 + $0x210] sm:$0xff]
    %v97 = vld [vmem:[%s1 + $0x218] sm:$0xff]
    %v98 = vld [vmem:[%s1 + $0x220] sm:$0xff]
    %v99 = vld [vmem:[%s1 + $0x228] sm:$0xff]
    %v100 = vld [vmem:[%s1 + $0x230] sm:$0xff]
    %v101 = vld [vmem:[%s1 + $0x238] sm:$0xff]
    %v102 = vld [vmem:[%s1 + $0x240] sm:$0xff]
    %v103 = vld [vmem:[%s1 + $0x248] sm:$0xff]
    %v104 = vld [vmem:[%s1 + $0x250] sm:$0xff]
    %v105 = vld [vmem:[%s1 + $0x258] sm:$0xff]
    %v106 = vld [vmem:[%s1 + $0x260] sm:$0xff]
    %v107 = vld [vmem:[%s1 + $0x268] sm:$0xff]
    %v108 = vld [vmem:[%s1 + $0x270] sm:$0xff]
    %v109 = vld [vmem:[%s1 + $0x278] sm:$0xff]
    %v110 = vld [vmem:[%s1 + $0x280] sm:$0xff]
    %v111 = vld [vmem:[%s1 + $0x288] sm:$0xff]
    %v112 = vld [vmem:[%s1 + $0x290] sm:$0xff]
    %v113 = vld [vmem:[%s1 + $0x298] sm:$0xff]
    %v114 = vld [vmem:[%s1 + $0x2a0] sm:$0xff]
    %v115 = vld [vmem:[%s1 + $0x2a8] sm:$0xff]
    %v116 = vld [vmem:[%s1 + $0x2b0] sm:$0xff]
    %v117 = vld [vmem:[%s1 + $0x2b8] sm:$0xff]
    %v118 = vld [vmem:[%s1 + $0x2c0] sm:$0xff]
    %v119 = vld [vmem:[%s1 + $0x2c8] sm:$0xff]
    %v120 = vld [vmem:[%s1 + $0x2d0] sm:$0xff]
    %v121 = vld [vmem:[%s1 + $0x2d8] sm:$0xff]
    %v122 = vld [vmem:[%s1 + $0x2e0] sm:$0xff]
    %v123 = vld [vmem:[%s1 + $0x2e8] sm:$0xff]
    %v124 = vld [vmem:[%s1 + $0x2f0] sm:$0xff]
    %v125 = vld [vmem:[%s1 + $0x2f8] sm:$0xff]
    %v126 = vld [vmem:[%s1 + $0x300] sm:$0xff]
    %v127 = vld [vmem:[%s1 + $0x308] sm:$0xff]
    %v128 = vld [vmem:[%s1 + $0x310] sm:$0xff]
    %v129 = vld [vmem:[%s1 + $0x318] sm:$0xff]
    %v130 = vld [vmem:[%s1 + $0x320] sm:$0xff]
    %v131 = vld [vmem:[%s1 + $0x328] sm:$0xff]
    %v132 = vld [vmem:[%s1 + $0x330] sm:$0xff]
    %v133 = vld [vmem:[%s1 + $0x338] sm:$0xff]
    %v134 = vld [vmem:[%s1 + $0x340] sm:$0xff]
    %v135 = vld [vmem:[%s1 + $0x348] sm:$0xff]
    %v136 = vld [vmem:[%s1 + $0x350] sm:$0xff]
    %v137 = vld [vmem:[%s1 + $0x358] sm:$0xff]
    %v138 = vld [vmem:[%s1 + $0x360] sm:$0xff]
    %v139 = vld [vmem:[%s1 + $0x368] sm:$0xff]
    %v140 = vld [vmem:[%s1 + $0x370] sm:$0xff]
    %v141 = vld [vmem:[%s1 + $0x378] sm:$0xff]
    %v142 = vld [vmem:[%s1 + $0x380] sm:$0xff]
    %v143 = vld [vmem:[%s1 + $0x388] sm:$0xff]
    %v144 = vld [vmem:[%s1 + $0x390] sm:$0xff]
    %v145 = vld [vmem:[%s1 + $0x398] sm:$0xff]
    %v146 = vld [vmem:[%s1 + $0x3a0] sm:$0xff]
    %v147 = vld [vmem:[%s1 + $0x3a8] sm:$0xff]
    %v148 = vld [vmem:[%s1 + $0x3b0] sm:$0xff]
    %v149 = vld [vmem:[%s1 + $0x3b8] sm:$0xff]
    %v150 = vld [vmem:[%s1 + $0x3c0] sm:$0xff]
    %v151 = vld [vmem:[%s1 + $0x3c8] sm:$0xff]
    %v152 = vld [vmem:[%s1 + $0x3d0] sm:$0xff]
    %v153 = vld [vmem:[%s1 + $0x3d8] sm:$0xff]
    %v154 = vld [vmem:[%s1 + $0x3e0] sm:$0xff]
    %v155 = vld [vmem:[%s1 + $0x3e8] sm:$0xff]
    %v156 = vld [vmem:[%s1 + $0x3f0] sm:$0xff]
    %v157 = vld [vmem:[%s1 + $0x3f8] sm:$0xff]
    %v158 = vld [vmem:[%s1 + $0x400] sm:$0xff]
    %v159 = vld [vmem:[%s1 + $0x408] sm:$0xff]
    %v160 = vld [vmem:[%s1 + $0x410] sm:$0xff]
    %v161 = vld [vmem:[%s1 + $0x418] sm:$0xff]
    %v162 = vld [vmem:[%s1 + $0x420] sm:$0xff]
    %v163 = vld [vmem:[%s1 + $0x428] sm:$0xff]
    %v164 = vld [vmem:[%s1 + $0x430] sm:$0xff]
    %v165 = vld [vmem:[%s1 + $0x438] sm:$0xff]
    %v166 = vld [vmem:[%s1 + $0x440] sm:$0xff]
    %v167 = vld [vmem:[%s1 + $0x448] sm:$0xff]
    %v168 = vld [vmem:[%s1 + $0x450] sm:$0xff]
    %v169 = vld [vmem:[%s1 + $0x458] sm:$0xff]
    %v170 = vld [vmem:[%s1 + $0x460] sm:$0xff]
    %v171 = vld [vmem:[%s1 + $0x468] sm:$0xff]
    %v172 = vld [vmem:[%s1 + $0x470] sm:$0xff]
    %v173 = vld [vmem:[%s1 + $0x478] sm:$0xff]
    %v174 = vld [vmem:[%s1 + $0x480] sm:$0xff]
    %v175 = vld [vmem:[%s1 + $0x488] sm:$0xff]
    %v176 = vld [vmem:[%s1 + $0x490] sm:$0xff]
    %v177 = vld [vmem:[%s1 + $0x498] sm:$0xff]
    %v178 = vld [vmem:[%s1 + $0x4a0] sm:$0xff]
    %v179 = vld [vmem:[%s1 + $0x4a8] sm:$0xff]
    %v180 = vld [vmem:[%s1 + $0x4b0] sm:$0xff]
    %v181 = vld [vmem:[%s1 + $0x4b8] sm:$0xff]
    %v182 = vld [vmem:[%s1 + $0x4c0] sm:$0xff]
    %v183 = vld [vmem:[%s1 + $0x4c8] sm:$0xff]
    %v184 = vld [vmem:[%s1 + $0x4d0] sm:$0xff]
    %v185 = vld [vmem:[%s1 + $0x4d8] sm:$0xff]
    %v186 = vld [vmem:[%s1 + $0x4e0] sm:$0xff]
    %v187 = vld [vmem:[%s1 + $0x4e8] sm:$0xff]
    %v188 = vld [vmem:[%s1 + $0x4f0] sm:$0xff]
    %v189 = vld [vmem:[%s1 + $0x4f8] sm:$0xff]
    %v190 = vld [vmem:[%s1 + $0x500] sm:$0xff]
    %v191 = vld [vmem:[%s1 + $0x508] sm:$0xff]
    %v192 = vld [vmem:[%s2] sm:$0x3]
    %v194 = vlaneseq
    %v195 = vshrl.u32 %v194, 7
    %v196 = vsub.s32 0, %v195
    %v197 = vrot.slane %v192, %v196
    %v198 = vlaneseq
    %v199 = vshrl.u32 %v198, 7
    %v200 = vsub.s32 1, %v199
    %v201 = vrot.slane %v192, %v200
    %v206 = vcombine.high %v28, %v28
    %v208 = vunpack.c.l.s4 1966171168
    %v209 = vunpack.c.0.s8 %v208
    %v210 = vlaneseq
    %v211 = vshrl.u32 %v210, 7
    %v212 = vsub.s32 %v209, %v211
    %v213 = vrot.slane %v28, %v212
    %v215 = vunpack.c.l.s4 1966171168
    %v216 = vunpack.c.0.s8 %v215
    %v217 = vlaneseq
    %v218 = vshrl.u32 %v217, 7
    %v219 = vsub.s32 %v216, %v218
    %v220 = vrot.slane %v206, %v219
    %v221 = vcombine.high %v213, %v213
    %v222 = vcombine.high %v220, %v220
    %v224 = vunpack.c.l.s4 1966171168
    %v225 = vunpack.c.0.s8 %v224
    %v226 = vlaneseq
    %v227 = vshrl.u32 %v226, 7
    %v228 = vsub.s32 %v225, %v227
    %v229 = vrot.slane %v213, %v228
    %v231 = vunpack.c.l.s4 1966171168
    %v232 = vunpack.c.0.s8 %v231
    %v233 = vlaneseq
    %v234 = vshrl.u32 %v233, 7
    %v235 = vsub.s32 %v232, %v234
    %v236 = vrot.slane %v220, %v235
    %v238 = vunpack.c.l.s4 1966171168
    %v239 = vunpack.c.0.s8 %v238
    %v240 = vlaneseq
    %v241 = vshrl.u32 %v240, 7
    %v242 = vsub.s32 %v239, %v241
    %v243 = vrot.slane %v221, %v242
    %v245 = vunpack.c.l.s4 1966171168
    %v246 = vunpack.c.0.s8 %v245
    %v247 = vlaneseq
    %v248 = vshrl.u32 %v247, 7
    %v249 = vsub.s32 %v246, %v248
    %v250 = vrot.slane %v222, %v249
    %v251 = vcombine.high %v229, %v229
    %v252 = vcombine.high %v236, %v236
    %v253 = vcombine.high %v243, %v243
    %v254 = vcombine.high %v250, %v250
    %v256 = vunpack.c.l.s4 1966171168
    %v257 = vunpack.c.0.s8 %v256
    %v258 = vlaneseq
    %v259 = vshrl.u32 %v258, 7
    %v260 = vsub.s32 %v257, %v259
    %v261 = vrot.slane %v29, %v260
    %v262 = vcombine.high %v261, %v261
    %v264 = vunpack.c.l.s4 1966171168
    %v265 = vunpack.c.0.s8 %v264
    %v266 = vlaneseq
    %v267 = vshrl.u32 %v266, 7
    %v268 = vsub.s32 %v265, %v267
    %v269 = vrot.slane %v261, %v268
    %v271 = vunpack.c.l.s4 1966171168
    %v272 = vunpack.c.0.s8 %v271
    %v273 = vlaneseq
    %v274 = vshrl.u32 %v273, 7
    %v275 = vsub.s32 %v272, %v274
    %v276 = vrot.slane %v262, %v275
    %v277 = vcombine.high %v269, %v269
    %v450 = vunpack.c.l.b16 %v30
    %v451 = vunpack.c.h.b16 %v30
    %v452 = vunpack.c.l.b16 %v31
    %v453 = vunpack.c.h.b16 %v31
    %v454 = vunpack.c.l.b16 %v32
    %v455 = vunpack.c.h.b16 %v32
    %v456 = vunpack.c.l.b16 %v33
    %v457 = vunpack.c.h.b16 %v33
    %v458 = vunpack.c.l.b16 %v34
    %v459 = vunpack.c.h.b16 %v34
    %v460 = vunpack.c.l.b16 %v35
    %v461 = vunpack.c.h.b16 %v35
    %v462 = vunpack.c.l.b16 %v36
    %v463 = vunpack.c.h.b16 %v36
    %v464 = vunpack.c.l.b16 %v37
    %v465 = vunpack.c.h.b16 %v37
    %v466 = vunpack.c.l.b16 %v38
    %v467 = vunpack.c.h.b16 %v38
    %v468 = vunpack.c.l.b16 %v39
    %v469 = vunpack.c.h.b16 %v39
    %v470 = vunpack.c.l.b16 %v40
    %v471 = vunpack.c.h.b16 %v40
    %v472 = vunpack.c.l.b16 %v41
    %v473 = vunpack.c.h.b16 %v41
    %v474 = vunpack.c.l.b16 %v42
    %v475 = vunpack.c.h.b16 %v42
    %v476 = vunpack.c.l.b16 %v43
    %v477 = vunpack.c.h.b16 %v43
    %v478 = vunpack.c.l.b16 %v44
    %v479 = vunpack.c.h.b16 %v44
    %v480 = vunpack.c.l.b16 %v45
    %v481 = vunpack.c.h.b16 %v45
    %v482 = vunpack.c.l.b16 %v46
    %v483 = vunpack.c.h.b16 %v46
    %v484 = vunpack.c.l.b16 %v47
    %v485 = vunpack.c.h.b16 %v47
    %v486 = vunpack.c.l.b16 %v48
    %v487 = vunpack.c.h.b16 %v48
    %v488 = vunpack.c.l.b16 %v49
    %v489 = vunpack.c.h.b16 %v49
    %v490 = vunpack.c.l.b16 %v50
    %v491 = vunpack.c.h.b16 %v50
    %v492 = vunpack.c.l.b16 %v51
    %v493 = vunpack.c.h.b16 %v51
    %v494 = vunpack.c.l.b16 %v52
    %v495 = vunpack.c.h.b16 %v52
    %v496 = vunpack.c.l.b16 %v53
    %v497 = vunpack.c.h.b16 %v53
    %v498 = vunpack.c.l.b16 %v54
    %v499 = vunpack.c.h.b16 %v54
    %v500 = vunpack.c.l.b16 %v55
    %v501 = vunpack.c.h.b16 %v55
    %v502 = vunpack.c.l.b16 %v56
    %v503 = vunpack.c.h.b16 %v56
    %v504 = vunpack.c.l.b16 %v57
    %v505 = vunpack.c.h.b16 %v57
    %v506 = vunpack.c.l.b16 %v58
    %v507 = vunpack.c.h.b16 %v58
    %v508 = vunpack.c.l.b16 %v59
    %v509 = vunpack.c.h.b16 %v59
    %v510 = vunpack.c.l.b16 %v60
    %v511 = vunpack.c.h.b16 %v60
    %v512 = vunpack.c.l.b16 %v61
    %v513 = vunpack.c.h.b16 %v61
    %v514 = vunpack.c.l.b16 %v62
    %v515 = vunpack.c.h.b16 %v62
    %v516 = vunpack.c.l.b16 %v63
    %v517 = vunpack.c.h.b16 %v63
    %v518 = vunpack.c.l.b16 %v64
    %v519 = vunpack.c.h.b16 %v64
    %v520 = vunpack.c.l.b16 %v65
    %v521 = vunpack.c.h.b16 %v65
    %v522 = vunpack.c.l.b16 %v66
    %v523 = vunpack.c.h.b16 %v66
    %v524 = vunpack.c.l.b16 %v67
    %v525 = vunpack.c.h.b16 %v67
    %v526 = vunpack.c.l.b16 %v68
    %v527 = vunpack.c.h.b16 %v68
    %v528 = vunpack.c.l.b16 %v69
    %v529 = vunpack.c.h.b16 %v69
    %v530 = vunpack.c.l.b16 %v70
    %v531 = vunpack.c.h.b16 %v70
    %v532 = vunpack.c.l.b16 %v71
    %v533 = vunpack.c.h.b16 %v71
    %v534 = vunpack.c.l.b16 %v72
    %v535 = vunpack.c.h.b16 %v72
    %v536 = vunpack.c.l.b16 %v73
    %v537 = vunpack.c.h.b16 %v73
    %v538 = vunpack.c.l.b16 %v74
    %v539 = vunpack.c.h.b16 %v74
    %v540 = vunpack.c.l.b16 %v75
    %v541 = vunpack.c.h.b16 %v75
    %v542 = vunpack.c.l.b16 %v76
    %v543 = vunpack.c.h.b16 %v76
    %v544 = vunpack.c.l.b16 %v77
    %v545 = vunpack.c.h.b16 %v77
    %v546 = vunpack.c.l.b16 %v78
    %v547 = vunpack.c.h.b16 %v78
    %v548 = vunpack.c.l.b16 %v79
    %v549 = vunpack.c.h.b16 %v79
    %v550 = vunpack.c.l.b16 %v80
    %v551 = vunpack.c.h.b16 %v80
    %v552 = vunpack.c.l.b16 %v81
    %v553 = vunpack.c.h.b16 %v81
    %v554 = vunpack.c.l.b16 %v82
    %v555 = vunpack.c.h.b16 %v82
    %v556 = vunpack.c.l.b16 %v83
    %v557 = vunpack.c.h.b16 %v83
    %v558 = vunpack.c.l.b16 %v84
    %v559 = vunpack.c.h.b16 %v84
    %v560 = vunpack.c.l.b16 %v85
    %v561 = vunpack.c.h.b16 %v85
    %v562 = vunpack.c.l.b16 %v86
    %v563 = vunpack.c.h.b16 %v86
    %v564 = vunpack.c.l.b16 %v87
    %v565 = vunpack.c.h.b16 %v87
    %v566 = vunpack.c.l.b16 %v88
    %v567 = vunpack.c.h.b16 %v88
    %v568 = vunpack.c.l.b16 %v89
    %v569 = vunpack.c.h.b16 %v89
    %v570 = vunpack.c.l.b16 %v90
    %v571 = vunpack.c.h.b16 %v90
    %v572 = vunpack.c.l.b16 %v91
    %v573 = vunpack.c.h.b16 %v91
    %v574 = vunpack.c.l.b16 %v92
    %v575 = vunpack.c.h.b16 %v92
    %v576 = vunpack.c.l.b16 %v93
    %v577 = vunpack.c.h.b16 %v93
    %v578 = vunpack.c.l.b16 %v94
    %v579 = vunpack.c.h.b16 %v94
    %v580 = vunpack.c.l.b16 %v95
    %v581 = vunpack.c.h.b16 %v95
    %v582 = vunpack.c.l.b16 %v96
    %v583 = vunpack.c.h.b16 %v96
    %v584 = vunpack.c.l.b16 %v97
    %v585 = vunpack.c.h.b16 %v97
    %v586 = vunpack.c.l.b16 %v98
    %v587 = vunpack.c.h.b16 %v98
    %v588 = vunpack.c.l.b16 %v99
    %v589 = vunpack.c.h.b16 %v99
    %v590 = vunpack.c.l.b16 %v100
    %v591 = vunpack.c.h.b16 %v100
    %v592 = vunpack.c.l.b16 %v101
    %v593 = vunpack.c.h.b16 %v101
    %v594 = vunpack.c.l.b16 %v102
    %v595 = vunpack.c.h.b16 %v102
    %v596 = vunpack.c.l.b16 %v103
    %v597 = vunpack.c.h.b16 %v103
    %v598 = vunpack.c.l.b16 %v104
    %v599 = vunpack.c.h.b16 %v104
    %v600 = vunpack.c.l.b16 %v105
    %v601 = vunpack.c.h.b16 %v105
    %v602 = vunpack.c.l.b16 %v106
    %v603 = vunpack.c.h.b16 %v106
    %v604 = vunpack.c.l.b16 %v107
    %v605 = vunpack.c.h.b16 %v107
    %v606 = vunpack.c.l.b16 %v108
    %v607 = vunpack.c.h.b16 %v108
    %v608 = vunpack.c.l.b16 %v109
    %v609 = vunpack.c.h.b16 %v109
    %v610 = vunpack.c.l.b16 %v110
    %v611 = vunpack.c.h.b16 %v110
    %v612 = vunpack.c.l.b16 %v111
    %v613 = vunpack.c.h.b16 %v111
    %v614 = vunpack.c.l.b16 %v112
    %v615 = vunpack.c.h.b16 %v112
    %v616 = vunpack.c.l.b16 %v113
    %v617 = vunpack.c.h.b16 %v113
    %v618 = vunpack.c.l.b16 %v114
    %v619 = vunpack.c.h.b16 %v114
    %v620 = vunpack.c.l.b16 %v115
    %v621 = vunpack.c.h.b16 %v115
    %v622 = vunpack.c.l.b16 %v116
    %v623 = vunpack.c.h.b16 %v116
    %v624 = vunpack.c.l.b16 %v117
    %v625 = vunpack.c.h.b16 %v117
    %v626 = vunpack.c.l.b16 %v118
    %v627 = vunpack.c.h.b16 %v118
    %v628 = vunpack.c.l.b16 %v119
    %v629 = vunpack.c.h.b16 %v119
    %v630 = vunpack.c.l.b16 %v120
    %v631 = vunpack.c.h.b16 %v120
    %v632 = vunpack.c.l.b16 %v121
    %v633 = vunpack.c.h.b16 %v121
    %v634 = vunpack.c.l.b16 %v122
    %v635 = vunpack.c.h.b16 %v122
    %v636 = vunpack.c.l.b16 %v123
    %v637 = vunpack.c.h.b16 %v123
    %v638 = vunpack.c.l.b16 %v124
    %v639 = vunpack.c.h.b16 %v124
    %v640 = vunpack.c.l.b16 %v125
    %v641 = vunpack.c.h.b16 %v125
    %v642 = vunpack.c.l.b16 %v126
    %v643 = vunpack.c.h.b16 %v126
    %v644 = vunpack.c.l.b16 %v127
    %v645 = vunpack.c.h.b16 %v127
    %v646 = vunpack.c.l.b16 %v128
    %v647 = vunpack.c.h.b16 %v128
    %v648 = vunpack.c.l.b16 %v129
    %v649 = vunpack.c.h.b16 %v129
    %v650 = vunpack.c.l.b16 %v130
    %v651 = vunpack.c.h.b16 %v130
    %v652 = vunpack.c.l.b16 %v131
    %v653 = vunpack.c.h.b16 %v131
    %v654 = vunpack.c.l.b16 %v132
    %v655 = vunpack.c.h.b16 %v132
    %v656 = vunpack.c.l.b16 %v133
    %v657 = vunpack.c.h.b16 %v133
    %v658 = vunpack.c.l.b16 %v134
    %v659 = vunpack.c.h.b16 %v134
    %v660 = vunpack.c.l.b16 %v135
    %v661 = vunpack.c.h.b16 %v135
    %v662 = vunpack.c.l.b16 %v136
    %v663 = vunpack.c.h.b16 %v136
    %v664 = vunpack.c.l.b16 %v137
    %v665 = vunpack.c.h.b16 %v137
    %v666 = vunpack.c.l.b16 %v138
    %v667 = vunpack.c.h.b16 %v138
    %v668 = vunpack.c.l.b16 %v139
    %v669 = vunpack.c.h.b16 %v139
    %v670 = vunpack.c.l.b16 %v140
    %v671 = vunpack.c.h.b16 %v140
    %v672 = vunpack.c.l.b16 %v141
    %v673 = vunpack.c.h.b16 %v141
    %v674 = vunpack.c.l.b16 %v142
    %v675 = vunpack.c.h.b16 %v142
    %v676 = vunpack.c.l.b16 %v143
    %v677 = vunpack.c.h.b16 %v143
    %v678 = vunpack.c.l.b16 %v144
    %v679 = vunpack.c.h.b16 %v144
    %v680 = vunpack.c.l.b16 %v145
    %v681 = vunpack.c.h.b16 %v145
    %v682 = vunpack.c.l.b16 %v146
    %v683 = vunpack.c.h.b16 %v146
    %v684 = vunpack.c.l.b16 %v147
    %v685 = vunpack.c.h.b16 %v147
    %v686 = vunpack.c.l.b16 %v148
    %v687 = vunpack.c.h.b16 %v148
    %v688 = vunpack.c.l.b16 %v149
    %v689 = vunpack.c.h.b16 %v149
    %v690 = vunpack.c.l.b16 %v150
    %v691 = vunpack.c.h.b16 %v150
    %v692 = vunpack.c.l.b16 %v151
    %v693 = vunpack.c.h.b16 %v151
    %v694 = vunpack.c.l.b16 %v152
    %v695 = vunpack.c.h.b16 %v152
    %v696 = vunpack.c.l.b16 %v153
    %v697 = vunpack.c.h.b16 %v153
    %v698 = vunpack.c.l.b16 %v154
    %v699 = vunpack.c.h.b16 %v154
    %v700 = vunpack.c.l.b16 %v155
    %v701 = vunpack.c.h.b16 %v155
    %v702 = vunpack.c.l.b16 %v156
    %v703 = vunpack.c.h.b16 %v156
    %v704 = vunpack.c.l.b16 %v157
    %v705 = vunpack.c.h.b16 %v157
    %v706 = vunpack.c.l.b16 %v158
    %v707 = vunpack.c.h.b16 %v158
    %v708 = vunpack.c.l.b16 %v159
    %v709 = vunpack.c.h.b16 %v159
    %v710 = vunpack.c.l.b16 %v160
    %v711 = vunpack.c.h.b16 %v160
    %v712 = vunpack.c.l.b16 %v161
    %v713 = vunpack.c.h.b16 %v161
    %v714 = vunpack.c.l.b16 %v162
    %v715 = vunpack.c.h.b16 %v162
    %v716 = vunpack.c.l.b16 %v163
    %v717 = vunpack.c.h.b16 %v163
    %v718 = vunpack.c.l.b16 %v164
    %v719 = vunpack.c.h.b16 %v164
    %v720 = vunpack.c.l.b16 %v165
    %v721 = vunpack.c.h.b16 %v165
    %v722 = vunpack.c.l.b16 %v166
    %v723 = vunpack.c.h.b16 %v166
    %v724 = vunpack.c.l.b16 %v167
    %v725 = vunpack.c.h.b16 %v167
    %v726 = vunpack.c.l.b16 %v168
    %v727 = vunpack.c.h.b16 %v168
    %v728 = vunpack.c.l.b16 %v169
    %v729 = vunpack.c.h.b16 %v169
    %v730 = vunpack.c.l.b16 %v170
    %v731 = vunpack.c.h.b16 %v170
    %v732 = vunpack.c.l.b16 %v171
    %v733 = vunpack.c.h.b16 %v171
    %v734 = vunpack.c.l.b16 %v172
    %v735 = vunpack.c.h.b16 %v172
    %v736 = vunpack.c.l.b16 %v173
    %v737 = vunpack.c.h.b16 %v173
    %v738 = vunpack.c.l.b16 %v174
    %v739 = vunpack.c.h.b16 %v174
    %v740 = vunpack.c.l.b16 %v175
    %v741 = vunpack.c.h.b16 %v175
    %v742 = vunpack.c.l.b16 %v176
    %v743 = vunpack.c.h.b16 %v176
    %v744 = vunpack.c.l.b16 %v177
    %v745 = vunpack.c.h.b16 %v177
    %v746 = vunpack.c.l.b16 %v178
    %v747 = vunpack.c.h.b16 %v178
    %v748 = vunpack.c.l.b16 %v179
    %v749 = vunpack.c.h.b16 %v179
    %v750 = vunpack.c.l.b16 %v180
    %v751 = vunpack.c.h.b16 %v180
    %v752 = vunpack.c.l.b16 %v181
    %v753 = vunpack.c.h.b16 %v181
    %v754 = vunpack.c.l.b16 %v182
    %v755 = vunpack.c.h.b16 %v182
    %v756 = vunpack.c.l.b16 %v183
    %v757 = vunpack.c.h.b16 %v183
    %v758 = vunpack.c.l.b16 %v184
    %v759 = vunpack.c.h.b16 %v184
    %v760 = vunpack.c.l.b16 %v185
    %v761 = vunpack.c.h.b16 %v185
    %v762 = vunpack.c.l.b16 %v186
    %v763 = vunpack.c.h.b16 %v186
    %v764 = vunpack.c.l.b16 %v187
    %v765 = vunpack.c.h.b16 %v187
    %v766 = vunpack.c.l.b16 %v188
    %v767 = vunpack.c.h.b16 %v188
    %v768 = vunpack.c.l.b16 %v189
    %v769 = vunpack.c.h.b16 %v189
    %v770 = vunpack.c.l.b16 %v190
    %v771 = vunpack.c.h.b16 %v190
    %v772 = vunpack.c.l.b16 %v191
    %v773 = vunpack.c.h.b16 %v191
    %v774 = vpack.c.b16 %v452, %v450
    %v775 = vpack.c.b16 %v453, %v451
    %v776 = vpack.c.b16 %v456, %v454
    %v777 = vpack.c.b16 %v457, %v455
    %v778 = vpack.c.b16 %v460, %v458
    %v779 = vpack.c.b16 %v461, %v459
    %v780 = vpack.c.b16 %v464, %v462
    %v781 = vpack.c.b16 %v465, %v463
    %v782 = vpack.c.b16 %v468, %v466
    %v783 = vpack.c.b16 %v469, %v467
    %v784 = vpack.c.b16 %v472, %v470
    %v785 = vpack.c.b16 %v473, %v471
    %v786 = vpack.c.b16 %v476, %v474
    %v787 = vpack.c.b16 %v477, %v475
    %v788 = vpack.c.b16 %v480, %v478
    %v789 = vpack.c.b16 %v481, %v479
    %v790 = vpack.c.b16 %v484, %v482
    %v791 = vpack.c.b16 %v485, %v483
    %v792 = vpack.c.b16 %v488, %v486
    %v793 = vpack.c.b16 %v489, %v487
    %v794 = vpack.c.b16 %v492, %v490
    %v795 = vpack.c.b16 %v493, %v491
    %v796 = vpack.c.b16 %v496, %v494
    %v797 = vpack.c.b16 %v497, %v495
    %v798 = vpack.c.b16 %v500, %v498
    %v799 = vpack.c.b16 %v501, %v499
    %v800 = vpack.c.b16 %v504, %v502
    %v801 = vpack.c.b16 %v505, %v503
    %v802 = vpack.c.b16 %v508, %v506
    %v803 = vpack.c.b16 %v509, %v507
    %v804 = vpack.c.b16 %v512, %v510
    %v805 = vpack.c.b16 %v513, %v511
    %v806 = vpack.c.b16 %v516, %v514
    %v807 = vpack.c.b16 %v517, %v515
    %v808 = vpack.c.b16 %v520, %v518
    %v809 = vpack.c.b16 %v521, %v519
    %v810 = vpack.c.b16 %v524, %v522
    %v811 = vpack.c.b16 %v525, %v523
    %v812 = vpack.c.b16 %v528, %v526
    %v813 = vpack.c.b16 %v529, %v527
    %v814 = vpack.c.b16 %v532, %v530
    %v815 = vpack.c.b16 %v533, %v531
    %v816 = vpack.c.b16 %v536, %v534
    %v817 = vpack.c.b16 %v537, %v535
    %v818 = vpack.c.b16 %v540, %v538
    %v819 = vpack.c.b16 %v541, %v539
    %v820 = vpack.c.b16 %v544, %v542
    %v821 = vpack.c.b16 %v545, %v543
    %v822 = vpack.c.b16 %v548, %v546
    %v823 = vpack.c.b16 %v549, %v547
    %v824 = vpack.c.b16 %v552, %v550
    %v825 = vpack.c.b16 %v553, %v551
    %v826 = vpack.c.b16 %v556, %v554
    %v827 = vpack.c.b16 %v557, %v555
    %v828 = vpack.c.b16 %v560, %v558
    %v829 = vpack.c.b16 %v561, %v559
    %v830 = vpack.c.b16 %v564, %v562
    %v831 = vpack.c.b16 %v565, %v563
    %v832 = vpack.c.b16 %v568, %v566
    %v833 = vpack.c.b16 %v569, %v567
    %v834 = vpack.c.b16 %v572, %v570
    %v835 = vpack.c.b16 %v573, %v571
    %v836 = vpack.c.b16 %v576, %v574
    %v837 = vpack.c.b16 %v577, %v575
    %v838 = vpack.c.b16 %v580, %v578
    %v839 = vpack.c.b16 %v581, %v579
    %v840 = vpack.c.b16 %v584, %v582
    %v841 = vpack.c.b16 %v585, %v583
    %v842 = vpack.c.b16 %v588, %v586
    %v843 = vpack.c.b16 %v589, %v587
    %v844 = vpack.c.b16 %v592, %v590
    %v845 = vpack.c.b16 %v593, %v591
    %v846 = vpack.c.b16 %v596, %v594
    %v847 = vpack.c.b16 %v597, %v595
    %v848 = vpack.c.b16 %v600, %v598
    %v849 = vpack.c.b16 %v601, %v599
    %v850 = vpack.c.b16 %v604, %v602
    %v851 = vpack.c.b16 %v605, %v603
    %v852 = vpack.c.b16 %v608, %v606
    %v853 = vpack.c.b16 %v609, %v607
    %v854 = vpack.c.b16 %v612, %v610
    %v855 = vpack.c.b16 %v613, %v611
    %v856 = vpack.c.b16 %v616, %v614
    %v857 = vpack.c.b16 %v617, %v615
    %v858 = vpack.c.b16 %v620, %v618
    %v859 = vpack.c.b16 %v621, %v619
    %v860 = vpack.c.b16 %v624, %v622
    %v861 = vpack.c.b16 %v625, %v623
    %v862 = vpack.c.b16 %v628, %v626
    %v863 = vpack.c.b16 %v629, %v627
    %v864 = vpack.c.b16 %v632, %v630
    %v865 = vpack.c.b16 %v633, %v631
    %v866 = vpack.c.b16 %v636, %v634
    %v867 = vpack.c.b16 %v637, %v635
    %v868 = vpack.c.b16 %v640, %v638
    %v869 = vpack.c.b16 %v641, %v639
    %v870 = vpack.c.b16 %v644, %v642
    %v871 = vpack.c.b16 %v645, %v643
    %v872 = vpack.c.b16 %v648, %v646
    %v873 = vpack.c.b16 %v649, %v647
    %v874 = vpack.c.b16 %v652, %v650
    %v875 = vpack.c.b16 %v653, %v651
    %v876 = vpack.c.b16 %v656, %v654
    %v877 = vpack.c.b16 %v657, %v655
    %v878 = vpack.c.b16 %v660, %v658
    %v879 = vpack.c.b16 %v661, %v659
    %v880 = vpack.c.b16 %v664, %v662
    %v881 = vpack.c.b16 %v665, %v663
    %v882 = vpack.c.b16 %v668, %v666
    %v883 = vpack.c.b16 %v669, %v667
    %v884 = vpack.c.b16 %v672, %v670
    %v885 = vpack.c.b16 %v673, %v671
    %v886 = vpack.c.b16 %v676, %v674
    %v887 = vpack.c.b16 %v677, %v675
    %v888 = vpack.c.b16 %v680, %v678
    %v889 = vpack.c.b16 %v681, %v679
    %v890 = vpack.c.b16 %v684, %v682
    %v891 = vpack.c.b16 %v685, %v683
    %v892 = vpack.c.b16 %v688, %v686
    %v893 = vpack.c.b16 %v689, %v687
    %v894 = vpack.c.b16 %v692, %v690
    %v895 = vpack.c.b16 %v693, %v691
    %v896 = vpack.c.b16 %v696, %v694
    %v897 = vpack.c.b16 %v697, %v695
    %v898 = vpack.c.b16 %v700, %v698
    %v899 = vpack.c.b16 %v701, %v699
    %v900 = vpack.c.b16 %v704, %v702
    %v901 = vpack.c.b16 %v705, %v703
    %v902 = vpack.c.b16 %v708, %v706
    %v903 = vpack.c.b16 %v709, %v707
    %v904 = vpack.c.b16 %v712, %v710
    %v905 = vpack.c.b16 %v713, %v711
    %v906 = vpack.c.b16 %v716, %v714
    %v907 = vpack.c.b16 %v717, %v715
    %v908 = vpack.c.b16 %v720, %v718
    %v909 = vpack.c.b16 %v721, %v719
    %v910 = vpack.c.b16 %v724, %v722
    %v911 = vpack.c.b16 %v725, %v723
    %v912 = vpack.c.b16 %v728, %v726
    %v913 = vpack.c.b16 %v729, %v727
    %v914 = vpack.c.b16 %v732, %v730
    %v915 = vpack.c.b16 %v733, %v731
    %v916 = vpack.c.b16 %v736, %v734
    %v917 = vpack.c.b16 %v737, %v735
    %v918 = vpack.c.b16 %v740, %v738
    %v919 = vpack.c.b16 %v741, %v739
    %v920 = vpack.c.b16 %v744, %v742
    %v921 = vpack.c.b16 %v745, %v743
    %v922 = vpack.c.b16 %v748, %v746
    %v923 = vpack.c.b16 %v749, %v747
    %v924 = vpack.c.b16 %v752, %v750
    %v925 = vpack.c.b16 %v753, %v751
    %v926 = vpack.c.b16 %v756, %v754
    %v927 = vpack.c.b16 %v757, %v755
    %v928 = vpack.c.b16 %v760, %v758
    %v929 = vpack.c.b16 %v761, %v759
    %v930 = vpack.c.b16 %v764, %v762
    %v931 = vpack.c.b16 %v765, %v763
    %v932 = vpack.c.b16 %v768, %v766
    %v933 = vpack.c.b16 %v769, %v767
    %v934 = vpack.c.b16 %v772, %v770
    %v935 = vpack.c.b16 %v773, %v771
    %vm1098 = vcmask 130048
    %v1100 = vsel %vm1098, %v277, 0
    %1102 = vmatprep.subr.bf16.mxu0 %v775
    %1103 = vmatpush1.bf16.msra.mxu0 %v774
    %1104 = vmatprep.subr.bf16.mxu0 %v777
    %1105 = vmatpush1.bf16.msra.mxu0 %v776
    %1106 = vmatprep.subr.bf16.mxu0 %v779
    %1107 = vmatpush1.bf16.msra.mxu0 %v778
    %1108 = vmatprep.subr.bf16.mxu0 %v781
    %1109 = vmatpush1.bf16.msra.mxu0 %v780
    %1110 = vmatprep.subr.bf16.mxu0 %v783
    %1111 = vmatpush1.bf16.msra.mxu0 %v782
    %1112 = vmatprep.subr.bf16.mxu0 %v785
    %1113 = vmatpush1.bf16.msra.mxu0 %v784
    %1114 = vmatprep.subr.bf16.mxu0 %v787
    %1115 = vmatpush1.bf16.msra.mxu0 %v786
    %1116 = vmatprep.subr.bf16.mxu0 %v789
    %1117 = vmatpush1.bf16.msra.mxu0 %v788
    %1118 = vmatprep.subr.bf16.mxu0 %v791
    %1119 = vmatpush1.bf16.msra.mxu0 %v790
    %1120 = vmatprep.subr.bf16.mxu0 %v793
    %1121 = vmatpush1.bf16.msra.mxu0 %v792
    %1122 = vmatprep.subr.bf16.mxu0 %v795
    %1123 = vmatpush1.bf16.msra.mxu0 %v794
    %1124 = vmatprep.subr.bf16.mxu0 %v797
    %1125 = vmatpush1.bf16.msra.mxu0 %v796
    %1126 = vmatprep.subr.bf16.mxu0 %v799
    %1127 = vmatpush1.bf16.msra.mxu0 %v798
    %1128 = vmatprep.subr.bf16.mxu0 %v801
    %1129 = vmatpush1.bf16.msra.mxu0 %v800
    %1130 = vmatprep.subr.bf16.mxu0 %v803
    %1131 = vmatpush1.bf16.msra.mxu0 %v802
    %1132 = vmatprep.subr.bf16.mxu0 %v805
    %1133 = vmatpush1.bf16.msra.mxu0 %v804
    %1134 = vmatprep.mubr.bf16.mxu0 %v243
    %1135 = vmatmul.mubr.bf16.gmra.mrb[0].mxu0 %v229
    %v1136 = vpop.f32.mrb[0].mxu0
    %v1137 = vadd.f32 %v197, %v1136
    %v1138 = vpop.f32.mrb[0].mxu0
    %v1139 = vadd.f32 %v201, %v1138
    %v1140 = vpop.f32.mrb[0].mxu0
    %v1141 = vpop.f32.mrb[0].mxu0
    %1142 = vdwg.mxu0
    %1143 = vmatprep.subr.bf16.mxu0 %v807
    %1144 = vmatpush1.bf16.msra.mxu0 %v806
    %1145 = vmatprep.subr.bf16.mxu0 %v809
    %1146 = vmatpush1.bf16.msra.mxu0 %v808
    %1147 = vmatprep.subr.bf16.mxu0 %v811
    %1148 = vmatpush1.bf16.msra.mxu0 %v810
    %1149 = vmatprep.subr.bf16.mxu0 %v813
    %1150 = vmatpush1.bf16.msra.mxu0 %v812
    %1151 = vmatprep.subr.bf16.mxu0 %v815
    %1152 = vmatpush1.bf16.msra.mxu0 %v814
    %1153 = vmatprep.subr.bf16.mxu0 %v817
    %1154 = vmatpush1.bf16.msra.mxu0 %v816
    %1155 = vmatprep.subr.bf16.mxu0 %v819
    %1156 = vmatpush1.bf16.msra.mxu0 %v818
    %1157 = vmatprep.subr.bf16.mxu0 %v821
    %1158 = vmatpush1.bf16.msra.mxu0 %v820
    %1159 = vmatprep.subr.bf16.mxu0 %v823
    %1160 = vmatpush1.bf16.msra.mxu0 %v822
    %1161 = vmatprep.subr.bf16.mxu0 %v825
    %1162 = vmatpush1.bf16.msra.mxu0 %v824
    %1163 = vmatprep.subr.bf16.mxu0 %v827
    %1164 = vmatpush1.bf16.msra.mxu0 %v826
    %1165 = vmatprep.subr.bf16.mxu0 %v829
    %1166 = vmatpush1.bf16.msra.mxu0 %v828
    %1167 = vmatprep.subr.bf16.mxu0 %v831
    %1168 = vmatpush1.bf16.msra.mxu0 %v830
    %1169 = vmatprep.subr.bf16.mxu0 %v833
    %1170 = vmatpush1.bf16.msra.mxu0 %v832
    %1171 = vmatprep.subr.bf16.mxu0 %v835
    %1172 = vmatpush1.bf16.msra.mxu0 %v834
    %1173 = vmatprep.subr.bf16.mxu0 %v837
    %1174 = vmatpush1.bf16.msra.mxu0 %v836
    %1175 = vmatprep.mubr.bf16.mxu0 %v253
    %1176 = vmatmul.mubr.bf16.gmra.mrb[0].mxu0 %v251
    %v1177 = vpop.f32.mrb[0].mxu0
    %v1178 = vadd.f32 %v1137, %v1177
    %v1179 = vpop.f32.mrb[0].mxu0
    %v1180 = vadd.f32 %v1139, %v1179
    %v1181 = vpop.f32.mrb[0].mxu0
    %v1182 = vpop.f32.mrb[0].mxu0
    %1183 = vdwg.mxu0
    %1184 = vmatprep.subr.bf16.mxu0 %v839
    %1185 = vmatpush1.bf16.msra.mxu0 %v838
    %1186 = vmatprep.subr.bf16.mxu0 %v841
    %1187 = vmatpush1.bf16.msra.mxu0 %v840
    %1188 = vmatprep.subr.bf16.mxu0 %v843
    %1189 = vmatpush1.bf16.msra.mxu0 %v842
    %1190 = vmatprep.subr.bf16.mxu0 %v845
    %1191 = vmatpush1.bf16.msra.mxu0 %v844
    %1192 = vmatprep.subr.bf16.mxu0 %v847
    %1193 = vmatpush1.bf16.msra.mxu0 %v846
    %1194 = vmatprep.subr.bf16.mxu0 %v849
    %1195 = vmatpush1.bf16.msra.mxu0 %v848
    %1196 = vmatprep.subr.bf16.mxu0 %v851
    %1197 = vmatpush1.bf16.msra.mxu0 %v850
    %1198 = vmatprep.subr.bf16.mxu0 %v853
    %1199 = vmatpush1.bf16.msra.mxu0 %v852
    %1200 = vmatprep.subr.bf16.mxu0 %v855
    %1201 = vmatpush1.bf16.msra.mxu0 %v854
    %1202 = vmatprep.subr.bf16.mxu0 %v857
    %1203 = vmatpush1.bf16.msra.mxu0 %v856
    %1204 = vmatprep.subr.bf16.mxu0 %v859
    %1205 = vmatpush1.bf16.msra.mxu0 %v858
    %1206 = vmatprep.subr.bf16.mxu0 %v861
    %1207 = vmatpush1.bf16.msra.mxu0 %v860
    %1208 = vmatprep.subr.bf16.mxu0 %v863
    %1209 = vmatpush1.bf16.msra.mxu0 %v862
    %1210 = vmatprep.subr.bf16.mxu0 %v865
    %1211 = vmatpush1.bf16.msra.mxu0 %v864
    %1212 = vmatprep.subr.bf16.mxu0 %v867
    %1213 = vmatpush1.bf16.msra.mxu0 %v866
    %1214 = vmatprep.subr.bf16.mxu0 %v869
    %1215 = vmatpush1.bf16.msra.mxu0 %v868
    %1216 = vmatprep.mubr.bf16.mxu0 %v250
    %1217 = vmatmul.mubr.bf16.gmra.mrb[0].mxu0 %v236
    %v1218 = vpop.f32.mrb[0].mxu0
    %v1219 = vadd.f32 %v1178, %v1218
    %v1220 = vpop.f32.mrb[0].mxu0
    %v1221 = vadd.f32 %v1180, %v1220
    %v1222 = vpop.f32.mrb[0].mxu0
    %v1223 = vpop.f32.mrb[0].mxu0
    %1224 = vdwg.mxu0
    %1225 = vmatprep.subr.bf16.mxu0 %v871
    %1226 = vmatpush1.bf16.msra.mxu0 %v870
    %1227 = vmatprep.subr.bf16.mxu0 %v873
    %1228 = vmatpush1.bf16.msra.mxu0 %v872
    %1229 = vmatprep.subr.bf16.mxu0 %v875
    %1230 = vmatpush1.bf16.msra.mxu0 %v874
    %1231 = vmatprep.subr.bf16.mxu0 %v877
    %1232 = vmatpush1.bf16.msra.mxu0 %v876
    %1233 = vmatprep.subr.bf16.mxu0 %v879
    %1234 = vmatpush1.bf16.msra.mxu0 %v878
    %1235 = vmatprep.subr.bf16.mxu0 %v881
    %1236 = vmatpush1.bf16.msra.mxu0 %v880
    %1237 = vmatprep.subr.bf16.mxu0 %v883
    %1238 = vmatpush1.bf16.msra.mxu0 %v882
    %1239 = vmatprep.subr.bf16.mxu0 %v885
    %1240 = vmatpush1.bf16.msra.mxu0 %v884
    %1241 = vmatprep.subr.bf16.mxu0 %v887
    %1242 = vmatpush1.bf16.msra.mxu0 %v886
    %1243 = vmatprep.subr.bf16.mxu0 %v889
    %1244 = vmatpush1.bf16.msra.mxu0 %v888
    %1245 = vmatprep.subr.bf16.mxu0 %v891
    %1246 = vmatpush1.bf16.msra.mxu0 %v890
    %1247 = vmatprep.subr.bf16.mxu0 %v893
    %1248 = vmatpush1.bf16.msra.mxu0 %v892
    %1249 = vmatprep.subr.bf16.mxu0 %v895
    %1250 = vmatpush1.bf16.msra.mxu0 %v894
    %1251 = vmatprep.subr.bf16.mxu0 %v897
    %1252 = vmatpush1.bf16.msra.mxu0 %v896
    %1253 = vmatprep.subr.bf16.mxu0 %v899
    %1254 = vmatpush1.bf16.msra.mxu0 %v898
    %1255 = vmatprep.subr.bf16.mxu0 %v901
    %1256 = vmatpush1.bf16.msra.mxu0 %v900
    %1257 = vmatprep.mubr.bf16.mxu0 %v254
    %1258 = vmatmul.mubr.bf16.gmra.mrb[0].mxu0 %v252
    %v1259 = vpop.f32.mrb[0].mxu0
    %v1260 = vadd.f32 %v1219, %v1259
    %v1261 = vpop.f32.mrb[0].mxu0
    %v1262 = vadd.f32 %v1221, %v1261
    %v1263 = vpop.f32.mrb[0].mxu0
    %v1264 = vpop.f32.mrb[0].mxu0
    %1265 = vdwg.mxu0
    %1266 = vmatprep.subr.bf16.mxu0 %v903
    %1267 = vmatpush1.bf16.msra.mxu0 %v902
    %1268 = vmatprep.subr.bf16.mxu0 %v905
    %1269 = vmatpush1.bf16.msra.mxu0 %v904
    %1270 = vmatprep.subr.bf16.mxu0 %v907
    %1271 = vmatpush1.bf16.msra.mxu0 %v906
    %1272 = vmatprep.subr.bf16.mxu0 %v909
    %1273 = vmatpush1.bf16.msra.mxu0 %v908
    %1274 = vmatprep.subr.bf16.mxu0 %v911
    %1275 = vmatpush1.bf16.msra.mxu0 %v910
    %1276 = vmatprep.subr.bf16.mxu0 %v913
    %1277 = vmatpush1.bf16.msra.mxu0 %v912
    %1278 = vmatprep.subr.bf16.mxu0 %v915
    %1279 = vmatpush1.bf16.msra.mxu0 %v914
    %1280 = vmatprep.subr.bf16.mxu0 %v917
    %1281 = vmatpush1.bf16.msra.mxu0 %v916
    %1282 = vmatprep.subr.bf16.mxu0 %v919
    %1283 = vmatpush1.bf16.msra.mxu0 %v918
    %1284 = vmatprep.subr.bf16.mxu0 %v921
    %1285 = vmatpush1.bf16.msra.mxu0 %v920
    %1286 = vmatprep.subr.bf16.mxu0 %v923
    %1287 = vmatpush1.bf16.msra.mxu0 %v922
    %1288 = vmatprep.subr.bf16.mxu0 %v925
    %1289 = vmatpush1.bf16.msra.mxu0 %v924
    %1290 = vmatprep.subr.bf16.mxu0 %v927
    %1291 = vmatpush1.bf16.msra.mxu0 %v926
    %1292 = vmatprep.subr.bf16.mxu0 %v929
    %1293 = vmatpush1.bf16.msra.mxu0 %v928
    %1294 = vmatprep.subr.bf16.mxu0 %v931
    %1295 = vmatpush1.bf16.msra.mxu0 %v930
    %1296 = vmatprep.subr.bf16.mxu0 %v933
    %1297 = vmatpush1.bf16.msra.mxu0 %v932
    %1298 = vmatprep.mubr.bf16.mxu0 %v276
    %1299 = vmatmul.mubr.bf16.gmra.mrb[0].mxu0 %v269
    %v1300 = vpop.f32.mrb[0].mxu0
    %v1301 = vadd.f32 %v1260, %v1300
    %v1302 = vpop.f32.mrb[0].mxu0
    %v1303 = vadd.f32 %v1262, %v1302
    %v1304 = vpop.f32.mrb[0].mxu0
    %v1305 = vpop.f32.mrb[0].mxu0
    %1306 = vdwg.mxu0
    %1307 = vmatprep.subr.bf16.mxu0 %v935
    %1308 = vmatpush1.bf16.msra.mxu0 %v934
    %1309 = vmatprep.subr.bf16.mxu0 0
    %1310 = vmatpush1.bf16.msra.mxu0 0
    %1311 = vmatprep.subr.bf16.mxu0 0
    %1312 = vmatpush1.bf16.msra.mxu0 0
    %1313 = vmatprep.subr.bf16.mxu0 0
    %1314 = vmatpush1.bf16.msra.mxu0 0
    %1315 = vmatprep.subr.bf16.mxu0 0
    %1316 = vmatpush1.bf16.msra.mxu0 0
    %1317 = vmatprep.subr.bf16.mxu0 0
    %1318 = vmatpush1.bf16.msra.mxu0 0
    %1319 = vmatprep.subr.bf16.mxu0 0
    %1320 = vmatpush1.bf16.msra.mxu0 0
    %1321 = vmatprep.subr.bf16.mxu0 0
    %1322 = vmatpush1.bf16.msra.mxu0 0
    %1323 = vmatprep.subr.bf16.mxu0 0
    %1324 = vmatpush1.bf16.msra.mxu0 0
    %1325 = vmatprep.subr.bf16.mxu0 0
    %1326 = vmatpush1.bf16.msra.mxu0 0
    %1327 = vmatprep.subr.bf16.mxu0 0
    %1328 = vmatpush1.bf16.msra.mxu0 0
    %1329 = vmatprep.subr.bf16.mxu0 0
    %1330 = vmatpush1.bf16.msra.mxu0 0
    %1331 = vmatprep.subr.bf16.mxu0 0
    %1332 = vmatpush1.bf16.msra.mxu0 0
    %1333 = vmatprep.subr.bf16.mxu0 0
    %1334 = vmatpush1.bf16.msra.mxu0 0
    %1335 = vmatprep.subr.bf16.mxu0 0
    %1336 = vmatpush1.bf16.msra.mxu0 0
    %1337 = vmatprep.subr.bf16.mxu0 0
    %1338 = vmatpush1.bf16.msra.mxu0 0
    %1339 = vmatprep.mubr.bf16.mxu0 0
    %1340 = vmatmul.mubr.bf16.gmra.mrb[0].mxu0 %v1100
    %v1341 = vpop.f32.mrb[0].mxu0
    %v1342 = vadd.f32 %v1301, %v1341
    %v1343 = vpop.f32.mrb[0].mxu0
    %v1344 = vadd.f32 %v1303, %v1343
    %v1345 = vpop.f32.mrb[0].mxu0
    %v1346 = vpop.f32.mrb[0].mxu0
    %1347 = vdwg.mxu0
    %v1348 = vmax.f32 %v1342, 0.0
    %v1349 = vmax.f32 %v1344, 0.0
    %v1350 = vpack.c.bf16 %v1348, %v1348
    %v1351 = vpack.c.bf16 %v1349, %v1349
    %v1352 = vld [vmem:[%s3] sm:$0xff]
    %v1353 = vld [vmem:[%s3 + $0x8] sm:$0xff]
    %v1354 = vld [vmem:[%s3 + $0x10] sm:$0xff]
    %v1355 = vld [vmem:[%s3 + $0x18] sm:$0xff]
    %v1356 = vld [vmem:[%s3 + $0x20] sm:$0xff]
    %v1357 = vld [vmem:[%s3 + $0x28] sm:$0xff]
    %v1358 = vld [vmem:[%s3 + $0x30] sm:$0xff]
    %v1359 = vld [vmem:[%s3 + $0x38] sm:$0xff]
    %v1360 = vld [vmem:[%s3 + $0x40] sm:$0xff]
    %v1361 = vld [vmem:[%s3 + $0x48] sm:$0xff]
    %v1362 = vld [vmem:[%s3 + $0x50] sm:$0xff]
    %v1363 = vld [vmem:[%s3 + $0x58] sm:$0xff]
    %v1364 = vld [vmem:[%s3 + $0x60] sm:$0xff]
    %v1365 = vld [vmem:[%s3 + $0x68] sm:$0xff]
    %v1366 = vld [vmem:[%s3 + $0x70] sm:$0xff]
    %v1367 = vld [vmem:[%s3 + $0x78] sm:$0xff]
    %v1368 = vld [vmem:[%s3 + $0x80] sm:$0xff]
    %v1369 = vld [vmem:[%s3 + $0x88] sm:$0xff]
    %v1370 = vld [vmem:[%s3 + $0x90] sm:$0xff]
    %v1371 = vld [vmem:[%s3 + $0x98] sm:$0xff]
    %v1372 = vld [vmem:[%s3 + $0xa0] sm:$0xff]
    %v1373 = vld [vmem:[%s3 + $0xa8] sm:$0xff]
    %v1374 = vld [vmem:[%s3 + $0xb0] sm:$0xff]
    %v1375 = vld [vmem:[%s3 + $0xb8] sm:$0xff]
    %v1376 = vld [vmem:[%s3 + $0xc0] sm:$0xff]
    %v1377 = vld [vmem:[%s3 + $0xc8] sm:$0xff]
    %v1378 = vld [vmem:[%s3 + $0xd0] sm:$0xff]
    %v1379 = vld [vmem:[%s3 + $0xd8] sm:$0xff]
    %v1380 = vld [vmem:[%s3 + $0xe0] sm:$0xff]
    %v1381 = vld [vmem:[%s3 + $0xe8] sm:$0xff]
    %v1382 = vld [vmem:[%s3 + $0xf0] sm:$0xff]
    %v1383 = vld [vmem:[%s3 + $0xf8] sm:$0xff]
    %v1384 = vld [vmem:[%s4] sm:$0x3]
    %v1386 = vlaneseq
    %v1387 = vshrl.u32 %v1386, 7
    %v1388 = vsub.s32 0, %v1387
    %v1389 = vrot.slane %v1384, %v1388
    %v1390 = vlaneseq
    %v1391 = vshrl.u32 %v1390, 7
    %v1392 = vsub.s32 1, %v1391
    %v1393 = vrot.slane %v1384, %v1392
    %v1428 = vunpack.c.l.b16 %v1352
    %v1429 = vunpack.c.h.b16 %v1352
    %v1430 = vunpack.c.l.b16 %v1353
    %v1431 = vunpack.c.h.b16 %v1353
    %v1432 = vunpack.c.l.b16 %v1354
    %v1433 = vunpack.c.h.b16 %v1354
    %v1434 = vunpack.c.l.b16 %v1355
    %v1435 = vunpack.c.h.b16 %v1355
    %v1436 = vunpack.c.l.b16 %v1356
    %v1437 = vunpack.c.h.b16 %v1356
    %v1438 = vunpack.c.l.b16 %v1357
    %v1439 = vunpack.c.h.b16 %v1357
    %v1440 = vunpack.c.l.b16 %v1358
    %v1441 = vunpack.c.h.b16 %v1358
    %v1442 = vunpack.c.l.b16 %v1359
    %v1443 = vunpack.c.h.b16 %v1359
    %v1444 = vunpack.c.l.b16 %v1360
    %v1445 = vunpack.c.h.b16 %v1360
    %v1446 = vunpack.c.l.b16 %v1361
    %v1447 = vunpack.c.h.b16 %v1361
    %v1448 = vunpack.c.l.b16 %v1362
    %v1449 = vunpack.c.h.b16 %v1362
    %v1450 = vunpack.c.l.b16 %v1363
    %v1451 = vunpack.c.h.b16 %v1363
    %v1452 = vunpack.c.l.b16 %v1364
    %v1453 = vunpack.c.h.b16 %v1364
    %v1454 = vunpack.c.l.b16 %v1365
    %v1455 = vunpack.c.h.b16 %v1365
    %v1456 = vunpack.c.l.b16 %v1366
    %v1457 = vunpack.c.h.b16 %v1366
    %v1458 = vunpack.c.l.b16 %v1367
    %v1459 = vunpack.c.h.b16 %v1367
    %v1460 = vunpack.c.l.b16 %v1368
    %v1461 = vunpack.c.h.b16 %v1368
    %v1462 = vunpack.c.l.b16 %v1369
    %v1463 = vunpack.c.h.b16 %v1369
    %v1464 = vunpack.c.l.b16 %v1370
    %v1465 = vunpack.c.h.b16 %v1370
    %v1466 = vunpack.c.l.b16 %v1371
    %v1467 = vunpack.c.h.b16 %v1371
    %v1468 = vunpack.c.l.b16 %v1372
    %v1469 = vunpack.c.h.b16 %v1372
    %v1470 = vunpack.c.l.b16 %v1373
    %v1471 = vunpack.c.h.b16 %v1373
    %v1472 = vunpack.c.l.b16 %v1374
    %v1473 = vunpack.c.h.b16 %v1374
    %v1474 = vunpack.c.l.b16 %v1375
    %v1475 = vunpack.c.h.b16 %v1375
    %v1476 = vunpack.c.l.b16 %v1376
    %v1477 = vunpack.c.h.b16 %v1376
    %v1478 = vunpack.c.l.b16 %v1377
    %v1479 = vunpack.c.h.b16 %v1377
    %v1480 = vunpack.c.l.b16 %v1378
    %v1481 = vunpack.c.h.b16 %v1378
    %v1482 = vunpack.c.l.b16 %v1379
    %v1483 = vunpack.c.h.b16 %v1379
    %v1484 = vunpack.c.l.b16 %v1380
    %v1485 = vunpack.c.h.b16 %v1380
    %v1486 = vunpack.c.l.b16 %v1381
    %v1487 = vunpack.c.h.b16 %v1381
    %v1488 = vunpack.c.l.b16 %v1382
    %v1489 = vunpack.c.h.b16 %v1382
    %v1490 = vunpack.c.l.b16 %v1383
    %v1491 = vunpack.c.h.b16 %v1383
    %v1492 = vpack.c.b16 %v1430, %v1428
    %v1493 = vpack.c.b16 %v1431, %v1429
    %v1494 = vpack.c.b16 %v1434, %v1432
    %v1495 = vpack.c.b16 %v1435, %v1433
    %v1496 = vpack.c.b16 %v1438, %v1436
    %v1497 = vpack.c.b16 %v1439, %v1437
    %v1498 = vpack.c.b16 %v1442, %v1440
    %v1499 = vpack.c.b16 %v1443, %v1441
    %v1500 = vpack.c.b16 %v1446, %v1444
    %v1501 = vpack.c.b16 %v1447, %v1445
    %v1502 = vpack.c.b16 %v1450, %v1448
    %v1503 = vpack.c.b16 %v1451, %v1449
    %v1504 = vpack.c.b16 %v1454, %v1452
    %v1505 = vpack.c.b16 %v1455, %v1453
    %v1506 = vpack.c.b16 %v1458, %v1456
    %v1507 = vpack.c.b16 %v1459, %v1457
    %v1508 = vpack.c.b16 %v1462, %v1460
    %v1509 = vpack.c.b16 %v1463, %v1461
    %v1510 = vpack.c.b16 %v1466, %v1464
    %v1511 = vpack.c.b16 %v1467, %v1465
    %v1512 = vpack.c.b16 %v1470, %v1468
    %v1513 = vpack.c.b16 %v1471, %v1469
    %v1514 = vpack.c.b16 %v1474, %v1472
    %v1515 = vpack.c.b16 %v1475, %v1473
    %v1516 = vpack.c.b16 %v1478, %v1476
    %v1517 = vpack.c.b16 %v1479, %v1477
    %v1518 = vpack.c.b16 %v1482, %v1480
    %v1519 = vpack.c.b16 %v1483, %v1481
    %v1520 = vpack.c.b16 %v1486, %v1484
    %v1521 = vpack.c.b16 %v1487, %v1485
    %v1522 = vpack.c.b16 %v1490, %v1488
    %v1523 = vpack.c.b16 %v1491, %v1489
    %1556 = vmatprep.subr.bf16.mxu0 %v1493
    %1557 = vmatpush1.bf16.msra.mxu0 %v1492
    %1558 = vmatprep.subr.bf16.mxu0 %v1495
    %1559 = vmatpush1.bf16.msra.mxu0 %v1494
    %1560 = vmatprep.subr.bf16.mxu0 %v1497
    %1561 = vmatpush1.bf16.msra.mxu0 %v1496
    %1562 = vmatprep.subr.bf16.mxu0 %v1499
    %1563 = vmatpush1.bf16.msra.mxu0 %v1498
    %1564 = vmatprep.subr.bf16.mxu0 %v1501
    %1565 = vmatpush1.bf16.msra.mxu0 %v1500
    %1566 = vmatprep.subr.bf16.mxu0 %v1503
    %1567 = vmatpush1.bf16.msra.mxu0 %v1502
    %1568 = vmatprep.subr.bf16.mxu0 %v1505
    %1569 = vmatpush1.bf16.msra.mxu0 %v1504
    %1570 = vmatprep.subr.bf16.mxu0 %v1507
    %1571 = vmatpush1.bf16.msra.mxu0 %v1506
    %1572 = vmatprep.subr.bf16.mxu0 %v1509
    %1573 = vmatpush1.bf16.msra.mxu0 %v1508
    %1574 = vmatprep.subr.bf16.mxu0 %v1511
    %1575 = vmatpush1.bf16.msra.mxu0 %v1510
    %1576 = vmatprep.subr.bf16.mxu0 %v1513
    %1577 = vmatpush1.bf16.msra.mxu0 %v1512
    %1578 = vmatprep.subr.bf16.mxu0 %v1515
    %1579 = vmatpush1.bf16.msra.mxu0 %v1514
    %1580 = vmatprep.subr.bf16.mxu0 %v1517
    %1581 = vmatpush1.bf16.msra.mxu0 %v1516
    %1582 = vmatprep.subr.bf16.mxu0 %v1519
    %1583 = vmatpush1.bf16.msra.mxu0 %v1518
    %1584 = vmatprep.subr.bf16.mxu0 %v1521
    %1585 = vmatpush1.bf16.msra.mxu0 %v1520
    %1586 = vmatprep.subr.bf16.mxu0 %v1523
    %1587 = vmatpush1.bf16.msra.mxu0 %v1522
    %1588 = vmatprep.mubr.bf16.mxu0 %v1351
    %1589 = vmatmul.mubr.bf16.gmra.mrb[0].mxu0 %v1350
    %v1590 = vpop.f32.mrb[0].mxu0
    %v1591 = vadd.f32 %v1389, %v1590
    %v1592 = vpop.f32.mrb[0].mxu0
    %v1593 = vadd.f32 %v1393, %v1592
    %v1594 = vpop.f32.mrb[0].mxu0
    %v1595 = vpop.f32.mrb[0].mxu0
    %1596 = vdwg.mxu0
    %v1597 = vmax.f32 %v1591, 0.0
    %v1598 = vmax.f32 %v1593, 0.0
    %v1599 = vpack.c.bf16 %v1597, %v1597
    %v1600 = vpack.c.bf16 %v1598, %v1598
    %v1601 = vld [vmem:[%s5] sm:$0xf]
    %v1602 = vld [vmem:[%s5 + $0x4] sm:$0xf]
    %v1603 = vld [vmem:[%s5 + $0x8] sm:$0xf]
    %v1604 = vld [vmem:[%s5 + $0xc] sm:$0xf]
    %v1605 = vld [vmem:[%s5 + $0x10] sm:$0xf]
    %v1606 = vld [vmem:[%s5 + $0x14] sm:$0xf]
    %v1607 = vld [vmem:[%s5 + $0x18] sm:$0xf]
    %v1608 = vld [vmem:[%s5 + $0x1c] sm:$0xf]
    %v1609 = vld [vmem:[%s5 + $0x20] sm:$0xf]
    %v1610 = vld [vmem:[%s5 + $0x24] sm:$0xf]
    %v1611 = vld [vmem:[%s5 + $0x28] sm:$0xf]
    %v1612 = vld [vmem:[%s5 + $0x2c] sm:$0xf]
    %v1613 = vld [vmem:[%s5 + $0x30] sm:$0xf]
    %v1614 = vld [vmem:[%s5 + $0x34] sm:$0xf]
    %v1615 = vld [vmem:[%s5 + $0x38] sm:$0xf]
    %v1616 = vld [vmem:[%s5 + $0x3c] sm:$0xf]
    %v1617 = vld [vmem:[%s5 + $0x40] sm:$0xf]
    %v1618 = vld [vmem:[%s5 + $0x44] sm:$0xf]
    %v1619 = vld [vmem:[%s5 + $0x48] sm:$0xf]
    %v1620 = vld [vmem:[%s5 + $0x4c] sm:$0xf]
    %v1621 = vld [vmem:[%s5 + $0x50] sm:$0xf]
    %v1622 = vld [vmem:[%s5 + $0x54] sm:$0xf]
    %v1623 = vld [vmem:[%s5 + $0x58] sm:$0xf]
    %v1624 = vld [vmem:[%s5 + $0x5c] sm:$0xf]
    %v1625 = vld [vmem:[%s5 + $0x60] sm:$0xf]
    %v1626 = vld [vmem:[%s5 + $0x64] sm:$0xf]
    %v1627 = vld [vmem:[%s5 + $0x68] sm:$0xf]
    %v1628 = vld [vmem:[%s5 + $0x6c] sm:$0xf]
    %v1629 = vld [vmem:[%s5 + $0x70] sm:$0xf]
    %v1630 = vld [vmem:[%s5 + $0x74] sm:$0xf]
    %v1631 = vld [vmem:[%s5 + $0x78] sm:$0xf]
    %v1632 = vld [vmem:[%s5 + $0x7c] sm:$0xf]
    %v1633 = vld [vmem:[%s6] sm:$0x1]
    %v1635 = vlaneseq
    %v1636 = vshrl.u32 %v1635, 7
    %v1637 = vsub.s32 0, %v1636
    %v1638 = vrot.slane %v1633, %v1637
    %v1672 = vunpack.c.l.b16 %v1601
    %v1673 = vunpack.c.l.b16 %v1602
    %v1674 = vunpack.c.l.b16 %v1603
    %v1675 = vunpack.c.l.b16 %v1604
    %v1676 = vunpack.c.l.b16 %v1605
    %v1677 = vunpack.c.l.b16 %v1606
    %v1678 = vunpack.c.l.b16 %v1607
    %v1679 = vunpack.c.l.b16 %v1608
    %v1680 = vunpack.c.l.b16 %v1609
    %v1681 = vunpack.c.l.b16 %v1610
    %v1682 = vunpack.c.l.b16 %v1611
    %v1683 = vunpack.c.l.b16 %v1612
    %v1684 = vunpack.c.l.b16 %v1613
    %v1685 = vunpack.c.l.b16 %v1614
    %v1686 = vunpack.c.l.b16 %v1615
    %v1687 = vunpack.c.l.b16 %v1616
    %v1688 = vunpack.c.l.b16 %v1617
    %v1689 = vunpack.c.l.b16 %v1618
    %v1690 = vunpack.c.l.b16 %v1619
    %v1691 = vunpack.c.l.b16 %v1620
    %v1692 = vunpack.c.l.b16 %v1621
    %v1693 = vunpack.c.l.b16 %v1622
    %v1694 = vunpack.c.l.b16 %v1623
    %v1695 = vunpack.c.l.b16 %v1624
    %v1696 = vunpack.c.l.b16 %v1625
    %v1697 = vunpack.c.l.b16 %v1626
    %v1698 = vunpack.c.l.b16 %v1627
    %v1699 = vunpack.c.l.b16 %v1628
    %v1700 = vunpack.c.l.b16 %v1629
    %v1701 = vunpack.c.l.b16 %v1630
    %v1702 = vunpack.c.l.b16 %v1631
    %v1703 = vunpack.c.l.b16 %v1632
    %v1704 = vpack.c.b16 %v1673, %v1672
    %v1705 = vpack.c.b16 %v1675, %v1674
    %v1706 = vpack.c.b16 %v1677, %v1676
    %v1707 = vpack.c.b16 %v1679, %v1678
    %v1708 = vpack.c.b16 %v1681, %v1680
    %v1709 = vpack.c.b16 %v1683, %v1682
    %v1710 = vpack.c.b16 %v1685, %v1684
    %v1711 = vpack.c.b16 %v1687, %v1686
    %v1712 = vpack.c.b16 %v1689, %v1688
    %v1713 = vpack.c.b16 %v1691, %v1690
    %v1714 = vpack.c.b16 %v1693, %v1692
    %v1715 = vpack.c.b16 %v1695, %v1694
    %v1716 = vpack.c.b16 %v1697, %v1696
    %v1717 = vpack.c.b16 %v1699, %v1698
    %v1718 = vpack.c.b16 %v1701, %v1700
    %v1719 = vpack.c.b16 %v1703, %v1702
    %1736 = vmatprep.subr.bf16.mxu0 0
    %1737 = vmatpush1.bf16.msra.mxu0 %v1704
    %1738 = vmatprep.subr.bf16.mxu0 0
    %1739 = vmatpush1.bf16.msra.mxu0 %v1705
    %1740 = vmatprep.subr.bf16.mxu0 0
    %1741 = vmatpush1.bf16.msra.mxu0 %v1706
    %1742 = vmatprep.subr.bf16.mxu0 0
    %1743 = vmatpush1.bf16.msra.mxu0 %v1707
    %1744 = vmatprep.subr.bf16.mxu0 0
    %1745 = vmatpush1.bf16.msra.mxu0 %v1708
    %1746 = vmatprep.subr.bf16.mxu0 0
    %1747 = vmatpush1.bf16.msra.mxu0 %v1709
    %1748 = vmatprep.subr.bf16.mxu0 0
    %1749 = vmatpush1.bf16.msra.mxu0 %v1710
    %1750 = vmatprep.subr.bf16.mxu0 0
    %1751 = vmatpush1.bf16.msra.mxu0 %v1711
    %1752 = vmatprep.subr.bf16.mxu0 0
    %1753 = vmatpush1.bf16.msra.mxu0 %v1712
    %1754 = vmatprep.subr.bf16.mxu0 0
    %1755 = vmatpush1.bf16.msra.mxu0 %v1713
    %1756 = vmatprep.subr.bf16.mxu0 0
    %1757 = vmatpush1.bf16.msra.mxu0 %v1714
    %1758 = vmatprep.subr.bf16.mxu0 0
    %1759 = vmatpush1.bf16.msra.mxu0 %v1715
    %1760 = vmatprep.subr.bf16.mxu0 0
    %1761 = vmatpush1.bf16.msra.mxu0 %v1716
    %1762 = vmatprep.subr.bf16.mxu0 0
    %1763 = vmatpush1.bf16.msra.mxu0 %v1717
    %1764 = vmatprep.subr.bf16.mxu0 0
    %1765 = vmatpush1.bf16.msra.mxu0 %v1718
    %1766 = vmatprep.subr.bf16.mxu0 0
    %1767 = vmatpush1.bf16.msra.mxu0 %v1719
    %1768 = vmatprep.mubr.bf16.mxu0 %v1600
    %1769 = vmatmul.mubr.bf16.gmra.mrb[0].mxu0 %v1599
    %v1770 = vpop.f32.mrb[0].mxu0
    %v1771 = vadd.f32 %v1638, %v1770
    %v1772 = vpop.f32.mrb[0].mxu0
    %v1773 = vpop.f32.mrb[0].mxu0
    %v1774 = vpop.f32.mrb[0].mxu0
    %1775 = vdwg.mxu0
    %1776 = vst [vmem:[#allocation2] sm:$0x3] %v1771
    // Predicated region
    $region30: #{net_forward.5} parent=1 // pred_check
      _
    $region31: #{net_forward.5} parent=1 // pred_check_branch
      %1778 = sbr.rel (0) target = $region33
    $region32: #{net_forward.5} parent=1 // pred_region
      %s1780 = ssub.s32 32, 32
      %1781 = vsyncadd [#allocation3], %s1780
      %s1783 = sshll.u32 [#allocation2], 4
      %s1784 = int_to_ptr.vmem [resolvable:$true] %s1783
      %1786 = dma.vmem_to_hbm [thread:$0]  %s1784, 32, %s7, [#allocation3]
    $region33: #{net_forward.5} parent=1 // pred_fallthru
      _
    // Predicated region
    $region34: #{net_forward.5} parent=1 // pred_check
      _
    $region35: #{net_forward.5} parent=1 // pred_check_branch
      %1788 = sbr.rel (0) target = $region37
    $region36: #{net_forward.5} parent=1 // pred_region
      %1789 = dma.done [#allocation3], 32
    $region37: #{net_forward.5} parent=1 // pred_fallthru
      _
    %1790 = vsyncpa [#allocation3], 1

</llo_original>
